<compile_context>
chip_gen: v5e
topology: v5e:2x2
jax: 0.10.0
libtpu: 0.0.40
codegen_flags: <defaults>
</compile_context>

<pallas_src>
import functools

import jax
import jax.numpy as jnp
from jax.experimental import pallas as pl
from jax.experimental.pallas import tpu as pltpu

NET_WIDTH = 4
NET_DEPTH = 2

_SUB = 8       # sublane height of one f32 vreg
_LANES = 128   # lane width of one vreg


def _wos_layer(xs, wp, wn, th, d_in, d_out):
    """One 1x1 WOS layer on a list of dense (8, 128) channel tiles.

    xs : list of d_in (8, 128) f32 arrays (one vreg each)
    wp, wn : [k][j] traced 0-d f32 scalars (SMEM reads, hoisted by caller)
    th : [k] traced 0-d f32 thresholds
    returns list of d_out (8, 128) f32 arrays
    """
    zero = jnp.float32(0.0)
    neg_inf = jnp.float32(-jnp.inf)
    xn = [-x for x in xs]
    ys = [None] * d_out
    for i in range(2 * d_in):                      # static, <= 8, fully unrolled
        pos = i < d_in
        v = xs[i] if pos else xn[i - d_in]
        # Comparison masks are shared across the d_out outputs.  The self term
        # (z_i >= z_i, always true) is folded into the threshold below, so its
        # compare and its accumulate are skipped entirely.
        mp = [None if (pos and j == i) else (xs[j] >= v) for j in range(d_in)]
        mn = [None if ((not pos) and j == i - d_in) else (xn[j] >= v)
              for j in range(d_in)]
        for k in range(d_out):
            w_self = wp[k][i] if pos else wn[k][i - d_in]
            s = None
            for j in range(d_in):                  # VPU select + add chain
                if mp[j] is not None:
                    term = jnp.where(mp[j], wp[k][j], zero)
                    s = term if s is None else s + term
                if mn[j] is not None:
                    term = jnp.where(mn[j], wn[k][j], zero)
                    s = term if s is None else s + term
            valid = s >= (th[k] - w_self)          # self term folded (scalar sub)
            cand = jnp.where(valid, v, neg_inf)
            ys[k] = cand if ys[k] is None else jnp.maximum(ys[k], cand)
    return ys


def _wosnet_kernel(layer_dims, sub_tiles, x_ref, *refs):
    # refs = (wp0, wn0, t0, ..., wpL, wnL, tL, o_ref); params are flat SMEM refs.
    o_ref = refs[-1]
    param_refs = refs[:-1]

    # Hoist every SMEM scalar read out of the pixel loop.
    layer_params = []
    for li, (d_in, d_out) in enumerate(layer_dims):
        wp_ref = param_refs[3 * li]
        wn_ref = param_refs[3 * li + 1]
        t_ref = param_refs[3 * li + 2]
        wp = [[wp_ref[k * d_in + j] for j in range(d_in)] for k in range(d_out)]
        wn = [[wn_ref[k * d_in + j] for j in range(d_in)] for k in range(d_out)]
        th = [t_ref[k] for k in range(d_out)]
        layer_params.append((wp, wn, th))

    c0 = layer_dims[0][0]

    # March the tile in (8, 128) one-vreg sub-tiles so the whole unrolled WOS
    # network stays register resident (no spills on the VALU-bound inner loop).
    @pl.loop(0, sub_tiles)
    def _(r):
        r0 = pl.multiple_of(r * _SUB, _SUB)
        xs = [x_ref[j, pl.ds(r0, _SUB), :] for j in range(c0)]
        for (d_in, d_out), (wp, wn, th) in zip(layer_dims, layer_params):
            xs = _wos_layer(xs, wp, wn, th, d_in, d_out)
        o_ref[pl.ds(r0, _SUB), :] = xs[0]          # lane+sublane dense store


def wosnet_forward(x_nchw, params, tile_rows=256):
    """params: list of (wp, wn, t) per WOS layer, in network order."""
    N, C, H, W = x_nchw.shape
    P = N * H * W
    layer_dims = tuple((wp.shape[1], wp.shape[0]) for wp, _, _ in params)
    assert layer_dims[0][0] == C and layer_dims[-1][1] == 1

    # (N, C, H, W) -> (C, P): channels lead, pixels trail (row-major pixel id).
    x2d = jnp.transpose(x_nchw.reshape(N, C, H * W), (1, 0, 2)).reshape(C, P)
    x2d = x2d.astype(jnp.float32)

    rows = (P + _LANES - 1) // _LANES
    tr = min(tile_rows, ((rows + _SUB - 1) // _SUB) * _SUB)   # multiple of 8
    rows_pad = ((rows + tr - 1) // tr) * tr
    p_pad = rows_pad * _LANES
    if p_pad != P:
        # Padded pixels are zeros -> finite WOS outputs, sliced off below.
        x2d = jnp.pad(x2d, ((0, 0), (0, p_pad - P)))
    x3d = x2d.reshape(C, rows_pad, _LANES)

    flat = []
    for wp, wn, t in params:
        flat += [wp.reshape(-1).astype(jnp.float32),
                 wn.reshape(-1).astype(jnp.float32),
                 t.reshape(-1).astype(jnp.float32)]

    smem = pl.BlockSpec(memory_space=pltpu.MemorySpace.SMEM)
    out2d = pl.pallas_call(
        functools.partial(_wosnet_kernel, layer_dims, tr // _SUB),
        out_shape=jax.ShapeDtypeStruct((rows_pad, _LANES), jnp.float32),
        grid=(rows_pad // tr,),
        in_specs=[pl.BlockSpec((C, tr, _LANES), lambda i: (0, i, 0))]
                 + [smem] * len(flat),
        out_specs=pl.BlockSpec((tr, _LANES), lambda i: (i, 0)),
        compiler_params=pltpu.CompilerParams(
            dimension_semantics=("parallel",)),
    )(x3d, *flat)

    return out2d.reshape(-1)[:P].reshape(N, 1, H, W)


# ----------------------------- plain-JAX reference -----------------------------

def _wos_layer_ref(x, wp, wn, t):
    # x: (P, D); wp, wn: (K, D); t: (K,)
    xn = -x
    D = x.shape[1]
    y = jnp.full((x.shape[0], wp.shape[0]), -jnp.inf, dtype=jnp.float32)
    for i in range(2 * D):
        v = x[:, i:i + 1] if i < D else xn[:, i - D:i - D + 1]          # (P, 1)
        mp = (x >= v).astype(jnp.float32)                               # (P, D)
        mn = (xn >= v).astype(jnp.float32)
        s = jnp.sum(mp[:, None, :] * wp[None, :, :]
                    + mn[:, None, :] * wn[None, :, :], axis=-1)          # (P, K)
        valid = s >= t.reshape(1, -1)
        y = jnp.maximum(y, jnp.where(valid, v, -jnp.inf))
    return y


def wosnet_forward_ref(x_nchw, params):
    N, C, H, W = x_nchw.shape
    y = jnp.transpose(x_nchw, (0, 2, 3, 1)).reshape(N * H * W, C).astype(jnp.float32)
    for wp, wn, t in params:
        y = _wos_layer_ref(y, wp, wn, t)
    return y.reshape(N, H, W, 1).transpose(0, 3, 1, 2)


# ------------------------------------ init ------------------------------------

def init_wos_params(key, d_in, d_out):
    """Deterministic synthetic init for one WOS(d_in, d_out, 1) layer."""
    kw, kt = jax.random.split(key)
    raw_w = jax.random.normal(kw, (d_out, 2 * d_in), jnp.float32)
    raw_t = jax.random.normal(kt, (d_out,), jnp.float32)
    w = jax.nn.softplus(raw_w)                           # positive weights
    wp, wn = w[:, :d_in], w[:, d_in:]
    t = jax.nn.sigmoid(raw_t) * jnp.sum(w, axis=1)       # 0 < t <= sum(w) precondition
    return wp, wn, t


if __name__ == "__main__":
    key = jax.random.PRNGKey(0)
    kx, kp = jax.random.split(key)

    # Small NCHW input with 2 channels (WOSNet.first = WOS(2, NET_WIDTH, 1)).
    x = jax.random.normal(kx, (2, 2, 16, 16), jnp.float32)

    layer_dims = ([(2, NET_WIDTH)]
                  + [(NET_WIDTH, NET_WIDTH)] * NET_DEPTH
                  + [(NET_WIDTH, 1)])
    keys = jax.random.split(kp, len(layer_dims))
    params = [init_wos_params(k, di, do) for k, (di, do) in zip(keys, layer_dims)]

    y = wosnet_forward(x, params)
    jax.block_until_ready(y)
    assert y.shape == (2, 1, 16, 16), y.shape
    assert bool(jnp.all(jnp.isfinite(y)))

    # Cross-check against the plain-JAX reference of the same WOS formulation.
    # A tiny fraction of near-threshold tie flips from fp summation order is
    # tolerated; any layout/tiling bug would scramble most outputs.
    y_ref = wosnet_forward_ref(x, params)
    mismatch = float(jnp.mean((jnp.abs(y - y_ref) > 1e-4).astype(jnp.float32)))
    assert mismatch < 0.01, mismatch

    print("KERNEL_OK")
</pallas_src>

<mosaic_0001>
module attributes {stable_mosaic.version = 11 : i64} {
  func.func @_wosnet_kernel(%arg0: i32, %arg1: memref<2x8x128xf32, #tpu.memory_space<vmem>>, %arg2: memref<8xf32, #tpu.memory_space<smem>>, %arg3: memref<8xf32, #tpu.memory_space<smem>>, %arg4: memref<4xf32, #tpu.memory_space<smem>>, %arg5: memref<16xf32, #tpu.memory_space<smem>>, %arg6: memref<16xf32, #tpu.memory_space<smem>>, %arg7: memref<4xf32, #tpu.memory_space<smem>>, %arg8: memref<16xf32, #tpu.memory_space<smem>>, %arg9: memref<16xf32, #tpu.memory_space<smem>>, %arg10: memref<4xf32, #tpu.memory_space<smem>>, %arg11: memref<4xf32, #tpu.memory_space<smem>>, %arg12: memref<4xf32, #tpu.memory_space<smem>>, %arg13: memref<1xf32, #tpu.memory_space<smem>>, %arg14: memref<8x128xf32, #tpu.memory_space<vmem>>) attributes {dimension_semantics = [#tpu.dimension_semantics<parallel>], iteration_bounds = array<i64: 1>, scalar_prefetch = 0 : i64, scratch_operands = 0 : i64, tpu.core_type = #tpu.core_type<tc>, window_params = [{transform_indices = @transform_0, window_bounds = array<i64: 2, 8, 128>}, {transform_indices = @transform_1, window_bounds = array<i64: 8>}, {transform_indices = @transform_2, window_bounds = array<i64: 8>}, {transform_indices = @transform_3, window_bounds = array<i64: 4>}, {transform_indices = @transform_4, window_bounds = array<i64: 16>}, {transform_indices = @transform_5, window_bounds = array<i64: 16>}, {transform_indices = @transform_6, window_bounds = array<i64: 4>}, {transform_indices = @transform_7, window_bounds = array<i64: 16>}, {transform_indices = @transform_8, window_bounds = array<i64: 16>}, {transform_indices = @transform_9, window_bounds = array<i64: 4>}, {transform_indices = @transform_10, window_bounds = array<i64: 4>}, {transform_indices = @transform_11, window_bounds = array<i64: 4>}, {transform_indices = @transform_12, window_bounds = array<i64: 1>}, {transform_indices = @transform_13, window_bounds = array<i64: 8, 128>}]} {
    %c0 = arith.constant 0 : index
    %0 = memref.load %arg2[%c0] : memref<8xf32, #tpu.memory_space<smem>>
    %c1 = arith.constant 1 : index
    %1 = memref.load %arg2[%c1] : memref<8xf32, #tpu.memory_space<smem>>
    %c2 = arith.constant 2 : index
    %2 = memref.load %arg2[%c2] : memref<8xf32, #tpu.memory_space<smem>>
    %c3 = arith.constant 3 : index
    %3 = memref.load %arg2[%c3] : memref<8xf32, #tpu.memory_space<smem>>
    %c4 = arith.constant 4 : index
    %4 = memref.load %arg2[%c4] : memref<8xf32, #tpu.memory_space<smem>>
    %c5 = arith.constant 5 : index
    %5 = memref.load %arg2[%c5] : memref<8xf32, #tpu.memory_space<smem>>
    %c6 = arith.constant 6 : index
    %6 = memref.load %arg2[%c6] : memref<8xf32, #tpu.memory_space<smem>>
    %c7 = arith.constant 7 : index
    %7 = memref.load %arg2[%c7] : memref<8xf32, #tpu.memory_space<smem>>
    %c0_0 = arith.constant 0 : index
    %8 = memref.load %arg3[%c0_0] : memref<8xf32, #tpu.memory_space<smem>>
    %c1_1 = arith.constant 1 : index
    %9 = memref.load %arg3[%c1_1] : memref<8xf32, #tpu.memory_space<smem>>
    %c2_2 = arith.constant 2 : index
    %10 = memref.load %arg3[%c2_2] : memref<8xf32, #tpu.memory_space<smem>>
    %c3_3 = arith.constant 3 : index
    %11 = memref.load %arg3[%c3_3] : memref<8xf32, #tpu.memory_space<smem>>
    %c4_4 = arith.constant 4 : index
    %12 = memref.load %arg3[%c4_4] : memref<8xf32, #tpu.memory_space<smem>>
    %c5_5 = arith.constant 5 : index
    %13 = memref.load %arg3[%c5_5] : memref<8xf32, #tpu.memory_space<smem>>
    %c6_6 = arith.constant 6 : index
    %14 = memref.load %arg3[%c6_6] : memref<8xf32, #tpu.memory_space<smem>>
    %c7_7 = arith.constant 7 : index
    %15 = memref.load %arg3[%c7_7] : memref<8xf32, #tpu.memory_space<smem>>
    %c0_8 = arith.constant 0 : index
    %16 = memref.load %arg4[%c0_8] : memref<4xf32, #tpu.memory_space<smem>>
    %c1_9 = arith.constant 1 : index
    %17 = memref.load %arg4[%c1_9] : memref<4xf32, #tpu.memory_space<smem>>
    %c2_10 = arith.constant 2 : index
    %18 = memref.load %arg4[%c2_10] : memref<4xf32, #tpu.memory_space<smem>>
    %c3_11 = arith.constant 3 : index
    %19 = memref.load %arg4[%c3_11] : memref<4xf32, #tpu.memory_space<smem>>
    %c0_12 = arith.constant 0 : index
    %20 = memref.load %arg5[%c0_12] : memref<16xf32, #tpu.memory_space<smem>>
    %c1_13 = arith.constant 1 : index
    %21 = memref.load %arg5[%c1_13] : memref<16xf32, #tpu.memory_space<smem>>
    %c2_14 = arith.constant 2 : index
    %22 = memref.load %arg5[%c2_14] : memref<16xf32, #tpu.memory_space<smem>>
    %c3_15 = arith.constant 3 : index
    %23 = memref.load %arg5[%c3_15] : memref<16xf32, #tpu.memory_space<smem>>
    %c4_16 = arith.constant 4 : index
    %24 = memref.load %arg5[%c4_16] : memref<16xf32, #tpu.memory_space<smem>>
    %c5_17 = arith.constant 5 : index
    %25 = memref.load %arg5[%c5_17] : memref<16xf32, #tpu.memory_space<smem>>
    %c6_18 = arith.constant 6 : index
    %26 = memref.load %arg5[%c6_18] : memref<16xf32, #tpu.memory_space<smem>>
    %c7_19 = arith.constant 7 : index
    %27 = memref.load %arg5[%c7_19] : memref<16xf32, #tpu.memory_space<smem>>
    %c8 = arith.constant 8 : index
    %28 = memref.load %arg5[%c8] : memref<16xf32, #tpu.memory_space<smem>>
    %c9 = arith.constant 9 : index
    %29 = memref.load %arg5[%c9] : memref<16xf32, #tpu.memory_space<smem>>
    %c10 = arith.constant 10 : index
    %30 = memref.load %arg5[%c10] : memref<16xf32, #tpu.memory_space<smem>>
    %c11 = arith.constant 11 : index
    %31 = memref.load %arg5[%c11] : memref<16xf32, #tpu.memory_space<smem>>
    %c12 = arith.constant 12 : index
    %32 = memref.load %arg5[%c12] : memref<16xf32, #tpu.memory_space<smem>>
    %c13 = arith.constant 13 : index
    %33 = memref.load %arg5[%c13] : memref<16xf32, #tpu.memory_space<smem>>
    %c14 = arith.constant 14 : index
    %34 = memref.load %arg5[%c14] : memref<16xf32, #tpu.memory_space<smem>>
    %c15 = arith.constant 15 : index
    %35 = memref.load %arg5[%c15] : memref<16xf32, #tpu.memory_space<smem>>
    %c0_20 = arith.constant 0 : index
    %36 = memref.load %arg6[%c0_20] : memref<16xf32, #tpu.memory_space<smem>>
    %c1_21 = arith.constant 1 : index
    %37 = memref.load %arg6[%c1_21] : memref<16xf32, #tpu.memory_space<smem>>
    %c2_22 = arith.constant 2 : index
    %38 = memref.load %arg6[%c2_22] : memref<16xf32, #tpu.memory_space<smem>>
    %c3_23 = arith.constant 3 : index
    %39 = memref.load %arg6[%c3_23] : memref<16xf32, #tpu.memory_space<smem>>
    %c4_24 = arith.constant 4 : index
    %40 = memref.load %arg6[%c4_24] : memref<16xf32, #tpu.memory_space<smem>>
    %c5_25 = arith.constant 5 : index
    %41 = memref.load %arg6[%c5_25] : memref<16xf32, #tpu.memory_space<smem>>
    %c6_26 = arith.constant 6 : index
    %42 = memref.load %arg6[%c6_26] : memref<16xf32, #tpu.memory_space<smem>>
    %c7_27 = arith.constant 7 : index
    %43 = memref.load %arg6[%c7_27] : memref<16xf32, #tpu.memory_space<smem>>
    %c8_28 = arith.constant 8 : index
    %44 = memref.load %arg6[%c8_28] : memref<16xf32, #tpu.memory_space<smem>>
    %c9_29 = arith.constant 9 : index
    %45 = memref.load %arg6[%c9_29] : memref<16xf32, #tpu.memory_space<smem>>
    %c10_30 = arith.constant 10 : index
    %46 = memref.load %arg6[%c10_30] : memref<16xf32, #tpu.memory_space<smem>>
    %c11_31 = arith.constant 11 : index
    %47 = memref.load %arg6[%c11_31] : memref<16xf32, #tpu.memory_space<smem>>
    %c12_32 = arith.constant 12 : index
    %48 = memref.load %arg6[%c12_32] : memref<16xf32, #tpu.memory_space<smem>>
    %c13_33 = arith.constant 13 : index
    %49 = memref.load %arg6[%c13_33] : memref<16xf32, #tpu.memory_space<smem>>
    %c14_34 = arith.constant 14 : index
    %50 = memref.load %arg6[%c14_34] : memref<16xf32, #tpu.memory_space<smem>>
    %c15_35 = arith.constant 15 : index
    %51 = memref.load %arg6[%c15_35] : memref<16xf32, #tpu.memory_space<smem>>
    %c0_36 = arith.constant 0 : index
    %52 = memref.load %arg7[%c0_36] : memref<4xf32, #tpu.memory_space<smem>>
    %c1_37 = arith.constant 1 : index
    %53 = memref.load %arg7[%c1_37] : memref<4xf32, #tpu.memory_space<smem>>
    %c2_38 = arith.constant 2 : index
    %54 = memref.load %arg7[%c2_38] : memref<4xf32, #tpu.memory_space<smem>>
    %c3_39 = arith.constant 3 : index
    %55 = memref.load %arg7[%c3_39] : memref<4xf32, #tpu.memory_space<smem>>
    %c0_40 = arith.constant 0 : index
    %56 = memref.load %arg8[%c0_40] : memref<16xf32, #tpu.memory_space<smem>>
    %c1_41 = arith.constant 1 : index
    %57 = memref.load %arg8[%c1_41] : memref<16xf32, #tpu.memory_space<smem>>
    %c2_42 = arith.constant 2 : index
    %58 = memref.load %arg8[%c2_42] : memref<16xf32, #tpu.memory_space<smem>>
    %c3_43 = arith.constant 3 : index
    %59 = memref.load %arg8[%c3_43] : memref<16xf32, #tpu.memory_space<smem>>
    %c4_44 = arith.constant 4 : index
    %60 = memref.load %arg8[%c4_44] : memref<16xf32, #tpu.memory_space<smem>>
    %c5_45 = arith.constant 5 : index
    %61 = memref.load %arg8[%c5_45] : memref<16xf32, #tpu.memory_space<smem>>
    %c6_46 = arith.constant 6 : index
    %62 = memref.load %arg8[%c6_46] : memref<16xf32, #tpu.memory_space<smem>>
    %c7_47 = arith.constant 7 : index
    %63 = memref.load %arg8[%c7_47] : memref<16xf32, #tpu.memory_space<smem>>
    %c8_48 = arith.constant 8 : index
    %64 = memref.load %arg8[%c8_48] : memref<16xf32, #tpu.memory_space<smem>>
    %c9_49 = arith.constant 9 : index
    %65 = memref.load %arg8[%c9_49] : memref<16xf32, #tpu.memory_space<smem>>
    %c10_50 = arith.constant 10 : index
    %66 = memref.load %arg8[%c10_50] : memref<16xf32, #tpu.memory_space<smem>>
    %c11_51 = arith.constant 11 : index
    %67 = memref.load %arg8[%c11_51] : memref<16xf32, #tpu.memory_space<smem>>
    %c12_52 = arith.constant 12 : index
    %68 = memref.load %arg8[%c12_52] : memref<16xf32, #tpu.memory_space<smem>>
    %c13_53 = arith.constant 13 : index
    %69 = memref.load %arg8[%c13_53] : memref<16xf32, #tpu.memory_space<smem>>
    %c14_54 = arith.constant 14 : index
    %70 = memref.load %arg8[%c14_54] : memref<16xf32, #tpu.memory_space<smem>>
    %c15_55 = arith.constant 15 : index
    %71 = memref.load %arg8[%c15_55] : memref<16xf32, #tpu.memory_space<smem>>
    %c0_56 = arith.constant 0 : index
    %72 = memref.load %arg9[%c0_56] : memref<16xf32, #tpu.memory_space<smem>>
    %c1_57 = arith.constant 1 : index
    %73 = memref.load %arg9[%c1_57] : memref<16xf32, #tpu.memory_space<smem>>
    %c2_58 = arith.constant 2 : index
    %74 = memref.load %arg9[%c2_58] : memref<16xf32, #tpu.memory_space<smem>>
    %c3_59 = arith.constant 3 : index
    %75 = memref.load %arg9[%c3_59] : memref<16xf32, #tpu.memory_space<smem>>
    %c4_60 = arith.constant 4 : index
    %76 = memref.load %arg9[%c4_60] : memref<16xf32, #tpu.memory_space<smem>>
    %c5_61 = arith.constant 5 : index
    %77 = memref.load %arg9[%c5_61] : memref<16xf32, #tpu.memory_space<smem>>
    %c6_62 = arith.constant 6 : index
    %78 = memref.load %arg9[%c6_62] : memref<16xf32, #tpu.memory_space<smem>>
    %c7_63 = arith.constant 7 : index
    %79 = memref.load %arg9[%c7_63] : memref<16xf32, #tpu.memory_space<smem>>
    %c8_64 = arith.constant 8 : index
    %80 = memref.load %arg9[%c8_64] : memref<16xf32, #tpu.memory_space<smem>>
    %c9_65 = arith.constant 9 : index
    %81 = memref.load %arg9[%c9_65] : memref<16xf32, #tpu.memory_space<smem>>
    %c10_66 = arith.constant 10 : index
    %82 = memref.load %arg9[%c10_66] : memref<16xf32, #tpu.memory_space<smem>>
    %c11_67 = arith.constant 11 : index
    %83 = memref.load %arg9[%c11_67] : memref<16xf32, #tpu.memory_space<smem>>
    %c12_68 = arith.constant 12 : index
    %84 = memref.load %arg9[%c12_68] : memref<16xf32, #tpu.memory_space<smem>>
    %c13_69 = arith.constant 13 : index
    %85 = memref.load %arg9[%c13_69] : memref<16xf32, #tpu.memory_space<smem>>
    %c14_70 = arith.constant 14 : index
    %86 = memref.load %arg9[%c14_70] : memref<16xf32, #tpu.memory_space<smem>>
    %c15_71 = arith.constant 15 : index
    %87 = memref.load %arg9[%c15_71] : memref<16xf32, #tpu.memory_space<smem>>
    %c0_72 = arith.constant 0 : index
    %88 = memref.load %arg10[%c0_72] : memref<4xf32, #tpu.memory_space<smem>>
    %c1_73 = arith.constant 1 : index
    %89 = memref.load %arg10[%c1_73] : memref<4xf32, #tpu.memory_space<smem>>
    %c2_74 = arith.constant 2 : index
    %90 = memref.load %arg10[%c2_74] : memref<4xf32, #tpu.memory_space<smem>>
    %c3_75 = arith.constant 3 : index
    %91 = memref.load %arg10[%c3_75] : memref<4xf32, #tpu.memory_space<smem>>
    %c0_76 = arith.constant 0 : index
    %92 = memref.load %arg11[%c0_76] : memref<4xf32, #tpu.memory_space<smem>>
    %c1_77 = arith.constant 1 : index
    %93 = memref.load %arg11[%c1_77] : memref<4xf32, #tpu.memory_space<smem>>
    %c2_78 = arith.constant 2 : index
    %94 = memref.load %arg11[%c2_78] : memref<4xf32, #tpu.memory_space<smem>>
    %c3_79 = arith.constant 3 : index
    %95 = memref.load %arg11[%c3_79] : memref<4xf32, #tpu.memory_space<smem>>
    %c0_80 = arith.constant 0 : index
    %96 = memref.load %arg12[%c0_80] : memref<4xf32, #tpu.memory_space<smem>>
    %c1_81 = arith.constant 1 : index
    %97 = memref.load %arg12[%c1_81] : memref<4xf32, #tpu.memory_space<smem>>
    %c2_82 = arith.constant 2 : index
    %98 = memref.load %arg12[%c2_82] : memref<4xf32, #tpu.memory_space<smem>>
    %c3_83 = arith.constant 3 : index
    %99 = memref.load %arg12[%c3_83] : memref<4xf32, #tpu.memory_space<smem>>
    %c0_84 = arith.constant 0 : index
    %100 = memref.load %arg13[%c0_84] : memref<1xf32, #tpu.memory_space<smem>>
    %c0_i32 = arith.constant 0 : i32
    %c1_i32 = arith.constant 1 : i32
    %101 = arith.muli %c0_i32, %c1_i32 : i32
    %c0_i32_85 = arith.constant 0 : i32
    %102 = arith.addi %c0_i32_85, %101 : i32
    %c8_i32 = arith.constant 8 : i32
    %103 = arith.muli %102, %c8_i32 : i32
    %104 = tpu.assume_multiple %103, 8 : i32
    %c0_86 = arith.constant 0 : index
    %105 = arith.index_cast %104 : i32 to index
    %c0_87 = arith.constant 0 : index
    %106 = vector.load %arg1[%c0_86, %105, %c0_87] : memref<2x8x128xf32, #tpu.memory_space<vmem>>, vector<1x8x128xf32>
    %107 = vector.shape_cast %106 : vector<1x8x128xf32> to vector<8x128xf32>
    %c1_88 = arith.constant 1 : index
    %108 = arith.index_cast %104 : i32 to index
    %c0_89 = arith.constant 0 : index
    %109 = vector.load %arg1[%c1_88, %108, %c0_89] : memref<2x8x128xf32, #tpu.memory_space<vmem>>, vector<1x8x128xf32>
    %110 = vector.shape_cast %109 : vector<1x8x128xf32> to vector<8x128xf32>
    %cst = arith.constant 0.000000e+00 : f32
    %111 = vector.broadcast %cst : f32 to vector<8x128xf32>
    %112 = arith.subf %111, %107 : vector<8x128xf32>
    %cst_90 = arith.constant 0.000000e+00 : f32
    %113 = vector.broadcast %cst_90 : f32 to vector<8x128xf32>
    %114 = arith.subf %113, %110 : vector<8x128xf32>
    %115 = arith.cmpf oge, %110, %107 : vector<8x128xf32>
    %116 = arith.cmpf oge, %112, %107 : vector<8x128xf32>
    %117 = arith.cmpf oge, %114, %107 : vector<8x128xf32>
    %cst_91 = arith.constant 0.000000e+00 : f32
    %118 = vector.broadcast %8 : f32 to vector<8x128xf32>
    %119 = vector.broadcast %cst_91 : f32 to vector<8x128xf32>
    %120 = arith.select %116, %118, %119 : vector<8x128xi1>, vector<8x128xf32>
    %cst_92 = arith.constant 0.000000e+00 : f32
    %121 = vector.broadcast %1 : f32 to vector<8x128xf32>
    %122 = vector.broadcast %cst_92 : f32 to vector<8x128xf32>
    %123 = arith.select %115, %121, %122 : vector<8x128xi1>, vector<8x128xf32>
    %124 = arith.addf %120, %123 : vector<8x128xf32>
    %cst_93 = arith.constant 0.000000e+00 : f32
    %125 = vector.broadcast %9 : f32 to vector<8x128xf32>
    %126 = vector.broadcast %cst_93 : f32 to vector<8x128xf32>
    %127 = arith.select %117, %125, %126 : vector<8x128xi1>, vector<8x128xf32>
    %128 = arith.addf %124, %127 : vector<8x128xf32>
    %129 = arith.subf %16, %0 : f32
    %130 = vector.broadcast %129 : f32 to vector<8x128xf32>
    %131 = arith.cmpf oge, %128, %130 : vector<8x128xf32>
    %cst_94 = arith.constant 0xFF800000 : f32
    %132 = vector.broadcast %cst_94 : f32 to vector<8x128xf32>
    %133 = arith.select %131, %107, %132 : vector<8x128xi1>, vector<8x128xf32>
    %cst_95 = arith.constant 0.000000e+00 : f32
    %134 = vector.broadcast %10 : f32 to vector<8x128xf32>
    %135 = vector.broadcast %cst_95 : f32 to vector<8x128xf32>
    %136 = arith.select %116, %134, %135 : vector<8x128xi1>, vector<8x128xf32>
    %cst_96 = arith.constant 0.000000e+00 : f32
    %137 = vector.broadcast %3 : f32 to vector<8x128xf32>
    %138 = vector.broadcast %cst_96 : f32 to vector<8x128xf32>
    %139 = arith.select %115, %137, %138 : vector<8x128xi1>, vector<8x128xf32>
    %140 = arith.addf %136, %139 : vector<8x128xf32>
    %cst_97 = arith.constant 0.000000e+00 : f32
    %141 = vector.broadcast %11 : f32 to vector<8x128xf32>
    %142 = vector.broadcast %cst_97 : f32 to vector<8x128xf32>
    %143 = arith.select %117, %141, %142 : vector<8x128xi1>, vector<8x128xf32>
    %144 = arith.addf %140, %143 : vector<8x128xf32>
    %145 = arith.subf %17, %2 : f32
    %146 = vector.broadcast %145 : f32 to vector<8x128xf32>
    %147 = arith.cmpf oge, %144, %146 : vector<8x128xf32>
    %cst_98 = arith.constant 0xFF800000 : f32
    %148 = vector.broadcast %cst_98 : f32 to vector<8x128xf32>
    %149 = arith.select %147, %107, %148 : vector<8x128xi1>, vector<8x128xf32>
    %cst_99 = arith.constant 0.000000e+00 : f32
    %150 = vector.broadcast %12 : f32 to vector<8x128xf32>
    %151 = vector.broadcast %cst_99 : f32 to vector<8x128xf32>
    %152 = arith.select %116, %150, %151 : vector<8x128xi1>, vector<8x128xf32>
    %cst_100 = arith.constant 0.000000e+00 : f32
    %153 = vector.broadcast %5 : f32 to vector<8x128xf32>
    %154 = vector.broadcast %cst_100 : f32 to vector<8x128xf32>
    %155 = arith.select %115, %153, %154 : vector<8x128xi1>, vector<8x128xf32>
    %156 = arith.addf %152, %155 : vector<8x128xf32>
    %cst_101 = arith.constant 0.000000e+00 : f32
    %157 = vector.broadcast %13 : f32 to vector<8x128xf32>
    %158 = vector.broadcast %cst_101 : f32 to vector<8x128xf32>
    %159 = arith.select %117, %157, %158 : vector<8x128xi1>, vector<8x128xf32>
    %160 = arith.addf %156, %159 : vector<8x128xf32>
    %161 = arith.subf %18, %4 : f32
    %162 = vector.broadcast %161 : f32 to vector<8x128xf32>
    %163 = arith.cmpf oge, %160, %162 : vector<8x128xf32>
    %cst_102 = arith.constant 0xFF800000 : f32
    %164 = vector.broadcast %cst_102 : f32 to vector<8x128xf32>
    %165 = arith.select %163, %107, %164 : vector<8x128xi1>, vector<8x128xf32>
    %cst_103 = arith.constant 0.000000e+00 : f32
    %166 = vector.broadcast %14 : f32 to vector<8x128xf32>
    %167 = vector.broadcast %cst_103 : f32 to vector<8x128xf32>
    %168 = arith.select %116, %166, %167 : vector<8x128xi1>, vector<8x128xf32>
    %cst_104 = arith.constant 0.000000e+00 : f32
    %169 = vector.broadcast %7 : f32 to vector<8x128xf32>
    %170 = vector.broadcast %cst_104 : f32 to vector<8x128xf32>
    %171 = arith.select %115, %169, %170 : vector<8x128xi1>, vector<8x128xf32>
    %172 = arith.addf %168, %171 : vector<8x128xf32>
    %cst_105 = arith.constant 0.000000e+00 : f32
    %173 = vector.broadcast %15 : f32 to vector<8x128xf32>
    %174 = vector.broadcast %cst_105 : f32 to vector<8x128xf32>
    %175 = arith.select %117, %173, %174 : vector<8x128xi1>, vector<8x128xf32>
    %176 = arith.addf %172, %175 : vector<8x128xf32>
    %177 = arith.subf %19, %6 : f32
    %178 = vector.broadcast %177 : f32 to vector<8x128xf32>
    %179 = arith.cmpf oge, %176, %178 : vector<8x128xf32>
    %cst_106 = arith.constant 0xFF800000 : f32
    %180 = vector.broadcast %cst_106 : f32 to vector<8x128xf32>
    %181 = arith.select %179, %107, %180 : vector<8x128xi1>, vector<8x128xf32>
    %182 = arith.cmpf oge, %107, %110 : vector<8x128xf32>
    %183 = arith.cmpf oge, %112, %110 : vector<8x128xf32>
    %184 = arith.cmpf oge, %114, %110 : vector<8x128xf32>
    %cst_107 = arith.constant 0.000000e+00 : f32
    %185 = vector.broadcast %0 : f32 to vector<8x128xf32>
    %186 = vector.broadcast %cst_107 : f32 to vector<8x128xf32>
    %187 = arith.select %182, %185, %186 : vector<8x128xi1>, vector<8x128xf32>
    %cst_108 = arith.constant 0.000000e+00 : f32
    %188 = vector.broadcast %8 : f32 to vector<8x128xf32>
    %189 = vector.broadcast %cst_108 : f32 to vector<8x128xf32>
    %190 = arith.select %183, %188, %189 : vector<8x128xi1>, vector<8x128xf32>
    %191 = arith.addf %187, %190 : vector<8x128xf32>
    %cst_109 = arith.constant 0.000000e+00 : f32
    %192 = vector.broadcast %9 : f32 to vector<8x128xf32>
    %193 = vector.broadcast %cst_109 : f32 to vector<8x128xf32>
    %194 = arith.select %184, %192, %193 : vector<8x128xi1>, vector<8x128xf32>
    %195 = arith.addf %191, %194 : vector<8x128xf32>
    %196 = arith.subf %16, %1 : f32
    %197 = vector.broadcast %196 : f32 to vector<8x128xf32>
    %198 = arith.cmpf oge, %195, %197 : vector<8x128xf32>
    %cst_110 = arith.constant 0xFF800000 : f32
    %199 = vector.broadcast %cst_110 : f32 to vector<8x128xf32>
    %200 = arith.select %198, %110, %199 : vector<8x128xi1>, vector<8x128xf32>
    %201 = arith.maximumf %133, %200 : vector<8x128xf32>
    %cst_111 = arith.constant 0.000000e+00 : f32
    %202 = vector.broadcast %2 : f32 to vector<8x128xf32>
    %203 = vector.broadcast %cst_111 : f32 to vector<8x128xf32>
    %204 = arith.select %182, %202, %203 : vector<8x128xi1>, vector<8x128xf32>
    %cst_112 = arith.constant 0.000000e+00 : f32
    %205 = vector.broadcast %10 : f32 to vector<8x128xf32>
    %206 = vector.broadcast %cst_112 : f32 to vector<8x128xf32>
    %207 = arith.select %183, %205, %206 : vector<8x128xi1>, vector<8x128xf32>
    %208 = arith.addf %204, %207 : vector<8x128xf32>
    %cst_113 = arith.constant 0.000000e+00 : f32
    %209 = vector.broadcast %11 : f32 to vector<8x128xf32>
    %210 = vector.broadcast %cst_113 : f32 to vector<8x128xf32>
    %211 = arith.select %184, %209, %210 : vector<8x128xi1>, vector<8x128xf32>
    %212 = arith.addf %208, %211 : vector<8x128xf32>
    %213 = arith.subf %17, %3 : f32
    %214 = vector.broadcast %213 : f32 to vector<8x128xf32>
    %215 = arith.cmpf oge, %212, %214 : vector<8x128xf32>
    %cst_114 = arith.constant 0xFF800000 : f32
    %216 = vector.broadcast %cst_114 : f32 to vector<8x128xf32>
    %217 = arith.select %215, %110, %216 : vector<8x128xi1>, vector<8x128xf32>
    %218 = arith.maximumf %149, %217 : vector<8x128xf32>
    %cst_115 = arith.constant 0.000000e+00 : f32
    %219 = vector.broadcast %4 : f32 to vector<8x128xf32>
    %220 = vector.broadcast %cst_115 : f32 to vector<8x128xf32>
    %221 = arith.select %182, %219, %220 : vector<8x128xi1>, vector<8x128xf32>
    %cst_116 = arith.constant 0.000000e+00 : f32
    %222 = vector.broadcast %12 : f32 to vector<8x128xf32>
    %223 = vector.broadcast %cst_116 : f32 to vector<8x128xf32>
    %224 = arith.select %183, %222, %223 : vector<8x128xi1>, vector<8x128xf32>
    %225 = arith.addf %221, %224 : vector<8x128xf32>
    %cst_117 = arith.constant 0.000000e+00 : f32
    %226 = vector.broadcast %13 : f32 to vector<8x128xf32>
    %227 = vector.broadcast %cst_117 : f32 to vector<8x128xf32>
    %228 = arith.select %184, %226, %227 : vector<8x128xi1>, vector<8x128xf32>
    %229 = arith.addf %225, %228 : vector<8x128xf32>
    %230 = arith.subf %18, %5 : f32
    %231 = vector.broadcast %230 : f32 to vector<8x128xf32>
    %232 = arith.cmpf oge, %229, %231 : vector<8x128xf32>
    %cst_118 = arith.constant 0xFF800000 : f32
    %233 = vector.broadcast %cst_118 : f32 to vector<8x128xf32>
    %234 = arith.select %232, %110, %233 : vector<8x128xi1>, vector<8x128xf32>
    %235 = arith.maximumf %165, %234 : vector<8x128xf32>
    %cst_119 = arith.constant 0.000000e+00 : f32
    %236 = vector.broadcast %6 : f32 to vector<8x128xf32>
    %237 = vector.broadcast %cst_119 : f32 to vector<8x128xf32>
    %238 = arith.select %182, %236, %237 : vector<8x128xi1>, vector<8x128xf32>
    %cst_120 = arith.constant 0.000000e+00 : f32
    %239 = vector.broadcast %14 : f32 to vector<8x128xf32>
    %240 = vector.broadcast %cst_120 : f32 to vector<8x128xf32>
    %241 = arith.select %183, %239, %240 : vector<8x128xi1>, vector<8x128xf32>
    %242 = arith.addf %238, %241 : vector<8x128xf32>
    %cst_121 = arith.constant 0.000000e+00 : f32
    %243 = vector.broadcast %15 : f32 to vector<8x128xf32>
    %244 = vector.broadcast %cst_121 : f32 to vector<8x128xf32>
    %245 = arith.select %184, %243, %244 : vector<8x128xi1>, vector<8x128xf32>
    %246 = arith.addf %242, %245 : vector<8x128xf32>
    %247 = arith.subf %19, %7 : f32
    %248 = vector.broadcast %247 : f32 to vector<8x128xf32>
    %249 = arith.cmpf oge, %246, %248 : vector<8x128xf32>
    %cst_122 = arith.constant 0xFF800000 : f32
    %250 = vector.broadcast %cst_122 : f32 to vector<8x128xf32>
    %251 = arith.select %249, %110, %250 : vector<8x128xi1>, vector<8x128xf32>
    %252 = arith.maximumf %181, %251 : vector<8x128xf32>
    %253 = arith.cmpf oge, %107, %112 : vector<8x128xf32>
    %254 = arith.cmpf oge, %110, %112 : vector<8x128xf32>
    %255 = arith.cmpf oge, %114, %112 : vector<8x128xf32>
    %cst_123 = arith.constant 0.000000e+00 : f32
    %256 = vector.broadcast %0 : f32 to vector<8x128xf32>
    %257 = vector.broadcast %cst_123 : f32 to vector<8x128xf32>
    %258 = arith.select %253, %256, %257 : vector<8x128xi1>, vector<8x128xf32>
    %cst_124 = arith.constant 0.000000e+00 : f32
    %259 = vector.broadcast %1 : f32 to vector<8x128xf32>
    %260 = vector.broadcast %cst_124 : f32 to vector<8x128xf32>
    %261 = arith.select %254, %259, %260 : vector<8x128xi1>, vector<8x128xf32>
    %262 = arith.addf %258, %261 : vector<8x128xf32>
    %cst_125 = arith.constant 0.000000e+00 : f32
    %263 = vector.broadcast %9 : f32 to vector<8x128xf32>
    %264 = vector.broadcast %cst_125 : f32 to vector<8x128xf32>
    %265 = arith.select %255, %263, %264 : vector<8x128xi1>, vector<8x128xf32>
    %266 = arith.addf %262, %265 : vector<8x128xf32>
    %267 = arith.subf %16, %8 : f32
    %268 = vector.broadcast %267 : f32 to vector<8x128xf32>
    %269 = arith.cmpf oge, %266, %268 : vector<8x128xf32>
    %cst_126 = arith.constant 0xFF800000 : f32
    %270 = vector.broadcast %cst_126 : f32 to vector<8x128xf32>
    %271 = arith.select %269, %112, %270 : vector<8x128xi1>, vector<8x128xf32>
    %272 = arith.maximumf %201, %271 : vector<8x128xf32>
    %cst_127 = arith.constant 0.000000e+00 : f32
    %273 = vector.broadcast %2 : f32 to vector<8x128xf32>
    %274 = vector.broadcast %cst_127 : f32 to vector<8x128xf32>
    %275 = arith.select %253, %273, %274 : vector<8x128xi1>, vector<8x128xf32>
    %cst_128 = arith.constant 0.000000e+00 : f32
    %276 = vector.broadcast %3 : f32 to vector<8x128xf32>
    %277 = vector.broadcast %cst_128 : f32 to vector<8x128xf32>
    %278 = arith.select %254, %276, %277 : vector<8x128xi1>, vector<8x128xf32>
    %279 = arith.addf %275, %278 : vector<8x128xf32>
    %cst_129 = arith.constant 0.000000e+00 : f32
    %280 = vector.broadcast %11 : f32 to vector<8x128xf32>
    %281 = vector.broadcast %cst_129 : f32 to vector<8x128xf32>
    %282 = arith.select %255, %280, %281 : vector<8x128xi1>, vector<8x128xf32>
    %283 = arith.addf %279, %282 : vector<8x128xf32>
    %284 = arith.subf %17, %10 : f32
    %285 = vector.broadcast %284 : f32 to vector<8x128xf32>
    %286 = arith.cmpf oge, %283, %285 : vector<8x128xf32>
    %cst_130 = arith.constant 0xFF800000 : f32
    %287 = vector.broadcast %cst_130 : f32 to vector<8x128xf32>
    %288 = arith.select %286, %112, %287 : vector<8x128xi1>, vector<8x128xf32>
    %289 = arith.maximumf %218, %288 : vector<8x128xf32>
    %cst_131 = arith.constant 0.000000e+00 : f32
    %290 = vector.broadcast %4 : f32 to vector<8x128xf32>
    %291 = vector.broadcast %cst_131 : f32 to vector<8x128xf32>
    %292 = arith.select %253, %290, %291 : vector<8x128xi1>, vector<8x128xf32>
    %cst_132 = arith.constant 0.000000e+00 : f32
    %293 = vector.broadcast %5 : f32 to vector<8x128xf32>
    %294 = vector.broadcast %cst_132 : f32 to vector<8x128xf32>
    %295 = arith.select %254, %293, %294 : vector<8x128xi1>, vector<8x128xf32>
    %296 = arith.addf %292, %295 : vector<8x128xf32>
    %cst_133 = arith.constant 0.000000e+00 : f32
    %297 = vector.broadcast %13 : f32 to vector<8x128xf32>
    %298 = vector.broadcast %cst_133 : f32 to vector<8x128xf32>
    %299 = arith.select %255, %297, %298 : vector<8x128xi1>, vector<8x128xf32>
    %300 = arith.addf %296, %299 : vector<8x128xf32>
    %301 = arith.subf %18, %12 : f32
    %302 = vector.broadcast %301 : f32 to vector<8x128xf32>
    %303 = arith.cmpf oge, %300, %302 : vector<8x128xf32>
    %cst_134 = arith.constant 0xFF800000 : f32
    %304 = vector.broadcast %cst_134 : f32 to vector<8x128xf32>
    %305 = arith.select %303, %112, %304 : vector<8x128xi1>, vector<8x128xf32>
    %306 = arith.maximumf %235, %305 : vector<8x128xf32>
    %cst_135 = arith.constant 0.000000e+00 : f32
    %307 = vector.broadcast %6 : f32 to vector<8x128xf32>
    %308 = vector.broadcast %cst_135 : f32 to vector<8x128xf32>
    %309 = arith.select %253, %307, %308 : vector<8x128xi1>, vector<8x128xf32>
    %cst_136 = arith.constant 0.000000e+00 : f32
    %310 = vector.broadcast %7 : f32 to vector<8x128xf32>
    %311 = vector.broadcast %cst_136 : f32 to vector<8x128xf32>
    %312 = arith.select %254, %310, %311 : vector<8x128xi1>, vector<8x128xf32>
    %313 = arith.addf %309, %312 : vector<8x128xf32>
    %cst_137 = arith.constant 0.000000e+00 : f32
    %314 = vector.broadcast %15 : f32 to vector<8x128xf32>
    %315 = vector.broadcast %cst_137 : f32 to vector<8x128xf32>
    %316 = arith.select %255, %314, %315 : vector<8x128xi1>, vector<8x128xf32>
    %317 = arith.addf %313, %316 : vector<8x128xf32>
    %318 = arith.subf %19, %14 : f32
    %319 = vector.broadcast %318 : f32 to vector<8x128xf32>
    %320 = arith.cmpf oge, %317, %319 : vector<8x128xf32>
    %cst_138 = arith.constant 0xFF800000 : f32
    %321 = vector.broadcast %cst_138 : f32 to vector<8x128xf32>
    %322 = arith.select %320, %112, %321 : vector<8x128xi1>, vector<8x128xf32>
    %323 = arith.maximumf %252, %322 : vector<8x128xf32>
    %324 = arith.cmpf oge, %107, %114 : vector<8x128xf32>
    %325 = arith.cmpf oge, %110, %114 : vector<8x128xf32>
    %326 = arith.cmpf oge, %112, %114 : vector<8x128xf32>
    %cst_139 = arith.constant 0.000000e+00 : f32
    %327 = vector.broadcast %0 : f32 to vector<8x128xf32>
    %328 = vector.broadcast %cst_139 : f32 to vector<8x128xf32>
    %329 = arith.select %324, %327, %328 : vector<8x128xi1>, vector<8x128xf32>
    %cst_140 = arith.constant 0.000000e+00 : f32
    %330 = vector.broadcast %8 : f32 to vector<8x128xf32>
    %331 = vector.broadcast %cst_140 : f32 to vector<8x128xf32>
    %332 = arith.select %326, %330, %331 : vector<8x128xi1>, vector<8x128xf32>
    %333 = arith.addf %329, %332 : vector<8x128xf32>
    %cst_141 = arith.constant 0.000000e+00 : f32
    %334 = vector.broadcast %1 : f32 to vector<8x128xf32>
    %335 = vector.broadcast %cst_141 : f32 to vector<8x128xf32>
    %336 = arith.select %325, %334, %335 : vector<8x128xi1>, vector<8x128xf32>
    %337 = arith.addf %333, %336 : vector<8x128xf32>
    %338 = arith.subf %16, %9 : f32
    %339 = vector.broadcast %338 : f32 to vector<8x128xf32>
    %340 = arith.cmpf oge, %337, %339 : vector<8x128xf32>
    %cst_142 = arith.constant 0xFF800000 : f32
    %341 = vector.broadcast %cst_142 : f32 to vector<8x128xf32>
    %342 = arith.select %340, %114, %341 : vector<8x128xi1>, vector<8x128xf32>
    %343 = arith.maximumf %272, %342 : vector<8x128xf32>
    %cst_143 = arith.constant 0.000000e+00 : f32
    %344 = vector.broadcast %2 : f32 to vector<8x128xf32>
    %345 = vector.broadcast %cst_143 : f32 to vector<8x128xf32>
    %346 = arith.select %324, %344, %345 : vector<8x128xi1>, vector<8x128xf32>
    %cst_144 = arith.constant 0.000000e+00 : f32
    %347 = vector.broadcast %10 : f32 to vector<8x128xf32>
    %348 = vector.broadcast %cst_144 : f32 to vector<8x128xf32>
    %349 = arith.select %326, %347, %348 : vector<8x128xi1>, vector<8x128xf32>
    %350 = arith.addf %346, %349 : vector<8x128xf32>
    %cst_145 = arith.constant 0.000000e+00 : f32
    %351 = vector.broadcast %3 : f32 to vector<8x128xf32>
    %352 = vector.broadcast %cst_145 : f32 to vector<8x128xf32>
    %353 = arith.select %325, %351, %352 : vector<8x128xi1>, vector<8x128xf32>
    %354 = arith.addf %350, %353 : vector<8x128xf32>
    %355 = arith.subf %17, %11 : f32
    %356 = vector.broadcast %355 : f32 to vector<8x128xf32>
    %357 = arith.cmpf oge, %354, %356 : vector<8x128xf32>
    %cst_146 = arith.constant 0xFF800000 : f32
    %358 = vector.broadcast %cst_146 : f32 to vector<8x128xf32>
    %359 = arith.select %357, %114, %358 : vector<8x128xi1>, vector<8x128xf32>
    %360 = arith.maximumf %289, %359 : vector<8x128xf32>
    %cst_147 = arith.constant 0.000000e+00 : f32
    %361 = vector.broadcast %4 : f32 to vector<8x128xf32>
    %362 = vector.broadcast %cst_147 : f32 to vector<8x128xf32>
    %363 = arith.select %324, %361, %362 : vector<8x128xi1>, vector<8x128xf32>
    %cst_148 = arith.constant 0.000000e+00 : f32
    %364 = vector.broadcast %12 : f32 to vector<8x128xf32>
    %365 = vector.broadcast %cst_148 : f32 to vector<8x128xf32>
    %366 = arith.select %326, %364, %365 : vector<8x128xi1>, vector<8x128xf32>
    %367 = arith.addf %363, %366 : vector<8x128xf32>
    %cst_149 = arith.constant 0.000000e+00 : f32
    %368 = vector.broadcast %5 : f32 to vector<8x128xf32>
    %369 = vector.broadcast %cst_149 : f32 to vector<8x128xf32>
    %370 = arith.select %325, %368, %369 : vector<8x128xi1>, vector<8x128xf32>
    %371 = arith.addf %367, %370 : vector<8x128xf32>
    %372 = arith.subf %18, %13 : f32
    %373 = vector.broadcast %372 : f32 to vector<8x128xf32>
    %374 = arith.cmpf oge, %371, %373 : vector<8x128xf32>
    %cst_150 = arith.constant 0xFF800000 : f32
    %375 = vector.broadcast %cst_150 : f32 to vector<8x128xf32>
    %376 = arith.select %374, %114, %375 : vector<8x128xi1>, vector<8x128xf32>
    %377 = arith.maximumf %306, %376 : vector<8x128xf32>
    %cst_151 = arith.constant 0.000000e+00 : f32
    %378 = vector.broadcast %6 : f32 to vector<8x128xf32>
    %379 = vector.broadcast %cst_151 : f32 to vector<8x128xf32>
    %380 = arith.select %324, %378, %379 : vector<8x128xi1>, vector<8x128xf32>
    %cst_152 = arith.constant 0.000000e+00 : f32
    %381 = vector.broadcast %14 : f32 to vector<8x128xf32>
    %382 = vector.broadcast %cst_152 : f32 to vector<8x128xf32>
    %383 = arith.select %326, %381, %382 : vector<8x128xi1>, vector<8x128xf32>
    %384 = arith.addf %380, %383 : vector<8x128xf32>
    %cst_153 = arith.constant 0.000000e+00 : f32
    %385 = vector.broadcast %7 : f32 to vector<8x128xf32>
    %386 = vector.broadcast %cst_153 : f32 to vector<8x128xf32>
    %387 = arith.select %325, %385, %386 : vector<8x128xi1>, vector<8x128xf32>
    %388 = arith.addf %384, %387 : vector<8x128xf32>
    %389 = arith.subf %19, %15 : f32
    %390 = vector.broadcast %389 : f32 to vector<8x128xf32>
    %391 = arith.cmpf oge, %388, %390 : vector<8x128xf32>
    %cst_154 = arith.constant 0xFF800000 : f32
    %392 = vector.broadcast %cst_154 : f32 to vector<8x128xf32>
    %393 = arith.select %391, %114, %392 : vector<8x128xi1>, vector<8x128xf32>
    %394 = arith.maximumf %323, %393 : vector<8x128xf32>
    %cst_155 = arith.constant 0.000000e+00 : f32
    %395 = vector.broadcast %cst_155 : f32 to vector<8x128xf32>
    %396 = arith.subf %395, %343 : vector<8x128xf32>
    %cst_156 = arith.constant 0.000000e+00 : f32
    %397 = vector.broadcast %cst_156 : f32 to vector<8x128xf32>
    %398 = arith.subf %397, %360 : vector<8x128xf32>
    %cst_157 = arith.constant 0.000000e+00 : f32
    %399 = vector.broadcast %cst_157 : f32 to vector<8x128xf32>
    %400 = arith.subf %399, %377 : vector<8x128xf32>
    %cst_158 = arith.constant 0.000000e+00 : f32
    %401 = vector.broadcast %cst_158 : f32 to vector<8x128xf32>
    %402 = arith.subf %401, %394 : vector<8x128xf32>
    %403 = arith.cmpf oge, %360, %343 : vector<8x128xf32>
    %404 = arith.cmpf oge, %377, %343 : vector<8x128xf32>
    %405 = arith.cmpf oge, %394, %343 : vector<8x128xf32>
    %406 = arith.cmpf oge, %396, %343 : vector<8x128xf32>
    %407 = arith.cmpf oge, %398, %343 : vector<8x128xf32>
    %408 = arith.cmpf oge, %400, %343 : vector<8x128xf32>
    %409 = arith.cmpf oge, %402, %343 : vector<8x128xf32>
    %cst_159 = arith.constant 0.000000e+00 : f32
    %410 = vector.broadcast %36 : f32 to vector<8x128xf32>
    %411 = vector.broadcast %cst_159 : f32 to vector<8x128xf32>
    %412 = arith.select %406, %410, %411 : vector<8x128xi1>, vector<8x128xf32>
    %cst_160 = arith.constant 0.000000e+00 : f32
    %413 = vector.broadcast %21 : f32 to vector<8x128xf32>
    %414 = vector.broadcast %cst_160 : f32 to vector<8x128xf32>
    %415 = arith.select %403, %413, %414 : vector<8x128xi1>, vector<8x128xf32>
    %416 = arith.addf %412, %415 : vector<8x128xf32>
    %cst_161 = arith.constant 0.000000e+00 : f32
    %417 = vector.broadcast %37 : f32 to vector<8x128xf32>
    %418 = vector.broadcast %cst_161 : f32 to vector<8x128xf32>
    %419 = arith.select %407, %417, %418 : vector<8x128xi1>, vector<8x128xf32>
    %420 = arith.addf %416, %419 : vector<8x128xf32>
    %cst_162 = arith.constant 0.000000e+00 : f32
    %421 = vector.broadcast %22 : f32 to vector<8x128xf32>
    %422 = vector.broadcast %cst_162 : f32 to vector<8x128xf32>
    %423 = arith.select %404, %421, %422 : vector<8x128xi1>, vector<8x128xf32>
    %424 = arith.addf %420, %423 : vector<8x128xf32>
    %cst_163 = arith.constant 0.000000e+00 : f32
    %425 = vector.broadcast %38 : f32 to vector<8x128xf32>
    %426 = vector.broadcast %cst_163 : f32 to vector<8x128xf32>
    %427 = arith.select %408, %425, %426 : vector<8x128xi1>, vector<8x128xf32>
    %428 = arith.addf %424, %427 : vector<8x128xf32>
    %cst_164 = arith.constant 0.000000e+00 : f32
    %429 = vector.broadcast %23 : f32 to vector<8x128xf32>
    %430 = vector.broadcast %cst_164 : f32 to vector<8x128xf32>
    %431 = arith.select %405, %429, %430 : vector<8x128xi1>, vector<8x128xf32>
    %432 = arith.addf %428, %431 : vector<8x128xf32>
    %cst_165 = arith.constant 0.000000e+00 : f32
    %433 = vector.broadcast %39 : f32 to vector<8x128xf32>
    %434 = vector.broadcast %cst_165 : f32 to vector<8x128xf32>
    %435 = arith.select %409, %433, %434 : vector<8x128xi1>, vector<8x128xf32>
    %436 = arith.addf %432, %435 : vector<8x128xf32>
    %437 = arith.subf %52, %20 : f32
    %438 = vector.broadcast %437 : f32 to vector<8x128xf32>
    %439 = arith.cmpf oge, %436, %438 : vector<8x128xf32>
    %cst_166 = arith.constant 0xFF800000 : f32
    %440 = vector.broadcast %cst_166 : f32 to vector<8x128xf32>
    %441 = arith.select %439, %343, %440 : vector<8x128xi1>, vector<8x128xf32>
    %cst_167 = arith.constant 0.000000e+00 : f32
    %442 = vector.broadcast %40 : f32 to vector<8x128xf32>
    %443 = vector.broadcast %cst_167 : f32 to vector<8x128xf32>
    %444 = arith.select %406, %442, %443 : vector<8x128xi1>, vector<8x128xf32>
    %cst_168 = arith.constant 0.000000e+00 : f32
    %445 = vector.broadcast %25 : f32 to vector<8x128xf32>
    %446 = vector.broadcast %cst_168 : f32 to vector<8x128xf32>
    %447 = arith.select %403, %445, %446 : vector<8x128xi1>, vector<8x128xf32>
    %448 = arith.addf %444, %447 : vector<8x128xf32>
    %cst_169 = arith.constant 0.000000e+00 : f32
    %449 = vector.broadcast %41 : f32 to vector<8x128xf32>
    %450 = vector.broadcast %cst_169 : f32 to vector<8x128xf32>
    %451 = arith.select %407, %449, %450 : vector<8x128xi1>, vector<8x128xf32>
    %452 = arith.addf %448, %451 : vector<8x128xf32>
    %cst_170 = arith.constant 0.000000e+00 : f32
    %453 = vector.broadcast %26 : f32 to vector<8x128xf32>
    %454 = vector.broadcast %cst_170 : f32 to vector<8x128xf32>
    %455 = arith.select %404, %453, %454 : vector<8x128xi1>, vector<8x128xf32>
    %456 = arith.addf %452, %455 : vector<8x128xf32>
    %cst_171 = arith.constant 0.000000e+00 : f32
    %457 = vector.broadcast %42 : f32 to vector<8x128xf32>
    %458 = vector.broadcast %cst_171 : f32 to vector<8x128xf32>
    %459 = arith.select %408, %457, %458 : vector<8x128xi1>, vector<8x128xf32>
    %460 = arith.addf %456, %459 : vector<8x128xf32>
    %cst_172 = arith.constant 0.000000e+00 : f32
    %461 = vector.broadcast %27 : f32 to vector<8x128xf32>
    %462 = vector.broadcast %cst_172 : f32 to vector<8x128xf32>
    %463 = arith.select %405, %461, %462 : vector<8x128xi1>, vector<8x128xf32>
    %464 = arith.addf %460, %463 : vector<8x128xf32>
    %cst_173 = arith.constant 0.000000e+00 : f32
    %465 = vector.broadcast %43 : f32 to vector<8x128xf32>
    %466 = vector.broadcast %cst_173 : f32 to vector<8x128xf32>
    %467 = arith.select %409, %465, %466 : vector<8x128xi1>, vector<8x128xf32>
    %468 = arith.addf %464, %467 : vector<8x128xf32>
    %469 = arith.subf %53, %24 : f32
    %470 = vector.broadcast %469 : f32 to vector<8x128xf32>
    %471 = arith.cmpf oge, %468, %470 : vector<8x128xf32>
    %cst_174 = arith.constant 0xFF800000 : f32
    %472 = vector.broadcast %cst_174 : f32 to vector<8x128xf32>
    %473 = arith.select %471, %343, %472 : vector<8x128xi1>, vector<8x128xf32>
    %cst_175 = arith.constant 0.000000e+00 : f32
    %474 = vector.broadcast %44 : f32 to vector<8x128xf32>
    %475 = vector.broadcast %cst_175 : f32 to vector<8x128xf32>
    %476 = arith.select %406, %474, %475 : vector<8x128xi1>, vector<8x128xf32>
    %cst_176 = arith.constant 0.000000e+00 : f32
    %477 = vector.broadcast %29 : f32 to vector<8x128xf32>
    %478 = vector.broadcast %cst_176 : f32 to vector<8x128xf32>
    %479 = arith.select %403, %477, %478 : vector<8x128xi1>, vector<8x128xf32>
    %480 = arith.addf %476, %479 : vector<8x128xf32>
    %cst_177 = arith.constant 0.000000e+00 : f32
    %481 = vector.broadcast %45 : f32 to vector<8x128xf32>
    %482 = vector.broadcast %cst_177 : f32 to vector<8x128xf32>
    %483 = arith.select %407, %481, %482 : vector<8x128xi1>, vector<8x128xf32>
    %484 = arith.addf %480, %483 : vector<8x128xf32>
    %cst_178 = arith.constant 0.000000e+00 : f32
    %485 = vector.broadcast %30 : f32 to vector<8x128xf32>
    %486 = vector.broadcast %cst_178 : f32 to vector<8x128xf32>
    %487 = arith.select %404, %485, %486 : vector<8x128xi1>, vector<8x128xf32>
    %488 = arith.addf %484, %487 : vector<8x128xf32>
    %cst_179 = arith.constant 0.000000e+00 : f32
    %489 = vector.broadcast %46 : f32 to vector<8x128xf32>
    %490 = vector.broadcast %cst_179 : f32 to vector<8x128xf32>
    %491 = arith.select %408, %489, %490 : vector<8x128xi1>, vector<8x128xf32>
    %492 = arith.addf %488, %491 : vector<8x128xf32>
    %cst_180 = arith.constant 0.000000e+00 : f32
    %493 = vector.broadcast %31 : f32 to vector<8x128xf32>
    %494 = vector.broadcast %cst_180 : f32 to vector<8x128xf32>
    %495 = arith.select %405, %493, %494 : vector<8x128xi1>, vector<8x128xf32>
    %496 = arith.addf %492, %495 : vector<8x128xf32>
    %cst_181 = arith.constant 0.000000e+00 : f32
    %497 = vector.broadcast %47 : f32 to vector<8x128xf32>
    %498 = vector.broadcast %cst_181 : f32 to vector<8x128xf32>
    %499 = arith.select %409, %497, %498 : vector<8x128xi1>, vector<8x128xf32>
    %500 = arith.addf %496, %499 : vector<8x128xf32>
    %501 = arith.subf %54, %28 : f32
    %502 = vector.broadcast %501 : f32 to vector<8x128xf32>
    %503 = arith.cmpf oge, %500, %502 : vector<8x128xf32>
    %cst_182 = arith.constant 0xFF800000 : f32
    %504 = vector.broadcast %cst_182 : f32 to vector<8x128xf32>
    %505 = arith.select %503, %343, %504 : vector<8x128xi1>, vector<8x128xf32>
    %cst_183 = arith.constant 0.000000e+00 : f32
    %506 = vector.broadcast %48 : f32 to vector<8x128xf32>
    %507 = vector.broadcast %cst_183 : f32 to vector<8x128xf32>
    %508 = arith.select %406, %506, %507 : vector<8x128xi1>, vector<8x128xf32>
    %cst_184 = arith.constant 0.000000e+00 : f32
    %509 = vector.broadcast %33 : f32 to vector<8x128xf32>
    %510 = vector.broadcast %cst_184 : f32 to vector<8x128xf32>
    %511 = arith.select %403, %509, %510 : vector<8x128xi1>, vector<8x128xf32>
    %512 = arith.addf %508, %511 : vector<8x128xf32>
    %cst_185 = arith.constant 0.000000e+00 : f32
    %513 = vector.broadcast %49 : f32 to vector<8x128xf32>
    %514 = vector.broadcast %cst_185 : f32 to vector<8x128xf32>
    %515 = arith.select %407, %513, %514 : vector<8x128xi1>, vector<8x128xf32>
    %516 = arith.addf %512, %515 : vector<8x128xf32>
    %cst_186 = arith.constant 0.000000e+00 : f32
    %517 = vector.broadcast %34 : f32 to vector<8x128xf32>
    %518 = vector.broadcast %cst_186 : f32 to vector<8x128xf32>
    %519 = arith.select %404, %517, %518 : vector<8x128xi1>, vector<8x128xf32>
    %520 = arith.addf %516, %519 : vector<8x128xf32>
    %cst_187 = arith.constant 0.000000e+00 : f32
    %521 = vector.broadcast %50 : f32 to vector<8x128xf32>
    %522 = vector.broadcast %cst_187 : f32 to vector<8x128xf32>
    %523 = arith.select %408, %521, %522 : vector<8x128xi1>, vector<8x128xf32>
    %524 = arith.addf %520, %523 : vector<8x128xf32>
    %cst_188 = arith.constant 0.000000e+00 : f32
    %525 = vector.broadcast %35 : f32 to vector<8x128xf32>
    %526 = vector.broadcast %cst_188 : f32 to vector<8x128xf32>
    %527 = arith.select %405, %525, %526 : vector<8x128xi1>, vector<8x128xf32>
    %528 = arith.addf %524, %527 : vector<8x128xf32>
    %cst_189 = arith.constant 0.000000e+00 : f32
    %529 = vector.broadcast %51 : f32 to vector<8x128xf32>
    %530 = vector.broadcast %cst_189 : f32 to vector<8x128xf32>
    %531 = arith.select %409, %529, %530 : vector<8x128xi1>, vector<8x128xf32>
    %532 = arith.addf %528, %531 : vector<8x128xf32>
    %533 = arith.subf %55, %32 : f32
    %534 = vector.broadcast %533 : f32 to vector<8x128xf32>
    %535 = arith.cmpf oge, %532, %534 : vector<8x128xf32>
    %cst_190 = arith.constant 0xFF800000 : f32
    %536 = vector.broadcast %cst_190 : f32 to vector<8x128xf32>
    %537 = arith.select %535, %343, %536 : vector<8x128xi1>, vector<8x128xf32>
    %538 = arith.cmpf oge, %343, %360 : vector<8x128xf32>
    %539 = arith.cmpf oge, %377, %360 : vector<8x128xf32>
    %540 = arith.cmpf oge, %394, %360 : vector<8x128xf32>
    %541 = arith.cmpf oge, %396, %360 : vector<8x128xf32>
    %542 = arith.cmpf oge, %398, %360 : vector<8x128xf32>
    %543 = arith.cmpf oge, %400, %360 : vector<8x128xf32>
    %544 = arith.cmpf oge, %402, %360 : vector<8x128xf32>
    %cst_191 = arith.constant 0.000000e+00 : f32
    %545 = vector.broadcast %20 : f32 to vector<8x128xf32>
    %546 = vector.broadcast %cst_191 : f32 to vector<8x128xf32>
    %547 = arith.select %538, %545, %546 : vector<8x128xi1>, vector<8x128xf32>
    %cst_192 = arith.constant 0.000000e+00 : f32
    %548 = vector.broadcast %36 : f32 to vector<8x128xf32>
    %549 = vector.broadcast %cst_192 : f32 to vector<8x128xf32>
    %550 = arith.select %541, %548, %549 : vector<8x128xi1>, vector<8x128xf32>
    %551 = arith.addf %547, %550 : vector<8x128xf32>
    %cst_193 = arith.constant 0.000000e+00 : f32
    %552 = vector.broadcast %37 : f32 to vector<8x128xf32>
    %553 = vector.broadcast %cst_193 : f32 to vector<8x128xf32>
    %554 = arith.select %542, %552, %553 : vector<8x128xi1>, vector<8x128xf32>
    %555 = arith.addf %551, %554 : vector<8x128xf32>
    %cst_194 = arith.constant 0.000000e+00 : f32
    %556 = vector.broadcast %22 : f32 to vector<8x128xf32>
    %557 = vector.broadcast %cst_194 : f32 to vector<8x128xf32>
    %558 = arith.select %539, %556, %557 : vector<8x128xi1>, vector<8x128xf32>
    %559 = arith.addf %555, %558 : vector<8x128xf32>
    %cst_195 = arith.constant 0.000000e+00 : f32
    %560 = vector.broadcast %38 : f32 to vector<8x128xf32>
    %561 = vector.broadcast %cst_195 : f32 to vector<8x128xf32>
    %562 = arith.select %543, %560, %561 : vector<8x128xi1>, vector<8x128xf32>
    %563 = arith.addf %559, %562 : vector<8x128xf32>
    %cst_196 = arith.constant 0.000000e+00 : f32
    %564 = vector.broadcast %23 : f32 to vector<8x128xf32>
    %565 = vector.broadcast %cst_196 : f32 to vector<8x128xf32>
    %566 = arith.select %540, %564, %565 : vector<8x128xi1>, vector<8x128xf32>
    %567 = arith.addf %563, %566 : vector<8x128xf32>
    %cst_197 = arith.constant 0.000000e+00 : f32
    %568 = vector.broadcast %39 : f32 to vector<8x128xf32>
    %569 = vector.broadcast %cst_197 : f32 to vector<8x128xf32>
    %570 = arith.select %544, %568, %569 : vector<8x128xi1>, vector<8x128xf32>
    %571 = arith.addf %567, %570 : vector<8x128xf32>
    %572 = arith.subf %52, %21 : f32
    %573 = vector.broadcast %572 : f32 to vector<8x128xf32>
    %574 = arith.cmpf oge, %571, %573 : vector<8x128xf32>
    %cst_198 = arith.constant 0xFF800000 : f32
    %575 = vector.broadcast %cst_198 : f32 to vector<8x128xf32>
    %576 = arith.select %574, %360, %575 : vector<8x128xi1>, vector<8x128xf32>
    %577 = arith.maximumf %441, %576 : vector<8x128xf32>
    %cst_199 = arith.constant 0.000000e+00 : f32
    %578 = vector.broadcast %24 : f32 to vector<8x128xf32>
    %579 = vector.broadcast %cst_199 : f32 to vector<8x128xf32>
    %580 = arith.select %538, %578, %579 : vector<8x128xi1>, vector<8x128xf32>
    %cst_200 = arith.constant 0.000000e+00 : f32
    %581 = vector.broadcast %40 : f32 to vector<8x128xf32>
    %582 = vector.broadcast %cst_200 : f32 to vector<8x128xf32>
    %583 = arith.select %541, %581, %582 : vector<8x128xi1>, vector<8x128xf32>
    %584 = arith.addf %580, %583 : vector<8x128xf32>
    %cst_201 = arith.constant 0.000000e+00 : f32
    %585 = vector.broadcast %41 : f32 to vector<8x128xf32>
    %586 = vector.broadcast %cst_201 : f32 to vector<8x128xf32>
    %587 = arith.select %542, %585, %586 : vector<8x128xi1>, vector<8x128xf32>
    %588 = arith.addf %584, %587 : vector<8x128xf32>
    %cst_202 = arith.constant 0.000000e+00 : f32
    %589 = vector.broadcast %26 : f32 to vector<8x128xf32>
    %590 = vector.broadcast %cst_202 : f32 to vector<8x128xf32>
    %591 = arith.select %539, %589, %590 : vector<8x128xi1>, vector<8x128xf32>
    %592 = arith.addf %588, %591 : vector<8x128xf32>
    %cst_203 = arith.constant 0.000000e+00 : f32
    %593 = vector.broadcast %42 : f32 to vector<8x128xf32>
    %594 = vector.broadcast %cst_203 : f32 to vector<8x128xf32>
    %595 = arith.select %543, %593, %594 : vector<8x128xi1>, vector<8x128xf32>
    %596 = arith.addf %592, %595 : vector<8x128xf32>
    %cst_204 = arith.constant 0.000000e+00 : f32
    %597 = vector.broadcast %27 : f32 to vector<8x128xf32>
    %598 = vector.broadcast %cst_204 : f32 to vector<8x128xf32>
    %599 = arith.select %540, %597, %598 : vector<8x128xi1>, vector<8x128xf32>
    %600 = arith.addf %596, %599 : vector<8x128xf32>
    %cst_205 = arith.constant 0.000000e+00 : f32
    %601 = vector.broadcast %43 : f32 to vector<8x128xf32>
    %602 = vector.broadcast %cst_205 : f32 to vector<8x128xf32>
    %603 = arith.select %544, %601, %602 : vector<8x128xi1>, vector<8x128xf32>
    %604 = arith.addf %600, %603 : vector<8x128xf32>
    %605 = arith.subf %53, %25 : f32
    %606 = vector.broadcast %605 : f32 to vector<8x128xf32>
    %607 = arith.cmpf oge, %604, %606 : vector<8x128xf32>
    %cst_206 = arith.constant 0xFF800000 : f32
    %608 = vector.broadcast %cst_206 : f32 to vector<8x128xf32>
    %609 = arith.select %607, %360, %608 : vector<8x128xi1>, vector<8x128xf32>
    %610 = arith.maximumf %473, %609 : vector<8x128xf32>
    %cst_207 = arith.constant 0.000000e+00 : f32
    %611 = vector.broadcast %28 : f32 to vector<8x128xf32>
    %612 = vector.broadcast %cst_207 : f32 to vector<8x128xf32>
    %613 = arith.select %538, %611, %612 : vector<8x128xi1>, vector<8x128xf32>
    %cst_208 = arith.constant 0.000000e+00 : f32
    %614 = vector.broadcast %44 : f32 to vector<8x128xf32>
    %615 = vector.broadcast %cst_208 : f32 to vector<8x128xf32>
    %616 = arith.select %541, %614, %615 : vector<8x128xi1>, vector<8x128xf32>
    %617 = arith.addf %613, %616 : vector<8x128xf32>
    %cst_209 = arith.constant 0.000000e+00 : f32
    %618 = vector.broadcast %45 : f32 to vector<8x128xf32>
    %619 = vector.broadcast %cst_209 : f32 to vector<8x128xf32>
    %620 = arith.select %542, %618, %619 : vector<8x128xi1>, vector<8x128xf32>
    %621 = arith.addf %617, %620 : vector<8x128xf32>
    %cst_210 = arith.constant 0.000000e+00 : f32
    %622 = vector.broadcast %30 : f32 to vector<8x128xf32>
    %623 = vector.broadcast %cst_210 : f32 to vector<8x128xf32>
    %624 = arith.select %539, %622, %623 : vector<8x128xi1>, vector<8x128xf32>
    %625 = arith.addf %621, %624 : vector<8x128xf32>
    %cst_211 = arith.constant 0.000000e+00 : f32
    %626 = vector.broadcast %46 : f32 to vector<8x128xf32>
    %627 = vector.broadcast %cst_211 : f32 to vector<8x128xf32>
    %628 = arith.select %543, %626, %627 : vector<8x128xi1>, vector<8x128xf32>
    %629 = arith.addf %625, %628 : vector<8x128xf32>
    %cst_212 = arith.constant 0.000000e+00 : f32
    %630 = vector.broadcast %31 : f32 to vector<8x128xf32>
    %631 = vector.broadcast %cst_212 : f32 to vector<8x128xf32>
    %632 = arith.select %540, %630, %631 : vector<8x128xi1>, vector<8x128xf32>
    %633 = arith.addf %629, %632 : vector<8x128xf32>
    %cst_213 = arith.constant 0.000000e+00 : f32
    %634 = vector.broadcast %47 : f32 to vector<8x128xf32>
    %635 = vector.broadcast %cst_213 : f32 to vector<8x128xf32>
    %636 = arith.select %544, %634, %635 : vector<8x128xi1>, vector<8x128xf32>
    %637 = arith.addf %633, %636 : vector<8x128xf32>
    %638 = arith.subf %54, %29 : f32
    %639 = vector.broadcast %638 : f32 to vector<8x128xf32>
    %640 = arith.cmpf oge, %637, %639 : vector<8x128xf32>
    %cst_214 = arith.constant 0xFF800000 : f32
    %641 = vector.broadcast %cst_214 : f32 to vector<8x128xf32>
    %642 = arith.select %640, %360, %641 : vector<8x128xi1>, vector<8x128xf32>
    %643 = arith.maximumf %505, %642 : vector<8x128xf32>
    %cst_215 = arith.constant 0.000000e+00 : f32
    %644 = vector.broadcast %32 : f32 to vector<8x128xf32>
    %645 = vector.broadcast %cst_215 : f32 to vector<8x128xf32>
    %646 = arith.select %538, %644, %645 : vector<8x128xi1>, vector<8x128xf32>
    %cst_216 = arith.constant 0.000000e+00 : f32
    %647 = vector.broadcast %48 : f32 to vector<8x128xf32>
    %648 = vector.broadcast %cst_216 : f32 to vector<8x128xf32>
    %649 = arith.select %541, %647, %648 : vector<8x128xi1>, vector<8x128xf32>
    %650 = arith.addf %646, %649 : vector<8x128xf32>
    %cst_217 = arith.constant 0.000000e+00 : f32
    %651 = vector.broadcast %49 : f32 to vector<8x128xf32>
    %652 = vector.broadcast %cst_217 : f32 to vector<8x128xf32>
    %653 = arith.select %542, %651, %652 : vector<8x128xi1>, vector<8x128xf32>
    %654 = arith.addf %650, %653 : vector<8x128xf32>
    %cst_218 = arith.constant 0.000000e+00 : f32
    %655 = vector.broadcast %34 : f32 to vector<8x128xf32>
    %656 = vector.broadcast %cst_218 : f32 to vector<8x128xf32>
    %657 = arith.select %539, %655, %656 : vector<8x128xi1>, vector<8x128xf32>
    %658 = arith.addf %654, %657 : vector<8x128xf32>
    %cst_219 = arith.constant 0.000000e+00 : f32
    %659 = vector.broadcast %50 : f32 to vector<8x128xf32>
    %660 = vector.broadcast %cst_219 : f32 to vector<8x128xf32>
    %661 = arith.select %543, %659, %660 : vector<8x128xi1>, vector<8x128xf32>
    %662 = arith.addf %658, %661 : vector<8x128xf32>
    %cst_220 = arith.constant 0.000000e+00 : f32
    %663 = vector.broadcast %35 : f32 to vector<8x128xf32>
    %664 = vector.broadcast %cst_220 : f32 to vector<8x128xf32>
    %665 = arith.select %540, %663, %664 : vector<8x128xi1>, vector<8x128xf32>
    %666 = arith.addf %662, %665 : vector<8x128xf32>
    %cst_221 = arith.constant 0.000000e+00 : f32
    %667 = vector.broadcast %51 : f32 to vector<8x128xf32>
    %668 = vector.broadcast %cst_221 : f32 to vector<8x128xf32>
    %669 = arith.select %544, %667, %668 : vector<8x128xi1>, vector<8x128xf32>
    %670 = arith.addf %666, %669 : vector<8x128xf32>
    %671 = arith.subf %55, %33 : f32
    %672 = vector.broadcast %671 : f32 to vector<8x128xf32>
    %673 = arith.cmpf oge, %670, %672 : vector<8x128xf32>
    %cst_222 = arith.constant 0xFF800000 : f32
    %674 = vector.broadcast %cst_222 : f32 to vector<8x128xf32>
    %675 = arith.select %673, %360, %674 : vector<8x128xi1>, vector<8x128xf32>
    %676 = arith.maximumf %537, %675 : vector<8x128xf32>
    %677 = arith.cmpf oge, %343, %377 : vector<8x128xf32>
    %678 = arith.cmpf oge, %360, %377 : vector<8x128xf32>
    %679 = arith.cmpf oge, %394, %377 : vector<8x128xf32>
    %680 = arith.cmpf oge, %396, %377 : vector<8x128xf32>
    %681 = arith.cmpf oge, %398, %377 : vector<8x128xf32>
    %682 = arith.cmpf oge, %400, %377 : vector<8x128xf32>
    %683 = arith.cmpf oge, %402, %377 : vector<8x128xf32>
    %cst_223 = arith.constant 0.000000e+00 : f32
    %684 = vector.broadcast %20 : f32 to vector<8x128xf32>
    %685 = vector.broadcast %cst_223 : f32 to vector<8x128xf32>
    %686 = arith.select %677, %684, %685 : vector<8x128xi1>, vector<8x128xf32>
    %cst_224 = arith.constant 0.000000e+00 : f32
    %687 = vector.broadcast %36 : f32 to vector<8x128xf32>
    %688 = vector.broadcast %cst_224 : f32 to vector<8x128xf32>
    %689 = arith.select %680, %687, %688 : vector<8x128xi1>, vector<8x128xf32>
    %690 = arith.addf %686, %689 : vector<8x128xf32>
    %cst_225 = arith.constant 0.000000e+00 : f32
    %691 = vector.broadcast %21 : f32 to vector<8x128xf32>
    %692 = vector.broadcast %cst_225 : f32 to vector<8x128xf32>
    %693 = arith.select %678, %691, %692 : vector<8x128xi1>, vector<8x128xf32>
    %694 = arith.addf %690, %693 : vector<8x128xf32>
    %cst_226 = arith.constant 0.000000e+00 : f32
    %695 = vector.broadcast %37 : f32 to vector<8x128xf32>
    %696 = vector.broadcast %cst_226 : f32 to vector<8x128xf32>
    %697 = arith.select %681, %695, %696 : vector<8x128xi1>, vector<8x128xf32>
    %698 = arith.addf %694, %697 : vector<8x128xf32>
    %cst_227 = arith.constant 0.000000e+00 : f32
    %699 = vector.broadcast %38 : f32 to vector<8x128xf32>
    %700 = vector.broadcast %cst_227 : f32 to vector<8x128xf32>
    %701 = arith.select %682, %699, %700 : vector<8x128xi1>, vector<8x128xf32>
    %702 = arith.addf %698, %701 : vector<8x128xf32>
    %cst_228 = arith.constant 0.000000e+00 : f32
    %703 = vector.broadcast %23 : f32 to vector<8x128xf32>
    %704 = vector.broadcast %cst_228 : f32 to vector<8x128xf32>
    %705 = arith.select %679, %703, %704 : vector<8x128xi1>, vector<8x128xf32>
    %706 = arith.addf %702, %705 : vector<8x128xf32>
    %cst_229 = arith.constant 0.000000e+00 : f32
    %707 = vector.broadcast %39 : f32 to vector<8x128xf32>
    %708 = vector.broadcast %cst_229 : f32 to vector<8x128xf32>
    %709 = arith.select %683, %707, %708 : vector<8x128xi1>, vector<8x128xf32>
    %710 = arith.addf %706, %709 : vector<8x128xf32>
    %711 = arith.subf %52, %22 : f32
    %712 = vector.broadcast %711 : f32 to vector<8x128xf32>
    %713 = arith.cmpf oge, %710, %712 : vector<8x128xf32>
    %cst_230 = arith.constant 0xFF800000 : f32
    %714 = vector.broadcast %cst_230 : f32 to vector<8x128xf32>
    %715 = arith.select %713, %377, %714 : vector<8x128xi1>, vector<8x128xf32>
    %716 = arith.maximumf %577, %715 : vector<8x128xf32>
    %cst_231 = arith.constant 0.000000e+00 : f32
    %717 = vector.broadcast %24 : f32 to vector<8x128xf32>
    %718 = vector.broadcast %cst_231 : f32 to vector<8x128xf32>
    %719 = arith.select %677, %717, %718 : vector<8x128xi1>, vector<8x128xf32>
    %cst_232 = arith.constant 0.000000e+00 : f32
    %720 = vector.broadcast %40 : f32 to vector<8x128xf32>
    %721 = vector.broadcast %cst_232 : f32 to vector<8x128xf32>
    %722 = arith.select %680, %720, %721 : vector<8x128xi1>, vector<8x128xf32>
    %723 = arith.addf %719, %722 : vector<8x128xf32>
    %cst_233 = arith.constant 0.000000e+00 : f32
    %724 = vector.broadcast %25 : f32 to vector<8x128xf32>
    %725 = vector.broadcast %cst_233 : f32 to vector<8x128xf32>
    %726 = arith.select %678, %724, %725 : vector<8x128xi1>, vector<8x128xf32>
    %727 = arith.addf %723, %726 : vector<8x128xf32>
    %cst_234 = arith.constant 0.000000e+00 : f32
    %728 = vector.broadcast %41 : f32 to vector<8x128xf32>
    %729 = vector.broadcast %cst_234 : f32 to vector<8x128xf32>
    %730 = arith.select %681, %728, %729 : vector<8x128xi1>, vector<8x128xf32>
    %731 = arith.addf %727, %730 : vector<8x128xf32>
    %cst_235 = arith.constant 0.000000e+00 : f32
    %732 = vector.broadcast %42 : f32 to vector<8x128xf32>
    %733 = vector.broadcast %cst_235 : f32 to vector<8x128xf32>
    %734 = arith.select %682, %732, %733 : vector<8x128xi1>, vector<8x128xf32>
    %735 = arith.addf %731, %734 : vector<8x128xf32>
    %cst_236 = arith.constant 0.000000e+00 : f32
    %736 = vector.broadcast %27 : f32 to vector<8x128xf32>
    %737 = vector.broadcast %cst_236 : f32 to vector<8x128xf32>
    %738 = arith.select %679, %736, %737 : vector<8x128xi1>, vector<8x128xf32>
    %739 = arith.addf %735, %738 : vector<8x128xf32>
    %cst_237 = arith.constant 0.000000e+00 : f32
    %740 = vector.broadcast %43 : f32 to vector<8x128xf32>
    %741 = vector.broadcast %cst_237 : f32 to vector<8x128xf32>
    %742 = arith.select %683, %740, %741 : vector<8x128xi1>, vector<8x128xf32>
    %743 = arith.addf %739, %742 : vector<8x128xf32>
    %744 = arith.subf %53, %26 : f32
    %745 = vector.broadcast %744 : f32 to vector<8x128xf32>
    %746 = arith.cmpf oge, %743, %745 : vector<8x128xf32>
    %cst_238 = arith.constant 0xFF800000 : f32
    %747 = vector.broadcast %cst_238 : f32 to vector<8x128xf32>
    %748 = arith.select %746, %377, %747 : vector<8x128xi1>, vector<8x128xf32>
    %749 = arith.maximumf %610, %748 : vector<8x128xf32>
    %cst_239 = arith.constant 0.000000e+00 : f32
    %750 = vector.broadcast %28 : f32 to vector<8x128xf32>
    %751 = vector.broadcast %cst_239 : f32 to vector<8x128xf32>
    %752 = arith.select %677, %750, %751 : vector<8x128xi1>, vector<8x128xf32>
    %cst_240 = arith.constant 0.000000e+00 : f32
    %753 = vector.broadcast %44 : f32 to vector<8x128xf32>
    %754 = vector.broadcast %cst_240 : f32 to vector<8x128xf32>
    %755 = arith.select %680, %753, %754 : vector<8x128xi1>, vector<8x128xf32>
    %756 = arith.addf %752, %755 : vector<8x128xf32>
    %cst_241 = arith.constant 0.000000e+00 : f32
    %757 = vector.broadcast %29 : f32 to vector<8x128xf32>
    %758 = vector.broadcast %cst_241 : f32 to vector<8x128xf32>
    %759 = arith.select %678, %757, %758 : vector<8x128xi1>, vector<8x128xf32>
    %760 = arith.addf %756, %759 : vector<8x128xf32>
    %cst_242 = arith.constant 0.000000e+00 : f32
    %761 = vector.broadcast %45 : f32 to vector<8x128xf32>
    %762 = vector.broadcast %cst_242 : f32 to vector<8x128xf32>
    %763 = arith.select %681, %761, %762 : vector<8x128xi1>, vector<8x128xf32>
    %764 = arith.addf %760, %763 : vector<8x128xf32>
    %cst_243 = arith.constant 0.000000e+00 : f32
    %765 = vector.broadcast %46 : f32 to vector<8x128xf32>
    %766 = vector.broadcast %cst_243 : f32 to vector<8x128xf32>
    %767 = arith.select %682, %765, %766 : vector<8x128xi1>, vector<8x128xf32>
    %768 = arith.addf %764, %767 : vector<8x128xf32>
    %cst_244 = arith.constant 0.000000e+00 : f32
    %769 = vector.broadcast %31 : f32 to vector<8x128xf32>
    %770 = vector.broadcast %cst_244 : f32 to vector<8x128xf32>
    %771 = arith.select %679, %769, %770 : vector<8x128xi1>, vector<8x128xf32>
    %772 = arith.addf %768, %771 : vector<8x128xf32>
    %cst_245 = arith.constant 0.000000e+00 : f32
    %773 = vector.broadcast %47 : f32 to vector<8x128xf32>
    %774 = vector.broadcast %cst_245 : f32 to vector<8x128xf32>
    %775 = arith.select %683, %773, %774 : vector<8x128xi1>, vector<8x128xf32>
    %776 = arith.addf %772, %775 : vector<8x128xf32>
    %777 = arith.subf %54, %30 : f32
    %778 = vector.broadcast %777 : f32 to vector<8x128xf32>
    %779 = arith.cmpf oge, %776, %778 : vector<8x128xf32>
    %cst_246 = arith.constant 0xFF800000 : f32
    %780 = vector.broadcast %cst_246 : f32 to vector<8x128xf32>
    %781 = arith.select %779, %377, %780 : vector<8x128xi1>, vector<8x128xf32>
    %782 = arith.maximumf %643, %781 : vector<8x128xf32>
    %cst_247 = arith.constant 0.000000e+00 : f32
    %783 = vector.broadcast %32 : f32 to vector<8x128xf32>
    %784 = vector.broadcast %cst_247 : f32 to vector<8x128xf32>
    %785 = arith.select %677, %783, %784 : vector<8x128xi1>, vector<8x128xf32>
    %cst_248 = arith.constant 0.000000e+00 : f32
    %786 = vector.broadcast %48 : f32 to vector<8x128xf32>
    %787 = vector.broadcast %cst_248 : f32 to vector<8x128xf32>
    %788 = arith.select %680, %786, %787 : vector<8x128xi1>, vector<8x128xf32>
    %789 = arith.addf %785, %788 : vector<8x128xf32>
    %cst_249 = arith.constant 0.000000e+00 : f32
    %790 = vector.broadcast %33 : f32 to vector<8x128xf32>
    %791 = vector.broadcast %cst_249 : f32 to vector<8x128xf32>
    %792 = arith.select %678, %790, %791 : vector<8x128xi1>, vector<8x128xf32>
    %793 = arith.addf %789, %792 : vector<8x128xf32>
    %cst_250 = arith.constant 0.000000e+00 : f32
    %794 = vector.broadcast %49 : f32 to vector<8x128xf32>
    %795 = vector.broadcast %cst_250 : f32 to vector<8x128xf32>
    %796 = arith.select %681, %794, %795 : vector<8x128xi1>, vector<8x128xf32>
    %797 = arith.addf %793, %796 : vector<8x128xf32>
    %cst_251 = arith.constant 0.000000e+00 : f32
    %798 = vector.broadcast %50 : f32 to vector<8x128xf32>
    %799 = vector.broadcast %cst_251 : f32 to vector<8x128xf32>
    %800 = arith.select %682, %798, %799 : vector<8x128xi1>, vector<8x128xf32>
    %801 = arith.addf %797, %800 : vector<8x128xf32>
    %cst_252 = arith.constant 0.000000e+00 : f32
    %802 = vector.broadcast %35 : f32 to vector<8x128xf32>
    %803 = vector.broadcast %cst_252 : f32 to vector<8x128xf32>
    %804 = arith.select %679, %802, %803 : vector<8x128xi1>, vector<8x128xf32>
    %805 = arith.addf %801, %804 : vector<8x128xf32>
    %cst_253 = arith.constant 0.000000e+00 : f32
    %806 = vector.broadcast %51 : f32 to vector<8x128xf32>
    %807 = vector.broadcast %cst_253 : f32 to vector<8x128xf32>
    %808 = arith.select %683, %806, %807 : vector<8x128xi1>, vector<8x128xf32>
    %809 = arith.addf %805, %808 : vector<8x128xf32>
    %810 = arith.subf %55, %34 : f32
    %811 = vector.broadcast %810 : f32 to vector<8x128xf32>
    %812 = arith.cmpf oge, %809, %811 : vector<8x128xf32>
    %cst_254 = arith.constant 0xFF800000 : f32
    %813 = vector.broadcast %cst_254 : f32 to vector<8x128xf32>
    %814 = arith.select %812, %377, %813 : vector<8x128xi1>, vector<8x128xf32>
    %815 = arith.maximumf %676, %814 : vector<8x128xf32>
    %816 = arith.cmpf oge, %343, %394 : vector<8x128xf32>
    %817 = arith.cmpf oge, %360, %394 : vector<8x128xf32>
    %818 = arith.cmpf oge, %377, %394 : vector<8x128xf32>
    %819 = arith.cmpf oge, %396, %394 : vector<8x128xf32>
    %820 = arith.cmpf oge, %398, %394 : vector<8x128xf32>
    %821 = arith.cmpf oge, %400, %394 : vector<8x128xf32>
    %822 = arith.cmpf oge, %402, %394 : vector<8x128xf32>
    %cst_255 = arith.constant 0.000000e+00 : f32
    %823 = vector.broadcast %20 : f32 to vector<8x128xf32>
    %824 = vector.broadcast %cst_255 : f32 to vector<8x128xf32>
    %825 = arith.select %816, %823, %824 : vector<8x128xi1>, vector<8x128xf32>
    %cst_256 = arith.constant 0.000000e+00 : f32
    %826 = vector.broadcast %36 : f32 to vector<8x128xf32>
    %827 = vector.broadcast %cst_256 : f32 to vector<8x128xf32>
    %828 = arith.select %819, %826, %827 : vector<8x128xi1>, vector<8x128xf32>
    %829 = arith.addf %825, %828 : vector<8x128xf32>
    %cst_257 = arith.constant 0.000000e+00 : f32
    %830 = vector.broadcast %21 : f32 to vector<8x128xf32>
    %831 = vector.broadcast %cst_257 : f32 to vector<8x128xf32>
    %832 = arith.select %817, %830, %831 : vector<8x128xi1>, vector<8x128xf32>
    %833 = arith.addf %829, %832 : vector<8x128xf32>
    %cst_258 = arith.constant 0.000000e+00 : f32
    %834 = vector.broadcast %37 : f32 to vector<8x128xf32>
    %835 = vector.broadcast %cst_258 : f32 to vector<8x128xf32>
    %836 = arith.select %820, %834, %835 : vector<8x128xi1>, vector<8x128xf32>
    %837 = arith.addf %833, %836 : vector<8x128xf32>
    %cst_259 = arith.constant 0.000000e+00 : f32
    %838 = vector.broadcast %22 : f32 to vector<8x128xf32>
    %839 = vector.broadcast %cst_259 : f32 to vector<8x128xf32>
    %840 = arith.select %818, %838, %839 : vector<8x128xi1>, vector<8x128xf32>
    %841 = arith.addf %837, %840 : vector<8x128xf32>
    %cst_260 = arith.constant 0.000000e+00 : f32
    %842 = vector.broadcast %38 : f32 to vector<8x128xf32>
    %843 = vector.broadcast %cst_260 : f32 to vector<8x128xf32>
    %844 = arith.select %821, %842, %843 : vector<8x128xi1>, vector<8x128xf32>
    %845 = arith.addf %841, %844 : vector<8x128xf32>
    %cst_261 = arith.constant 0.000000e+00 : f32
    %846 = vector.broadcast %39 : f32 to vector<8x128xf32>
    %847 = vector.broadcast %cst_261 : f32 to vector<8x128xf32>
    %848 = arith.select %822, %846, %847 : vector<8x128xi1>, vector<8x128xf32>
    %849 = arith.addf %845, %848 : vector<8x128xf32>
    %850 = arith.subf %52, %23 : f32
    %851 = vector.broadcast %850 : f32 to vector<8x128xf32>
    %852 = arith.cmpf oge, %849, %851 : vector<8x128xf32>
    %cst_262 = arith.constant 0xFF800000 : f32
    %853 = vector.broadcast %cst_262 : f32 to vector<8x128xf32>
    %854 = arith.select %852, %394, %853 : vector<8x128xi1>, vector<8x128xf32>
    %855 = arith.maximumf %716, %854 : vector<8x128xf32>
    %cst_263 = arith.constant 0.000000e+00 : f32
    %856 = vector.broadcast %24 : f32 to vector<8x128xf32>
    %857 = vector.broadcast %cst_263 : f32 to vector<8x128xf32>
    %858 = arith.select %816, %856, %857 : vector<8x128xi1>, vector<8x128xf32>
    %cst_264 = arith.constant 0.000000e+00 : f32
    %859 = vector.broadcast %40 : f32 to vector<8x128xf32>
    %860 = vector.broadcast %cst_264 : f32 to vector<8x128xf32>
    %861 = arith.select %819, %859, %860 : vector<8x128xi1>, vector<8x128xf32>
    %862 = arith.addf %858, %861 : vector<8x128xf32>
    %cst_265 = arith.constant 0.000000e+00 : f32
    %863 = vector.broadcast %25 : f32 to vector<8x128xf32>
    %864 = vector.broadcast %cst_265 : f32 to vector<8x128xf32>
    %865 = arith.select %817, %863, %864 : vector<8x128xi1>, vector<8x128xf32>
    %866 = arith.addf %862, %865 : vector<8x128xf32>
    %cst_266 = arith.constant 0.000000e+00 : f32
    %867 = vector.broadcast %41 : f32 to vector<8x128xf32>
    %868 = vector.broadcast %cst_266 : f32 to vector<8x128xf32>
    %869 = arith.select %820, %867, %868 : vector<8x128xi1>, vector<8x128xf32>
    %870 = arith.addf %866, %869 : vector<8x128xf32>
    %cst_267 = arith.constant 0.000000e+00 : f32
    %871 = vector.broadcast %26 : f32 to vector<8x128xf32>
    %872 = vector.broadcast %cst_267 : f32 to vector<8x128xf32>
    %873 = arith.select %818, %871, %872 : vector<8x128xi1>, vector<8x128xf32>
    %874 = arith.addf %870, %873 : vector<8x128xf32>
    %cst_268 = arith.constant 0.000000e+00 : f32
    %875 = vector.broadcast %42 : f32 to vector<8x128xf32>
    %876 = vector.broadcast %cst_268 : f32 to vector<8x128xf32>
    %877 = arith.select %821, %875, %876 : vector<8x128xi1>, vector<8x128xf32>
    %878 = arith.addf %874, %877 : vector<8x128xf32>
    %cst_269 = arith.constant 0.000000e+00 : f32
    %879 = vector.broadcast %43 : f32 to vector<8x128xf32>
    %880 = vector.broadcast %cst_269 : f32 to vector<8x128xf32>
    %881 = arith.select %822, %879, %880 : vector<8x128xi1>, vector<8x128xf32>
    %882 = arith.addf %878, %881 : vector<8x128xf32>
    %883 = arith.subf %53, %27 : f32
    %884 = vector.broadcast %883 : f32 to vector<8x128xf32>
    %885 = arith.cmpf oge, %882, %884 : vector<8x128xf32>
    %cst_270 = arith.constant 0xFF800000 : f32
    %886 = vector.broadcast %cst_270 : f32 to vector<8x128xf32>
    %887 = arith.select %885, %394, %886 : vector<8x128xi1>, vector<8x128xf32>
    %888 = arith.maximumf %749, %887 : vector<8x128xf32>
    %cst_271 = arith.constant 0.000000e+00 : f32
    %889 = vector.broadcast %28 : f32 to vector<8x128xf32>
    %890 = vector.broadcast %cst_271 : f32 to vector<8x128xf32>
    %891 = arith.select %816, %889, %890 : vector<8x128xi1>, vector<8x128xf32>
    %cst_272 = arith.constant 0.000000e+00 : f32
    %892 = vector.broadcast %44 : f32 to vector<8x128xf32>
    %893 = vector.broadcast %cst_272 : f32 to vector<8x128xf32>
    %894 = arith.select %819, %892, %893 : vector<8x128xi1>, vector<8x128xf32>
    %895 = arith.addf %891, %894 : vector<8x128xf32>
    %cst_273 = arith.constant 0.000000e+00 : f32
    %896 = vector.broadcast %29 : f32 to vector<8x128xf32>
    %897 = vector.broadcast %cst_273 : f32 to vector<8x128xf32>
    %898 = arith.select %817, %896, %897 : vector<8x128xi1>, vector<8x128xf32>
    %899 = arith.addf %895, %898 : vector<8x128xf32>
    %cst_274 = arith.constant 0.000000e+00 : f32
    %900 = vector.broadcast %45 : f32 to vector<8x128xf32>
    %901 = vector.broadcast %cst_274 : f32 to vector<8x128xf32>
    %902 = arith.select %820, %900, %901 : vector<8x128xi1>, vector<8x128xf32>
    %903 = arith.addf %899, %902 : vector<8x128xf32>
    %cst_275 = arith.constant 0.000000e+00 : f32
    %904 = vector.broadcast %30 : f32 to vector<8x128xf32>
    %905 = vector.broadcast %cst_275 : f32 to vector<8x128xf32>
    %906 = arith.select %818, %904, %905 : vector<8x128xi1>, vector<8x128xf32>
    %907 = arith.addf %903, %906 : vector<8x128xf32>
    %cst_276 = arith.constant 0.000000e+00 : f32
    %908 = vector.broadcast %46 : f32 to vector<8x128xf32>
    %909 = vector.broadcast %cst_276 : f32 to vector<8x128xf32>
    %910 = arith.select %821, %908, %909 : vector<8x128xi1>, vector<8x128xf32>
    %911 = arith.addf %907, %910 : vector<8x128xf32>
    %cst_277 = arith.constant 0.000000e+00 : f32
    %912 = vector.broadcast %47 : f32 to vector<8x128xf32>
    %913 = vector.broadcast %cst_277 : f32 to vector<8x128xf32>
    %914 = arith.select %822, %912, %913 : vector<8x128xi1>, vector<8x128xf32>
    %915 = arith.addf %911, %914 : vector<8x128xf32>
    %916 = arith.subf %54, %31 : f32
    %917 = vector.broadcast %916 : f32 to vector<8x128xf32>
    %918 = arith.cmpf oge, %915, %917 : vector<8x128xf32>
    %cst_278 = arith.constant 0xFF800000 : f32
    %919 = vector.broadcast %cst_278 : f32 to vector<8x128xf32>
    %920 = arith.select %918, %394, %919 : vector<8x128xi1>, vector<8x128xf32>
    %921 = arith.maximumf %782, %920 : vector<8x128xf32>
    %cst_279 = arith.constant 0.000000e+00 : f32
    %922 = vector.broadcast %32 : f32 to vector<8x128xf32>
    %923 = vector.broadcast %cst_279 : f32 to vector<8x128xf32>
    %924 = arith.select %816, %922, %923 : vector<8x128xi1>, vector<8x128xf32>
    %cst_280 = arith.constant 0.000000e+00 : f32
    %925 = vector.broadcast %48 : f32 to vector<8x128xf32>
    %926 = vector.broadcast %cst_280 : f32 to vector<8x128xf32>
    %927 = arith.select %819, %925, %926 : vector<8x128xi1>, vector<8x128xf32>
    %928 = arith.addf %924, %927 : vector<8x128xf32>
    %cst_281 = arith.constant 0.000000e+00 : f32
    %929 = vector.broadcast %33 : f32 to vector<8x128xf32>
    %930 = vector.broadcast %cst_281 : f32 to vector<8x128xf32>
    %931 = arith.select %817, %929, %930 : vector<8x128xi1>, vector<8x128xf32>
    %932 = arith.addf %928, %931 : vector<8x128xf32>
    %cst_282 = arith.constant 0.000000e+00 : f32
    %933 = vector.broadcast %49 : f32 to vector<8x128xf32>
    %934 = vector.broadcast %cst_282 : f32 to vector<8x128xf32>
    %935 = arith.select %820, %933, %934 : vector<8x128xi1>, vector<8x128xf32>
    %936 = arith.addf %932, %935 : vector<8x128xf32>
    %cst_283 = arith.constant 0.000000e+00 : f32
    %937 = vector.broadcast %34 : f32 to vector<8x128xf32>
    %938 = vector.broadcast %cst_283 : f32 to vector<8x128xf32>
    %939 = arith.select %818, %937, %938 : vector<8x128xi1>, vector<8x128xf32>
    %940 = arith.addf %936, %939 : vector<8x128xf32>
    %cst_284 = arith.constant 0.000000e+00 : f32
    %941 = vector.broadcast %50 : f32 to vector<8x128xf32>
    %942 = vector.broadcast %cst_284 : f32 to vector<8x128xf32>
    %943 = arith.select %821, %941, %942 : vector<8x128xi1>, vector<8x128xf32>
    %944 = arith.addf %940, %943 : vector<8x128xf32>
    %cst_285 = arith.constant 0.000000e+00 : f32
    %945 = vector.broadcast %51 : f32 to vector<8x128xf32>
    %946 = vector.broadcast %cst_285 : f32 to vector<8x128xf32>
    %947 = arith.select %822, %945, %946 : vector<8x128xi1>, vector<8x128xf32>
    %948 = arith.addf %944, %947 : vector<8x128xf32>
    %949 = arith.subf %55, %35 : f32
    %950 = vector.broadcast %949 : f32 to vector<8x128xf32>
    %951 = arith.cmpf oge, %948, %950 : vector<8x128xf32>
    %cst_286 = arith.constant 0xFF800000 : f32
    %952 = vector.broadcast %cst_286 : f32 to vector<8x128xf32>
    %953 = arith.select %951, %394, %952 : vector<8x128xi1>, vector<8x128xf32>
    %954 = arith.maximumf %815, %953 : vector<8x128xf32>
    %955 = arith.cmpf oge, %343, %396 : vector<8x128xf32>
    %956 = arith.cmpf oge, %360, %396 : vector<8x128xf32>
    %957 = arith.cmpf oge, %377, %396 : vector<8x128xf32>
    %958 = arith.cmpf oge, %394, %396 : vector<8x128xf32>
    %959 = arith.cmpf oge, %398, %396 : vector<8x128xf32>
    %960 = arith.cmpf oge, %400, %396 : vector<8x128xf32>
    %961 = arith.cmpf oge, %402, %396 : vector<8x128xf32>
    %cst_287 = arith.constant 0.000000e+00 : f32
    %962 = vector.broadcast %20 : f32 to vector<8x128xf32>
    %963 = vector.broadcast %cst_287 : f32 to vector<8x128xf32>
    %964 = arith.select %955, %962, %963 : vector<8x128xi1>, vector<8x128xf32>
    %cst_288 = arith.constant 0.000000e+00 : f32
    %965 = vector.broadcast %21 : f32 to vector<8x128xf32>
    %966 = vector.broadcast %cst_288 : f32 to vector<8x128xf32>
    %967 = arith.select %956, %965, %966 : vector<8x128xi1>, vector<8x128xf32>
    %968 = arith.addf %964, %967 : vector<8x128xf32>
    %cst_289 = arith.constant 0.000000e+00 : f32
    %969 = vector.broadcast %37 : f32 to vector<8x128xf32>
    %970 = vector.broadcast %cst_289 : f32 to vector<8x128xf32>
    %971 = arith.select %959, %969, %970 : vector<8x128xi1>, vector<8x128xf32>
    %972 = arith.addf %968, %971 : vector<8x128xf32>
    %cst_290 = arith.constant 0.000000e+00 : f32
    %973 = vector.broadcast %22 : f32 to vector<8x128xf32>
    %974 = vector.broadcast %cst_290 : f32 to vector<8x128xf32>
    %975 = arith.select %957, %973, %974 : vector<8x128xi1>, vector<8x128xf32>
    %976 = arith.addf %972, %975 : vector<8x128xf32>
    %cst_291 = arith.constant 0.000000e+00 : f32
    %977 = vector.broadcast %38 : f32 to vector<8x128xf32>
    %978 = vector.broadcast %cst_291 : f32 to vector<8x128xf32>
    %979 = arith.select %960, %977, %978 : vector<8x128xi1>, vector<8x128xf32>
    %980 = arith.addf %976, %979 : vector<8x128xf32>
    %cst_292 = arith.constant 0.000000e+00 : f32
    %981 = vector.broadcast %23 : f32 to vector<8x128xf32>
    %982 = vector.broadcast %cst_292 : f32 to vector<8x128xf32>
    %983 = arith.select %958, %981, %982 : vector<8x128xi1>, vector<8x128xf32>
    %984 = arith.addf %980, %983 : vector<8x128xf32>
    %cst_293 = arith.constant 0.000000e+00 : f32
    %985 = vector.broadcast %39 : f32 to vector<8x128xf32>
    %986 = vector.broadcast %cst_293 : f32 to vector<8x128xf32>
    %987 = arith.select %961, %985, %986 : vector<8x128xi1>, vector<8x128xf32>
    %988 = arith.addf %984, %987 : vector<8x128xf32>
    %989 = arith.subf %52, %36 : f32
    %990 = vector.broadcast %989 : f32 to vector<8x128xf32>
    %991 = arith.cmpf oge, %988, %990 : vector<8x128xf32>
    %cst_294 = arith.constant 0xFF800000 : f32
    %992 = vector.broadcast %cst_294 : f32 to vector<8x128xf32>
    %993 = arith.select %991, %396, %992 : vector<8x128xi1>, vector<8x128xf32>
    %994 = arith.maximumf %855, %993 : vector<8x128xf32>
    %cst_295 = arith.constant 0.000000e+00 : f32
    %995 = vector.broadcast %24 : f32 to vector<8x128xf32>
    %996 = vector.broadcast %cst_295 : f32 to vector<8x128xf32>
    %997 = arith.select %955, %995, %996 : vector<8x128xi1>, vector<8x128xf32>
    %cst_296 = arith.constant 0.000000e+00 : f32
    %998 = vector.broadcast %25 : f32 to vector<8x128xf32>
    %999 = vector.broadcast %cst_296 : f32 to vector<8x128xf32>
    %1000 = arith.select %956, %998, %999 : vector<8x128xi1>, vector<8x128xf32>
    %1001 = arith.addf %997, %1000 : vector<8x128xf32>
    %cst_297 = arith.constant 0.000000e+00 : f32
    %1002 = vector.broadcast %41 : f32 to vector<8x128xf32>
    %1003 = vector.broadcast %cst_297 : f32 to vector<8x128xf32>
    %1004 = arith.select %959, %1002, %1003 : vector<8x128xi1>, vector<8x128xf32>
    %1005 = arith.addf %1001, %1004 : vector<8x128xf32>
    %cst_298 = arith.constant 0.000000e+00 : f32
    %1006 = vector.broadcast %26 : f32 to vector<8x128xf32>
    %1007 = vector.broadcast %cst_298 : f32 to vector<8x128xf32>
    %1008 = arith.select %957, %1006, %1007 : vector<8x128xi1>, vector<8x128xf32>
    %1009 = arith.addf %1005, %1008 : vector<8x128xf32>
    %cst_299 = arith.constant 0.000000e+00 : f32
    %1010 = vector.broadcast %42 : f32 to vector<8x128xf32>
    %1011 = vector.broadcast %cst_299 : f32 to vector<8x128xf32>
    %1012 = arith.select %960, %1010, %1011 : vector<8x128xi1>, vector<8x128xf32>
    %1013 = arith.addf %1009, %1012 : vector<8x128xf32>
    %cst_300 = arith.constant 0.000000e+00 : f32
    %1014 = vector.broadcast %27 : f32 to vector<8x128xf32>
    %1015 = vector.broadcast %cst_300 : f32 to vector<8x128xf32>
    %1016 = arith.select %958, %1014, %1015 : vector<8x128xi1>, vector<8x128xf32>
    %1017 = arith.addf %1013, %1016 : vector<8x128xf32>
    %cst_301 = arith.constant 0.000000e+00 : f32
    %1018 = vector.broadcast %43 : f32 to vector<8x128xf32>
    %1019 = vector.broadcast %cst_301 : f32 to vector<8x128xf32>
    %1020 = arith.select %961, %1018, %1019 : vector<8x128xi1>, vector<8x128xf32>
    %1021 = arith.addf %1017, %1020 : vector<8x128xf32>
    %1022 = arith.subf %53, %40 : f32
    %1023 = vector.broadcast %1022 : f32 to vector<8x128xf32>
    %1024 = arith.cmpf oge, %1021, %1023 : vector<8x128xf32>
    %cst_302 = arith.constant 0xFF800000 : f32
    %1025 = vector.broadcast %cst_302 : f32 to vector<8x128xf32>
    %1026 = arith.select %1024, %396, %1025 : vector<8x128xi1>, vector<8x128xf32>
    %1027 = arith.maximumf %888, %1026 : vector<8x128xf32>
    %cst_303 = arith.constant 0.000000e+00 : f32
    %1028 = vector.broadcast %28 : f32 to vector<8x128xf32>
    %1029 = vector.broadcast %cst_303 : f32 to vector<8x128xf32>
    %1030 = arith.select %955, %1028, %1029 : vector<8x128xi1>, vector<8x128xf32>
    %cst_304 = arith.constant 0.000000e+00 : f32
    %1031 = vector.broadcast %29 : f32 to vector<8x128xf32>
    %1032 = vector.broadcast %cst_304 : f32 to vector<8x128xf32>
    %1033 = arith.select %956, %1031, %1032 : vector<8x128xi1>, vector<8x128xf32>
    %1034 = arith.addf %1030, %1033 : vector<8x128xf32>
    %cst_305 = arith.constant 0.000000e+00 : f32
    %1035 = vector.broadcast %45 : f32 to vector<8x128xf32>
    %1036 = vector.broadcast %cst_305 : f32 to vector<8x128xf32>
    %1037 = arith.select %959, %1035, %1036 : vector<8x128xi1>, vector<8x128xf32>
    %1038 = arith.addf %1034, %1037 : vector<8x128xf32>
    %cst_306 = arith.constant 0.000000e+00 : f32
    %1039 = vector.broadcast %30 : f32 to vector<8x128xf32>
    %1040 = vector.broadcast %cst_306 : f32 to vector<8x128xf32>
    %1041 = arith.select %957, %1039, %1040 : vector<8x128xi1>, vector<8x128xf32>
    %1042 = arith.addf %1038, %1041 : vector<8x128xf32>
    %cst_307 = arith.constant 0.000000e+00 : f32
    %1043 = vector.broadcast %46 : f32 to vector<8x128xf32>
    %1044 = vector.broadcast %cst_307 : f32 to vector<8x128xf32>
    %1045 = arith.select %960, %1043, %1044 : vector<8x128xi1>, vector<8x128xf32>
    %1046 = arith.addf %1042, %1045 : vector<8x128xf32>
    %cst_308 = arith.constant 0.000000e+00 : f32
    %1047 = vector.broadcast %31 : f32 to vector<8x128xf32>
    %1048 = vector.broadcast %cst_308 : f32 to vector<8x128xf32>
    %1049 = arith.select %958, %1047, %1048 : vector<8x128xi1>, vector<8x128xf32>
    %1050 = arith.addf %1046, %1049 : vector<8x128xf32>
    %cst_309 = arith.constant 0.000000e+00 : f32
    %1051 = vector.broadcast %47 : f32 to vector<8x128xf32>
    %1052 = vector.broadcast %cst_309 : f32 to vector<8x128xf32>
    %1053 = arith.select %961, %1051, %1052 : vector<8x128xi1>, vector<8x128xf32>
    %1054 = arith.addf %1050, %1053 : vector<8x128xf32>
    %1055 = arith.subf %54, %44 : f32
    %1056 = vector.broadcast %1055 : f32 to vector<8x128xf32>
    %1057 = arith.cmpf oge, %1054, %1056 : vector<8x128xf32>
    %cst_310 = arith.constant 0xFF800000 : f32
    %1058 = vector.broadcast %cst_310 : f32 to vector<8x128xf32>
    %1059 = arith.select %1057, %396, %1058 : vector<8x128xi1>, vector<8x128xf32>
    %1060 = arith.maximumf %921, %1059 : vector<8x128xf32>
    %cst_311 = arith.constant 0.000000e+00 : f32
    %1061 = vector.broadcast %32 : f32 to vector<8x128xf32>
    %1062 = vector.broadcast %cst_311 : f32 to vector<8x128xf32>
    %1063 = arith.select %955, %1061, %1062 : vector<8x128xi1>, vector<8x128xf32>
    %cst_312 = arith.constant 0.000000e+00 : f32
    %1064 = vector.broadcast %33 : f32 to vector<8x128xf32>
    %1065 = vector.broadcast %cst_312 : f32 to vector<8x128xf32>
    %1066 = arith.select %956, %1064, %1065 : vector<8x128xi1>, vector<8x128xf32>
    %1067 = arith.addf %1063, %1066 : vector<8x128xf32>
    %cst_313 = arith.constant 0.000000e+00 : f32
    %1068 = vector.broadcast %49 : f32 to vector<8x128xf32>
    %1069 = vector.broadcast %cst_313 : f32 to vector<8x128xf32>
    %1070 = arith.select %959, %1068, %1069 : vector<8x128xi1>, vector<8x128xf32>
    %1071 = arith.addf %1067, %1070 : vector<8x128xf32>
    %cst_314 = arith.constant 0.000000e+00 : f32
    %1072 = vector.broadcast %34 : f32 to vector<8x128xf32>
    %1073 = vector.broadcast %cst_314 : f32 to vector<8x128xf32>
    %1074 = arith.select %957, %1072, %1073 : vector<8x128xi1>, vector<8x128xf32>
    %1075 = arith.addf %1071, %1074 : vector<8x128xf32>
    %cst_315 = arith.constant 0.000000e+00 : f32
    %1076 = vector.broadcast %50 : f32 to vector<8x128xf32>
    %1077 = vector.broadcast %cst_315 : f32 to vector<8x128xf32>
    %1078 = arith.select %960, %1076, %1077 : vector<8x128xi1>, vector<8x128xf32>
    %1079 = arith.addf %1075, %1078 : vector<8x128xf32>
    %cst_316 = arith.constant 0.000000e+00 : f32
    %1080 = vector.broadcast %35 : f32 to vector<8x128xf32>
    %1081 = vector.broadcast %cst_316 : f32 to vector<8x128xf32>
    %1082 = arith.select %958, %1080, %1081 : vector<8x128xi1>, vector<8x128xf32>
    %1083 = arith.addf %1079, %1082 : vector<8x128xf32>
    %cst_317 = arith.constant 0.000000e+00 : f32
    %1084 = vector.broadcast %51 : f32 to vector<8x128xf32>
    %1085 = vector.broadcast %cst_317 : f32 to vector<8x128xf32>
    %1086 = arith.select %961, %1084, %1085 : vector<8x128xi1>, vector<8x128xf32>
    %1087 = arith.addf %1083, %1086 : vector<8x128xf32>
    %1088 = arith.subf %55, %48 : f32
    %1089 = vector.broadcast %1088 : f32 to vector<8x128xf32>
    %1090 = arith.cmpf oge, %1087, %1089 : vector<8x128xf32>
    %cst_318 = arith.constant 0xFF800000 : f32
    %1091 = vector.broadcast %cst_318 : f32 to vector<8x128xf32>
    %1092 = arith.select %1090, %396, %1091 : vector<8x128xi1>, vector<8x128xf32>
    %1093 = arith.maximumf %954, %1092 : vector<8x128xf32>
    %1094 = arith.cmpf oge, %343, %398 : vector<8x128xf32>
    %1095 = arith.cmpf oge, %360, %398 : vector<8x128xf32>
    %1096 = arith.cmpf oge, %377, %398 : vector<8x128xf32>
    %1097 = arith.cmpf oge, %394, %398 : vector<8x128xf32>
    %1098 = arith.cmpf oge, %396, %398 : vector<8x128xf32>
    %1099 = arith.cmpf oge, %400, %398 : vector<8x128xf32>
    %1100 = arith.cmpf oge, %402, %398 : vector<8x128xf32>
    %cst_319 = arith.constant 0.000000e+00 : f32
    %1101 = vector.broadcast %20 : f32 to vector<8x128xf32>
    %1102 = vector.broadcast %cst_319 : f32 to vector<8x128xf32>
    %1103 = arith.select %1094, %1101, %1102 : vector<8x128xi1>, vector<8x128xf32>
    %cst_320 = arith.constant 0.000000e+00 : f32
    %1104 = vector.broadcast %36 : f32 to vector<8x128xf32>
    %1105 = vector.broadcast %cst_320 : f32 to vector<8x128xf32>
    %1106 = arith.select %1098, %1104, %1105 : vector<8x128xi1>, vector<8x128xf32>
    %1107 = arith.addf %1103, %1106 : vector<8x128xf32>
    %cst_321 = arith.constant 0.000000e+00 : f32
    %1108 = vector.broadcast %21 : f32 to vector<8x128xf32>
    %1109 = vector.broadcast %cst_321 : f32 to vector<8x128xf32>
    %1110 = arith.select %1095, %1108, %1109 : vector<8x128xi1>, vector<8x128xf32>
    %1111 = arith.addf %1107, %1110 : vector<8x128xf32>
    %cst_322 = arith.constant 0.000000e+00 : f32
    %1112 = vector.broadcast %22 : f32 to vector<8x128xf32>
    %1113 = vector.broadcast %cst_322 : f32 to vector<8x128xf32>
    %1114 = arith.select %1096, %1112, %1113 : vector<8x128xi1>, vector<8x128xf32>
    %1115 = arith.addf %1111, %1114 : vector<8x128xf32>
    %cst_323 = arith.constant 0.000000e+00 : f32
    %1116 = vector.broadcast %38 : f32 to vector<8x128xf32>
    %1117 = vector.broadcast %cst_323 : f32 to vector<8x128xf32>
    %1118 = arith.select %1099, %1116, %1117 : vector<8x128xi1>, vector<8x128xf32>
    %1119 = arith.addf %1115, %1118 : vector<8x128xf32>
    %cst_324 = arith.constant 0.000000e+00 : f32
    %1120 = vector.broadcast %23 : f32 to vector<8x128xf32>
    %1121 = vector.broadcast %cst_324 : f32 to vector<8x128xf32>
    %1122 = arith.select %1097, %1120, %1121 : vector<8x128xi1>, vector<8x128xf32>
    %1123 = arith.addf %1119, %1122 : vector<8x128xf32>
    %cst_325 = arith.constant 0.000000e+00 : f32
    %1124 = vector.broadcast %39 : f32 to vector<8x128xf32>
    %1125 = vector.broadcast %cst_325 : f32 to vector<8x128xf32>
    %1126 = arith.select %1100, %1124, %1125 : vector<8x128xi1>, vector<8x128xf32>
    %1127 = arith.addf %1123, %1126 : vector<8x128xf32>
    %1128 = arith.subf %52, %37 : f32
    %1129 = vector.broadcast %1128 : f32 to vector<8x128xf32>
    %1130 = arith.cmpf oge, %1127, %1129 : vector<8x128xf32>
    %cst_326 = arith.constant 0xFF800000 : f32
    %1131 = vector.broadcast %cst_326 : f32 to vector<8x128xf32>
    %1132 = arith.select %1130, %398, %1131 : vector<8x128xi1>, vector<8x128xf32>
    %1133 = arith.maximumf %994, %1132 : vector<8x128xf32>
    %cst_327 = arith.constant 0.000000e+00 : f32
    %1134 = vector.broadcast %24 : f32 to vector<8x128xf32>
    %1135 = vector.broadcast %cst_327 : f32 to vector<8x128xf32>
    %1136 = arith.select %1094, %1134, %1135 : vector<8x128xi1>, vector<8x128xf32>
    %cst_328 = arith.constant 0.000000e+00 : f32
    %1137 = vector.broadcast %40 : f32 to vector<8x128xf32>
    %1138 = vector.broadcast %cst_328 : f32 to vector<8x128xf32>
    %1139 = arith.select %1098, %1137, %1138 : vector<8x128xi1>, vector<8x128xf32>
    %1140 = arith.addf %1136, %1139 : vector<8x128xf32>
    %cst_329 = arith.constant 0.000000e+00 : f32
    %1141 = vector.broadcast %25 : f32 to vector<8x128xf32>
    %1142 = vector.broadcast %cst_329 : f32 to vector<8x128xf32>
    %1143 = arith.select %1095, %1141, %1142 : vector<8x128xi1>, vector<8x128xf32>
    %1144 = arith.addf %1140, %1143 : vector<8x128xf32>
    %cst_330 = arith.constant 0.000000e+00 : f32
    %1145 = vector.broadcast %26 : f32 to vector<8x128xf32>
    %1146 = vector.broadcast %cst_330 : f32 to vector<8x128xf32>
    %1147 = arith.select %1096, %1145, %1146 : vector<8x128xi1>, vector<8x128xf32>
    %1148 = arith.addf %1144, %1147 : vector<8x128xf32>
    %cst_331 = arith.constant 0.000000e+00 : f32
    %1149 = vector.broadcast %42 : f32 to vector<8x128xf32>
    %1150 = vector.broadcast %cst_331 : f32 to vector<8x128xf32>
    %1151 = arith.select %1099, %1149, %1150 : vector<8x128xi1>, vector<8x128xf32>
    %1152 = arith.addf %1148, %1151 : vector<8x128xf32>
    %cst_332 = arith.constant 0.000000e+00 : f32
    %1153 = vector.broadcast %27 : f32 to vector<8x128xf32>
    %1154 = vector.broadcast %cst_332 : f32 to vector<8x128xf32>
    %1155 = arith.select %1097, %1153, %1154 : vector<8x128xi1>, vector<8x128xf32>
    %1156 = arith.addf %1152, %1155 : vector<8x128xf32>
    %cst_333 = arith.constant 0.000000e+00 : f32
    %1157 = vector.broadcast %43 : f32 to vector<8x128xf32>
    %1158 = vector.broadcast %cst_333 : f32 to vector<8x128xf32>
    %1159 = arith.select %1100, %1157, %1158 : vector<8x128xi1>, vector<8x128xf32>
    %1160 = arith.addf %1156, %1159 : vector<8x128xf32>
    %1161 = arith.subf %53, %41 : f32
    %1162 = vector.broadcast %1161 : f32 to vector<8x128xf32>
    %1163 = arith.cmpf oge, %1160, %1162 : vector<8x128xf32>
    %cst_334 = arith.constant 0xFF800000 : f32
    %1164 = vector.broadcast %cst_334 : f32 to vector<8x128xf32>
    %1165 = arith.select %1163, %398, %1164 : vector<8x128xi1>, vector<8x128xf32>
    %1166 = arith.maximumf %1027, %1165 : vector<8x128xf32>
    %cst_335 = arith.constant 0.000000e+00 : f32
    %1167 = vector.broadcast %28 : f32 to vector<8x128xf32>
    %1168 = vector.broadcast %cst_335 : f32 to vector<8x128xf32>
    %1169 = arith.select %1094, %1167, %1168 : vector<8x128xi1>, vector<8x128xf32>
    %cst_336 = arith.constant 0.000000e+00 : f32
    %1170 = vector.broadcast %44 : f32 to vector<8x128xf32>
    %1171 = vector.broadcast %cst_336 : f32 to vector<8x128xf32>
    %1172 = arith.select %1098, %1170, %1171 : vector<8x128xi1>, vector<8x128xf32>
    %1173 = arith.addf %1169, %1172 : vector<8x128xf32>
    %cst_337 = arith.constant 0.000000e+00 : f32
    %1174 = vector.broadcast %29 : f32 to vector<8x128xf32>
    %1175 = vector.broadcast %cst_337 : f32 to vector<8x128xf32>
    %1176 = arith.select %1095, %1174, %1175 : vector<8x128xi1>, vector<8x128xf32>
    %1177 = arith.addf %1173, %1176 : vector<8x128xf32>
    %cst_338 = arith.constant 0.000000e+00 : f32
    %1178 = vector.broadcast %30 : f32 to vector<8x128xf32>
    %1179 = vector.broadcast %cst_338 : f32 to vector<8x128xf32>
    %1180 = arith.select %1096, %1178, %1179 : vector<8x128xi1>, vector<8x128xf32>
    %1181 = arith.addf %1177, %1180 : vector<8x128xf32>
    %cst_339 = arith.constant 0.000000e+00 : f32
    %1182 = vector.broadcast %46 : f32 to vector<8x128xf32>
    %1183 = vector.broadcast %cst_339 : f32 to vector<8x128xf32>
    %1184 = arith.select %1099, %1182, %1183 : vector<8x128xi1>, vector<8x128xf32>
    %1185 = arith.addf %1181, %1184 : vector<8x128xf32>
    %cst_340 = arith.constant 0.000000e+00 : f32
    %1186 = vector.broadcast %31 : f32 to vector<8x128xf32>
    %1187 = vector.broadcast %cst_340 : f32 to vector<8x128xf32>
    %1188 = arith.select %1097, %1186, %1187 : vector<8x128xi1>, vector<8x128xf32>
    %1189 = arith.addf %1185, %1188 : vector<8x128xf32>
    %cst_341 = arith.constant 0.000000e+00 : f32
    %1190 = vector.broadcast %47 : f32 to vector<8x128xf32>
    %1191 = vector.broadcast %cst_341 : f32 to vector<8x128xf32>
    %1192 = arith.select %1100, %1190, %1191 : vector<8x128xi1>, vector<8x128xf32>
    %1193 = arith.addf %1189, %1192 : vector<8x128xf32>
    %1194 = arith.subf %54, %45 : f32
    %1195 = vector.broadcast %1194 : f32 to vector<8x128xf32>
    %1196 = arith.cmpf oge, %1193, %1195 : vector<8x128xf32>
    %cst_342 = arith.constant 0xFF800000 : f32
    %1197 = vector.broadcast %cst_342 : f32 to vector<8x128xf32>
    %1198 = arith.select %1196, %398, %1197 : vector<8x128xi1>, vector<8x128xf32>
    %1199 = arith.maximumf %1060, %1198 : vector<8x128xf32>
    %cst_343 = arith.constant 0.000000e+00 : f32
    %1200 = vector.broadcast %32 : f32 to vector<8x128xf32>
    %1201 = vector.broadcast %cst_343 : f32 to vector<8x128xf32>
    %1202 = arith.select %1094, %1200, %1201 : vector<8x128xi1>, vector<8x128xf32>
    %cst_344 = arith.constant 0.000000e+00 : f32
    %1203 = vector.broadcast %48 : f32 to vector<8x128xf32>
    %1204 = vector.broadcast %cst_344 : f32 to vector<8x128xf32>
    %1205 = arith.select %1098, %1203, %1204 : vector<8x128xi1>, vector<8x128xf32>
    %1206 = arith.addf %1202, %1205 : vector<8x128xf32>
    %cst_345 = arith.constant 0.000000e+00 : f32
    %1207 = vector.broadcast %33 : f32 to vector<8x128xf32>
    %1208 = vector.broadcast %cst_345 : f32 to vector<8x128xf32>
    %1209 = arith.select %1095, %1207, %1208 : vector<8x128xi1>, vector<8x128xf32>
    %1210 = arith.addf %1206, %1209 : vector<8x128xf32>
    %cst_346 = arith.constant 0.000000e+00 : f32
    %1211 = vector.broadcast %34 : f32 to vector<8x128xf32>
    %1212 = vector.broadcast %cst_346 : f32 to vector<8x128xf32>
    %1213 = arith.select %1096, %1211, %1212 : vector<8x128xi1>, vector<8x128xf32>
    %1214 = arith.addf %1210, %1213 : vector<8x128xf32>
    %cst_347 = arith.constant 0.000000e+00 : f32
    %1215 = vector.broadcast %50 : f32 to vector<8x128xf32>
    %1216 = vector.broadcast %cst_347 : f32 to vector<8x128xf32>
    %1217 = arith.select %1099, %1215, %1216 : vector<8x128xi1>, vector<8x128xf32>
    %1218 = arith.addf %1214, %1217 : vector<8x128xf32>
    %cst_348 = arith.constant 0.000000e+00 : f32
    %1219 = vector.broadcast %35 : f32 to vector<8x128xf32>
    %1220 = vector.broadcast %cst_348 : f32 to vector<8x128xf32>
    %1221 = arith.select %1097, %1219, %1220 : vector<8x128xi1>, vector<8x128xf32>
    %1222 = arith.addf %1218, %1221 : vector<8x128xf32>
    %cst_349 = arith.constant 0.000000e+00 : f32
    %1223 = vector.broadcast %51 : f32 to vector<8x128xf32>
    %1224 = vector.broadcast %cst_349 : f32 to vector<8x128xf32>
    %1225 = arith.select %1100, %1223, %1224 : vector<8x128xi1>, vector<8x128xf32>
    %1226 = arith.addf %1222, %1225 : vector<8x128xf32>
    %1227 = arith.subf %55, %49 : f32
    %1228 = vector.broadcast %1227 : f32 to vector<8x128xf32>
    %1229 = arith.cmpf oge, %1226, %1228 : vector<8x128xf32>
    %cst_350 = arith.constant 0xFF800000 : f32
    %1230 = vector.broadcast %cst_350 : f32 to vector<8x128xf32>
    %1231 = arith.select %1229, %398, %1230 : vector<8x128xi1>, vector<8x128xf32>
    %1232 = arith.maximumf %1093, %1231 : vector<8x128xf32>
    %1233 = arith.cmpf oge, %343, %400 : vector<8x128xf32>
    %1234 = arith.cmpf oge, %360, %400 : vector<8x128xf32>
    %1235 = arith.cmpf oge, %377, %400 : vector<8x128xf32>
    %1236 = arith.cmpf oge, %394, %400 : vector<8x128xf32>
    %1237 = arith.cmpf oge, %396, %400 : vector<8x128xf32>
    %1238 = arith.cmpf oge, %398, %400 : vector<8x128xf32>
    %1239 = arith.cmpf oge, %402, %400 : vector<8x128xf32>
    %cst_351 = arith.constant 0.000000e+00 : f32
    %1240 = vector.broadcast %20 : f32 to vector<8x128xf32>
    %1241 = vector.broadcast %cst_351 : f32 to vector<8x128xf32>
    %1242 = arith.select %1233, %1240, %1241 : vector<8x128xi1>, vector<8x128xf32>
    %cst_352 = arith.constant 0.000000e+00 : f32
    %1243 = vector.broadcast %36 : f32 to vector<8x128xf32>
    %1244 = vector.broadcast %cst_352 : f32 to vector<8x128xf32>
    %1245 = arith.select %1237, %1243, %1244 : vector<8x128xi1>, vector<8x128xf32>
    %1246 = arith.addf %1242, %1245 : vector<8x128xf32>
    %cst_353 = arith.constant 0.000000e+00 : f32
    %1247 = vector.broadcast %21 : f32 to vector<8x128xf32>
    %1248 = vector.broadcast %cst_353 : f32 to vector<8x128xf32>
    %1249 = arith.select %1234, %1247, %1248 : vector<8x128xi1>, vector<8x128xf32>
    %1250 = arith.addf %1246, %1249 : vector<8x128xf32>
    %cst_354 = arith.constant 0.000000e+00 : f32
    %1251 = vector.broadcast %37 : f32 to vector<8x128xf32>
    %1252 = vector.broadcast %cst_354 : f32 to vector<8x128xf32>
    %1253 = arith.select %1238, %1251, %1252 : vector<8x128xi1>, vector<8x128xf32>
    %1254 = arith.addf %1250, %1253 : vector<8x128xf32>
    %cst_355 = arith.constant 0.000000e+00 : f32
    %1255 = vector.broadcast %22 : f32 to vector<8x128xf32>
    %1256 = vector.broadcast %cst_355 : f32 to vector<8x128xf32>
    %1257 = arith.select %1235, %1255, %1256 : vector<8x128xi1>, vector<8x128xf32>
    %1258 = arith.addf %1254, %1257 : vector<8x128xf32>
    %cst_356 = arith.constant 0.000000e+00 : f32
    %1259 = vector.broadcast %23 : f32 to vector<8x128xf32>
    %1260 = vector.broadcast %cst_356 : f32 to vector<8x128xf32>
    %1261 = arith.select %1236, %1259, %1260 : vector<8x128xi1>, vector<8x128xf32>
    %1262 = arith.addf %1258, %1261 : vector<8x128xf32>
    %cst_357 = arith.constant 0.000000e+00 : f32
    %1263 = vector.broadcast %39 : f32 to vector<8x128xf32>
    %1264 = vector.broadcast %cst_357 : f32 to vector<8x128xf32>
    %1265 = arith.select %1239, %1263, %1264 : vector<8x128xi1>, vector<8x128xf32>
    %1266 = arith.addf %1262, %1265 : vector<8x128xf32>
    %1267 = arith.subf %52, %38 : f32
    %1268 = vector.broadcast %1267 : f32 to vector<8x128xf32>
    %1269 = arith.cmpf oge, %1266, %1268 : vector<8x128xf32>
    %cst_358 = arith.constant 0xFF800000 : f32
    %1270 = vector.broadcast %cst_358 : f32 to vector<8x128xf32>
    %1271 = arith.select %1269, %400, %1270 : vector<8x128xi1>, vector<8x128xf32>
    %1272 = arith.maximumf %1133, %1271 : vector<8x128xf32>
    %cst_359 = arith.constant 0.000000e+00 : f32
    %1273 = vector.broadcast %24 : f32 to vector<8x128xf32>
    %1274 = vector.broadcast %cst_359 : f32 to vector<8x128xf32>
    %1275 = arith.select %1233, %1273, %1274 : vector<8x128xi1>, vector<8x128xf32>
    %cst_360 = arith.constant 0.000000e+00 : f32
    %1276 = vector.broadcast %40 : f32 to vector<8x128xf32>
    %1277 = vector.broadcast %cst_360 : f32 to vector<8x128xf32>
    %1278 = arith.select %1237, %1276, %1277 : vector<8x128xi1>, vector<8x128xf32>
    %1279 = arith.addf %1275, %1278 : vector<8x128xf32>
    %cst_361 = arith.constant 0.000000e+00 : f32
    %1280 = vector.broadcast %25 : f32 to vector<8x128xf32>
    %1281 = vector.broadcast %cst_361 : f32 to vector<8x128xf32>
    %1282 = arith.select %1234, %1280, %1281 : vector<8x128xi1>, vector<8x128xf32>
    %1283 = arith.addf %1279, %1282 : vector<8x128xf32>
    %cst_362 = arith.constant 0.000000e+00 : f32
    %1284 = vector.broadcast %41 : f32 to vector<8x128xf32>
    %1285 = vector.broadcast %cst_362 : f32 to vector<8x128xf32>
    %1286 = arith.select %1238, %1284, %1285 : vector<8x128xi1>, vector<8x128xf32>
    %1287 = arith.addf %1283, %1286 : vector<8x128xf32>
    %cst_363 = arith.constant 0.000000e+00 : f32
    %1288 = vector.broadcast %26 : f32 to vector<8x128xf32>
    %1289 = vector.broadcast %cst_363 : f32 to vector<8x128xf32>
    %1290 = arith.select %1235, %1288, %1289 : vector<8x128xi1>, vector<8x128xf32>
    %1291 = arith.addf %1287, %1290 : vector<8x128xf32>
    %cst_364 = arith.constant 0.000000e+00 : f32
    %1292 = vector.broadcast %27 : f32 to vector<8x128xf32>
    %1293 = vector.broadcast %cst_364 : f32 to vector<8x128xf32>
    %1294 = arith.select %1236, %1292, %1293 : vector<8x128xi1>, vector<8x128xf32>
    %1295 = arith.addf %1291, %1294 : vector<8x128xf32>
    %cst_365 = arith.constant 0.000000e+00 : f32
    %1296 = vector.broadcast %43 : f32 to vector<8x128xf32>
    %1297 = vector.broadcast %cst_365 : f32 to vector<8x128xf32>
    %1298 = arith.select %1239, %1296, %1297 : vector<8x128xi1>, vector<8x128xf32>
    %1299 = arith.addf %1295, %1298 : vector<8x128xf32>
    %1300 = arith.subf %53, %42 : f32
    %1301 = vector.broadcast %1300 : f32 to vector<8x128xf32>
    %1302 = arith.cmpf oge, %1299, %1301 : vector<8x128xf32>
    %cst_366 = arith.constant 0xFF800000 : f32
    %1303 = vector.broadcast %cst_366 : f32 to vector<8x128xf32>
    %1304 = arith.select %1302, %400, %1303 : vector<8x128xi1>, vector<8x128xf32>
    %1305 = arith.maximumf %1166, %1304 : vector<8x128xf32>
    %cst_367 = arith.constant 0.000000e+00 : f32
    %1306 = vector.broadcast %28 : f32 to vector<8x128xf32>
    %1307 = vector.broadcast %cst_367 : f32 to vector<8x128xf32>
    %1308 = arith.select %1233, %1306, %1307 : vector<8x128xi1>, vector<8x128xf32>
    %cst_368 = arith.constant 0.000000e+00 : f32
    %1309 = vector.broadcast %44 : f32 to vector<8x128xf32>
    %1310 = vector.broadcast %cst_368 : f32 to vector<8x128xf32>
    %1311 = arith.select %1237, %1309, %1310 : vector<8x128xi1>, vector<8x128xf32>
    %1312 = arith.addf %1308, %1311 : vector<8x128xf32>
    %cst_369 = arith.constant 0.000000e+00 : f32
    %1313 = vector.broadcast %29 : f32 to vector<8x128xf32>
    %1314 = vector.broadcast %cst_369 : f32 to vector<8x128xf32>
    %1315 = arith.select %1234, %1313, %1314 : vector<8x128xi1>, vector<8x128xf32>
    %1316 = arith.addf %1312, %1315 : vector<8x128xf32>
    %cst_370 = arith.constant 0.000000e+00 : f32
    %1317 = vector.broadcast %45 : f32 to vector<8x128xf32>
    %1318 = vector.broadcast %cst_370 : f32 to vector<8x128xf32>
    %1319 = arith.select %1238, %1317, %1318 : vector<8x128xi1>, vector<8x128xf32>
    %1320 = arith.addf %1316, %1319 : vector<8x128xf32>
    %cst_371 = arith.constant 0.000000e+00 : f32
    %1321 = vector.broadcast %30 : f32 to vector<8x128xf32>
    %1322 = vector.broadcast %cst_371 : f32 to vector<8x128xf32>
    %1323 = arith.select %1235, %1321, %1322 : vector<8x128xi1>, vector<8x128xf32>
    %1324 = arith.addf %1320, %1323 : vector<8x128xf32>
    %cst_372 = arith.constant 0.000000e+00 : f32
    %1325 = vector.broadcast %31 : f32 to vector<8x128xf32>
    %1326 = vector.broadcast %cst_372 : f32 to vector<8x128xf32>
    %1327 = arith.select %1236, %1325, %1326 : vector<8x128xi1>, vector<8x128xf32>
    %1328 = arith.addf %1324, %1327 : vector<8x128xf32>
    %cst_373 = arith.constant 0.000000e+00 : f32
    %1329 = vector.broadcast %47 : f32 to vector<8x128xf32>
    %1330 = vector.broadcast %cst_373 : f32 to vector<8x128xf32>
    %1331 = arith.select %1239, %1329, %1330 : vector<8x128xi1>, vector<8x128xf32>
    %1332 = arith.addf %1328, %1331 : vector<8x128xf32>
    %1333 = arith.subf %54, %46 : f32
    %1334 = vector.broadcast %1333 : f32 to vector<8x128xf32>
    %1335 = arith.cmpf oge, %1332, %1334 : vector<8x128xf32>
    %cst_374 = arith.constant 0xFF800000 : f32
    %1336 = vector.broadcast %cst_374 : f32 to vector<8x128xf32>
    %1337 = arith.select %1335, %400, %1336 : vector<8x128xi1>, vector<8x128xf32>
    %1338 = arith.maximumf %1199, %1337 : vector<8x128xf32>
    %cst_375 = arith.constant 0.000000e+00 : f32
    %1339 = vector.broadcast %32 : f32 to vector<8x128xf32>
    %1340 = vector.broadcast %cst_375 : f32 to vector<8x128xf32>
    %1341 = arith.select %1233, %1339, %1340 : vector<8x128xi1>, vector<8x128xf32>
    %cst_376 = arith.constant 0.000000e+00 : f32
    %1342 = vector.broadcast %48 : f32 to vector<8x128xf32>
    %1343 = vector.broadcast %cst_376 : f32 to vector<8x128xf32>
    %1344 = arith.select %1237, %1342, %1343 : vector<8x128xi1>, vector<8x128xf32>
    %1345 = arith.addf %1341, %1344 : vector<8x128xf32>
    %cst_377 = arith.constant 0.000000e+00 : f32
    %1346 = vector.broadcast %33 : f32 to vector<8x128xf32>
    %1347 = vector.broadcast %cst_377 : f32 to vector<8x128xf32>
    %1348 = arith.select %1234, %1346, %1347 : vector<8x128xi1>, vector<8x128xf32>
    %1349 = arith.addf %1345, %1348 : vector<8x128xf32>
    %cst_378 = arith.constant 0.000000e+00 : f32
    %1350 = vector.broadcast %49 : f32 to vector<8x128xf32>
    %1351 = vector.broadcast %cst_378 : f32 to vector<8x128xf32>
    %1352 = arith.select %1238, %1350, %1351 : vector<8x128xi1>, vector<8x128xf32>
    %1353 = arith.addf %1349, %1352 : vector<8x128xf32>
    %cst_379 = arith.constant 0.000000e+00 : f32
    %1354 = vector.broadcast %34 : f32 to vector<8x128xf32>
    %1355 = vector.broadcast %cst_379 : f32 to vector<8x128xf32>
    %1356 = arith.select %1235, %1354, %1355 : vector<8x128xi1>, vector<8x128xf32>
    %1357 = arith.addf %1353, %1356 : vector<8x128xf32>
    %cst_380 = arith.constant 0.000000e+00 : f32
    %1358 = vector.broadcast %35 : f32 to vector<8x128xf32>
    %1359 = vector.broadcast %cst_380 : f32 to vector<8x128xf32>
    %1360 = arith.select %1236, %1358, %1359 : vector<8x128xi1>, vector<8x128xf32>
    %1361 = arith.addf %1357, %1360 : vector<8x128xf32>
    %cst_381 = arith.constant 0.000000e+00 : f32
    %1362 = vector.broadcast %51 : f32 to vector<8x128xf32>
    %1363 = vector.broadcast %cst_381 : f32 to vector<8x128xf32>
    %1364 = arith.select %1239, %1362, %1363 : vector<8x128xi1>, vector<8x128xf32>
    %1365 = arith.addf %1361, %1364 : vector<8x128xf32>
    %1366 = arith.subf %55, %50 : f32
    %1367 = vector.broadcast %1366 : f32 to vector<8x128xf32>
    %1368 = arith.cmpf oge, %1365, %1367 : vector<8x128xf32>
    %cst_382 = arith.constant 0xFF800000 : f32
    %1369 = vector.broadcast %cst_382 : f32 to vector<8x128xf32>
    %1370 = arith.select %1368, %400, %1369 : vector<8x128xi1>, vector<8x128xf32>
    %1371 = arith.maximumf %1232, %1370 : vector<8x128xf32>
    %1372 = arith.cmpf oge, %343, %402 : vector<8x128xf32>
    %1373 = arith.cmpf oge, %360, %402 : vector<8x128xf32>
    %1374 = arith.cmpf oge, %377, %402 : vector<8x128xf32>
    %1375 = arith.cmpf oge, %394, %402 : vector<8x128xf32>
    %1376 = arith.cmpf oge, %396, %402 : vector<8x128xf32>
    %1377 = arith.cmpf oge, %398, %402 : vector<8x128xf32>
    %1378 = arith.cmpf oge, %400, %402 : vector<8x128xf32>
    %cst_383 = arith.constant 0.000000e+00 : f32
    %1379 = vector.broadcast %20 : f32 to vector<8x128xf32>
    %1380 = vector.broadcast %cst_383 : f32 to vector<8x128xf32>
    %1381 = arith.select %1372, %1379, %1380 : vector<8x128xi1>, vector<8x128xf32>
    %cst_384 = arith.constant 0.000000e+00 : f32
    %1382 = vector.broadcast %36 : f32 to vector<8x128xf32>
    %1383 = vector.broadcast %cst_384 : f32 to vector<8x128xf32>
    %1384 = arith.select %1376, %1382, %1383 : vector<8x128xi1>, vector<8x128xf32>
    %1385 = arith.addf %1381, %1384 : vector<8x128xf32>
    %cst_385 = arith.constant 0.000000e+00 : f32
    %1386 = vector.broadcast %21 : f32 to vector<8x128xf32>
    %1387 = vector.broadcast %cst_385 : f32 to vector<8x128xf32>
    %1388 = arith.select %1373, %1386, %1387 : vector<8x128xi1>, vector<8x128xf32>
    %1389 = arith.addf %1385, %1388 : vector<8x128xf32>
    %cst_386 = arith.constant 0.000000e+00 : f32
    %1390 = vector.broadcast %37 : f32 to vector<8x128xf32>
    %1391 = vector.broadcast %cst_386 : f32 to vector<8x128xf32>
    %1392 = arith.select %1377, %1390, %1391 : vector<8x128xi1>, vector<8x128xf32>
    %1393 = arith.addf %1389, %1392 : vector<8x128xf32>
    %cst_387 = arith.constant 0.000000e+00 : f32
    %1394 = vector.broadcast %22 : f32 to vector<8x128xf32>
    %1395 = vector.broadcast %cst_387 : f32 to vector<8x128xf32>
    %1396 = arith.select %1374, %1394, %1395 : vector<8x128xi1>, vector<8x128xf32>
    %1397 = arith.addf %1393, %1396 : vector<8x128xf32>
    %cst_388 = arith.constant 0.000000e+00 : f32
    %1398 = vector.broadcast %38 : f32 to vector<8x128xf32>
    %1399 = vector.broadcast %cst_388 : f32 to vector<8x128xf32>
    %1400 = arith.select %1378, %1398, %1399 : vector<8x128xi1>, vector<8x128xf32>
    %1401 = arith.addf %1397, %1400 : vector<8x128xf32>
    %cst_389 = arith.constant 0.000000e+00 : f32
    %1402 = vector.broadcast %23 : f32 to vector<8x128xf32>
    %1403 = vector.broadcast %cst_389 : f32 to vector<8x128xf32>
    %1404 = arith.select %1375, %1402, %1403 : vector<8x128xi1>, vector<8x128xf32>
    %1405 = arith.addf %1401, %1404 : vector<8x128xf32>
    %1406 = arith.subf %52, %39 : f32
    %1407 = vector.broadcast %1406 : f32 to vector<8x128xf32>
    %1408 = arith.cmpf oge, %1405, %1407 : vector<8x128xf32>
    %cst_390 = arith.constant 0xFF800000 : f32
    %1409 = vector.broadcast %cst_390 : f32 to vector<8x128xf32>
    %1410 = arith.select %1408, %402, %1409 : vector<8x128xi1>, vector<8x128xf32>
    %1411 = arith.maximumf %1272, %1410 : vector<8x128xf32>
    %cst_391 = arith.constant 0.000000e+00 : f32
    %1412 = vector.broadcast %24 : f32 to vector<8x128xf32>
    %1413 = vector.broadcast %cst_391 : f32 to vector<8x128xf32>
    %1414 = arith.select %1372, %1412, %1413 : vector<8x128xi1>, vector<8x128xf32>
    %cst_392 = arith.constant 0.000000e+00 : f32
    %1415 = vector.broadcast %40 : f32 to vector<8x128xf32>
    %1416 = vector.broadcast %cst_392 : f32 to vector<8x128xf32>
    %1417 = arith.select %1376, %1415, %1416 : vector<8x128xi1>, vector<8x128xf32>
    %1418 = arith.addf %1414, %1417 : vector<8x128xf32>
    %cst_393 = arith.constant 0.000000e+00 : f32
    %1419 = vector.broadcast %25 : f32 to vector<8x128xf32>
    %1420 = vector.broadcast %cst_393 : f32 to vector<8x128xf32>
    %1421 = arith.select %1373, %1419, %1420 : vector<8x128xi1>, vector<8x128xf32>
    %1422 = arith.addf %1418, %1421 : vector<8x128xf32>
    %cst_394 = arith.constant 0.000000e+00 : f32
    %1423 = vector.broadcast %41 : f32 to vector<8x128xf32>
    %1424 = vector.broadcast %cst_394 : f32 to vector<8x128xf32>
    %1425 = arith.select %1377, %1423, %1424 : vector<8x128xi1>, vector<8x128xf32>
    %1426 = arith.addf %1422, %1425 : vector<8x128xf32>
    %cst_395 = arith.constant 0.000000e+00 : f32
    %1427 = vector.broadcast %26 : f32 to vector<8x128xf32>
    %1428 = vector.broadcast %cst_395 : f32 to vector<8x128xf32>
    %1429 = arith.select %1374, %1427, %1428 : vector<8x128xi1>, vector<8x128xf32>
    %1430 = arith.addf %1426, %1429 : vector<8x128xf32>
    %cst_396 = arith.constant 0.000000e+00 : f32
    %1431 = vector.broadcast %42 : f32 to vector<8x128xf32>
    %1432 = vector.broadcast %cst_396 : f32 to vector<8x128xf32>
    %1433 = arith.select %1378, %1431, %1432 : vector<8x128xi1>, vector<8x128xf32>
    %1434 = arith.addf %1430, %1433 : vector<8x128xf32>
    %cst_397 = arith.constant 0.000000e+00 : f32
    %1435 = vector.broadcast %27 : f32 to vector<8x128xf32>
    %1436 = vector.broadcast %cst_397 : f32 to vector<8x128xf32>
    %1437 = arith.select %1375, %1435, %1436 : vector<8x128xi1>, vector<8x128xf32>
    %1438 = arith.addf %1434, %1437 : vector<8x128xf32>
    %1439 = arith.subf %53, %43 : f32
    %1440 = vector.broadcast %1439 : f32 to vector<8x128xf32>
    %1441 = arith.cmpf oge, %1438, %1440 : vector<8x128xf32>
    %cst_398 = arith.constant 0xFF800000 : f32
    %1442 = vector.broadcast %cst_398 : f32 to vector<8x128xf32>
    %1443 = arith.select %1441, %402, %1442 : vector<8x128xi1>, vector<8x128xf32>
    %1444 = arith.maximumf %1305, %1443 : vector<8x128xf32>
    %cst_399 = arith.constant 0.000000e+00 : f32
    %1445 = vector.broadcast %28 : f32 to vector<8x128xf32>
    %1446 = vector.broadcast %cst_399 : f32 to vector<8x128xf32>
    %1447 = arith.select %1372, %1445, %1446 : vector<8x128xi1>, vector<8x128xf32>
    %cst_400 = arith.constant 0.000000e+00 : f32
    %1448 = vector.broadcast %44 : f32 to vector<8x128xf32>
    %1449 = vector.broadcast %cst_400 : f32 to vector<8x128xf32>
    %1450 = arith.select %1376, %1448, %1449 : vector<8x128xi1>, vector<8x128xf32>
    %1451 = arith.addf %1447, %1450 : vector<8x128xf32>
    %cst_401 = arith.constant 0.000000e+00 : f32
    %1452 = vector.broadcast %29 : f32 to vector<8x128xf32>
    %1453 = vector.broadcast %cst_401 : f32 to vector<8x128xf32>
    %1454 = arith.select %1373, %1452, %1453 : vector<8x128xi1>, vector<8x128xf32>
    %1455 = arith.addf %1451, %1454 : vector<8x128xf32>
    %cst_402 = arith.constant 0.000000e+00 : f32
    %1456 = vector.broadcast %45 : f32 to vector<8x128xf32>
    %1457 = vector.broadcast %cst_402 : f32 to vector<8x128xf32>
    %1458 = arith.select %1377, %1456, %1457 : vector<8x128xi1>, vector<8x128xf32>
    %1459 = arith.addf %1455, %1458 : vector<8x128xf32>
    %cst_403 = arith.constant 0.000000e+00 : f32
    %1460 = vector.broadcast %30 : f32 to vector<8x128xf32>
    %1461 = vector.broadcast %cst_403 : f32 to vector<8x128xf32>
    %1462 = arith.select %1374, %1460, %1461 : vector<8x128xi1>, vector<8x128xf32>
    %1463 = arith.addf %1459, %1462 : vector<8x128xf32>
    %cst_404 = arith.constant 0.000000e+00 : f32
    %1464 = vector.broadcast %46 : f32 to vector<8x128xf32>
    %1465 = vector.broadcast %cst_404 : f32 to vector<8x128xf32>
    %1466 = arith.select %1378, %1464, %1465 : vector<8x128xi1>, vector<8x128xf32>
    %1467 = arith.addf %1463, %1466 : vector<8x128xf32>
    %cst_405 = arith.constant 0.000000e+00 : f32
    %1468 = vector.broadcast %31 : f32 to vector<8x128xf32>
    %1469 = vector.broadcast %cst_405 : f32 to vector<8x128xf32>
    %1470 = arith.select %1375, %1468, %1469 : vector<8x128xi1>, vector<8x128xf32>
    %1471 = arith.addf %1467, %1470 : vector<8x128xf32>
    %1472 = arith.subf %54, %47 : f32
    %1473 = vector.broadcast %1472 : f32 to vector<8x128xf32>
    %1474 = arith.cmpf oge, %1471, %1473 : vector<8x128xf32>
    %cst_406 = arith.constant 0xFF800000 : f32
    %1475 = vector.broadcast %cst_406 : f32 to vector<8x128xf32>
    %1476 = arith.select %1474, %402, %1475 : vector<8x128xi1>, vector<8x128xf32>
    %1477 = arith.maximumf %1338, %1476 : vector<8x128xf32>
    %cst_407 = arith.constant 0.000000e+00 : f32
    %1478 = vector.broadcast %32 : f32 to vector<8x128xf32>
    %1479 = vector.broadcast %cst_407 : f32 to vector<8x128xf32>
    %1480 = arith.select %1372, %1478, %1479 : vector<8x128xi1>, vector<8x128xf32>
    %cst_408 = arith.constant 0.000000e+00 : f32
    %1481 = vector.broadcast %48 : f32 to vector<8x128xf32>
    %1482 = vector.broadcast %cst_408 : f32 to vector<8x128xf32>
    %1483 = arith.select %1376, %1481, %1482 : vector<8x128xi1>, vector<8x128xf32>
    %1484 = arith.addf %1480, %1483 : vector<8x128xf32>
    %cst_409 = arith.constant 0.000000e+00 : f32
    %1485 = vector.broadcast %33 : f32 to vector<8x128xf32>
    %1486 = vector.broadcast %cst_409 : f32 to vector<8x128xf32>
    %1487 = arith.select %1373, %1485, %1486 : vector<8x128xi1>, vector<8x128xf32>
    %1488 = arith.addf %1484, %1487 : vector<8x128xf32>
    %cst_410 = arith.constant 0.000000e+00 : f32
    %1489 = vector.broadcast %49 : f32 to vector<8x128xf32>
    %1490 = vector.broadcast %cst_410 : f32 to vector<8x128xf32>
    %1491 = arith.select %1377, %1489, %1490 : vector<8x128xi1>, vector<8x128xf32>
    %1492 = arith.addf %1488, %1491 : vector<8x128xf32>
    %cst_411 = arith.constant 0.000000e+00 : f32
    %1493 = vector.broadcast %34 : f32 to vector<8x128xf32>
    %1494 = vector.broadcast %cst_411 : f32 to vector<8x128xf32>
    %1495 = arith.select %1374, %1493, %1494 : vector<8x128xi1>, vector<8x128xf32>
    %1496 = arith.addf %1492, %1495 : vector<8x128xf32>
    %cst_412 = arith.constant 0.000000e+00 : f32
    %1497 = vector.broadcast %50 : f32 to vector<8x128xf32>
    %1498 = vector.broadcast %cst_412 : f32 to vector<8x128xf32>
    %1499 = arith.select %1378, %1497, %1498 : vector<8x128xi1>, vector<8x128xf32>
    %1500 = arith.addf %1496, %1499 : vector<8x128xf32>
    %cst_413 = arith.constant 0.000000e+00 : f32
    %1501 = vector.broadcast %35 : f32 to vector<8x128xf32>
    %1502 = vector.broadcast %cst_413 : f32 to vector<8x128xf32>
    %1503 = arith.select %1375, %1501, %1502 : vector<8x128xi1>, vector<8x128xf32>
    %1504 = arith.addf %1500, %1503 : vector<8x128xf32>
    %1505 = arith.subf %55, %51 : f32
    %1506 = vector.broadcast %1505 : f32 to vector<8x128xf32>
    %1507 = arith.cmpf oge, %1504, %1506 : vector<8x128xf32>
    %cst_414 = arith.constant 0xFF800000 : f32
    %1508 = vector.broadcast %cst_414 : f32 to vector<8x128xf32>
    %1509 = arith.select %1507, %402, %1508 : vector<8x128xi1>, vector<8x128xf32>
    %1510 = arith.maximumf %1371, %1509 : vector<8x128xf32>
    %cst_415 = arith.constant 0.000000e+00 : f32
    %1511 = vector.broadcast %cst_415 : f32 to vector<8x128xf32>
    %1512 = arith.subf %1511, %1411 : vector<8x128xf32>
    %cst_416 = arith.constant 0.000000e+00 : f32
    %1513 = vector.broadcast %cst_416 : f32 to vector<8x128xf32>
    %1514 = arith.subf %1513, %1444 : vector<8x128xf32>
    %cst_417 = arith.constant 0.000000e+00 : f32
    %1515 = vector.broadcast %cst_417 : f32 to vector<8x128xf32>
    %1516 = arith.subf %1515, %1477 : vector<8x128xf32>
    %cst_418 = arith.constant 0.000000e+00 : f32
    %1517 = vector.broadcast %cst_418 : f32 to vector<8x128xf32>
    %1518 = arith.subf %1517, %1510 : vector<8x128xf32>
    %1519 = arith.cmpf oge, %1444, %1411 : vector<8x128xf32>
    %1520 = arith.cmpf oge, %1477, %1411 : vector<8x128xf32>
    %1521 = arith.cmpf oge, %1510, %1411 : vector<8x128xf32>
    %1522 = arith.cmpf oge, %1512, %1411 : vector<8x128xf32>
    %1523 = arith.cmpf oge, %1514, %1411 : vector<8x128xf32>
    %1524 = arith.cmpf oge, %1516, %1411 : vector<8x128xf32>
    %1525 = arith.cmpf oge, %1518, %1411 : vector<8x128xf32>
    %cst_419 = arith.constant 0.000000e+00 : f32
    %1526 = vector.broadcast %72 : f32 to vector<8x128xf32>
    %1527 = vector.broadcast %cst_419 : f32 to vector<8x128xf32>
    %1528 = arith.select %1522, %1526, %1527 : vector<8x128xi1>, vector<8x128xf32>
    %cst_420 = arith.constant 0.000000e+00 : f32
    %1529 = vector.broadcast %57 : f32 to vector<8x128xf32>
    %1530 = vector.broadcast %cst_420 : f32 to vector<8x128xf32>
    %1531 = arith.select %1519, %1529, %1530 : vector<8x128xi1>, vector<8x128xf32>
    %1532 = arith.addf %1528, %1531 : vector<8x128xf32>
    %cst_421 = arith.constant 0.000000e+00 : f32
    %1533 = vector.broadcast %73 : f32 to vector<8x128xf32>
    %1534 = vector.broadcast %cst_421 : f32 to vector<8x128xf32>
    %1535 = arith.select %1523, %1533, %1534 : vector<8x128xi1>, vector<8x128xf32>
    %1536 = arith.addf %1532, %1535 : vector<8x128xf32>
    %cst_422 = arith.constant 0.000000e+00 : f32
    %1537 = vector.broadcast %58 : f32 to vector<8x128xf32>
    %1538 = vector.broadcast %cst_422 : f32 to vector<8x128xf32>
    %1539 = arith.select %1520, %1537, %1538 : vector<8x128xi1>, vector<8x128xf32>
    %1540 = arith.addf %1536, %1539 : vector<8x128xf32>
    %cst_423 = arith.constant 0.000000e+00 : f32
    %1541 = vector.broadcast %74 : f32 to vector<8x128xf32>
    %1542 = vector.broadcast %cst_423 : f32 to vector<8x128xf32>
    %1543 = arith.select %1524, %1541, %1542 : vector<8x128xi1>, vector<8x128xf32>
    %1544 = arith.addf %1540, %1543 : vector<8x128xf32>
    %cst_424 = arith.constant 0.000000e+00 : f32
    %1545 = vector.broadcast %59 : f32 to vector<8x128xf32>
    %1546 = vector.broadcast %cst_424 : f32 to vector<8x128xf32>
    %1547 = arith.select %1521, %1545, %1546 : vector<8x128xi1>, vector<8x128xf32>
    %1548 = arith.addf %1544, %1547 : vector<8x128xf32>
    %cst_425 = arith.constant 0.000000e+00 : f32
    %1549 = vector.broadcast %75 : f32 to vector<8x128xf32>
    %1550 = vector.broadcast %cst_425 : f32 to vector<8x128xf32>
    %1551 = arith.select %1525, %1549, %1550 : vector<8x128xi1>, vector<8x128xf32>
    %1552 = arith.addf %1548, %1551 : vector<8x128xf32>
    %1553 = arith.subf %88, %56 : f32
    %1554 = vector.broadcast %1553 : f32 to vector<8x128xf32>
    %1555 = arith.cmpf oge, %1552, %1554 : vector<8x128xf32>
    %cst_426 = arith.constant 0xFF800000 : f32
    %1556 = vector.broadcast %cst_426 : f32 to vector<8x128xf32>
    %1557 = arith.select %1555, %1411, %1556 : vector<8x128xi1>, vector<8x128xf32>
    %cst_427 = arith.constant 0.000000e+00 : f32
    %1558 = vector.broadcast %76 : f32 to vector<8x128xf32>
    %1559 = vector.broadcast %cst_427 : f32 to vector<8x128xf32>
    %1560 = arith.select %1522, %1558, %1559 : vector<8x128xi1>, vector<8x128xf32>
    %cst_428 = arith.constant 0.000000e+00 : f32
    %1561 = vector.broadcast %61 : f32 to vector<8x128xf32>
    %1562 = vector.broadcast %cst_428 : f32 to vector<8x128xf32>
    %1563 = arith.select %1519, %1561, %1562 : vector<8x128xi1>, vector<8x128xf32>
    %1564 = arith.addf %1560, %1563 : vector<8x128xf32>
    %cst_429 = arith.constant 0.000000e+00 : f32
    %1565 = vector.broadcast %77 : f32 to vector<8x128xf32>
    %1566 = vector.broadcast %cst_429 : f32 to vector<8x128xf32>
    %1567 = arith.select %1523, %1565, %1566 : vector<8x128xi1>, vector<8x128xf32>
    %1568 = arith.addf %1564, %1567 : vector<8x128xf32>
    %cst_430 = arith.constant 0.000000e+00 : f32
    %1569 = vector.broadcast %62 : f32 to vector<8x128xf32>
    %1570 = vector.broadcast %cst_430 : f32 to vector<8x128xf32>
    %1571 = arith.select %1520, %1569, %1570 : vector<8x128xi1>, vector<8x128xf32>
    %1572 = arith.addf %1568, %1571 : vector<8x128xf32>
    %cst_431 = arith.constant 0.000000e+00 : f32
    %1573 = vector.broadcast %78 : f32 to vector<8x128xf32>
    %1574 = vector.broadcast %cst_431 : f32 to vector<8x128xf32>
    %1575 = arith.select %1524, %1573, %1574 : vector<8x128xi1>, vector<8x128xf32>
    %1576 = arith.addf %1572, %1575 : vector<8x128xf32>
    %cst_432 = arith.constant 0.000000e+00 : f32
    %1577 = vector.broadcast %63 : f32 to vector<8x128xf32>
    %1578 = vector.broadcast %cst_432 : f32 to vector<8x128xf32>
    %1579 = arith.select %1521, %1577, %1578 : vector<8x128xi1>, vector<8x128xf32>
    %1580 = arith.addf %1576, %1579 : vector<8x128xf32>
    %cst_433 = arith.constant 0.000000e+00 : f32
    %1581 = vector.broadcast %79 : f32 to vector<8x128xf32>
    %1582 = vector.broadcast %cst_433 : f32 to vector<8x128xf32>
    %1583 = arith.select %1525, %1581, %1582 : vector<8x128xi1>, vector<8x128xf32>
    %1584 = arith.addf %1580, %1583 : vector<8x128xf32>
    %1585 = arith.subf %89, %60 : f32
    %1586 = vector.broadcast %1585 : f32 to vector<8x128xf32>
    %1587 = arith.cmpf oge, %1584, %1586 : vector<8x128xf32>
    %cst_434 = arith.constant 0xFF800000 : f32
    %1588 = vector.broadcast %cst_434 : f32 to vector<8x128xf32>
    %1589 = arith.select %1587, %1411, %1588 : vector<8x128xi1>, vector<8x128xf32>
    %cst_435 = arith.constant 0.000000e+00 : f32
    %1590 = vector.broadcast %80 : f32 to vector<8x128xf32>
    %1591 = vector.broadcast %cst_435 : f32 to vector<8x128xf32>
    %1592 = arith.select %1522, %1590, %1591 : vector<8x128xi1>, vector<8x128xf32>
    %cst_436 = arith.constant 0.000000e+00 : f32
    %1593 = vector.broadcast %65 : f32 to vector<8x128xf32>
    %1594 = vector.broadcast %cst_436 : f32 to vector<8x128xf32>
    %1595 = arith.select %1519, %1593, %1594 : vector<8x128xi1>, vector<8x128xf32>
    %1596 = arith.addf %1592, %1595 : vector<8x128xf32>
    %cst_437 = arith.constant 0.000000e+00 : f32
    %1597 = vector.broadcast %81 : f32 to vector<8x128xf32>
    %1598 = vector.broadcast %cst_437 : f32 to vector<8x128xf32>
    %1599 = arith.select %1523, %1597, %1598 : vector<8x128xi1>, vector<8x128xf32>
    %1600 = arith.addf %1596, %1599 : vector<8x128xf32>
    %cst_438 = arith.constant 0.000000e+00 : f32
    %1601 = vector.broadcast %66 : f32 to vector<8x128xf32>
    %1602 = vector.broadcast %cst_438 : f32 to vector<8x128xf32>
    %1603 = arith.select %1520, %1601, %1602 : vector<8x128xi1>, vector<8x128xf32>
    %1604 = arith.addf %1600, %1603 : vector<8x128xf32>
    %cst_439 = arith.constant 0.000000e+00 : f32
    %1605 = vector.broadcast %82 : f32 to vector<8x128xf32>
    %1606 = vector.broadcast %cst_439 : f32 to vector<8x128xf32>
    %1607 = arith.select %1524, %1605, %1606 : vector<8x128xi1>, vector<8x128xf32>
    %1608 = arith.addf %1604, %1607 : vector<8x128xf32>
    %cst_440 = arith.constant 0.000000e+00 : f32
    %1609 = vector.broadcast %67 : f32 to vector<8x128xf32>
    %1610 = vector.broadcast %cst_440 : f32 to vector<8x128xf32>
    %1611 = arith.select %1521, %1609, %1610 : vector<8x128xi1>, vector<8x128xf32>
    %1612 = arith.addf %1608, %1611 : vector<8x128xf32>
    %cst_441 = arith.constant 0.000000e+00 : f32
    %1613 = vector.broadcast %83 : f32 to vector<8x128xf32>
    %1614 = vector.broadcast %cst_441 : f32 to vector<8x128xf32>
    %1615 = arith.select %1525, %1613, %1614 : vector<8x128xi1>, vector<8x128xf32>
    %1616 = arith.addf %1612, %1615 : vector<8x128xf32>
    %1617 = arith.subf %90, %64 : f32
    %1618 = vector.broadcast %1617 : f32 to vector<8x128xf32>
    %1619 = arith.cmpf oge, %1616, %1618 : vector<8x128xf32>
    %cst_442 = arith.constant 0xFF800000 : f32
    %1620 = vector.broadcast %cst_442 : f32 to vector<8x128xf32>
    %1621 = arith.select %1619, %1411, %1620 : vector<8x128xi1>, vector<8x128xf32>
    %cst_443 = arith.constant 0.000000e+00 : f32
    %1622 = vector.broadcast %84 : f32 to vector<8x128xf32>
    %1623 = vector.broadcast %cst_443 : f32 to vector<8x128xf32>
    %1624 = arith.select %1522, %1622, %1623 : vector<8x128xi1>, vector<8x128xf32>
    %cst_444 = arith.constant 0.000000e+00 : f32
    %1625 = vector.broadcast %69 : f32 to vector<8x128xf32>
    %1626 = vector.broadcast %cst_444 : f32 to vector<8x128xf32>
    %1627 = arith.select %1519, %1625, %1626 : vector<8x128xi1>, vector<8x128xf32>
    %1628 = arith.addf %1624, %1627 : vector<8x128xf32>
    %cst_445 = arith.constant 0.000000e+00 : f32
    %1629 = vector.broadcast %85 : f32 to vector<8x128xf32>
    %1630 = vector.broadcast %cst_445 : f32 to vector<8x128xf32>
    %1631 = arith.select %1523, %1629, %1630 : vector<8x128xi1>, vector<8x128xf32>
    %1632 = arith.addf %1628, %1631 : vector<8x128xf32>
    %cst_446 = arith.constant 0.000000e+00 : f32
    %1633 = vector.broadcast %70 : f32 to vector<8x128xf32>
    %1634 = vector.broadcast %cst_446 : f32 to vector<8x128xf32>
    %1635 = arith.select %1520, %1633, %1634 : vector<8x128xi1>, vector<8x128xf32>
    %1636 = arith.addf %1632, %1635 : vector<8x128xf32>
    %cst_447 = arith.constant 0.000000e+00 : f32
    %1637 = vector.broadcast %86 : f32 to vector<8x128xf32>
    %1638 = vector.broadcast %cst_447 : f32 to vector<8x128xf32>
    %1639 = arith.select %1524, %1637, %1638 : vector<8x128xi1>, vector<8x128xf32>
    %1640 = arith.addf %1636, %1639 : vector<8x128xf32>
    %cst_448 = arith.constant 0.000000e+00 : f32
    %1641 = vector.broadcast %71 : f32 to vector<8x128xf32>
    %1642 = vector.broadcast %cst_448 : f32 to vector<8x128xf32>
    %1643 = arith.select %1521, %1641, %1642 : vector<8x128xi1>, vector<8x128xf32>
    %1644 = arith.addf %1640, %1643 : vector<8x128xf32>
    %cst_449 = arith.constant 0.000000e+00 : f32
    %1645 = vector.broadcast %87 : f32 to vector<8x128xf32>
    %1646 = vector.broadcast %cst_449 : f32 to vector<8x128xf32>
    %1647 = arith.select %1525, %1645, %1646 : vector<8x128xi1>, vector<8x128xf32>
    %1648 = arith.addf %1644, %1647 : vector<8x128xf32>
    %1649 = arith.subf %91, %68 : f32
    %1650 = vector.broadcast %1649 : f32 to vector<8x128xf32>
    %1651 = arith.cmpf oge, %1648, %1650 : vector<8x128xf32>
    %cst_450 = arith.constant 0xFF800000 : f32
    %1652 = vector.broadcast %cst_450 : f32 to vector<8x128xf32>
    %1653 = arith.select %1651, %1411, %1652 : vector<8x128xi1>, vector<8x128xf32>
    %1654 = arith.cmpf oge, %1411, %1444 : vector<8x128xf32>
    %1655 = arith.cmpf oge, %1477, %1444 : vector<8x128xf32>
    %1656 = arith.cmpf oge, %1510, %1444 : vector<8x128xf32>
    %1657 = arith.cmpf oge, %1512, %1444 : vector<8x128xf32>
    %1658 = arith.cmpf oge, %1514, %1444 : vector<8x128xf32>
    %1659 = arith.cmpf oge, %1516, %1444 : vector<8x128xf32>
    %1660 = arith.cmpf oge, %1518, %1444 : vector<8x128xf32>
    %cst_451 = arith.constant 0.000000e+00 : f32
    %1661 = vector.broadcast %56 : f32 to vector<8x128xf32>
    %1662 = vector.broadcast %cst_451 : f32 to vector<8x128xf32>
    %1663 = arith.select %1654, %1661, %1662 : vector<8x128xi1>, vector<8x128xf32>
    %cst_452 = arith.constant 0.000000e+00 : f32
    %1664 = vector.broadcast %72 : f32 to vector<8x128xf32>
    %1665 = vector.broadcast %cst_452 : f32 to vector<8x128xf32>
    %1666 = arith.select %1657, %1664, %1665 : vector<8x128xi1>, vector<8x128xf32>
    %1667 = arith.addf %1663, %1666 : vector<8x128xf32>
    %cst_453 = arith.constant 0.000000e+00 : f32
    %1668 = vector.broadcast %73 : f32 to vector<8x128xf32>
    %1669 = vector.broadcast %cst_453 : f32 to vector<8x128xf32>
    %1670 = arith.select %1658, %1668, %1669 : vector<8x128xi1>, vector<8x128xf32>
    %1671 = arith.addf %1667, %1670 : vector<8x128xf32>
    %cst_454 = arith.constant 0.000000e+00 : f32
    %1672 = vector.broadcast %58 : f32 to vector<8x128xf32>
    %1673 = vector.broadcast %cst_454 : f32 to vector<8x128xf32>
    %1674 = arith.select %1655, %1672, %1673 : vector<8x128xi1>, vector<8x128xf32>
    %1675 = arith.addf %1671, %1674 : vector<8x128xf32>
    %cst_455 = arith.constant 0.000000e+00 : f32
    %1676 = vector.broadcast %74 : f32 to vector<8x128xf32>
    %1677 = vector.broadcast %cst_455 : f32 to vector<8x128xf32>
    %1678 = arith.select %1659, %1676, %1677 : vector<8x128xi1>, vector<8x128xf32>
    %1679 = arith.addf %1675, %1678 : vector<8x128xf32>
    %cst_456 = arith.constant 0.000000e+00 : f32
    %1680 = vector.broadcast %59 : f32 to vector<8x128xf32>
    %1681 = vector.broadcast %cst_456 : f32 to vector<8x128xf32>
    %1682 = arith.select %1656, %1680, %1681 : vector<8x128xi1>, vector<8x128xf32>
    %1683 = arith.addf %1679, %1682 : vector<8x128xf32>
    %cst_457 = arith.constant 0.000000e+00 : f32
    %1684 = vector.broadcast %75 : f32 to vector<8x128xf32>
    %1685 = vector.broadcast %cst_457 : f32 to vector<8x128xf32>
    %1686 = arith.select %1660, %1684, %1685 : vector<8x128xi1>, vector<8x128xf32>
    %1687 = arith.addf %1683, %1686 : vector<8x128xf32>
    %1688 = arith.subf %88, %57 : f32
    %1689 = vector.broadcast %1688 : f32 to vector<8x128xf32>
    %1690 = arith.cmpf oge, %1687, %1689 : vector<8x128xf32>
    %cst_458 = arith.constant 0xFF800000 : f32
    %1691 = vector.broadcast %cst_458 : f32 to vector<8x128xf32>
    %1692 = arith.select %1690, %1444, %1691 : vector<8x128xi1>, vector<8x128xf32>
    %1693 = arith.maximumf %1557, %1692 : vector<8x128xf32>
    %cst_459 = arith.constant 0.000000e+00 : f32
    %1694 = vector.broadcast %60 : f32 to vector<8x128xf32>
    %1695 = vector.broadcast %cst_459 : f32 to vector<8x128xf32>
    %1696 = arith.select %1654, %1694, %1695 : vector<8x128xi1>, vector<8x128xf32>
    %cst_460 = arith.constant 0.000000e+00 : f32
    %1697 = vector.broadcast %76 : f32 to vector<8x128xf32>
    %1698 = vector.broadcast %cst_460 : f32 to vector<8x128xf32>
    %1699 = arith.select %1657, %1697, %1698 : vector<8x128xi1>, vector<8x128xf32>
    %1700 = arith.addf %1696, %1699 : vector<8x128xf32>
    %cst_461 = arith.constant 0.000000e+00 : f32
    %1701 = vector.broadcast %77 : f32 to vector<8x128xf32>
    %1702 = vector.broadcast %cst_461 : f32 to vector<8x128xf32>
    %1703 = arith.select %1658, %1701, %1702 : vector<8x128xi1>, vector<8x128xf32>
    %1704 = arith.addf %1700, %1703 : vector<8x128xf32>
    %cst_462 = arith.constant 0.000000e+00 : f32
    %1705 = vector.broadcast %62 : f32 to vector<8x128xf32>
    %1706 = vector.broadcast %cst_462 : f32 to vector<8x128xf32>
    %1707 = arith.select %1655, %1705, %1706 : vector<8x128xi1>, vector<8x128xf32>
    %1708 = arith.addf %1704, %1707 : vector<8x128xf32>
    %cst_463 = arith.constant 0.000000e+00 : f32
    %1709 = vector.broadcast %78 : f32 to vector<8x128xf32>
    %1710 = vector.broadcast %cst_463 : f32 to vector<8x128xf32>
    %1711 = arith.select %1659, %1709, %1710 : vector<8x128xi1>, vector<8x128xf32>
    %1712 = arith.addf %1708, %1711 : vector<8x128xf32>
    %cst_464 = arith.constant 0.000000e+00 : f32
    %1713 = vector.broadcast %63 : f32 to vector<8x128xf32>
    %1714 = vector.broadcast %cst_464 : f32 to vector<8x128xf32>
    %1715 = arith.select %1656, %1713, %1714 : vector<8x128xi1>, vector<8x128xf32>
    %1716 = arith.addf %1712, %1715 : vector<8x128xf32>
    %cst_465 = arith.constant 0.000000e+00 : f32
    %1717 = vector.broadcast %79 : f32 to vector<8x128xf32>
    %1718 = vector.broadcast %cst_465 : f32 to vector<8x128xf32>
    %1719 = arith.select %1660, %1717, %1718 : vector<8x128xi1>, vector<8x128xf32>
    %1720 = arith.addf %1716, %1719 : vector<8x128xf32>
    %1721 = arith.subf %89, %61 : f32
    %1722 = vector.broadcast %1721 : f32 to vector<8x128xf32>
    %1723 = arith.cmpf oge, %1720, %1722 : vector<8x128xf32>
    %cst_466 = arith.constant 0xFF800000 : f32
    %1724 = vector.broadcast %cst_466 : f32 to vector<8x128xf32>
    %1725 = arith.select %1723, %1444, %1724 : vector<8x128xi1>, vector<8x128xf32>
    %1726 = arith.maximumf %1589, %1725 : vector<8x128xf32>
    %cst_467 = arith.constant 0.000000e+00 : f32
    %1727 = vector.broadcast %64 : f32 to vector<8x128xf32>
    %1728 = vector.broadcast %cst_467 : f32 to vector<8x128xf32>
    %1729 = arith.select %1654, %1727, %1728 : vector<8x128xi1>, vector<8x128xf32>
    %cst_468 = arith.constant 0.000000e+00 : f32
    %1730 = vector.broadcast %80 : f32 to vector<8x128xf32>
    %1731 = vector.broadcast %cst_468 : f32 to vector<8x128xf32>
    %1732 = arith.select %1657, %1730, %1731 : vector<8x128xi1>, vector<8x128xf32>
    %1733 = arith.addf %1729, %1732 : vector<8x128xf32>
    %cst_469 = arith.constant 0.000000e+00 : f32
    %1734 = vector.broadcast %81 : f32 to vector<8x128xf32>
    %1735 = vector.broadcast %cst_469 : f32 to vector<8x128xf32>
    %1736 = arith.select %1658, %1734, %1735 : vector<8x128xi1>, vector<8x128xf32>
    %1737 = arith.addf %1733, %1736 : vector<8x128xf32>
    %cst_470 = arith.constant 0.000000e+00 : f32
    %1738 = vector.broadcast %66 : f32 to vector<8x128xf32>
    %1739 = vector.broadcast %cst_470 : f32 to vector<8x128xf32>
    %1740 = arith.select %1655, %1738, %1739 : vector<8x128xi1>, vector<8x128xf32>
    %1741 = arith.addf %1737, %1740 : vector<8x128xf32>
    %cst_471 = arith.constant 0.000000e+00 : f32
    %1742 = vector.broadcast %82 : f32 to vector<8x128xf32>
    %1743 = vector.broadcast %cst_471 : f32 to vector<8x128xf32>
    %1744 = arith.select %1659, %1742, %1743 : vector<8x128xi1>, vector<8x128xf32>
    %1745 = arith.addf %1741, %1744 : vector<8x128xf32>
    %cst_472 = arith.constant 0.000000e+00 : f32
    %1746 = vector.broadcast %67 : f32 to vector<8x128xf32>
    %1747 = vector.broadcast %cst_472 : f32 to vector<8x128xf32>
    %1748 = arith.select %1656, %1746, %1747 : vector<8x128xi1>, vector<8x128xf32>
    %1749 = arith.addf %1745, %1748 : vector<8x128xf32>
    %cst_473 = arith.constant 0.000000e+00 : f32
    %1750 = vector.broadcast %83 : f32 to vector<8x128xf32>
    %1751 = vector.broadcast %cst_473 : f32 to vector<8x128xf32>
    %1752 = arith.select %1660, %1750, %1751 : vector<8x128xi1>, vector<8x128xf32>
    %1753 = arith.addf %1749, %1752 : vector<8x128xf32>
    %1754 = arith.subf %90, %65 : f32
    %1755 = vector.broadcast %1754 : f32 to vector<8x128xf32>
    %1756 = arith.cmpf oge, %1753, %1755 : vector<8x128xf32>
    %cst_474 = arith.constant 0xFF800000 : f32
    %1757 = vector.broadcast %cst_474 : f32 to vector<8x128xf32>
    %1758 = arith.select %1756, %1444, %1757 : vector<8x128xi1>, vector<8x128xf32>
    %1759 = arith.maximumf %1621, %1758 : vector<8x128xf32>
    %cst_475 = arith.constant 0.000000e+00 : f32
    %1760 = vector.broadcast %68 : f32 to vector<8x128xf32>
    %1761 = vector.broadcast %cst_475 : f32 to vector<8x128xf32>
    %1762 = arith.select %1654, %1760, %1761 : vector<8x128xi1>, vector<8x128xf32>
    %cst_476 = arith.constant 0.000000e+00 : f32
    %1763 = vector.broadcast %84 : f32 to vector<8x128xf32>
    %1764 = vector.broadcast %cst_476 : f32 to vector<8x128xf32>
    %1765 = arith.select %1657, %1763, %1764 : vector<8x128xi1>, vector<8x128xf32>
    %1766 = arith.addf %1762, %1765 : vector<8x128xf32>
    %cst_477 = arith.constant 0.000000e+00 : f32
    %1767 = vector.broadcast %85 : f32 to vector<8x128xf32>
    %1768 = vector.broadcast %cst_477 : f32 to vector<8x128xf32>
    %1769 = arith.select %1658, %1767, %1768 : vector<8x128xi1>, vector<8x128xf32>
    %1770 = arith.addf %1766, %1769 : vector<8x128xf32>
    %cst_478 = arith.constant 0.000000e+00 : f32
    %1771 = vector.broadcast %70 : f32 to vector<8x128xf32>
    %1772 = vector.broadcast %cst_478 : f32 to vector<8x128xf32>
    %1773 = arith.select %1655, %1771, %1772 : vector<8x128xi1>, vector<8x128xf32>
    %1774 = arith.addf %1770, %1773 : vector<8x128xf32>
    %cst_479 = arith.constant 0.000000e+00 : f32
    %1775 = vector.broadcast %86 : f32 to vector<8x128xf32>
    %1776 = vector.broadcast %cst_479 : f32 to vector<8x128xf32>
    %1777 = arith.select %1659, %1775, %1776 : vector<8x128xi1>, vector<8x128xf32>
    %1778 = arith.addf %1774, %1777 : vector<8x128xf32>
    %cst_480 = arith.constant 0.000000e+00 : f32
    %1779 = vector.broadcast %71 : f32 to vector<8x128xf32>
    %1780 = vector.broadcast %cst_480 : f32 to vector<8x128xf32>
    %1781 = arith.select %1656, %1779, %1780 : vector<8x128xi1>, vector<8x128xf32>
    %1782 = arith.addf %1778, %1781 : vector<8x128xf32>
    %cst_481 = arith.constant 0.000000e+00 : f32
    %1783 = vector.broadcast %87 : f32 to vector<8x128xf32>
    %1784 = vector.broadcast %cst_481 : f32 to vector<8x128xf32>
    %1785 = arith.select %1660, %1783, %1784 : vector<8x128xi1>, vector<8x128xf32>
    %1786 = arith.addf %1782, %1785 : vector<8x128xf32>
    %1787 = arith.subf %91, %69 : f32
    %1788 = vector.broadcast %1787 : f32 to vector<8x128xf32>
    %1789 = arith.cmpf oge, %1786, %1788 : vector<8x128xf32>
    %cst_482 = arith.constant 0xFF800000 : f32
    %1790 = vector.broadcast %cst_482 : f32 to vector<8x128xf32>
    %1791 = arith.select %1789, %1444, %1790 : vector<8x128xi1>, vector<8x128xf32>
    %1792 = arith.maximumf %1653, %1791 : vector<8x128xf32>
    %1793 = arith.cmpf oge, %1411, %1477 : vector<8x128xf32>
    %1794 = arith.cmpf oge, %1444, %1477 : vector<8x128xf32>
    %1795 = arith.cmpf oge, %1510, %1477 : vector<8x128xf32>
    %1796 = arith.cmpf oge, %1512, %1477 : vector<8x128xf32>
    %1797 = arith.cmpf oge, %1514, %1477 : vector<8x128xf32>
    %1798 = arith.cmpf oge, %1516, %1477 : vector<8x128xf32>
    %1799 = arith.cmpf oge, %1518, %1477 : vector<8x128xf32>
    %cst_483 = arith.constant 0.000000e+00 : f32
    %1800 = vector.broadcast %56 : f32 to vector<8x128xf32>
    %1801 = vector.broadcast %cst_483 : f32 to vector<8x128xf32>
    %1802 = arith.select %1793, %1800, %1801 : vector<8x128xi1>, vector<8x128xf32>
    %cst_484 = arith.constant 0.000000e+00 : f32
    %1803 = vector.broadcast %72 : f32 to vector<8x128xf32>
    %1804 = vector.broadcast %cst_484 : f32 to vector<8x128xf32>
    %1805 = arith.select %1796, %1803, %1804 : vector<8x128xi1>, vector<8x128xf32>
    %1806 = arith.addf %1802, %1805 : vector<8x128xf32>
    %cst_485 = arith.constant 0.000000e+00 : f32
    %1807 = vector.broadcast %57 : f32 to vector<8x128xf32>
    %1808 = vector.broadcast %cst_485 : f32 to vector<8x128xf32>
    %1809 = arith.select %1794, %1807, %1808 : vector<8x128xi1>, vector<8x128xf32>
    %1810 = arith.addf %1806, %1809 : vector<8x128xf32>
    %cst_486 = arith.constant 0.000000e+00 : f32
    %1811 = vector.broadcast %73 : f32 to vector<8x128xf32>
    %1812 = vector.broadcast %cst_486 : f32 to vector<8x128xf32>
    %1813 = arith.select %1797, %1811, %1812 : vector<8x128xi1>, vector<8x128xf32>
    %1814 = arith.addf %1810, %1813 : vector<8x128xf32>
    %cst_487 = arith.constant 0.000000e+00 : f32
    %1815 = vector.broadcast %74 : f32 to vector<8x128xf32>
    %1816 = vector.broadcast %cst_487 : f32 to vector<8x128xf32>
    %1817 = arith.select %1798, %1815, %1816 : vector<8x128xi1>, vector<8x128xf32>
    %1818 = arith.addf %1814, %1817 : vector<8x128xf32>
    %cst_488 = arith.constant 0.000000e+00 : f32
    %1819 = vector.broadcast %59 : f32 to vector<8x128xf32>
    %1820 = vector.broadcast %cst_488 : f32 to vector<8x128xf32>
    %1821 = arith.select %1795, %1819, %1820 : vector<8x128xi1>, vector<8x128xf32>
    %1822 = arith.addf %1818, %1821 : vector<8x128xf32>
    %cst_489 = arith.constant 0.000000e+00 : f32
    %1823 = vector.broadcast %75 : f32 to vector<8x128xf32>
    %1824 = vector.broadcast %cst_489 : f32 to vector<8x128xf32>
    %1825 = arith.select %1799, %1823, %1824 : vector<8x128xi1>, vector<8x128xf32>
    %1826 = arith.addf %1822, %1825 : vector<8x128xf32>
    %1827 = arith.subf %88, %58 : f32
    %1828 = vector.broadcast %1827 : f32 to vector<8x128xf32>
    %1829 = arith.cmpf oge, %1826, %1828 : vector<8x128xf32>
    %cst_490 = arith.constant 0xFF800000 : f32
    %1830 = vector.broadcast %cst_490 : f32 to vector<8x128xf32>
    %1831 = arith.select %1829, %1477, %1830 : vector<8x128xi1>, vector<8x128xf32>
    %1832 = arith.maximumf %1693, %1831 : vector<8x128xf32>
    %cst_491 = arith.constant 0.000000e+00 : f32
    %1833 = vector.broadcast %60 : f32 to vector<8x128xf32>
    %1834 = vector.broadcast %cst_491 : f32 to vector<8x128xf32>
    %1835 = arith.select %1793, %1833, %1834 : vector<8x128xi1>, vector<8x128xf32>
    %cst_492 = arith.constant 0.000000e+00 : f32
    %1836 = vector.broadcast %76 : f32 to vector<8x128xf32>
    %1837 = vector.broadcast %cst_492 : f32 to vector<8x128xf32>
    %1838 = arith.select %1796, %1836, %1837 : vector<8x128xi1>, vector<8x128xf32>
    %1839 = arith.addf %1835, %1838 : vector<8x128xf32>
    %cst_493 = arith.constant 0.000000e+00 : f32
    %1840 = vector.broadcast %61 : f32 to vector<8x128xf32>
    %1841 = vector.broadcast %cst_493 : f32 to vector<8x128xf32>
    %1842 = arith.select %1794, %1840, %1841 : vector<8x128xi1>, vector<8x128xf32>
    %1843 = arith.addf %1839, %1842 : vector<8x128xf32>
    %cst_494 = arith.constant 0.000000e+00 : f32
    %1844 = vector.broadcast %77 : f32 to vector<8x128xf32>
    %1845 = vector.broadcast %cst_494 : f32 to vector<8x128xf32>
    %1846 = arith.select %1797, %1844, %1845 : vector<8x128xi1>, vector<8x128xf32>
    %1847 = arith.addf %1843, %1846 : vector<8x128xf32>
    %cst_495 = arith.constant 0.000000e+00 : f32
    %1848 = vector.broadcast %78 : f32 to vector<8x128xf32>
    %1849 = vector.broadcast %cst_495 : f32 to vector<8x128xf32>
    %1850 = arith.select %1798, %1848, %1849 : vector<8x128xi1>, vector<8x128xf32>
    %1851 = arith.addf %1847, %1850 : vector<8x128xf32>
    %cst_496 = arith.constant 0.000000e+00 : f32
    %1852 = vector.broadcast %63 : f32 to vector<8x128xf32>
    %1853 = vector.broadcast %cst_496 : f32 to vector<8x128xf32>
    %1854 = arith.select %1795, %1852, %1853 : vector<8x128xi1>, vector<8x128xf32>
    %1855 = arith.addf %1851, %1854 : vector<8x128xf32>
    %cst_497 = arith.constant 0.000000e+00 : f32
    %1856 = vector.broadcast %79 : f32 to vector<8x128xf32>
    %1857 = vector.broadcast %cst_497 : f32 to vector<8x128xf32>
    %1858 = arith.select %1799, %1856, %1857 : vector<8x128xi1>, vector<8x128xf32>
    %1859 = arith.addf %1855, %1858 : vector<8x128xf32>
    %1860 = arith.subf %89, %62 : f32
    %1861 = vector.broadcast %1860 : f32 to vector<8x128xf32>
    %1862 = arith.cmpf oge, %1859, %1861 : vector<8x128xf32>
    %cst_498 = arith.constant 0xFF800000 : f32
    %1863 = vector.broadcast %cst_498 : f32 to vector<8x128xf32>
    %1864 = arith.select %1862, %1477, %1863 : vector<8x128xi1>, vector<8x128xf32>
    %1865 = arith.maximumf %1726, %1864 : vector<8x128xf32>
    %cst_499 = arith.constant 0.000000e+00 : f32
    %1866 = vector.broadcast %64 : f32 to vector<8x128xf32>
    %1867 = vector.broadcast %cst_499 : f32 to vector<8x128xf32>
    %1868 = arith.select %1793, %1866, %1867 : vector<8x128xi1>, vector<8x128xf32>
    %cst_500 = arith.constant 0.000000e+00 : f32
    %1869 = vector.broadcast %80 : f32 to vector<8x128xf32>
    %1870 = vector.broadcast %cst_500 : f32 to vector<8x128xf32>
    %1871 = arith.select %1796, %1869, %1870 : vector<8x128xi1>, vector<8x128xf32>
    %1872 = arith.addf %1868, %1871 : vector<8x128xf32>
    %cst_501 = arith.constant 0.000000e+00 : f32
    %1873 = vector.broadcast %65 : f32 to vector<8x128xf32>
    %1874 = vector.broadcast %cst_501 : f32 to vector<8x128xf32>
    %1875 = arith.select %1794, %1873, %1874 : vector<8x128xi1>, vector<8x128xf32>
    %1876 = arith.addf %1872, %1875 : vector<8x128xf32>
    %cst_502 = arith.constant 0.000000e+00 : f32
    %1877 = vector.broadcast %81 : f32 to vector<8x128xf32>
    %1878 = vector.broadcast %cst_502 : f32 to vector<8x128xf32>
    %1879 = arith.select %1797, %1877, %1878 : vector<8x128xi1>, vector<8x128xf32>
    %1880 = arith.addf %1876, %1879 : vector<8x128xf32>
    %cst_503 = arith.constant 0.000000e+00 : f32
    %1881 = vector.broadcast %82 : f32 to vector<8x128xf32>
    %1882 = vector.broadcast %cst_503 : f32 to vector<8x128xf32>
    %1883 = arith.select %1798, %1881, %1882 : vector<8x128xi1>, vector<8x128xf32>
    %1884 = arith.addf %1880, %1883 : vector<8x128xf32>
    %cst_504 = arith.constant 0.000000e+00 : f32
    %1885 = vector.broadcast %67 : f32 to vector<8x128xf32>
    %1886 = vector.broadcast %cst_504 : f32 to vector<8x128xf32>
    %1887 = arith.select %1795, %1885, %1886 : vector<8x128xi1>, vector<8x128xf32>
    %1888 = arith.addf %1884, %1887 : vector<8x128xf32>
    %cst_505 = arith.constant 0.000000e+00 : f32
    %1889 = vector.broadcast %83 : f32 to vector<8x128xf32>
    %1890 = vector.broadcast %cst_505 : f32 to vector<8x128xf32>
    %1891 = arith.select %1799, %1889, %1890 : vector<8x128xi1>, vector<8x128xf32>
    %1892 = arith.addf %1888, %1891 : vector<8x128xf32>
    %1893 = arith.subf %90, %66 : f32
    %1894 = vector.broadcast %1893 : f32 to vector<8x128xf32>
    %1895 = arith.cmpf oge, %1892, %1894 : vector<8x128xf32>
    %cst_506 = arith.constant 0xFF800000 : f32
    %1896 = vector.broadcast %cst_506 : f32 to vector<8x128xf32>
    %1897 = arith.select %1895, %1477, %1896 : vector<8x128xi1>, vector<8x128xf32>
    %1898 = arith.maximumf %1759, %1897 : vector<8x128xf32>
    %cst_507 = arith.constant 0.000000e+00 : f32
    %1899 = vector.broadcast %68 : f32 to vector<8x128xf32>
    %1900 = vector.broadcast %cst_507 : f32 to vector<8x128xf32>
    %1901 = arith.select %1793, %1899, %1900 : vector<8x128xi1>, vector<8x128xf32>
    %cst_508 = arith.constant 0.000000e+00 : f32
    %1902 = vector.broadcast %84 : f32 to vector<8x128xf32>
    %1903 = vector.broadcast %cst_508 : f32 to vector<8x128xf32>
    %1904 = arith.select %1796, %1902, %1903 : vector<8x128xi1>, vector<8x128xf32>
    %1905 = arith.addf %1901, %1904 : vector<8x128xf32>
    %cst_509 = arith.constant 0.000000e+00 : f32
    %1906 = vector.broadcast %69 : f32 to vector<8x128xf32>
    %1907 = vector.broadcast %cst_509 : f32 to vector<8x128xf32>
    %1908 = arith.select %1794, %1906, %1907 : vector<8x128xi1>, vector<8x128xf32>
    %1909 = arith.addf %1905, %1908 : vector<8x128xf32>
    %cst_510 = arith.constant 0.000000e+00 : f32
    %1910 = vector.broadcast %85 : f32 to vector<8x128xf32>
    %1911 = vector.broadcast %cst_510 : f32 to vector<8x128xf32>
    %1912 = arith.select %1797, %1910, %1911 : vector<8x128xi1>, vector<8x128xf32>
    %1913 = arith.addf %1909, %1912 : vector<8x128xf32>
    %cst_511 = arith.constant 0.000000e+00 : f32
    %1914 = vector.broadcast %86 : f32 to vector<8x128xf32>
    %1915 = vector.broadcast %cst_511 : f32 to vector<8x128xf32>
    %1916 = arith.select %1798, %1914, %1915 : vector<8x128xi1>, vector<8x128xf32>
    %1917 = arith.addf %1913, %1916 : vector<8x128xf32>
    %cst_512 = arith.constant 0.000000e+00 : f32
    %1918 = vector.broadcast %71 : f32 to vector<8x128xf32>
    %1919 = vector.broadcast %cst_512 : f32 to vector<8x128xf32>
    %1920 = arith.select %1795, %1918, %1919 : vector<8x128xi1>, vector<8x128xf32>
    %1921 = arith.addf %1917, %1920 : vector<8x128xf32>
    %cst_513 = arith.constant 0.000000e+00 : f32
    %1922 = vector.broadcast %87 : f32 to vector<8x128xf32>
    %1923 = vector.broadcast %cst_513 : f32 to vector<8x128xf32>
    %1924 = arith.select %1799, %1922, %1923 : vector<8x128xi1>, vector<8x128xf32>
    %1925 = arith.addf %1921, %1924 : vector<8x128xf32>
    %1926 = arith.subf %91, %70 : f32
    %1927 = vector.broadcast %1926 : f32 to vector<8x128xf32>
    %1928 = arith.cmpf oge, %1925, %1927 : vector<8x128xf32>
    %cst_514 = arith.constant 0xFF800000 : f32
    %1929 = vector.broadcast %cst_514 : f32 to vector<8x128xf32>
    %1930 = arith.select %1928, %1477, %1929 : vector<8x128xi1>, vector<8x128xf32>
    %1931 = arith.maximumf %1792, %1930 : vector<8x128xf32>
    %1932 = arith.cmpf oge, %1411, %1510 : vector<8x128xf32>
    %1933 = arith.cmpf oge, %1444, %1510 : vector<8x128xf32>
    %1934 = arith.cmpf oge, %1477, %1510 : vector<8x128xf32>
    %1935 = arith.cmpf oge, %1512, %1510 : vector<8x128xf32>
    %1936 = arith.cmpf oge, %1514, %1510 : vector<8x128xf32>
    %1937 = arith.cmpf oge, %1516, %1510 : vector<8x128xf32>
    %1938 = arith.cmpf oge, %1518, %1510 : vector<8x128xf32>
    %cst_515 = arith.constant 0.000000e+00 : f32
    %1939 = vector.broadcast %56 : f32 to vector<8x128xf32>
    %1940 = vector.broadcast %cst_515 : f32 to vector<8x128xf32>
    %1941 = arith.select %1932, %1939, %1940 : vector<8x128xi1>, vector<8x128xf32>
    %cst_516 = arith.constant 0.000000e+00 : f32
    %1942 = vector.broadcast %72 : f32 to vector<8x128xf32>
    %1943 = vector.broadcast %cst_516 : f32 to vector<8x128xf32>
    %1944 = arith.select %1935, %1942, %1943 : vector<8x128xi1>, vector<8x128xf32>
    %1945 = arith.addf %1941, %1944 : vector<8x128xf32>
    %cst_517 = arith.constant 0.000000e+00 : f32
    %1946 = vector.broadcast %57 : f32 to vector<8x128xf32>
    %1947 = vector.broadcast %cst_517 : f32 to vector<8x128xf32>
    %1948 = arith.select %1933, %1946, %1947 : vector<8x128xi1>, vector<8x128xf32>
    %1949 = arith.addf %1945, %1948 : vector<8x128xf32>
    %cst_518 = arith.constant 0.000000e+00 : f32
    %1950 = vector.broadcast %73 : f32 to vector<8x128xf32>
    %1951 = vector.broadcast %cst_518 : f32 to vector<8x128xf32>
    %1952 = arith.select %1936, %1950, %1951 : vector<8x128xi1>, vector<8x128xf32>
    %1953 = arith.addf %1949, %1952 : vector<8x128xf32>
    %cst_519 = arith.constant 0.000000e+00 : f32
    %1954 = vector.broadcast %58 : f32 to vector<8x128xf32>
    %1955 = vector.broadcast %cst_519 : f32 to vector<8x128xf32>
    %1956 = arith.select %1934, %1954, %1955 : vector<8x128xi1>, vector<8x128xf32>
    %1957 = arith.addf %1953, %1956 : vector<8x128xf32>
    %cst_520 = arith.constant 0.000000e+00 : f32
    %1958 = vector.broadcast %74 : f32 to vector<8x128xf32>
    %1959 = vector.broadcast %cst_520 : f32 to vector<8x128xf32>
    %1960 = arith.select %1937, %1958, %1959 : vector<8x128xi1>, vector<8x128xf32>
    %1961 = arith.addf %1957, %1960 : vector<8x128xf32>
    %cst_521 = arith.constant 0.000000e+00 : f32
    %1962 = vector.broadcast %75 : f32 to vector<8x128xf32>
    %1963 = vector.broadcast %cst_521 : f32 to vector<8x128xf32>
    %1964 = arith.select %1938, %1962, %1963 : vector<8x128xi1>, vector<8x128xf32>
    %1965 = arith.addf %1961, %1964 : vector<8x128xf32>
    %1966 = arith.subf %88, %59 : f32
    %1967 = vector.broadcast %1966 : f32 to vector<8x128xf32>
    %1968 = arith.cmpf oge, %1965, %1967 : vector<8x128xf32>
    %cst_522 = arith.constant 0xFF800000 : f32
    %1969 = vector.broadcast %cst_522 : f32 to vector<8x128xf32>
    %1970 = arith.select %1968, %1510, %1969 : vector<8x128xi1>, vector<8x128xf32>
    %1971 = arith.maximumf %1832, %1970 : vector<8x128xf32>
    %cst_523 = arith.constant 0.000000e+00 : f32
    %1972 = vector.broadcast %60 : f32 to vector<8x128xf32>
    %1973 = vector.broadcast %cst_523 : f32 to vector<8x128xf32>
    %1974 = arith.select %1932, %1972, %1973 : vector<8x128xi1>, vector<8x128xf32>
    %cst_524 = arith.constant 0.000000e+00 : f32
    %1975 = vector.broadcast %76 : f32 to vector<8x128xf32>
    %1976 = vector.broadcast %cst_524 : f32 to vector<8x128xf32>
    %1977 = arith.select %1935, %1975, %1976 : vector<8x128xi1>, vector<8x128xf32>
    %1978 = arith.addf %1974, %1977 : vector<8x128xf32>
    %cst_525 = arith.constant 0.000000e+00 : f32
    %1979 = vector.broadcast %61 : f32 to vector<8x128xf32>
    %1980 = vector.broadcast %cst_525 : f32 to vector<8x128xf32>
    %1981 = arith.select %1933, %1979, %1980 : vector<8x128xi1>, vector<8x128xf32>
    %1982 = arith.addf %1978, %1981 : vector<8x128xf32>
    %cst_526 = arith.constant 0.000000e+00 : f32
    %1983 = vector.broadcast %77 : f32 to vector<8x128xf32>
    %1984 = vector.broadcast %cst_526 : f32 to vector<8x128xf32>
    %1985 = arith.select %1936, %1983, %1984 : vector<8x128xi1>, vector<8x128xf32>
    %1986 = arith.addf %1982, %1985 : vector<8x128xf32>
    %cst_527 = arith.constant 0.000000e+00 : f32
    %1987 = vector.broadcast %62 : f32 to vector<8x128xf32>
    %1988 = vector.broadcast %cst_527 : f32 to vector<8x128xf32>
    %1989 = arith.select %1934, %1987, %1988 : vector<8x128xi1>, vector<8x128xf32>
    %1990 = arith.addf %1986, %1989 : vector<8x128xf32>
    %cst_528 = arith.constant 0.000000e+00 : f32
    %1991 = vector.broadcast %78 : f32 to vector<8x128xf32>
    %1992 = vector.broadcast %cst_528 : f32 to vector<8x128xf32>
    %1993 = arith.select %1937, %1991, %1992 : vector<8x128xi1>, vector<8x128xf32>
    %1994 = arith.addf %1990, %1993 : vector<8x128xf32>
    %cst_529 = arith.constant 0.000000e+00 : f32
    %1995 = vector.broadcast %79 : f32 to vector<8x128xf32>
    %1996 = vector.broadcast %cst_529 : f32 to vector<8x128xf32>
    %1997 = arith.select %1938, %1995, %1996 : vector<8x128xi1>, vector<8x128xf32>
    %1998 = arith.addf %1994, %1997 : vector<8x128xf32>
    %1999 = arith.subf %89, %63 : f32
    %2000 = vector.broadcast %1999 : f32 to vector<8x128xf32>
    %2001 = arith.cmpf oge, %1998, %2000 : vector<8x128xf32>
    %cst_530 = arith.constant 0xFF800000 : f32
    %2002 = vector.broadcast %cst_530 : f32 to vector<8x128xf32>
    %2003 = arith.select %2001, %1510, %2002 : vector<8x128xi1>, vector<8x128xf32>
    %2004 = arith.maximumf %1865, %2003 : vector<8x128xf32>
    %cst_531 = arith.constant 0.000000e+00 : f32
    %2005 = vector.broadcast %64 : f32 to vector<8x128xf32>
    %2006 = vector.broadcast %cst_531 : f32 to vector<8x128xf32>
    %2007 = arith.select %1932, %2005, %2006 : vector<8x128xi1>, vector<8x128xf32>
    %cst_532 = arith.constant 0.000000e+00 : f32
    %2008 = vector.broadcast %80 : f32 to vector<8x128xf32>
    %2009 = vector.broadcast %cst_532 : f32 to vector<8x128xf32>
    %2010 = arith.select %1935, %2008, %2009 : vector<8x128xi1>, vector<8x128xf32>
    %2011 = arith.addf %2007, %2010 : vector<8x128xf32>
    %cst_533 = arith.constant 0.000000e+00 : f32
    %2012 = vector.broadcast %65 : f32 to vector<8x128xf32>
    %2013 = vector.broadcast %cst_533 : f32 to vector<8x128xf32>
    %2014 = arith.select %1933, %2012, %2013 : vector<8x128xi1>, vector<8x128xf32>
    %2015 = arith.addf %2011, %2014 : vector<8x128xf32>
    %cst_534 = arith.constant 0.000000e+00 : f32
    %2016 = vector.broadcast %81 : f32 to vector<8x128xf32>
    %2017 = vector.broadcast %cst_534 : f32 to vector<8x128xf32>
    %2018 = arith.select %1936, %2016, %2017 : vector<8x128xi1>, vector<8x128xf32>
    %2019 = arith.addf %2015, %2018 : vector<8x128xf32>
    %cst_535 = arith.constant 0.000000e+00 : f32
    %2020 = vector.broadcast %66 : f32 to vector<8x128xf32>
    %2021 = vector.broadcast %cst_535 : f32 to vector<8x128xf32>
    %2022 = arith.select %1934, %2020, %2021 : vector<8x128xi1>, vector<8x128xf32>
    %2023 = arith.addf %2019, %2022 : vector<8x128xf32>
    %cst_536 = arith.constant 0.000000e+00 : f32
    %2024 = vector.broadcast %82 : f32 to vector<8x128xf32>
    %2025 = vector.broadcast %cst_536 : f32 to vector<8x128xf32>
    %2026 = arith.select %1937, %2024, %2025 : vector<8x128xi1>, vector<8x128xf32>
    %2027 = arith.addf %2023, %2026 : vector<8x128xf32>
    %cst_537 = arith.constant 0.000000e+00 : f32
    %2028 = vector.broadcast %83 : f32 to vector<8x128xf32>
    %2029 = vector.broadcast %cst_537 : f32 to vector<8x128xf32>
    %2030 = arith.select %1938, %2028, %2029 : vector<8x128xi1>, vector<8x128xf32>
    %2031 = arith.addf %2027, %2030 : vector<8x128xf32>
    %2032 = arith.subf %90, %67 : f32
    %2033 = vector.broadcast %2032 : f32 to vector<8x128xf32>
    %2034 = arith.cmpf oge, %2031, %2033 : vector<8x128xf32>
    %cst_538 = arith.constant 0xFF800000 : f32
    %2035 = vector.broadcast %cst_538 : f32 to vector<8x128xf32>
    %2036 = arith.select %2034, %1510, %2035 : vector<8x128xi1>, vector<8x128xf32>
    %2037 = arith.maximumf %1898, %2036 : vector<8x128xf32>
    %cst_539 = arith.constant 0.000000e+00 : f32
    %2038 = vector.broadcast %68 : f32 to vector<8x128xf32>
    %2039 = vector.broadcast %cst_539 : f32 to vector<8x128xf32>
    %2040 = arith.select %1932, %2038, %2039 : vector<8x128xi1>, vector<8x128xf32>
    %cst_540 = arith.constant 0.000000e+00 : f32
    %2041 = vector.broadcast %84 : f32 to vector<8x128xf32>
    %2042 = vector.broadcast %cst_540 : f32 to vector<8x128xf32>
    %2043 = arith.select %1935, %2041, %2042 : vector<8x128xi1>, vector<8x128xf32>
    %2044 = arith.addf %2040, %2043 : vector<8x128xf32>
    %cst_541 = arith.constant 0.000000e+00 : f32
    %2045 = vector.broadcast %69 : f32 to vector<8x128xf32>
    %2046 = vector.broadcast %cst_541 : f32 to vector<8x128xf32>
    %2047 = arith.select %1933, %2045, %2046 : vector<8x128xi1>, vector<8x128xf32>
    %2048 = arith.addf %2044, %2047 : vector<8x128xf32>
    %cst_542 = arith.constant 0.000000e+00 : f32
    %2049 = vector.broadcast %85 : f32 to vector<8x128xf32>
    %2050 = vector.broadcast %cst_542 : f32 to vector<8x128xf32>
    %2051 = arith.select %1936, %2049, %2050 : vector<8x128xi1>, vector<8x128xf32>
    %2052 = arith.addf %2048, %2051 : vector<8x128xf32>
    %cst_543 = arith.constant 0.000000e+00 : f32
    %2053 = vector.broadcast %70 : f32 to vector<8x128xf32>
    %2054 = vector.broadcast %cst_543 : f32 to vector<8x128xf32>
    %2055 = arith.select %1934, %2053, %2054 : vector<8x128xi1>, vector<8x128xf32>
    %2056 = arith.addf %2052, %2055 : vector<8x128xf32>
    %cst_544 = arith.constant 0.000000e+00 : f32
    %2057 = vector.broadcast %86 : f32 to vector<8x128xf32>
    %2058 = vector.broadcast %cst_544 : f32 to vector<8x128xf32>
    %2059 = arith.select %1937, %2057, %2058 : vector<8x128xi1>, vector<8x128xf32>
    %2060 = arith.addf %2056, %2059 : vector<8x128xf32>
    %cst_545 = arith.constant 0.000000e+00 : f32
    %2061 = vector.broadcast %87 : f32 to vector<8x128xf32>
    %2062 = vector.broadcast %cst_545 : f32 to vector<8x128xf32>
    %2063 = arith.select %1938, %2061, %2062 : vector<8x128xi1>, vector<8x128xf32>
    %2064 = arith.addf %2060, %2063 : vector<8x128xf32>
    %2065 = arith.subf %91, %71 : f32
    %2066 = vector.broadcast %2065 : f32 to vector<8x128xf32>
    %2067 = arith.cmpf oge, %2064, %2066 : vector<8x128xf32>
    %cst_546 = arith.constant 0xFF800000 : f32
    %2068 = vector.broadcast %cst_546 : f32 to vector<8x128xf32>
    %2069 = arith.select %2067, %1510, %2068 : vector<8x128xi1>, vector<8x128xf32>
    %2070 = arith.maximumf %1931, %2069 : vector<8x128xf32>
    %2071 = arith.cmpf oge, %1411, %1512 : vector<8x128xf32>
    %2072 = arith.cmpf oge, %1444, %1512 : vector<8x128xf32>
    %2073 = arith.cmpf oge, %1477, %1512 : vector<8x128xf32>
    %2074 = arith.cmpf oge, %1510, %1512 : vector<8x128xf32>
    %2075 = arith.cmpf oge, %1514, %1512 : vector<8x128xf32>
    %2076 = arith.cmpf oge, %1516, %1512 : vector<8x128xf32>
    %2077 = arith.cmpf oge, %1518, %1512 : vector<8x128xf32>
    %cst_547 = arith.constant 0.000000e+00 : f32
    %2078 = vector.broadcast %56 : f32 to vector<8x128xf32>
    %2079 = vector.broadcast %cst_547 : f32 to vector<8x128xf32>
    %2080 = arith.select %2071, %2078, %2079 : vector<8x128xi1>, vector<8x128xf32>
    %cst_548 = arith.constant 0.000000e+00 : f32
    %2081 = vector.broadcast %57 : f32 to vector<8x128xf32>
    %2082 = vector.broadcast %cst_548 : f32 to vector<8x128xf32>
    %2083 = arith.select %2072, %2081, %2082 : vector<8x128xi1>, vector<8x128xf32>
    %2084 = arith.addf %2080, %2083 : vector<8x128xf32>
    %cst_549 = arith.constant 0.000000e+00 : f32
    %2085 = vector.broadcast %73 : f32 to vector<8x128xf32>
    %2086 = vector.broadcast %cst_549 : f32 to vector<8x128xf32>
    %2087 = arith.select %2075, %2085, %2086 : vector<8x128xi1>, vector<8x128xf32>
    %2088 = arith.addf %2084, %2087 : vector<8x128xf32>
    %cst_550 = arith.constant 0.000000e+00 : f32
    %2089 = vector.broadcast %58 : f32 to vector<8x128xf32>
    %2090 = vector.broadcast %cst_550 : f32 to vector<8x128xf32>
    %2091 = arith.select %2073, %2089, %2090 : vector<8x128xi1>, vector<8x128xf32>
    %2092 = arith.addf %2088, %2091 : vector<8x128xf32>
    %cst_551 = arith.constant 0.000000e+00 : f32
    %2093 = vector.broadcast %74 : f32 to vector<8x128xf32>
    %2094 = vector.broadcast %cst_551 : f32 to vector<8x128xf32>
    %2095 = arith.select %2076, %2093, %2094 : vector<8x128xi1>, vector<8x128xf32>
    %2096 = arith.addf %2092, %2095 : vector<8x128xf32>
    %cst_552 = arith.constant 0.000000e+00 : f32
    %2097 = vector.broadcast %59 : f32 to vector<8x128xf32>
    %2098 = vector.broadcast %cst_552 : f32 to vector<8x128xf32>
    %2099 = arith.select %2074, %2097, %2098 : vector<8x128xi1>, vector<8x128xf32>
    %2100 = arith.addf %2096, %2099 : vector<8x128xf32>
    %cst_553 = arith.constant 0.000000e+00 : f32
    %2101 = vector.broadcast %75 : f32 to vector<8x128xf32>
    %2102 = vector.broadcast %cst_553 : f32 to vector<8x128xf32>
    %2103 = arith.select %2077, %2101, %2102 : vector<8x128xi1>, vector<8x128xf32>
    %2104 = arith.addf %2100, %2103 : vector<8x128xf32>
    %2105 = arith.subf %88, %72 : f32
    %2106 = vector.broadcast %2105 : f32 to vector<8x128xf32>
    %2107 = arith.cmpf oge, %2104, %2106 : vector<8x128xf32>
    %cst_554 = arith.constant 0xFF800000 : f32
    %2108 = vector.broadcast %cst_554 : f32 to vector<8x128xf32>
    %2109 = arith.select %2107, %1512, %2108 : vector<8x128xi1>, vector<8x128xf32>
    %2110 = arith.maximumf %1971, %2109 : vector<8x128xf32>
    %cst_555 = arith.constant 0.000000e+00 : f32
    %2111 = vector.broadcast %60 : f32 to vector<8x128xf32>
    %2112 = vector.broadcast %cst_555 : f32 to vector<8x128xf32>
    %2113 = arith.select %2071, %2111, %2112 : vector<8x128xi1>, vector<8x128xf32>
    %cst_556 = arith.constant 0.000000e+00 : f32
    %2114 = vector.broadcast %61 : f32 to vector<8x128xf32>
    %2115 = vector.broadcast %cst_556 : f32 to vector<8x128xf32>
    %2116 = arith.select %2072, %2114, %2115 : vector<8x128xi1>, vector<8x128xf32>
    %2117 = arith.addf %2113, %2116 : vector<8x128xf32>
    %cst_557 = arith.constant 0.000000e+00 : f32
    %2118 = vector.broadcast %77 : f32 to vector<8x128xf32>
    %2119 = vector.broadcast %cst_557 : f32 to vector<8x128xf32>
    %2120 = arith.select %2075, %2118, %2119 : vector<8x128xi1>, vector<8x128xf32>
    %2121 = arith.addf %2117, %2120 : vector<8x128xf32>
    %cst_558 = arith.constant 0.000000e+00 : f32
    %2122 = vector.broadcast %62 : f32 to vector<8x128xf32>
    %2123 = vector.broadcast %cst_558 : f32 to vector<8x128xf32>
    %2124 = arith.select %2073, %2122, %2123 : vector<8x128xi1>, vector<8x128xf32>
    %2125 = arith.addf %2121, %2124 : vector<8x128xf32>
    %cst_559 = arith.constant 0.000000e+00 : f32
    %2126 = vector.broadcast %78 : f32 to vector<8x128xf32>
    %2127 = vector.broadcast %cst_559 : f32 to vector<8x128xf32>
    %2128 = arith.select %2076, %2126, %2127 : vector<8x128xi1>, vector<8x128xf32>
    %2129 = arith.addf %2125, %2128 : vector<8x128xf32>
    %cst_560 = arith.constant 0.000000e+00 : f32
    %2130 = vector.broadcast %63 : f32 to vector<8x128xf32>
    %2131 = vector.broadcast %cst_560 : f32 to vector<8x128xf32>
    %2132 = arith.select %2074, %2130, %2131 : vector<8x128xi1>, vector<8x128xf32>
    %2133 = arith.addf %2129, %2132 : vector<8x128xf32>
    %cst_561 = arith.constant 0.000000e+00 : f32
    %2134 = vector.broadcast %79 : f32 to vector<8x128xf32>
    %2135 = vector.broadcast %cst_561 : f32 to vector<8x128xf32>
    %2136 = arith.select %2077, %2134, %2135 : vector<8x128xi1>, vector<8x128xf32>
    %2137 = arith.addf %2133, %2136 : vector<8x128xf32>
    %2138 = arith.subf %89, %76 : f32
    %2139 = vector.broadcast %2138 : f32 to vector<8x128xf32>
    %2140 = arith.cmpf oge, %2137, %2139 : vector<8x128xf32>
    %cst_562 = arith.constant 0xFF800000 : f32
    %2141 = vector.broadcast %cst_562 : f32 to vector<8x128xf32>
    %2142 = arith.select %2140, %1512, %2141 : vector<8x128xi1>, vector<8x128xf32>
    %2143 = arith.maximumf %2004, %2142 : vector<8x128xf32>
    %cst_563 = arith.constant 0.000000e+00 : f32
    %2144 = vector.broadcast %64 : f32 to vector<8x128xf32>
    %2145 = vector.broadcast %cst_563 : f32 to vector<8x128xf32>
    %2146 = arith.select %2071, %2144, %2145 : vector<8x128xi1>, vector<8x128xf32>
    %cst_564 = arith.constant 0.000000e+00 : f32
    %2147 = vector.broadcast %65 : f32 to vector<8x128xf32>
    %2148 = vector.broadcast %cst_564 : f32 to vector<8x128xf32>
    %2149 = arith.select %2072, %2147, %2148 : vector<8x128xi1>, vector<8x128xf32>
    %2150 = arith.addf %2146, %2149 : vector<8x128xf32>
    %cst_565 = arith.constant 0.000000e+00 : f32
    %2151 = vector.broadcast %81 : f32 to vector<8x128xf32>
    %2152 = vector.broadcast %cst_565 : f32 to vector<8x128xf32>
    %2153 = arith.select %2075, %2151, %2152 : vector<8x128xi1>, vector<8x128xf32>
    %2154 = arith.addf %2150, %2153 : vector<8x128xf32>
    %cst_566 = arith.constant 0.000000e+00 : f32
    %2155 = vector.broadcast %66 : f32 to vector<8x128xf32>
    %2156 = vector.broadcast %cst_566 : f32 to vector<8x128xf32>
    %2157 = arith.select %2073, %2155, %2156 : vector<8x128xi1>, vector<8x128xf32>
    %2158 = arith.addf %2154, %2157 : vector<8x128xf32>
    %cst_567 = arith.constant 0.000000e+00 : f32
    %2159 = vector.broadcast %82 : f32 to vector<8x128xf32>
    %2160 = vector.broadcast %cst_567 : f32 to vector<8x128xf32>
    %2161 = arith.select %2076, %2159, %2160 : vector<8x128xi1>, vector<8x128xf32>
    %2162 = arith.addf %2158, %2161 : vector<8x128xf32>
    %cst_568 = arith.constant 0.000000e+00 : f32
    %2163 = vector.broadcast %67 : f32 to vector<8x128xf32>
    %2164 = vector.broadcast %cst_568 : f32 to vector<8x128xf32>
    %2165 = arith.select %2074, %2163, %2164 : vector<8x128xi1>, vector<8x128xf32>
    %2166 = arith.addf %2162, %2165 : vector<8x128xf32>
    %cst_569 = arith.constant 0.000000e+00 : f32
    %2167 = vector.broadcast %83 : f32 to vector<8x128xf32>
    %2168 = vector.broadcast %cst_569 : f32 to vector<8x128xf32>
    %2169 = arith.select %2077, %2167, %2168 : vector<8x128xi1>, vector<8x128xf32>
    %2170 = arith.addf %2166, %2169 : vector<8x128xf32>
    %2171 = arith.subf %90, %80 : f32
    %2172 = vector.broadcast %2171 : f32 to vector<8x128xf32>
    %2173 = arith.cmpf oge, %2170, %2172 : vector<8x128xf32>
    %cst_570 = arith.constant 0xFF800000 : f32
    %2174 = vector.broadcast %cst_570 : f32 to vector<8x128xf32>
    %2175 = arith.select %2173, %1512, %2174 : vector<8x128xi1>, vector<8x128xf32>
    %2176 = arith.maximumf %2037, %2175 : vector<8x128xf32>
    %cst_571 = arith.constant 0.000000e+00 : f32
    %2177 = vector.broadcast %68 : f32 to vector<8x128xf32>
    %2178 = vector.broadcast %cst_571 : f32 to vector<8x128xf32>
    %2179 = arith.select %2071, %2177, %2178 : vector<8x128xi1>, vector<8x128xf32>
    %cst_572 = arith.constant 0.000000e+00 : f32
    %2180 = vector.broadcast %69 : f32 to vector<8x128xf32>
    %2181 = vector.broadcast %cst_572 : f32 to vector<8x128xf32>
    %2182 = arith.select %2072, %2180, %2181 : vector<8x128xi1>, vector<8x128xf32>
    %2183 = arith.addf %2179, %2182 : vector<8x128xf32>
    %cst_573 = arith.constant 0.000000e+00 : f32
    %2184 = vector.broadcast %85 : f32 to vector<8x128xf32>
    %2185 = vector.broadcast %cst_573 : f32 to vector<8x128xf32>
    %2186 = arith.select %2075, %2184, %2185 : vector<8x128xi1>, vector<8x128xf32>
    %2187 = arith.addf %2183, %2186 : vector<8x128xf32>
    %cst_574 = arith.constant 0.000000e+00 : f32
    %2188 = vector.broadcast %70 : f32 to vector<8x128xf32>
    %2189 = vector.broadcast %cst_574 : f32 to vector<8x128xf32>
    %2190 = arith.select %2073, %2188, %2189 : vector<8x128xi1>, vector<8x128xf32>
    %2191 = arith.addf %2187, %2190 : vector<8x128xf32>
    %cst_575 = arith.constant 0.000000e+00 : f32
    %2192 = vector.broadcast %86 : f32 to vector<8x128xf32>
    %2193 = vector.broadcast %cst_575 : f32 to vector<8x128xf32>
    %2194 = arith.select %2076, %2192, %2193 : vector<8x128xi1>, vector<8x128xf32>
    %2195 = arith.addf %2191, %2194 : vector<8x128xf32>
    %cst_576 = arith.constant 0.000000e+00 : f32
    %2196 = vector.broadcast %71 : f32 to vector<8x128xf32>
    %2197 = vector.broadcast %cst_576 : f32 to vector<8x128xf32>
    %2198 = arith.select %2074, %2196, %2197 : vector<8x128xi1>, vector<8x128xf32>
    %2199 = arith.addf %2195, %2198 : vector<8x128xf32>
    %cst_577 = arith.constant 0.000000e+00 : f32
    %2200 = vector.broadcast %87 : f32 to vector<8x128xf32>
    %2201 = vector.broadcast %cst_577 : f32 to vector<8x128xf32>
    %2202 = arith.select %2077, %2200, %2201 : vector<8x128xi1>, vector<8x128xf32>
    %2203 = arith.addf %2199, %2202 : vector<8x128xf32>
    %2204 = arith.subf %91, %84 : f32
    %2205 = vector.broadcast %2204 : f32 to vector<8x128xf32>
    %2206 = arith.cmpf oge, %2203, %2205 : vector<8x128xf32>
    %cst_578 = arith.constant 0xFF800000 : f32
    %2207 = vector.broadcast %cst_578 : f32 to vector<8x128xf32>
    %2208 = arith.select %2206, %1512, %2207 : vector<8x128xi1>, vector<8x128xf32>
    %2209 = arith.maximumf %2070, %2208 : vector<8x128xf32>
    %2210 = arith.cmpf oge, %1411, %1514 : vector<8x128xf32>
    %2211 = arith.cmpf oge, %1444, %1514 : vector<8x128xf32>
    %2212 = arith.cmpf oge, %1477, %1514 : vector<8x128xf32>
    %2213 = arith.cmpf oge, %1510, %1514 : vector<8x128xf32>
    %2214 = arith.cmpf oge, %1512, %1514 : vector<8x128xf32>
    %2215 = arith.cmpf oge, %1516, %1514 : vector<8x128xf32>
    %2216 = arith.cmpf oge, %1518, %1514 : vector<8x128xf32>
    %cst_579 = arith.constant 0.000000e+00 : f32
    %2217 = vector.broadcast %56 : f32 to vector<8x128xf32>
    %2218 = vector.broadcast %cst_579 : f32 to vector<8x128xf32>
    %2219 = arith.select %2210, %2217, %2218 : vector<8x128xi1>, vector<8x128xf32>
    %cst_580 = arith.constant 0.000000e+00 : f32
    %2220 = vector.broadcast %72 : f32 to vector<8x128xf32>
    %2221 = vector.broadcast %cst_580 : f32 to vector<8x128xf32>
    %2222 = arith.select %2214, %2220, %2221 : vector<8x128xi1>, vector<8x128xf32>
    %2223 = arith.addf %2219, %2222 : vector<8x128xf32>
    %cst_581 = arith.constant 0.000000e+00 : f32
    %2224 = vector.broadcast %57 : f32 to vector<8x128xf32>
    %2225 = vector.broadcast %cst_581 : f32 to vector<8x128xf32>
    %2226 = arith.select %2211, %2224, %2225 : vector<8x128xi1>, vector<8x128xf32>
    %2227 = arith.addf %2223, %2226 : vector<8x128xf32>
    %cst_582 = arith.constant 0.000000e+00 : f32
    %2228 = vector.broadcast %58 : f32 to vector<8x128xf32>
    %2229 = vector.broadcast %cst_582 : f32 to vector<8x128xf32>
    %2230 = arith.select %2212, %2228, %2229 : vector<8x128xi1>, vector<8x128xf32>
    %2231 = arith.addf %2227, %2230 : vector<8x128xf32>
    %cst_583 = arith.constant 0.000000e+00 : f32
    %2232 = vector.broadcast %74 : f32 to vector<8x128xf32>
    %2233 = vector.broadcast %cst_583 : f32 to vector<8x128xf32>
    %2234 = arith.select %2215, %2232, %2233 : vector<8x128xi1>, vector<8x128xf32>
    %2235 = arith.addf %2231, %2234 : vector<8x128xf32>
    %cst_584 = arith.constant 0.000000e+00 : f32
    %2236 = vector.broadcast %59 : f32 to vector<8x128xf32>
    %2237 = vector.broadcast %cst_584 : f32 to vector<8x128xf32>
    %2238 = arith.select %2213, %2236, %2237 : vector<8x128xi1>, vector<8x128xf32>
    %2239 = arith.addf %2235, %2238 : vector<8x128xf32>
    %cst_585 = arith.constant 0.000000e+00 : f32
    %2240 = vector.broadcast %75 : f32 to vector<8x128xf32>
    %2241 = vector.broadcast %cst_585 : f32 to vector<8x128xf32>
    %2242 = arith.select %2216, %2240, %2241 : vector<8x128xi1>, vector<8x128xf32>
    %2243 = arith.addf %2239, %2242 : vector<8x128xf32>
    %2244 = arith.subf %88, %73 : f32
    %2245 = vector.broadcast %2244 : f32 to vector<8x128xf32>
    %2246 = arith.cmpf oge, %2243, %2245 : vector<8x128xf32>
    %cst_586 = arith.constant 0xFF800000 : f32
    %2247 = vector.broadcast %cst_586 : f32 to vector<8x128xf32>
    %2248 = arith.select %2246, %1514, %2247 : vector<8x128xi1>, vector<8x128xf32>
    %2249 = arith.maximumf %2110, %2248 : vector<8x128xf32>
    %cst_587 = arith.constant 0.000000e+00 : f32
    %2250 = vector.broadcast %60 : f32 to vector<8x128xf32>
    %2251 = vector.broadcast %cst_587 : f32 to vector<8x128xf32>
    %2252 = arith.select %2210, %2250, %2251 : vector<8x128xi1>, vector<8x128xf32>
    %cst_588 = arith.constant 0.000000e+00 : f32
    %2253 = vector.broadcast %76 : f32 to vector<8x128xf32>
    %2254 = vector.broadcast %cst_588 : f32 to vector<8x128xf32>
    %2255 = arith.select %2214, %2253, %2254 : vector<8x128xi1>, vector<8x128xf32>
    %2256 = arith.addf %2252, %2255 : vector<8x128xf32>
    %cst_589 = arith.constant 0.000000e+00 : f32
    %2257 = vector.broadcast %61 : f32 to vector<8x128xf32>
    %2258 = vector.broadcast %cst_589 : f32 to vector<8x128xf32>
    %2259 = arith.select %2211, %2257, %2258 : vector<8x128xi1>, vector<8x128xf32>
    %2260 = arith.addf %2256, %2259 : vector<8x128xf32>
    %cst_590 = arith.constant 0.000000e+00 : f32
    %2261 = vector.broadcast %62 : f32 to vector<8x128xf32>
    %2262 = vector.broadcast %cst_590 : f32 to vector<8x128xf32>
    %2263 = arith.select %2212, %2261, %2262 : vector<8x128xi1>, vector<8x128xf32>
    %2264 = arith.addf %2260, %2263 : vector<8x128xf32>
    %cst_591 = arith.constant 0.000000e+00 : f32
    %2265 = vector.broadcast %78 : f32 to vector<8x128xf32>
    %2266 = vector.broadcast %cst_591 : f32 to vector<8x128xf32>
    %2267 = arith.select %2215, %2265, %2266 : vector<8x128xi1>, vector<8x128xf32>
    %2268 = arith.addf %2264, %2267 : vector<8x128xf32>
    %cst_592 = arith.constant 0.000000e+00 : f32
    %2269 = vector.broadcast %63 : f32 to vector<8x128xf32>
    %2270 = vector.broadcast %cst_592 : f32 to vector<8x128xf32>
    %2271 = arith.select %2213, %2269, %2270 : vector<8x128xi1>, vector<8x128xf32>
    %2272 = arith.addf %2268, %2271 : vector<8x128xf32>
    %cst_593 = arith.constant 0.000000e+00 : f32
    %2273 = vector.broadcast %79 : f32 to vector<8x128xf32>
    %2274 = vector.broadcast %cst_593 : f32 to vector<8x128xf32>
    %2275 = arith.select %2216, %2273, %2274 : vector<8x128xi1>, vector<8x128xf32>
    %2276 = arith.addf %2272, %2275 : vector<8x128xf32>
    %2277 = arith.subf %89, %77 : f32
    %2278 = vector.broadcast %2277 : f32 to vector<8x128xf32>
    %2279 = arith.cmpf oge, %2276, %2278 : vector<8x128xf32>
    %cst_594 = arith.constant 0xFF800000 : f32
    %2280 = vector.broadcast %cst_594 : f32 to vector<8x128xf32>
    %2281 = arith.select %2279, %1514, %2280 : vector<8x128xi1>, vector<8x128xf32>
    %2282 = arith.maximumf %2143, %2281 : vector<8x128xf32>
    %cst_595 = arith.constant 0.000000e+00 : f32
    %2283 = vector.broadcast %64 : f32 to vector<8x128xf32>
    %2284 = vector.broadcast %cst_595 : f32 to vector<8x128xf32>
    %2285 = arith.select %2210, %2283, %2284 : vector<8x128xi1>, vector<8x128xf32>
    %cst_596 = arith.constant 0.000000e+00 : f32
    %2286 = vector.broadcast %80 : f32 to vector<8x128xf32>
    %2287 = vector.broadcast %cst_596 : f32 to vector<8x128xf32>
    %2288 = arith.select %2214, %2286, %2287 : vector<8x128xi1>, vector<8x128xf32>
    %2289 = arith.addf %2285, %2288 : vector<8x128xf32>
    %cst_597 = arith.constant 0.000000e+00 : f32
    %2290 = vector.broadcast %65 : f32 to vector<8x128xf32>
    %2291 = vector.broadcast %cst_597 : f32 to vector<8x128xf32>
    %2292 = arith.select %2211, %2290, %2291 : vector<8x128xi1>, vector<8x128xf32>
    %2293 = arith.addf %2289, %2292 : vector<8x128xf32>
    %cst_598 = arith.constant 0.000000e+00 : f32
    %2294 = vector.broadcast %66 : f32 to vector<8x128xf32>
    %2295 = vector.broadcast %cst_598 : f32 to vector<8x128xf32>
    %2296 = arith.select %2212, %2294, %2295 : vector<8x128xi1>, vector<8x128xf32>
    %2297 = arith.addf %2293, %2296 : vector<8x128xf32>
    %cst_599 = arith.constant 0.000000e+00 : f32
    %2298 = vector.broadcast %82 : f32 to vector<8x128xf32>
    %2299 = vector.broadcast %cst_599 : f32 to vector<8x128xf32>
    %2300 = arith.select %2215, %2298, %2299 : vector<8x128xi1>, vector<8x128xf32>
    %2301 = arith.addf %2297, %2300 : vector<8x128xf32>
    %cst_600 = arith.constant 0.000000e+00 : f32
    %2302 = vector.broadcast %67 : f32 to vector<8x128xf32>
    %2303 = vector.broadcast %cst_600 : f32 to vector<8x128xf32>
    %2304 = arith.select %2213, %2302, %2303 : vector<8x128xi1>, vector<8x128xf32>
    %2305 = arith.addf %2301, %2304 : vector<8x128xf32>
    %cst_601 = arith.constant 0.000000e+00 : f32
    %2306 = vector.broadcast %83 : f32 to vector<8x128xf32>
    %2307 = vector.broadcast %cst_601 : f32 to vector<8x128xf32>
    %2308 = arith.select %2216, %2306, %2307 : vector<8x128xi1>, vector<8x128xf32>
    %2309 = arith.addf %2305, %2308 : vector<8x128xf32>
    %2310 = arith.subf %90, %81 : f32
    %2311 = vector.broadcast %2310 : f32 to vector<8x128xf32>
    %2312 = arith.cmpf oge, %2309, %2311 : vector<8x128xf32>
    %cst_602 = arith.constant 0xFF800000 : f32
    %2313 = vector.broadcast %cst_602 : f32 to vector<8x128xf32>
    %2314 = arith.select %2312, %1514, %2313 : vector<8x128xi1>, vector<8x128xf32>
    %2315 = arith.maximumf %2176, %2314 : vector<8x128xf32>
    %cst_603 = arith.constant 0.000000e+00 : f32
    %2316 = vector.broadcast %68 : f32 to vector<8x128xf32>
    %2317 = vector.broadcast %cst_603 : f32 to vector<8x128xf32>
    %2318 = arith.select %2210, %2316, %2317 : vector<8x128xi1>, vector<8x128xf32>
    %cst_604 = arith.constant 0.000000e+00 : f32
    %2319 = vector.broadcast %84 : f32 to vector<8x128xf32>
    %2320 = vector.broadcast %cst_604 : f32 to vector<8x128xf32>
    %2321 = arith.select %2214, %2319, %2320 : vector<8x128xi1>, vector<8x128xf32>
    %2322 = arith.addf %2318, %2321 : vector<8x128xf32>
    %cst_605 = arith.constant 0.000000e+00 : f32
    %2323 = vector.broadcast %69 : f32 to vector<8x128xf32>
    %2324 = vector.broadcast %cst_605 : f32 to vector<8x128xf32>
    %2325 = arith.select %2211, %2323, %2324 : vector<8x128xi1>, vector<8x128xf32>
    %2326 = arith.addf %2322, %2325 : vector<8x128xf32>
    %cst_606 = arith.constant 0.000000e+00 : f32
    %2327 = vector.broadcast %70 : f32 to vector<8x128xf32>
    %2328 = vector.broadcast %cst_606 : f32 to vector<8x128xf32>
    %2329 = arith.select %2212, %2327, %2328 : vector<8x128xi1>, vector<8x128xf32>
    %2330 = arith.addf %2326, %2329 : vector<8x128xf32>
    %cst_607 = arith.constant 0.000000e+00 : f32
    %2331 = vector.broadcast %86 : f32 to vector<8x128xf32>
    %2332 = vector.broadcast %cst_607 : f32 to vector<8x128xf32>
    %2333 = arith.select %2215, %2331, %2332 : vector<8x128xi1>, vector<8x128xf32>
    %2334 = arith.addf %2330, %2333 : vector<8x128xf32>
    %cst_608 = arith.constant 0.000000e+00 : f32
    %2335 = vector.broadcast %71 : f32 to vector<8x128xf32>
    %2336 = vector.broadcast %cst_608 : f32 to vector<8x128xf32>
    %2337 = arith.select %2213, %2335, %2336 : vector<8x128xi1>, vector<8x128xf32>
    %2338 = arith.addf %2334, %2337 : vector<8x128xf32>
    %cst_609 = arith.constant 0.000000e+00 : f32
    %2339 = vector.broadcast %87 : f32 to vector<8x128xf32>
    %2340 = vector.broadcast %cst_609 : f32 to vector<8x128xf32>
    %2341 = arith.select %2216, %2339, %2340 : vector<8x128xi1>, vector<8x128xf32>
    %2342 = arith.addf %2338, %2341 : vector<8x128xf32>
    %2343 = arith.subf %91, %85 : f32
    %2344 = vector.broadcast %2343 : f32 to vector<8x128xf32>
    %2345 = arith.cmpf oge, %2342, %2344 : vector<8x128xf32>
    %cst_610 = arith.constant 0xFF800000 : f32
    %2346 = vector.broadcast %cst_610 : f32 to vector<8x128xf32>
    %2347 = arith.select %2345, %1514, %2346 : vector<8x128xi1>, vector<8x128xf32>
    %2348 = arith.maximumf %2209, %2347 : vector<8x128xf32>
    %2349 = arith.cmpf oge, %1411, %1516 : vector<8x128xf32>
    %2350 = arith.cmpf oge, %1444, %1516 : vector<8x128xf32>
    %2351 = arith.cmpf oge, %1477, %1516 : vector<8x128xf32>
    %2352 = arith.cmpf oge, %1510, %1516 : vector<8x128xf32>
    %2353 = arith.cmpf oge, %1512, %1516 : vector<8x128xf32>
    %2354 = arith.cmpf oge, %1514, %1516 : vector<8x128xf32>
    %2355 = arith.cmpf oge, %1518, %1516 : vector<8x128xf32>
    %cst_611 = arith.constant 0.000000e+00 : f32
    %2356 = vector.broadcast %56 : f32 to vector<8x128xf32>
    %2357 = vector.broadcast %cst_611 : f32 to vector<8x128xf32>
    %2358 = arith.select %2349, %2356, %2357 : vector<8x128xi1>, vector<8x128xf32>
    %cst_612 = arith.constant 0.000000e+00 : f32
    %2359 = vector.broadcast %72 : f32 to vector<8x128xf32>
    %2360 = vector.broadcast %cst_612 : f32 to vector<8x128xf32>
    %2361 = arith.select %2353, %2359, %2360 : vector<8x128xi1>, vector<8x128xf32>
    %2362 = arith.addf %2358, %2361 : vector<8x128xf32>
    %cst_613 = arith.constant 0.000000e+00 : f32
    %2363 = vector.broadcast %57 : f32 to vector<8x128xf32>
    %2364 = vector.broadcast %cst_613 : f32 to vector<8x128xf32>
    %2365 = arith.select %2350, %2363, %2364 : vector<8x128xi1>, vector<8x128xf32>
    %2366 = arith.addf %2362, %2365 : vector<8x128xf32>
    %cst_614 = arith.constant 0.000000e+00 : f32
    %2367 = vector.broadcast %73 : f32 to vector<8x128xf32>
    %2368 = vector.broadcast %cst_614 : f32 to vector<8x128xf32>
    %2369 = arith.select %2354, %2367, %2368 : vector<8x128xi1>, vector<8x128xf32>
    %2370 = arith.addf %2366, %2369 : vector<8x128xf32>
    %cst_615 = arith.constant 0.000000e+00 : f32
    %2371 = vector.broadcast %58 : f32 to vector<8x128xf32>
    %2372 = vector.broadcast %cst_615 : f32 to vector<8x128xf32>
    %2373 = arith.select %2351, %2371, %2372 : vector<8x128xi1>, vector<8x128xf32>
    %2374 = arith.addf %2370, %2373 : vector<8x128xf32>
    %cst_616 = arith.constant 0.000000e+00 : f32
    %2375 = vector.broadcast %59 : f32 to vector<8x128xf32>
    %2376 = vector.broadcast %cst_616 : f32 to vector<8x128xf32>
    %2377 = arith.select %2352, %2375, %2376 : vector<8x128xi1>, vector<8x128xf32>
    %2378 = arith.addf %2374, %2377 : vector<8x128xf32>
    %cst_617 = arith.constant 0.000000e+00 : f32
    %2379 = vector.broadcast %75 : f32 to vector<8x128xf32>
    %2380 = vector.broadcast %cst_617 : f32 to vector<8x128xf32>
    %2381 = arith.select %2355, %2379, %2380 : vector<8x128xi1>, vector<8x128xf32>
    %2382 = arith.addf %2378, %2381 : vector<8x128xf32>
    %2383 = arith.subf %88, %74 : f32
    %2384 = vector.broadcast %2383 : f32 to vector<8x128xf32>
    %2385 = arith.cmpf oge, %2382, %2384 : vector<8x128xf32>
    %cst_618 = arith.constant 0xFF800000 : f32
    %2386 = vector.broadcast %cst_618 : f32 to vector<8x128xf32>
    %2387 = arith.select %2385, %1516, %2386 : vector<8x128xi1>, vector<8x128xf32>
    %2388 = arith.maximumf %2249, %2387 : vector<8x128xf32>
    %cst_619 = arith.constant 0.000000e+00 : f32
    %2389 = vector.broadcast %60 : f32 to vector<8x128xf32>
    %2390 = vector.broadcast %cst_619 : f32 to vector<8x128xf32>
    %2391 = arith.select %2349, %2389, %2390 : vector<8x128xi1>, vector<8x128xf32>
    %cst_620 = arith.constant 0.000000e+00 : f32
    %2392 = vector.broadcast %76 : f32 to vector<8x128xf32>
    %2393 = vector.broadcast %cst_620 : f32 to vector<8x128xf32>
    %2394 = arith.select %2353, %2392, %2393 : vector<8x128xi1>, vector<8x128xf32>
    %2395 = arith.addf %2391, %2394 : vector<8x128xf32>
    %cst_621 = arith.constant 0.000000e+00 : f32
    %2396 = vector.broadcast %61 : f32 to vector<8x128xf32>
    %2397 = vector.broadcast %cst_621 : f32 to vector<8x128xf32>
    %2398 = arith.select %2350, %2396, %2397 : vector<8x128xi1>, vector<8x128xf32>
    %2399 = arith.addf %2395, %2398 : vector<8x128xf32>
    %cst_622 = arith.constant 0.000000e+00 : f32
    %2400 = vector.broadcast %77 : f32 to vector<8x128xf32>
    %2401 = vector.broadcast %cst_622 : f32 to vector<8x128xf32>
    %2402 = arith.select %2354, %2400, %2401 : vector<8x128xi1>, vector<8x128xf32>
    %2403 = arith.addf %2399, %2402 : vector<8x128xf32>
    %cst_623 = arith.constant 0.000000e+00 : f32
    %2404 = vector.broadcast %62 : f32 to vector<8x128xf32>
    %2405 = vector.broadcast %cst_623 : f32 to vector<8x128xf32>
    %2406 = arith.select %2351, %2404, %2405 : vector<8x128xi1>, vector<8x128xf32>
    %2407 = arith.addf %2403, %2406 : vector<8x128xf32>
    %cst_624 = arith.constant 0.000000e+00 : f32
    %2408 = vector.broadcast %63 : f32 to vector<8x128xf32>
    %2409 = vector.broadcast %cst_624 : f32 to vector<8x128xf32>
    %2410 = arith.select %2352, %2408, %2409 : vector<8x128xi1>, vector<8x128xf32>
    %2411 = arith.addf %2407, %2410 : vector<8x128xf32>
    %cst_625 = arith.constant 0.000000e+00 : f32
    %2412 = vector.broadcast %79 : f32 to vector<8x128xf32>
    %2413 = vector.broadcast %cst_625 : f32 to vector<8x128xf32>
    %2414 = arith.select %2355, %2412, %2413 : vector<8x128xi1>, vector<8x128xf32>
    %2415 = arith.addf %2411, %2414 : vector<8x128xf32>
    %2416 = arith.subf %89, %78 : f32
    %2417 = vector.broadcast %2416 : f32 to vector<8x128xf32>
    %2418 = arith.cmpf oge, %2415, %2417 : vector<8x128xf32>
    %cst_626 = arith.constant 0xFF800000 : f32
    %2419 = vector.broadcast %cst_626 : f32 to vector<8x128xf32>
    %2420 = arith.select %2418, %1516, %2419 : vector<8x128xi1>, vector<8x128xf32>
    %2421 = arith.maximumf %2282, %2420 : vector<8x128xf32>
    %cst_627 = arith.constant 0.000000e+00 : f32
    %2422 = vector.broadcast %64 : f32 to vector<8x128xf32>
    %2423 = vector.broadcast %cst_627 : f32 to vector<8x128xf32>
    %2424 = arith.select %2349, %2422, %2423 : vector<8x128xi1>, vector<8x128xf32>
    %cst_628 = arith.constant 0.000000e+00 : f32
    %2425 = vector.broadcast %80 : f32 to vector<8x128xf32>
    %2426 = vector.broadcast %cst_628 : f32 to vector<8x128xf32>
    %2427 = arith.select %2353, %2425, %2426 : vector<8x128xi1>, vector<8x128xf32>
    %2428 = arith.addf %2424, %2427 : vector<8x128xf32>
    %cst_629 = arith.constant 0.000000e+00 : f32
    %2429 = vector.broadcast %65 : f32 to vector<8x128xf32>
    %2430 = vector.broadcast %cst_629 : f32 to vector<8x128xf32>
    %2431 = arith.select %2350, %2429, %2430 : vector<8x128xi1>, vector<8x128xf32>
    %2432 = arith.addf %2428, %2431 : vector<8x128xf32>
    %cst_630 = arith.constant 0.000000e+00 : f32
    %2433 = vector.broadcast %81 : f32 to vector<8x128xf32>
    %2434 = vector.broadcast %cst_630 : f32 to vector<8x128xf32>
    %2435 = arith.select %2354, %2433, %2434 : vector<8x128xi1>, vector<8x128xf32>
    %2436 = arith.addf %2432, %2435 : vector<8x128xf32>
    %cst_631 = arith.constant 0.000000e+00 : f32
    %2437 = vector.broadcast %66 : f32 to vector<8x128xf32>
    %2438 = vector.broadcast %cst_631 : f32 to vector<8x128xf32>
    %2439 = arith.select %2351, %2437, %2438 : vector<8x128xi1>, vector<8x128xf32>
    %2440 = arith.addf %2436, %2439 : vector<8x128xf32>
    %cst_632 = arith.constant 0.000000e+00 : f32
    %2441 = vector.broadcast %67 : f32 to vector<8x128xf32>
    %2442 = vector.broadcast %cst_632 : f32 to vector<8x128xf32>
    %2443 = arith.select %2352, %2441, %2442 : vector<8x128xi1>, vector<8x128xf32>
    %2444 = arith.addf %2440, %2443 : vector<8x128xf32>
    %cst_633 = arith.constant 0.000000e+00 : f32
    %2445 = vector.broadcast %83 : f32 to vector<8x128xf32>
    %2446 = vector.broadcast %cst_633 : f32 to vector<8x128xf32>
    %2447 = arith.select %2355, %2445, %2446 : vector<8x128xi1>, vector<8x128xf32>
    %2448 = arith.addf %2444, %2447 : vector<8x128xf32>
    %2449 = arith.subf %90, %82 : f32
    %2450 = vector.broadcast %2449 : f32 to vector<8x128xf32>
    %2451 = arith.cmpf oge, %2448, %2450 : vector<8x128xf32>
    %cst_634 = arith.constant 0xFF800000 : f32
    %2452 = vector.broadcast %cst_634 : f32 to vector<8x128xf32>
    %2453 = arith.select %2451, %1516, %2452 : vector<8x128xi1>, vector<8x128xf32>
    %2454 = arith.maximumf %2315, %2453 : vector<8x128xf32>
    %cst_635 = arith.constant 0.000000e+00 : f32
    %2455 = vector.broadcast %68 : f32 to vector<8x128xf32>
    %2456 = vector.broadcast %cst_635 : f32 to vector<8x128xf32>
    %2457 = arith.select %2349, %2455, %2456 : vector<8x128xi1>, vector<8x128xf32>
    %cst_636 = arith.constant 0.000000e+00 : f32
    %2458 = vector.broadcast %84 : f32 to vector<8x128xf32>
    %2459 = vector.broadcast %cst_636 : f32 to vector<8x128xf32>
    %2460 = arith.select %2353, %2458, %2459 : vector<8x128xi1>, vector<8x128xf32>
    %2461 = arith.addf %2457, %2460 : vector<8x128xf32>
    %cst_637 = arith.constant 0.000000e+00 : f32
    %2462 = vector.broadcast %69 : f32 to vector<8x128xf32>
    %2463 = vector.broadcast %cst_637 : f32 to vector<8x128xf32>
    %2464 = arith.select %2350, %2462, %2463 : vector<8x128xi1>, vector<8x128xf32>
    %2465 = arith.addf %2461, %2464 : vector<8x128xf32>
    %cst_638 = arith.constant 0.000000e+00 : f32
    %2466 = vector.broadcast %85 : f32 to vector<8x128xf32>
    %2467 = vector.broadcast %cst_638 : f32 to vector<8x128xf32>
    %2468 = arith.select %2354, %2466, %2467 : vector<8x128xi1>, vector<8x128xf32>
    %2469 = arith.addf %2465, %2468 : vector<8x128xf32>
    %cst_639 = arith.constant 0.000000e+00 : f32
    %2470 = vector.broadcast %70 : f32 to vector<8x128xf32>
    %2471 = vector.broadcast %cst_639 : f32 to vector<8x128xf32>
    %2472 = arith.select %2351, %2470, %2471 : vector<8x128xi1>, vector<8x128xf32>
    %2473 = arith.addf %2469, %2472 : vector<8x128xf32>
    %cst_640 = arith.constant 0.000000e+00 : f32
    %2474 = vector.broadcast %71 : f32 to vector<8x128xf32>
    %2475 = vector.broadcast %cst_640 : f32 to vector<8x128xf32>
    %2476 = arith.select %2352, %2474, %2475 : vector<8x128xi1>, vector<8x128xf32>
    %2477 = arith.addf %2473, %2476 : vector<8x128xf32>
    %cst_641 = arith.constant 0.000000e+00 : f32
    %2478 = vector.broadcast %87 : f32 to vector<8x128xf32>
    %2479 = vector.broadcast %cst_641 : f32 to vector<8x128xf32>
    %2480 = arith.select %2355, %2478, %2479 : vector<8x128xi1>, vector<8x128xf32>
    %2481 = arith.addf %2477, %2480 : vector<8x128xf32>
    %2482 = arith.subf %91, %86 : f32
    %2483 = vector.broadcast %2482 : f32 to vector<8x128xf32>
    %2484 = arith.cmpf oge, %2481, %2483 : vector<8x128xf32>
    %cst_642 = arith.constant 0xFF800000 : f32
    %2485 = vector.broadcast %cst_642 : f32 to vector<8x128xf32>
    %2486 = arith.select %2484, %1516, %2485 : vector<8x128xi1>, vector<8x128xf32>
    %2487 = arith.maximumf %2348, %2486 : vector<8x128xf32>
    %2488 = arith.cmpf oge, %1411, %1518 : vector<8x128xf32>
    %2489 = arith.cmpf oge, %1444, %1518 : vector<8x128xf32>
    %2490 = arith.cmpf oge, %1477, %1518 : vector<8x128xf32>
    %2491 = arith.cmpf oge, %1510, %1518 : vector<8x128xf32>
    %2492 = arith.cmpf oge, %1512, %1518 : vector<8x128xf32>
    %2493 = arith.cmpf oge, %1514, %1518 : vector<8x128xf32>
    %2494 = arith.cmpf oge, %1516, %1518 : vector<8x128xf32>
    %cst_643 = arith.constant 0.000000e+00 : f32
    %2495 = vector.broadcast %56 : f32 to vector<8x128xf32>
    %2496 = vector.broadcast %cst_643 : f32 to vector<8x128xf32>
    %2497 = arith.select %2488, %2495, %2496 : vector<8x128xi1>, vector<8x128xf32>
    %cst_644 = arith.constant 0.000000e+00 : f32
    %2498 = vector.broadcast %72 : f32 to vector<8x128xf32>
    %2499 = vector.broadcast %cst_644 : f32 to vector<8x128xf32>
    %2500 = arith.select %2492, %2498, %2499 : vector<8x128xi1>, vector<8x128xf32>
    %2501 = arith.addf %2497, %2500 : vector<8x128xf32>
    %cst_645 = arith.constant 0.000000e+00 : f32
    %2502 = vector.broadcast %57 : f32 to vector<8x128xf32>
    %2503 = vector.broadcast %cst_645 : f32 to vector<8x128xf32>
    %2504 = arith.select %2489, %2502, %2503 : vector<8x128xi1>, vector<8x128xf32>
    %2505 = arith.addf %2501, %2504 : vector<8x128xf32>
    %cst_646 = arith.constant 0.000000e+00 : f32
    %2506 = vector.broadcast %73 : f32 to vector<8x128xf32>
    %2507 = vector.broadcast %cst_646 : f32 to vector<8x128xf32>
    %2508 = arith.select %2493, %2506, %2507 : vector<8x128xi1>, vector<8x128xf32>
    %2509 = arith.addf %2505, %2508 : vector<8x128xf32>
    %cst_647 = arith.constant 0.000000e+00 : f32
    %2510 = vector.broadcast %58 : f32 to vector<8x128xf32>
    %2511 = vector.broadcast %cst_647 : f32 to vector<8x128xf32>
    %2512 = arith.select %2490, %2510, %2511 : vector<8x128xi1>, vector<8x128xf32>
    %2513 = arith.addf %2509, %2512 : vector<8x128xf32>
    %cst_648 = arith.constant 0.000000e+00 : f32
    %2514 = vector.broadcast %74 : f32 to vector<8x128xf32>
    %2515 = vector.broadcast %cst_648 : f32 to vector<8x128xf32>
    %2516 = arith.select %2494, %2514, %2515 : vector<8x128xi1>, vector<8x128xf32>
    %2517 = arith.addf %2513, %2516 : vector<8x128xf32>
    %cst_649 = arith.constant 0.000000e+00 : f32
    %2518 = vector.broadcast %59 : f32 to vector<8x128xf32>
    %2519 = vector.broadcast %cst_649 : f32 to vector<8x128xf32>
    %2520 = arith.select %2491, %2518, %2519 : vector<8x128xi1>, vector<8x128xf32>
    %2521 = arith.addf %2517, %2520 : vector<8x128xf32>
    %2522 = arith.subf %88, %75 : f32
    %2523 = vector.broadcast %2522 : f32 to vector<8x128xf32>
    %2524 = arith.cmpf oge, %2521, %2523 : vector<8x128xf32>
    %cst_650 = arith.constant 0xFF800000 : f32
    %2525 = vector.broadcast %cst_650 : f32 to vector<8x128xf32>
    %2526 = arith.select %2524, %1518, %2525 : vector<8x128xi1>, vector<8x128xf32>
    %2527 = arith.maximumf %2388, %2526 : vector<8x128xf32>
    %cst_651 = arith.constant 0.000000e+00 : f32
    %2528 = vector.broadcast %60 : f32 to vector<8x128xf32>
    %2529 = vector.broadcast %cst_651 : f32 to vector<8x128xf32>
    %2530 = arith.select %2488, %2528, %2529 : vector<8x128xi1>, vector<8x128xf32>
    %cst_652 = arith.constant 0.000000e+00 : f32
    %2531 = vector.broadcast %76 : f32 to vector<8x128xf32>
    %2532 = vector.broadcast %cst_652 : f32 to vector<8x128xf32>
    %2533 = arith.select %2492, %2531, %2532 : vector<8x128xi1>, vector<8x128xf32>
    %2534 = arith.addf %2530, %2533 : vector<8x128xf32>
    %cst_653 = arith.constant 0.000000e+00 : f32
    %2535 = vector.broadcast %61 : f32 to vector<8x128xf32>
    %2536 = vector.broadcast %cst_653 : f32 to vector<8x128xf32>
    %2537 = arith.select %2489, %2535, %2536 : vector<8x128xi1>, vector<8x128xf32>
    %2538 = arith.addf %2534, %2537 : vector<8x128xf32>
    %cst_654 = arith.constant 0.000000e+00 : f32
    %2539 = vector.broadcast %77 : f32 to vector<8x128xf32>
    %2540 = vector.broadcast %cst_654 : f32 to vector<8x128xf32>
    %2541 = arith.select %2493, %2539, %2540 : vector<8x128xi1>, vector<8x128xf32>
    %2542 = arith.addf %2538, %2541 : vector<8x128xf32>
    %cst_655 = arith.constant 0.000000e+00 : f32
    %2543 = vector.broadcast %62 : f32 to vector<8x128xf32>
    %2544 = vector.broadcast %cst_655 : f32 to vector<8x128xf32>
    %2545 = arith.select %2490, %2543, %2544 : vector<8x128xi1>, vector<8x128xf32>
    %2546 = arith.addf %2542, %2545 : vector<8x128xf32>
    %cst_656 = arith.constant 0.000000e+00 : f32
    %2547 = vector.broadcast %78 : f32 to vector<8x128xf32>
    %2548 = vector.broadcast %cst_656 : f32 to vector<8x128xf32>
    %2549 = arith.select %2494, %2547, %2548 : vector<8x128xi1>, vector<8x128xf32>
    %2550 = arith.addf %2546, %2549 : vector<8x128xf32>
    %cst_657 = arith.constant 0.000000e+00 : f32
    %2551 = vector.broadcast %63 : f32 to vector<8x128xf32>
    %2552 = vector.broadcast %cst_657 : f32 to vector<8x128xf32>
    %2553 = arith.select %2491, %2551, %2552 : vector<8x128xi1>, vector<8x128xf32>
    %2554 = arith.addf %2550, %2553 : vector<8x128xf32>
    %2555 = arith.subf %89, %79 : f32
    %2556 = vector.broadcast %2555 : f32 to vector<8x128xf32>
    %2557 = arith.cmpf oge, %2554, %2556 : vector<8x128xf32>
    %cst_658 = arith.constant 0xFF800000 : f32
    %2558 = vector.broadcast %cst_658 : f32 to vector<8x128xf32>
    %2559 = arith.select %2557, %1518, %2558 : vector<8x128xi1>, vector<8x128xf32>
    %2560 = arith.maximumf %2421, %2559 : vector<8x128xf32>
    %cst_659 = arith.constant 0.000000e+00 : f32
    %2561 = vector.broadcast %64 : f32 to vector<8x128xf32>
    %2562 = vector.broadcast %cst_659 : f32 to vector<8x128xf32>
    %2563 = arith.select %2488, %2561, %2562 : vector<8x128xi1>, vector<8x128xf32>
    %cst_660 = arith.constant 0.000000e+00 : f32
    %2564 = vector.broadcast %80 : f32 to vector<8x128xf32>
    %2565 = vector.broadcast %cst_660 : f32 to vector<8x128xf32>
    %2566 = arith.select %2492, %2564, %2565 : vector<8x128xi1>, vector<8x128xf32>
    %2567 = arith.addf %2563, %2566 : vector<8x128xf32>
    %cst_661 = arith.constant 0.000000e+00 : f32
    %2568 = vector.broadcast %65 : f32 to vector<8x128xf32>
    %2569 = vector.broadcast %cst_661 : f32 to vector<8x128xf32>
    %2570 = arith.select %2489, %2568, %2569 : vector<8x128xi1>, vector<8x128xf32>
    %2571 = arith.addf %2567, %2570 : vector<8x128xf32>
    %cst_662 = arith.constant 0.000000e+00 : f32
    %2572 = vector.broadcast %81 : f32 to vector<8x128xf32>
    %2573 = vector.broadcast %cst_662 : f32 to vector<8x128xf32>
    %2574 = arith.select %2493, %2572, %2573 : vector<8x128xi1>, vector<8x128xf32>
    %2575 = arith.addf %2571, %2574 : vector<8x128xf32>
    %cst_663 = arith.constant 0.000000e+00 : f32
    %2576 = vector.broadcast %66 : f32 to vector<8x128xf32>
    %2577 = vector.broadcast %cst_663 : f32 to vector<8x128xf32>
    %2578 = arith.select %2490, %2576, %2577 : vector<8x128xi1>, vector<8x128xf32>
    %2579 = arith.addf %2575, %2578 : vector<8x128xf32>
    %cst_664 = arith.constant 0.000000e+00 : f32
    %2580 = vector.broadcast %82 : f32 to vector<8x128xf32>
    %2581 = vector.broadcast %cst_664 : f32 to vector<8x128xf32>
    %2582 = arith.select %2494, %2580, %2581 : vector<8x128xi1>, vector<8x128xf32>
    %2583 = arith.addf %2579, %2582 : vector<8x128xf32>
    %cst_665 = arith.constant 0.000000e+00 : f32
    %2584 = vector.broadcast %67 : f32 to vector<8x128xf32>
    %2585 = vector.broadcast %cst_665 : f32 to vector<8x128xf32>
    %2586 = arith.select %2491, %2584, %2585 : vector<8x128xi1>, vector<8x128xf32>
    %2587 = arith.addf %2583, %2586 : vector<8x128xf32>
    %2588 = arith.subf %90, %83 : f32
    %2589 = vector.broadcast %2588 : f32 to vector<8x128xf32>
    %2590 = arith.cmpf oge, %2587, %2589 : vector<8x128xf32>
    %cst_666 = arith.constant 0xFF800000 : f32
    %2591 = vector.broadcast %cst_666 : f32 to vector<8x128xf32>
    %2592 = arith.select %2590, %1518, %2591 : vector<8x128xi1>, vector<8x128xf32>
    %2593 = arith.maximumf %2454, %2592 : vector<8x128xf32>
    %cst_667 = arith.constant 0.000000e+00 : f32
    %2594 = vector.broadcast %68 : f32 to vector<8x128xf32>
    %2595 = vector.broadcast %cst_667 : f32 to vector<8x128xf32>
    %2596 = arith.select %2488, %2594, %2595 : vector<8x128xi1>, vector<8x128xf32>
    %cst_668 = arith.constant 0.000000e+00 : f32
    %2597 = vector.broadcast %84 : f32 to vector<8x128xf32>
    %2598 = vector.broadcast %cst_668 : f32 to vector<8x128xf32>
    %2599 = arith.select %2492, %2597, %2598 : vector<8x128xi1>, vector<8x128xf32>
    %2600 = arith.addf %2596, %2599 : vector<8x128xf32>
    %cst_669 = arith.constant 0.000000e+00 : f32
    %2601 = vector.broadcast %69 : f32 to vector<8x128xf32>
    %2602 = vector.broadcast %cst_669 : f32 to vector<8x128xf32>
    %2603 = arith.select %2489, %2601, %2602 : vector<8x128xi1>, vector<8x128xf32>
    %2604 = arith.addf %2600, %2603 : vector<8x128xf32>
    %cst_670 = arith.constant 0.000000e+00 : f32
    %2605 = vector.broadcast %85 : f32 to vector<8x128xf32>
    %2606 = vector.broadcast %cst_670 : f32 to vector<8x128xf32>
    %2607 = arith.select %2493, %2605, %2606 : vector<8x128xi1>, vector<8x128xf32>
    %2608 = arith.addf %2604, %2607 : vector<8x128xf32>
    %cst_671 = arith.constant 0.000000e+00 : f32
    %2609 = vector.broadcast %70 : f32 to vector<8x128xf32>
    %2610 = vector.broadcast %cst_671 : f32 to vector<8x128xf32>
    %2611 = arith.select %2490, %2609, %2610 : vector<8x128xi1>, vector<8x128xf32>
    %2612 = arith.addf %2608, %2611 : vector<8x128xf32>
    %cst_672 = arith.constant 0.000000e+00 : f32
    %2613 = vector.broadcast %86 : f32 to vector<8x128xf32>
    %2614 = vector.broadcast %cst_672 : f32 to vector<8x128xf32>
    %2615 = arith.select %2494, %2613, %2614 : vector<8x128xi1>, vector<8x128xf32>
    %2616 = arith.addf %2612, %2615 : vector<8x128xf32>
    %cst_673 = arith.constant 0.000000e+00 : f32
    %2617 = vector.broadcast %71 : f32 to vector<8x128xf32>
    %2618 = vector.broadcast %cst_673 : f32 to vector<8x128xf32>
    %2619 = arith.select %2491, %2617, %2618 : vector<8x128xi1>, vector<8x128xf32>
    %2620 = arith.addf %2616, %2619 : vector<8x128xf32>
    %2621 = arith.subf %91, %87 : f32
    %2622 = vector.broadcast %2621 : f32 to vector<8x128xf32>
    %2623 = arith.cmpf oge, %2620, %2622 : vector<8x128xf32>
    %cst_674 = arith.constant 0xFF800000 : f32
    %2624 = vector.broadcast %cst_674 : f32 to vector<8x128xf32>
    %2625 = arith.select %2623, %1518, %2624 : vector<8x128xi1>, vector<8x128xf32>
    %2626 = arith.maximumf %2487, %2625 : vector<8x128xf32>
    %cst_675 = arith.constant 0.000000e+00 : f32
    %2627 = vector.broadcast %cst_675 : f32 to vector<8x128xf32>
    %2628 = arith.subf %2627, %2527 : vector<8x128xf32>
    %cst_676 = arith.constant 0.000000e+00 : f32
    %2629 = vector.broadcast %cst_676 : f32 to vector<8x128xf32>
    %2630 = arith.subf %2629, %2560 : vector<8x128xf32>
    %cst_677 = arith.constant 0.000000e+00 : f32
    %2631 = vector.broadcast %cst_677 : f32 to vector<8x128xf32>
    %2632 = arith.subf %2631, %2593 : vector<8x128xf32>
    %cst_678 = arith.constant 0.000000e+00 : f32
    %2633 = vector.broadcast %cst_678 : f32 to vector<8x128xf32>
    %2634 = arith.subf %2633, %2626 : vector<8x128xf32>
    %2635 = arith.cmpf oge, %2560, %2527 : vector<8x128xf32>
    %2636 = arith.cmpf oge, %2593, %2527 : vector<8x128xf32>
    %2637 = arith.cmpf oge, %2626, %2527 : vector<8x128xf32>
    %2638 = arith.cmpf oge, %2628, %2527 : vector<8x128xf32>
    %2639 = arith.cmpf oge, %2630, %2527 : vector<8x128xf32>
    %2640 = arith.cmpf oge, %2632, %2527 : vector<8x128xf32>
    %2641 = arith.cmpf oge, %2634, %2527 : vector<8x128xf32>
    %cst_679 = arith.constant 0.000000e+00 : f32
    %2642 = vector.broadcast %96 : f32 to vector<8x128xf32>
    %2643 = vector.broadcast %cst_679 : f32 to vector<8x128xf32>
    %2644 = arith.select %2638, %2642, %2643 : vector<8x128xi1>, vector<8x128xf32>
    %cst_680 = arith.constant 0.000000e+00 : f32
    %2645 = vector.broadcast %93 : f32 to vector<8x128xf32>
    %2646 = vector.broadcast %cst_680 : f32 to vector<8x128xf32>
    %2647 = arith.select %2635, %2645, %2646 : vector<8x128xi1>, vector<8x128xf32>
    %2648 = arith.addf %2644, %2647 : vector<8x128xf32>
    %cst_681 = arith.constant 0.000000e+00 : f32
    %2649 = vector.broadcast %97 : f32 to vector<8x128xf32>
    %2650 = vector.broadcast %cst_681 : f32 to vector<8x128xf32>
    %2651 = arith.select %2639, %2649, %2650 : vector<8x128xi1>, vector<8x128xf32>
    %2652 = arith.addf %2648, %2651 : vector<8x128xf32>
    %cst_682 = arith.constant 0.000000e+00 : f32
    %2653 = vector.broadcast %94 : f32 to vector<8x128xf32>
    %2654 = vector.broadcast %cst_682 : f32 to vector<8x128xf32>
    %2655 = arith.select %2636, %2653, %2654 : vector<8x128xi1>, vector<8x128xf32>
    %2656 = arith.addf %2652, %2655 : vector<8x128xf32>
    %cst_683 = arith.constant 0.000000e+00 : f32
    %2657 = vector.broadcast %98 : f32 to vector<8x128xf32>
    %2658 = vector.broadcast %cst_683 : f32 to vector<8x128xf32>
    %2659 = arith.select %2640, %2657, %2658 : vector<8x128xi1>, vector<8x128xf32>
    %2660 = arith.addf %2656, %2659 : vector<8x128xf32>
    %cst_684 = arith.constant 0.000000e+00 : f32
    %2661 = vector.broadcast %95 : f32 to vector<8x128xf32>
    %2662 = vector.broadcast %cst_684 : f32 to vector<8x128xf32>
    %2663 = arith.select %2637, %2661, %2662 : vector<8x128xi1>, vector<8x128xf32>
    %2664 = arith.addf %2660, %2663 : vector<8x128xf32>
    %cst_685 = arith.constant 0.000000e+00 : f32
    %2665 = vector.broadcast %99 : f32 to vector<8x128xf32>
    %2666 = vector.broadcast %cst_685 : f32 to vector<8x128xf32>
    %2667 = arith.select %2641, %2665, %2666 : vector<8x128xi1>, vector<8x128xf32>
    %2668 = arith.addf %2664, %2667 : vector<8x128xf32>
    %2669 = arith.subf %100, %92 : f32
    %2670 = vector.broadcast %2669 : f32 to vector<8x128xf32>
    %2671 = arith.cmpf oge, %2668, %2670 : vector<8x128xf32>
    %cst_686 = arith.constant 0xFF800000 : f32
    %2672 = vector.broadcast %cst_686 : f32 to vector<8x128xf32>
    %2673 = arith.select %2671, %2527, %2672 : vector<8x128xi1>, vector<8x128xf32>
    %2674 = arith.cmpf oge, %2527, %2560 : vector<8x128xf32>
    %2675 = arith.cmpf oge, %2593, %2560 : vector<8x128xf32>
    %2676 = arith.cmpf oge, %2626, %2560 : vector<8x128xf32>
    %2677 = arith.cmpf oge, %2628, %2560 : vector<8x128xf32>
    %2678 = arith.cmpf oge, %2630, %2560 : vector<8x128xf32>
    %2679 = arith.cmpf oge, %2632, %2560 : vector<8x128xf32>
    %2680 = arith.cmpf oge, %2634, %2560 : vector<8x128xf32>
    %cst_687 = arith.constant 0.000000e+00 : f32
    %2681 = vector.broadcast %92 : f32 to vector<8x128xf32>
    %2682 = vector.broadcast %cst_687 : f32 to vector<8x128xf32>
    %2683 = arith.select %2674, %2681, %2682 : vector<8x128xi1>, vector<8x128xf32>
    %cst_688 = arith.constant 0.000000e+00 : f32
    %2684 = vector.broadcast %96 : f32 to vector<8x128xf32>
    %2685 = vector.broadcast %cst_688 : f32 to vector<8x128xf32>
    %2686 = arith.select %2677, %2684, %2685 : vector<8x128xi1>, vector<8x128xf32>
    %2687 = arith.addf %2683, %2686 : vector<8x128xf32>
    %cst_689 = arith.constant 0.000000e+00 : f32
    %2688 = vector.broadcast %97 : f32 to vector<8x128xf32>
    %2689 = vector.broadcast %cst_689 : f32 to vector<8x128xf32>
    %2690 = arith.select %2678, %2688, %2689 : vector<8x128xi1>, vector<8x128xf32>
    %2691 = arith.addf %2687, %2690 : vector<8x128xf32>
    %cst_690 = arith.constant 0.000000e+00 : f32
    %2692 = vector.broadcast %94 : f32 to vector<8x128xf32>
    %2693 = vector.broadcast %cst_690 : f32 to vector<8x128xf32>
    %2694 = arith.select %2675, %2692, %2693 : vector<8x128xi1>, vector<8x128xf32>
    %2695 = arith.addf %2691, %2694 : vector<8x128xf32>
    %cst_691 = arith.constant 0.000000e+00 : f32
    %2696 = vector.broadcast %98 : f32 to vector<8x128xf32>
    %2697 = vector.broadcast %cst_691 : f32 to vector<8x128xf32>
    %2698 = arith.select %2679, %2696, %2697 : vector<8x128xi1>, vector<8x128xf32>
    %2699 = arith.addf %2695, %2698 : vector<8x128xf32>
    %cst_692 = arith.constant 0.000000e+00 : f32
    %2700 = vector.broadcast %95 : f32 to vector<8x128xf32>
    %2701 = vector.broadcast %cst_692 : f32 to vector<8x128xf32>
    %2702 = arith.select %2676, %2700, %2701 : vector<8x128xi1>, vector<8x128xf32>
    %2703 = arith.addf %2699, %2702 : vector<8x128xf32>
    %cst_693 = arith.constant 0.000000e+00 : f32
    %2704 = vector.broadcast %99 : f32 to vector<8x128xf32>
    %2705 = vector.broadcast %cst_693 : f32 to vector<8x128xf32>
    %2706 = arith.select %2680, %2704, %2705 : vector<8x128xi1>, vector<8x128xf32>
    %2707 = arith.addf %2703, %2706 : vector<8x128xf32>
    %2708 = arith.subf %100, %93 : f32
    %2709 = vector.broadcast %2708 : f32 to vector<8x128xf32>
    %2710 = arith.cmpf oge, %2707, %2709 : vector<8x128xf32>
    %cst_694 = arith.constant 0xFF800000 : f32
    %2711 = vector.broadcast %cst_694 : f32 to vector<8x128xf32>
    %2712 = arith.select %2710, %2560, %2711 : vector<8x128xi1>, vector<8x128xf32>
    %2713 = arith.maximumf %2673, %2712 : vector<8x128xf32>
    %2714 = arith.cmpf oge, %2527, %2593 : vector<8x128xf32>
    %2715 = arith.cmpf oge, %2560, %2593 : vector<8x128xf32>
    %2716 = arith.cmpf oge, %2626, %2593 : vector<8x128xf32>
    %2717 = arith.cmpf oge, %2628, %2593 : vector<8x128xf32>
    %2718 = arith.cmpf oge, %2630, %2593 : vector<8x128xf32>
    %2719 = arith.cmpf oge, %2632, %2593 : vector<8x128xf32>
    %2720 = arith.cmpf oge, %2634, %2593 : vector<8x128xf32>
    %cst_695 = arith.constant 0.000000e+00 : f32
    %2721 = vector.broadcast %92 : f32 to vector<8x128xf32>
    %2722 = vector.broadcast %cst_695 : f32 to vector<8x128xf32>
    %2723 = arith.select %2714, %2721, %2722 : vector<8x128xi1>, vector<8x128xf32>
    %cst_696 = arith.constant 0.000000e+00 : f32
    %2724 = vector.broadcast %96 : f32 to vector<8x128xf32>
    %2725 = vector.broadcast %cst_696 : f32 to vector<8x128xf32>
    %2726 = arith.select %2717, %2724, %2725 : vector<8x128xi1>, vector<8x128xf32>
    %2727 = arith.addf %2723, %2726 : vector<8x128xf32>
    %cst_697 = arith.constant 0.000000e+00 : f32
    %2728 = vector.broadcast %93 : f32 to vector<8x128xf32>
    %2729 = vector.broadcast %cst_697 : f32 to vector<8x128xf32>
    %2730 = arith.select %2715, %2728, %2729 : vector<8x128xi1>, vector<8x128xf32>
    %2731 = arith.addf %2727, %2730 : vector<8x128xf32>
    %cst_698 = arith.constant 0.000000e+00 : f32
    %2732 = vector.broadcast %97 : f32 to vector<8x128xf32>
    %2733 = vector.broadcast %cst_698 : f32 to vector<8x128xf32>
    %2734 = arith.select %2718, %2732, %2733 : vector<8x128xi1>, vector<8x128xf32>
    %2735 = arith.addf %2731, %2734 : vector<8x128xf32>
    %cst_699 = arith.constant 0.000000e+00 : f32
    %2736 = vector.broadcast %98 : f32 to vector<8x128xf32>
    %2737 = vector.broadcast %cst_699 : f32 to vector<8x128xf32>
    %2738 = arith.select %2719, %2736, %2737 : vector<8x128xi1>, vector<8x128xf32>
    %2739 = arith.addf %2735, %2738 : vector<8x128xf32>
    %cst_700 = arith.constant 0.000000e+00 : f32
    %2740 = vector.broadcast %95 : f32 to vector<8x128xf32>
    %2741 = vector.broadcast %cst_700 : f32 to vector<8x128xf32>
    %2742 = arith.select %2716, %2740, %2741 : vector<8x128xi1>, vector<8x128xf32>
    %2743 = arith.addf %2739, %2742 : vector<8x128xf32>
    %cst_701 = arith.constant 0.000000e+00 : f32
    %2744 = vector.broadcast %99 : f32 to vector<8x128xf32>
    %2745 = vector.broadcast %cst_701 : f32 to vector<8x128xf32>
    %2746 = arith.select %2720, %2744, %2745 : vector<8x128xi1>, vector<8x128xf32>
    %2747 = arith.addf %2743, %2746 : vector<8x128xf32>
    %2748 = arith.subf %100, %94 : f32
    %2749 = vector.broadcast %2748 : f32 to vector<8x128xf32>
    %2750 = arith.cmpf oge, %2747, %2749 : vector<8x128xf32>
    %cst_702 = arith.constant 0xFF800000 : f32
    %2751 = vector.broadcast %cst_702 : f32 to vector<8x128xf32>
    %2752 = arith.select %2750, %2593, %2751 : vector<8x128xi1>, vector<8x128xf32>
    %2753 = arith.maximumf %2713, %2752 : vector<8x128xf32>
    %2754 = arith.cmpf oge, %2527, %2626 : vector<8x128xf32>
    %2755 = arith.cmpf oge, %2560, %2626 : vector<8x128xf32>
    %2756 = arith.cmpf oge, %2593, %2626 : vector<8x128xf32>
    %2757 = arith.cmpf oge, %2628, %2626 : vector<8x128xf32>
    %2758 = arith.cmpf oge, %2630, %2626 : vector<8x128xf32>
    %2759 = arith.cmpf oge, %2632, %2626 : vector<8x128xf32>
    %2760 = arith.cmpf oge, %2634, %2626 : vector<8x128xf32>
    %cst_703 = arith.constant 0.000000e+00 : f32
    %2761 = vector.broadcast %92 : f32 to vector<8x128xf32>
    %2762 = vector.broadcast %cst_703 : f32 to vector<8x128xf32>
    %2763 = arith.select %2754, %2761, %2762 : vector<8x128xi1>, vector<8x128xf32>
    %cst_704 = arith.constant 0.000000e+00 : f32
    %2764 = vector.broadcast %96 : f32 to vector<8x128xf32>
    %2765 = vector.broadcast %cst_704 : f32 to vector<8x128xf32>
    %2766 = arith.select %2757, %2764, %2765 : vector<8x128xi1>, vector<8x128xf32>
    %2767 = arith.addf %2763, %2766 : vector<8x128xf32>
    %cst_705 = arith.constant 0.000000e+00 : f32
    %2768 = vector.broadcast %93 : f32 to vector<8x128xf32>
    %2769 = vector.broadcast %cst_705 : f32 to vector<8x128xf32>
    %2770 = arith.select %2755, %2768, %2769 : vector<8x128xi1>, vector<8x128xf32>
    %2771 = arith.addf %2767, %2770 : vector<8x128xf32>
    %cst_706 = arith.constant 0.000000e+00 : f32
    %2772 = vector.broadcast %97 : f32 to vector<8x128xf32>
    %2773 = vector.broadcast %cst_706 : f32 to vector<8x128xf32>
    %2774 = arith.select %2758, %2772, %2773 : vector<8x128xi1>, vector<8x128xf32>
    %2775 = arith.addf %2771, %2774 : vector<8x128xf32>
    %cst_707 = arith.constant 0.000000e+00 : f32
    %2776 = vector.broadcast %94 : f32 to vector<8x128xf32>
    %2777 = vector.broadcast %cst_707 : f32 to vector<8x128xf32>
    %2778 = arith.select %2756, %2776, %2777 : vector<8x128xi1>, vector<8x128xf32>
    %2779 = arith.addf %2775, %2778 : vector<8x128xf32>
    %cst_708 = arith.constant 0.000000e+00 : f32
    %2780 = vector.broadcast %98 : f32 to vector<8x128xf32>
    %2781 = vector.broadcast %cst_708 : f32 to vector<8x128xf32>
    %2782 = arith.select %2759, %2780, %2781 : vector<8x128xi1>, vector<8x128xf32>
    %2783 = arith.addf %2779, %2782 : vector<8x128xf32>
    %cst_709 = arith.constant 0.000000e+00 : f32
    %2784 = vector.broadcast %99 : f32 to vector<8x128xf32>
    %2785 = vector.broadcast %cst_709 : f32 to vector<8x128xf32>
    %2786 = arith.select %2760, %2784, %2785 : vector<8x128xi1>, vector<8x128xf32>
    %2787 = arith.addf %2783, %2786 : vector<8x128xf32>
    %2788 = arith.subf %100, %95 : f32
    %2789 = vector.broadcast %2788 : f32 to vector<8x128xf32>
    %2790 = arith.cmpf oge, %2787, %2789 : vector<8x128xf32>
    %cst_710 = arith.constant 0xFF800000 : f32
    %2791 = vector.broadcast %cst_710 : f32 to vector<8x128xf32>
    %2792 = arith.select %2790, %2626, %2791 : vector<8x128xi1>, vector<8x128xf32>
    %2793 = arith.maximumf %2753, %2792 : vector<8x128xf32>
    %2794 = arith.cmpf oge, %2527, %2628 : vector<8x128xf32>
    %2795 = arith.cmpf oge, %2560, %2628 : vector<8x128xf32>
    %2796 = arith.cmpf oge, %2593, %2628 : vector<8x128xf32>
    %2797 = arith.cmpf oge, %2626, %2628 : vector<8x128xf32>
    %2798 = arith.cmpf oge, %2630, %2628 : vector<8x128xf32>
    %2799 = arith.cmpf oge, %2632, %2628 : vector<8x128xf32>
    %2800 = arith.cmpf oge, %2634, %2628 : vector<8x128xf32>
    %cst_711 = arith.constant 0.000000e+00 : f32
    %2801 = vector.broadcast %92 : f32 to vector<8x128xf32>
    %2802 = vector.broadcast %cst_711 : f32 to vector<8x128xf32>
    %2803 = arith.select %2794, %2801, %2802 : vector<8x128xi1>, vector<8x128xf32>
    %cst_712 = arith.constant 0.000000e+00 : f32
    %2804 = vector.broadcast %93 : f32 to vector<8x128xf32>
    %2805 = vector.broadcast %cst_712 : f32 to vector<8x128xf32>
    %2806 = arith.select %2795, %2804, %2805 : vector<8x128xi1>, vector<8x128xf32>
    %2807 = arith.addf %2803, %2806 : vector<8x128xf32>
    %cst_713 = arith.constant 0.000000e+00 : f32
    %2808 = vector.broadcast %97 : f32 to vector<8x128xf32>
    %2809 = vector.broadcast %cst_713 : f32 to vector<8x128xf32>
    %2810 = arith.select %2798, %2808, %2809 : vector<8x128xi1>, vector<8x128xf32>
    %2811 = arith.addf %2807, %2810 : vector<8x128xf32>
    %cst_714 = arith.constant 0.000000e+00 : f32
    %2812 = vector.broadcast %94 : f32 to vector<8x128xf32>
    %2813 = vector.broadcast %cst_714 : f32 to vector<8x128xf32>
    %2814 = arith.select %2796, %2812, %2813 : vector<8x128xi1>, vector<8x128xf32>
    %2815 = arith.addf %2811, %2814 : vector<8x128xf32>
    %cst_715 = arith.constant 0.000000e+00 : f32
    %2816 = vector.broadcast %98 : f32 to vector<8x128xf32>
    %2817 = vector.broadcast %cst_715 : f32 to vector<8x128xf32>
    %2818 = arith.select %2799, %2816, %2817 : vector<8x128xi1>, vector<8x128xf32>
    %2819 = arith.addf %2815, %2818 : vector<8x128xf32>
    %cst_716 = arith.constant 0.000000e+00 : f32
    %2820 = vector.broadcast %95 : f32 to vector<8x128xf32>
    %2821 = vector.broadcast %cst_716 : f32 to vector<8x128xf32>
    %2822 = arith.select %2797, %2820, %2821 : vector<8x128xi1>, vector<8x128xf32>
    %2823 = arith.addf %2819, %2822 : vector<8x128xf32>
    %cst_717 = arith.constant 0.000000e+00 : f32
    %2824 = vector.broadcast %99 : f32 to vector<8x128xf32>
    %2825 = vector.broadcast %cst_717 : f32 to vector<8x128xf32>
    %2826 = arith.select %2800, %2824, %2825 : vector<8x128xi1>, vector<8x128xf32>
    %2827 = arith.addf %2823, %2826 : vector<8x128xf32>
    %2828 = arith.subf %100, %96 : f32
    %2829 = vector.broadcast %2828 : f32 to vector<8x128xf32>
    %2830 = arith.cmpf oge, %2827, %2829 : vector<8x128xf32>
    %cst_718 = arith.constant 0xFF800000 : f32
    %2831 = vector.broadcast %cst_718 : f32 to vector<8x128xf32>
    %2832 = arith.select %2830, %2628, %2831 : vector<8x128xi1>, vector<8x128xf32>
    %2833 = arith.maximumf %2793, %2832 : vector<8x128xf32>
    %2834 = arith.cmpf oge, %2527, %2630 : vector<8x128xf32>
    %2835 = arith.cmpf oge, %2560, %2630 : vector<8x128xf32>
    %2836 = arith.cmpf oge, %2593, %2630 : vector<8x128xf32>
    %2837 = arith.cmpf oge, %2626, %2630 : vector<8x128xf32>
    %2838 = arith.cmpf oge, %2628, %2630 : vector<8x128xf32>
    %2839 = arith.cmpf oge, %2632, %2630 : vector<8x128xf32>
    %2840 = arith.cmpf oge, %2634, %2630 : vector<8x128xf32>
    %cst_719 = arith.constant 0.000000e+00 : f32
    %2841 = vector.broadcast %92 : f32 to vector<8x128xf32>
    %2842 = vector.broadcast %cst_719 : f32 to vector<8x128xf32>
    %2843 = arith.select %2834, %2841, %2842 : vector<8x128xi1>, vector<8x128xf32>
    %cst_720 = arith.constant 0.000000e+00 : f32
    %2844 = vector.broadcast %96 : f32 to vector<8x128xf32>
    %2845 = vector.broadcast %cst_720 : f32 to vector<8x128xf32>
    %2846 = arith.select %2838, %2844, %2845 : vector<8x128xi1>, vector<8x128xf32>
    %2847 = arith.addf %2843, %2846 : vector<8x128xf32>
    %cst_721 = arith.constant 0.000000e+00 : f32
    %2848 = vector.broadcast %93 : f32 to vector<8x128xf32>
    %2849 = vector.broadcast %cst_721 : f32 to vector<8x128xf32>
    %2850 = arith.select %2835, %2848, %2849 : vector<8x128xi1>, vector<8x128xf32>
    %2851 = arith.addf %2847, %2850 : vector<8x128xf32>
    %cst_722 = arith.constant 0.000000e+00 : f32
    %2852 = vector.broadcast %94 : f32 to vector<8x128xf32>
    %2853 = vector.broadcast %cst_722 : f32 to vector<8x128xf32>
    %2854 = arith.select %2836, %2852, %2853 : vector<8x128xi1>, vector<8x128xf32>
    %2855 = arith.addf %2851, %2854 : vector<8x128xf32>
    %cst_723 = arith.constant 0.000000e+00 : f32
    %2856 = vector.broadcast %98 : f32 to vector<8x128xf32>
    %2857 = vector.broadcast %cst_723 : f32 to vector<8x128xf32>
    %2858 = arith.select %2839, %2856, %2857 : vector<8x128xi1>, vector<8x128xf32>
    %2859 = arith.addf %2855, %2858 : vector<8x128xf32>
    %cst_724 = arith.constant 0.000000e+00 : f32
    %2860 = vector.broadcast %95 : f32 to vector<8x128xf32>
    %2861 = vector.broadcast %cst_724 : f32 to vector<8x128xf32>
    %2862 = arith.select %2837, %2860, %2861 : vector<8x128xi1>, vector<8x128xf32>
    %2863 = arith.addf %2859, %2862 : vector<8x128xf32>
    %cst_725 = arith.constant 0.000000e+00 : f32
    %2864 = vector.broadcast %99 : f32 to vector<8x128xf32>
    %2865 = vector.broadcast %cst_725 : f32 to vector<8x128xf32>
    %2866 = arith.select %2840, %2864, %2865 : vector<8x128xi1>, vector<8x128xf32>
    %2867 = arith.addf %2863, %2866 : vector<8x128xf32>
    %2868 = arith.subf %100, %97 : f32
    %2869 = vector.broadcast %2868 : f32 to vector<8x128xf32>
    %2870 = arith.cmpf oge, %2867, %2869 : vector<8x128xf32>
    %cst_726 = arith.constant 0xFF800000 : f32
    %2871 = vector.broadcast %cst_726 : f32 to vector<8x128xf32>
    %2872 = arith.select %2870, %2630, %2871 : vector<8x128xi1>, vector<8x128xf32>
    %2873 = arith.maximumf %2833, %2872 : vector<8x128xf32>
    %2874 = arith.cmpf oge, %2527, %2632 : vector<8x128xf32>
    %2875 = arith.cmpf oge, %2560, %2632 : vector<8x128xf32>
    %2876 = arith.cmpf oge, %2593, %2632 : vector<8x128xf32>
    %2877 = arith.cmpf oge, %2626, %2632 : vector<8x128xf32>
    %2878 = arith.cmpf oge, %2628, %2632 : vector<8x128xf32>
    %2879 = arith.cmpf oge, %2630, %2632 : vector<8x128xf32>
    %2880 = arith.cmpf oge, %2634, %2632 : vector<8x128xf32>
    %cst_727 = arith.constant 0.000000e+00 : f32
    %2881 = vector.broadcast %92 : f32 to vector<8x128xf32>
    %2882 = vector.broadcast %cst_727 : f32 to vector<8x128xf32>
    %2883 = arith.select %2874, %2881, %2882 : vector<8x128xi1>, vector<8x128xf32>
    %cst_728 = arith.constant 0.000000e+00 : f32
    %2884 = vector.broadcast %96 : f32 to vector<8x128xf32>
    %2885 = vector.broadcast %cst_728 : f32 to vector<8x128xf32>
    %2886 = arith.select %2878, %2884, %2885 : vector<8x128xi1>, vector<8x128xf32>
    %2887 = arith.addf %2883, %2886 : vector<8x128xf32>
    %cst_729 = arith.constant 0.000000e+00 : f32
    %2888 = vector.broadcast %93 : f32 to vector<8x128xf32>
    %2889 = vector.broadcast %cst_729 : f32 to vector<8x128xf32>
    %2890 = arith.select %2875, %2888, %2889 : vector<8x128xi1>, vector<8x128xf32>
    %2891 = arith.addf %2887, %2890 : vector<8x128xf32>
    %cst_730 = arith.constant 0.000000e+00 : f32
    %2892 = vector.broadcast %97 : f32 to vector<8x128xf32>
    %2893 = vector.broadcast %cst_730 : f32 to vector<8x128xf32>
    %2894 = arith.select %2879, %2892, %2893 : vector<8x128xi1>, vector<8x128xf32>
    %2895 = arith.addf %2891, %2894 : vector<8x128xf32>
    %cst_731 = arith.constant 0.000000e+00 : f32
    %2896 = vector.broadcast %94 : f32 to vector<8x128xf32>
    %2897 = vector.broadcast %cst_731 : f32 to vector<8x128xf32>
    %2898 = arith.select %2876, %2896, %2897 : vector<8x128xi1>, vector<8x128xf32>
    %2899 = arith.addf %2895, %2898 : vector<8x128xf32>
    %cst_732 = arith.constant 0.000000e+00 : f32
    %2900 = vector.broadcast %95 : f32 to vector<8x128xf32>
    %2901 = vector.broadcast %cst_732 : f32 to vector<8x128xf32>
    %2902 = arith.select %2877, %2900, %2901 : vector<8x128xi1>, vector<8x128xf32>
    %2903 = arith.addf %2899, %2902 : vector<8x128xf32>
    %cst_733 = arith.constant 0.000000e+00 : f32
    %2904 = vector.broadcast %99 : f32 to vector<8x128xf32>
    %2905 = vector.broadcast %cst_733 : f32 to vector<8x128xf32>
    %2906 = arith.select %2880, %2904, %2905 : vector<8x128xi1>, vector<8x128xf32>
    %2907 = arith.addf %2903, %2906 : vector<8x128xf32>
    %2908 = arith.subf %100, %98 : f32
    %2909 = vector.broadcast %2908 : f32 to vector<8x128xf32>
    %2910 = arith.cmpf oge, %2907, %2909 : vector<8x128xf32>
    %cst_734 = arith.constant 0xFF800000 : f32
    %2911 = vector.broadcast %cst_734 : f32 to vector<8x128xf32>
    %2912 = arith.select %2910, %2632, %2911 : vector<8x128xi1>, vector<8x128xf32>
    %2913 = arith.maximumf %2873, %2912 : vector<8x128xf32>
    %2914 = arith.cmpf oge, %2527, %2634 : vector<8x128xf32>
    %2915 = arith.cmpf oge, %2560, %2634 : vector<8x128xf32>
    %2916 = arith.cmpf oge, %2593, %2634 : vector<8x128xf32>
    %2917 = arith.cmpf oge, %2626, %2634 : vector<8x128xf32>
    %2918 = arith.cmpf oge, %2628, %2634 : vector<8x128xf32>
    %2919 = arith.cmpf oge, %2630, %2634 : vector<8x128xf32>
    %2920 = arith.cmpf oge, %2632, %2634 : vector<8x128xf32>
    %cst_735 = arith.constant 0.000000e+00 : f32
    %2921 = vector.broadcast %92 : f32 to vector<8x128xf32>
    %2922 = vector.broadcast %cst_735 : f32 to vector<8x128xf32>
    %2923 = arith.select %2914, %2921, %2922 : vector<8x128xi1>, vector<8x128xf32>
    %cst_736 = arith.constant 0.000000e+00 : f32
    %2924 = vector.broadcast %96 : f32 to vector<8x128xf32>
    %2925 = vector.broadcast %cst_736 : f32 to vector<8x128xf32>
    %2926 = arith.select %2918, %2924, %2925 : vector<8x128xi1>, vector<8x128xf32>
    %2927 = arith.addf %2923, %2926 : vector<8x128xf32>
    %cst_737 = arith.constant 0.000000e+00 : f32
    %2928 = vector.broadcast %93 : f32 to vector<8x128xf32>
    %2929 = vector.broadcast %cst_737 : f32 to vector<8x128xf32>
    %2930 = arith.select %2915, %2928, %2929 : vector<8x128xi1>, vector<8x128xf32>
    %2931 = arith.addf %2927, %2930 : vector<8x128xf32>
    %cst_738 = arith.constant 0.000000e+00 : f32
    %2932 = vector.broadcast %97 : f32 to vector<8x128xf32>
    %2933 = vector.broadcast %cst_738 : f32 to vector<8x128xf32>
    %2934 = arith.select %2919, %2932, %2933 : vector<8x128xi1>, vector<8x128xf32>
    %2935 = arith.addf %2931, %2934 : vector<8x128xf32>
    %cst_739 = arith.constant 0.000000e+00 : f32
    %2936 = vector.broadcast %94 : f32 to vector<8x128xf32>
    %2937 = vector.broadcast %cst_739 : f32 to vector<8x128xf32>
    %2938 = arith.select %2916, %2936, %2937 : vector<8x128xi1>, vector<8x128xf32>
    %2939 = arith.addf %2935, %2938 : vector<8x128xf32>
    %cst_740 = arith.constant 0.000000e+00 : f32
    %2940 = vector.broadcast %98 : f32 to vector<8x128xf32>
    %2941 = vector.broadcast %cst_740 : f32 to vector<8x128xf32>
    %2942 = arith.select %2920, %2940, %2941 : vector<8x128xi1>, vector<8x128xf32>
    %2943 = arith.addf %2939, %2942 : vector<8x128xf32>
    %cst_741 = arith.constant 0.000000e+00 : f32
    %2944 = vector.broadcast %95 : f32 to vector<8x128xf32>
    %2945 = vector.broadcast %cst_741 : f32 to vector<8x128xf32>
    %2946 = arith.select %2917, %2944, %2945 : vector<8x128xi1>, vector<8x128xf32>
    %2947 = arith.addf %2943, %2946 : vector<8x128xf32>
    %2948 = arith.subf %100, %99 : f32
    %2949 = vector.broadcast %2948 : f32 to vector<8x128xf32>
    %2950 = arith.cmpf oge, %2947, %2949 : vector<8x128xf32>
    %cst_742 = arith.constant 0xFF800000 : f32
    %2951 = vector.broadcast %cst_742 : f32 to vector<8x128xf32>
    %2952 = arith.select %2950, %2634, %2951 : vector<8x128xi1>, vector<8x128xf32>
    %2953 = arith.maximumf %2913, %2952 : vector<8x128xf32>
    %2954 = arith.index_cast %104 : i32 to index
    %c0_743 = arith.constant 0 : index
    %2955 = vector.load %arg14[%2954, %c0_743] : memref<8x128xf32, #tpu.memory_space<vmem>>, vector<8x128xf32>
    tpu.vector_store %arg14[%2954, %c0_743], %2953 {strides = array<i32>} : memref<8x128xf32, #tpu.memory_space<vmem>>, vector<8x128xf32>,
    %c1_i32_744 = arith.constant 1 : i32
    return
  }
  func.func @transform_0(%arg0: i32) -> (i32, i32, i32) {
    %c0_i32 = arith.constant 0 : i32
    %c0_i32_0 = arith.constant 0 : i32
    %c0_i32_1 = arith.constant 0 : i32
    return %c0_i32, %arg0, %c0_i32_0 : i32, i32, i32
  }
  func.func @transform_1(%arg0: i32) -> i32 {
    %c0_i32 = arith.constant 0 : i32
    %c0_i32_0 = arith.constant 0 : i32
    return %c0_i32 : i32
  }
  func.func @transform_2(%arg0: i32) -> i32 {
    %c0_i32 = arith.constant 0 : i32
    %c0_i32_0 = arith.constant 0 : i32
    return %c0_i32 : i32
  }
  func.func @transform_3(%arg0: i32) -> i32 {
    %c0_i32 = arith.constant 0 : i32
    %c0_i32_0 = arith.constant 0 : i32
    return %c0_i32 : i32
  }
  func.func @transform_4(%arg0: i32) -> i32 {
    %c0_i32 = arith.constant 0 : i32
    %c0_i32_0 = arith.constant 0 : i32
    return %c0_i32 : i32
  }
  func.func @transform_5(%arg0: i32) -> i32 {
    %c0_i32 = arith.constant 0 : i32
    %c0_i32_0 = arith.constant 0 : i32
    return %c0_i32 : i32
  }
  func.func @transform_6(%arg0: i32) -> i32 {
    %c0_i32 = arith.constant 0 : i32
    %c0_i32_0 = arith.constant 0 : i32
    return %c0_i32 : i32
  }
  func.func @transform_7(%arg0: i32) -> i32 {
    %c0_i32 = arith.constant 0 : i32
    %c0_i32_0 = arith.constant 0 : i32
    return %c0_i32 : i32
  }
  func.func @transform_8(%arg0: i32) -> i32 {
    %c0_i32 = arith.constant 0 : i32
    %c0_i32_0 = arith.constant 0 : i32
    return %c0_i32 : i32
  }
  func.func @transform_9(%arg0: i32) -> i32 {
    %c0_i32 = arith.constant 0 : i32
    %c0_i32_0 = arith.constant 0 : i32
    return %c0_i32 : i32
  }
  func.func @transform_10(%arg0: i32) -> i32 {
    %c0_i32 = arith.constant 0 : i32
    %c0_i32_0 = arith.constant 0 : i32
    return %c0_i32 : i32
  }
  func.func @transform_11(%arg0: i32) -> i32 {
    %c0_i32 = arith.constant 0 : i32
    %c0_i32_0 = arith.constant 0 : i32
    return %c0_i32 : i32
  }
  func.func @transform_12(%arg0: i32) -> i32 {
    %c0_i32 = arith.constant 0 : i32
    %c0_i32_0 = arith.constant 0 : i32
    return %c0_i32 : i32
  }
  func.func @transform_13(%arg0: i32) -> (i32, i32) {
    %c0_i32 = arith.constant 0 : i32
    %c0_i32_0 = arith.constant 0 : i32
    return %arg0, %c0_i32 : i32, i32
  }
}

</mosaic_0001>

<llo_original>
// kernel: tpu_custom_call.1
$region0: #{tpu_custom_call.1}
  #allocation0 [shape = 'u32[]', space=smem, size = 0x4, offset = 0x4, fixed_abs, tag = 'smem constant byte address 0x4 - core index']
  #allocation1 [shape = 'u32[72,128]{1,0:T(1,128)}', space=vmem, size = 0x9000, scoped, tag = 'internal scratch']
  #allocation2 [shape = 'f32[1]{0:T(128)S(6)}', space=smem, size = 0x200, scoped, tag = 'scoped memory for tpu_custom_call.1']
  %s0 = inlined_call_operand.hbm [shape: f32[2,8,128], index: 0, kind: input, shape index: {}]
  %s1 = inlined_call_operand.vmem [shape: f32[8], index: 1, kind: input, shape index: {}]
  %s2 = inlined_call_operand.vmem [shape: f32[8], index: 2, kind: input, shape index: {}]
  %s3 = inlined_call_operand.vmem [shape: f32[4], index: 3, kind: input, shape index: {}]
  %s4 = inlined_call_operand.vmem [shape: f32[16], index: 4, kind: input, shape index: {}]
  %s5 = inlined_call_operand.vmem [shape: f32[16], index: 5, kind: input, shape index: {}]
  %s6 = inlined_call_operand.vmem [shape: f32[4], index: 6, kind: input, shape index: {}]
  %s7 = inlined_call_operand.vmem [shape: f32[16], index: 7, kind: input, shape index: {}]
  %s8 = inlined_call_operand.vmem [shape: f32[16], index: 8, kind: input, shape index: {}]
  %s9 = inlined_call_operand.vmem [shape: f32[4], index: 9, kind: input, shape index: {}]
  %s10 = inlined_call_operand.vmem [shape: f32[4], index: 10, kind: input, shape index: {}]
  %s11 = inlined_call_operand.vmem [shape: f32[4], index: 11, kind: input, shape index: {}]
  %s12 = inlined_call_operand.<no memory space> [shape: f32[1], index: 12, kind: input, shape index: {}]
  %s13 = inlined_call_operand.hbm [shape: f32[8,128], index: 13, kind: output, shape index: {}]
  %s14 = sld [smem:[#allocation0]]
  $region110: #{tpu_custom_call.1} parent=0
    _
  %s16 = ssub.s32 1, %s14
  %s17 = scalar_select 0, %s16, %s14
  %18 = sst [smem:[#allocation2]] %s12
  $region1: #{tpu_custom_call.1} parent=0
    #allocation3 [shape = 'u8[8192]{0}', space=vmem, size = 0x2000, scoped, tag = 'input window, operand 0, single buffered']
    #allocation4 [shape = 's32[1]{0}', space=sflag, size = 0x4, scoped, tag = 'scoped memory for tpu_custom_call.1']
    #allocation5 [shape = 's32[1]{0}', space=sflag, size = 0x4, scoped, tag = 'scoped memory for tpu_custom_call.1']
    #allocation6 [shape = 's32[1]{0}', space=sflag, size = 0x4, scoped, tag = 'scoped memory for tpu_custom_call.1']
    #allocation7 [shape = 'u8[512]{0}', space=smem, size = 0x200, scoped, tag = 'input window, operand 1, single buffered']
    #allocation8 [shape = 'u8[512]{0}', space=smem, size = 0x200, scoped, tag = 'input window, operand 2, single buffered']
    #allocation9 [shape = 's32[1]{0}', space=sflag, size = 0x4, scoped, tag = 'scoped memory for tpu_custom_call.1']
    #allocation10 [shape = 'u8[512]{0}', space=smem, size = 0x200, scoped, tag = 'input window, operand 3, single buffered']
    #allocation11 [shape = 'u8[512]{0}', space=smem, size = 0x200, scoped, tag = 'input window, operand 4, single buffered']
    #allocation12 [shape = 's32[1]{0}', space=sflag, size = 0x4, scoped, tag = 'scoped memory for tpu_custom_call.1']
    #allocation13 [shape = 'u8[512]{0}', space=smem, size = 0x200, scoped, tag = 'input window, operand 5, single buffered']
    #allocation14 [shape = 'u8[512]{0}', space=smem, size = 0x200, scoped, tag = 'input window, operand 6, single buffered']
    #allocation15 [shape = 's32[1]{0}', space=sflag, size = 0x4, scoped, tag = 'scoped memory for tpu_custom_call.1']
    #allocation16 [shape = 'u8[512]{0}', space=smem, size = 0x200, scoped, tag = 'input window, operand 7, single buffered']
    #allocation17 [shape = 'u8[512]{0}', space=smem, size = 0x200, scoped, tag = 'input window, operand 8, single buffered']
    #allocation18 [shape = 's32[1]{0}', space=sflag, size = 0x4, scoped, tag = 'scoped memory for tpu_custom_call.1']
    #allocation19 [shape = 'u8[512]{0}', space=smem, size = 0x200, scoped, tag = 'input window, operand 9, single buffered']
    #allocation20 [shape = 'u8[512]{0}', space=smem, size = 0x200, scoped, tag = 'input window, operand 10, single buffered']
    #allocation21 [shape = 's32[1]{0}', space=sflag, size = 0x4, scoped, tag = 'scoped memory for tpu_custom_call.1']
    #allocation22 [shape = 'u8[512]{0}', space=smem, size = 0x200, scoped, tag = 'input window, operand 11, single buffered']
    #allocation23 [shape = 'u8[4096]{0}', space=vmem, size = 0x1000, scoped, tag = 'output window, operand 0, single buffered']
    %19 = vsyncpa [#allocation4], 0
    %20 = vsyncpa [#allocation6], 0
    %21 = vsyncpa [#allocation9], 0
    %22 = vsyncpa [#allocation12], 0
    %23 = vsyncpa [#allocation15], 0
    %24 = vsyncpa [#allocation18], 0
    %25 = vsyncpa [#allocation21], 0
    %26 = vsyncpa [#allocation5], 0
    // Predicated region
    $region2: #{tpu_custom_call.1} parent=1 // pred_check
      _
    $region3: #{tpu_custom_call.1} parent=1 // pred_check_branch
      %28 = sbr.rel (0) target = $region5
    $region4: #{tpu_custom_call.1} parent=1 // pred_region
      %30 = vsyncadd [#allocation4], 0
      %s31 = sshll.u32 %s0, 4
      %s32 = int_to_ptr.hbm [resolvable:$true] %s31
      %s33 = sshll.u32 [#allocation3], 4
      %s34 = int_to_ptr.vmem [resolvable:$true] %s33
      %39 = dma.hbm_to_vmem [thread:$0]  %s32, 256, %s34, [#allocation4], 128, 128, 8
    $region5: #{tpu_custom_call.1} parent=1 // pred_fallthru
      _
    // Predicated region
    $region6: #{tpu_custom_call.1} parent=1 // pred_check
      _
    $region7: #{tpu_custom_call.1} parent=1 // pred_check_branch
      %41 = sbr.rel (0) target = $region9
    $region8: #{tpu_custom_call.1} parent=1 // pred_region
      %43 = vsyncadd [#allocation6], 0
      %s45 = sshll.u32 %s1, 4
      %s46 = int_to_ptr.vmem [resolvable:$true] %s45
      %48 = dma.vmem_to_smem %s46, 16, [#allocation7], [#allocation6]
    $region9: #{tpu_custom_call.1} parent=1 // pred_fallthru
      _
    // Predicated region
    $region10: #{tpu_custom_call.1} parent=1 // pred_check
      _
    $region11: #{tpu_custom_call.1} parent=1 // pred_check_branch
      %50 = sbr.rel (0) target = $region13
    $region12: #{tpu_custom_call.1} parent=1 // pred_region
      %52 = vsyncadd [#allocation9], 0
      %s54 = sshll.u32 %s2, 4
      %s55 = int_to_ptr.vmem [resolvable:$true] %s54
      %57 = dma.vmem_to_smem %s55, 16, [#allocation8], [#allocation9]
    $region13: #{tpu_custom_call.1} parent=1 // pred_fallthru
      _
    // Predicated region
    $region14: #{tpu_custom_call.1} parent=1 // pred_check
      _
    $region15: #{tpu_custom_call.1} parent=1 // pred_check_branch
      %59 = sbr.rel (0) target = $region17
    $region16: #{tpu_custom_call.1} parent=1 // pred_region
      %61 = vsyncadd [#allocation9], 0
      %s63 = sshll.u32 %s3, 4
      %s64 = int_to_ptr.vmem [resolvable:$true] %s63
      %66 = dma.vmem_to_smem %s64, 16, [#allocation10], [#allocation9]
    $region17: #{tpu_custom_call.1} parent=1 // pred_fallthru
      _
    // Predicated region
    $region18: #{tpu_custom_call.1} parent=1 // pred_check
      _
    $region19: #{tpu_custom_call.1} parent=1 // pred_check_branch
      %68 = sbr.rel (0) target = $region21
    $region20: #{tpu_custom_call.1} parent=1 // pred_region
      %70 = vsyncadd [#allocation12], 0
      %s72 = sshll.u32 %s4, 4
      %s73 = int_to_ptr.vmem [resolvable:$true] %s72
      %75 = dma.vmem_to_smem %s73, 16, [#allocation11], [#allocation12]
    $region21: #{tpu_custom_call.1} parent=1 // pred_fallthru
      _
    // Predicated region
    $region22: #{tpu_custom_call.1} parent=1 // pred_check
      _
    $region23: #{tpu_custom_call.1} parent=1 // pred_check_branch
      %77 = sbr.rel (0) target = $region25
    $region24: #{tpu_custom_call.1} parent=1 // pred_region
      %79 = vsyncadd [#allocation12], 0
      %s81 = sshll.u32 %s5, 4
      %s82 = int_to_ptr.vmem [resolvable:$true] %s81
      %84 = dma.vmem_to_smem %s82, 16, [#allocation13], [#allocation12]
    $region25: #{tpu_custom_call.1} parent=1 // pred_fallthru
      _
    // Predicated region
    $region26: #{tpu_custom_call.1} parent=1 // pred_check
      _
    $region27: #{tpu_custom_call.1} parent=1 // pred_check_branch
      %86 = sbr.rel (0) target = $region29
    $region28: #{tpu_custom_call.1} parent=1 // pred_region
      %88 = vsyncadd [#allocation15], 0
      %s90 = sshll.u32 %s6, 4
      %s91 = int_to_ptr.vmem [resolvable:$true] %s90
      %93 = dma.vmem_to_smem %s91, 16, [#allocation14], [#allocation15]
    $region29: #{tpu_custom_call.1} parent=1 // pred_fallthru
      _
    // Predicated region
    $region30: #{tpu_custom_call.1} parent=1 // pred_check
      _
    $region31: #{tpu_custom_call.1} parent=1 // pred_check_branch
      %95 = sbr.rel (0) target = $region33
    $region32: #{tpu_custom_call.1} parent=1 // pred_region
      %97 = vsyncadd [#allocation15], 0
      %s99 = sshll.u32 %s7, 4
      %s100 = int_to_ptr.vmem [resolvable:$true] %s99
      %102 = dma.vmem_to_smem %s100, 16, [#allocation16], [#allocation15]
    $region33: #{tpu_custom_call.1} parent=1 // pred_fallthru
      _
    // Predicated region
    $region34: #{tpu_custom_call.1} parent=1 // pred_check
      _
    $region35: #{tpu_custom_call.1} parent=1 // pred_check_branch
      %104 = sbr.rel (0) target = $region37
    $region36: #{tpu_custom_call.1} parent=1 // pred_region
      %106 = vsyncadd [#allocation18], 0
      %s108 = sshll.u32 %s8, 4
      %s109 = int_to_ptr.vmem [resolvable:$true] %s108
      %111 = dma.vmem_to_smem %s109, 16, [#allocation17], [#allocation18]
    $region37: #{tpu_custom_call.1} parent=1 // pred_fallthru
      _
    // Predicated region
    $region38: #{tpu_custom_call.1} parent=1 // pred_check
      _
    $region39: #{tpu_custom_call.1} parent=1 // pred_check_branch
      %113 = sbr.rel (0) target = $region41
    $region40: #{tpu_custom_call.1} parent=1 // pred_region
      %115 = vsyncadd [#allocation18], 0
      %s117 = sshll.u32 %s9, 4
      %s118 = int_to_ptr.vmem [resolvable:$true] %s117
      %120 = dma.vmem_to_smem %s118, 16, [#allocation19], [#allocation18]
    $region41: #{tpu_custom_call.1} parent=1 // pred_fallthru
      _
    // Predicated region
    $region42: #{tpu_custom_call.1} parent=1 // pred_check
      _
    $region43: #{tpu_custom_call.1} parent=1 // pred_check_branch
      %122 = sbr.rel (0) target = $region45
    $region44: #{tpu_custom_call.1} parent=1 // pred_region
      %124 = vsyncadd [#allocation21], 0
      %s126 = sshll.u32 %s10, 4
      %s127 = int_to_ptr.vmem [resolvable:$true] %s126
      %129 = dma.vmem_to_smem %s127, 16, [#allocation20], [#allocation21]
    $region45: #{tpu_custom_call.1} parent=1 // pred_fallthru
      _
    // Predicated region
    $region46: #{tpu_custom_call.1} parent=1 // pred_check
      _
    $region47: #{tpu_custom_call.1} parent=1 // pred_check_branch
      %131 = sbr.rel (0) target = $region49
    $region48: #{tpu_custom_call.1} parent=1 // pred_region
      %133 = vsyncadd [#allocation21], 0
      %s135 = sshll.u32 %s11, 4
      %s136 = int_to_ptr.vmem [resolvable:$true] %s135
      %138 = dma.vmem_to_smem %s136, 16, [#allocation22], [#allocation21]
    $region49: #{tpu_custom_call.1} parent=1 // pred_fallthru
      _
    // Predicated region
    $region50: #{tpu_custom_call.1} parent=1 // pred_check
      _
    $region51: #{tpu_custom_call.1} parent=1 // pred_check_branch
      %140 = sbr.rel (0) target = $region53
    $region52: #{tpu_custom_call.1} parent=1 // pred_region
      _
    $region53: #{tpu_custom_call.1} parent=1 // pred_fallthru
      _
    // Predicated region
    $region54: #{tpu_custom_call.1} parent=1 // pred_check
      _
    $region55: #{tpu_custom_call.1} parent=1 // pred_check_branch
      %142 = sbr.rel (0) target = $region57
    $region56: #{tpu_custom_call.1} parent=1 // pred_region
      %144 = dma.done [#allocation4], 256
    $region57: #{tpu_custom_call.1} parent=1 // pred_fallthru
      _
    // Predicated region
    $region58: #{tpu_custom_call.1} parent=1 // pred_check
      _
    $region59: #{tpu_custom_call.1} parent=1 // pred_check_branch
      %146 = sbr.rel (0) target = $region61
    $region60: #{tpu_custom_call.1} parent=1 // pred_region
      %148 = dma.done [#allocation6], 16
    $region61: #{tpu_custom_call.1} parent=1 // pred_fallthru
      _
    // Predicated region
    $region62: #{tpu_custom_call.1} parent=1 // pred_check
      _
    $region63: #{tpu_custom_call.1} parent=1 // pred_check_branch
      %150 = sbr.rel (0) target = $region65
    $region64: #{tpu_custom_call.1} parent=1 // pred_region
      %152 = dma.done [#allocation9], 16
    $region65: #{tpu_custom_call.1} parent=1 // pred_fallthru
      _
    // Predicated region
    $region66: #{tpu_custom_call.1} parent=1 // pred_check
      _
    $region67: #{tpu_custom_call.1} parent=1 // pred_check_branch
      %154 = sbr.rel (0) target = $region69
    $region68: #{tpu_custom_call.1} parent=1 // pred_region
      %156 = dma.done [#allocation9], 16
    $region69: #{tpu_custom_call.1} parent=1 // pred_fallthru
      _
    // Predicated region
    $region70: #{tpu_custom_call.1} parent=1 // pred_check
      _
    $region71: #{tpu_custom_call.1} parent=1 // pred_check_branch
      %158 = sbr.rel (0) target = $region73
    $region72: #{tpu_custom_call.1} parent=1 // pred_region
      %160 = dma.done [#allocation12], 16
    $region73: #{tpu_custom_call.1} parent=1 // pred_fallthru
      _
    // Predicated region
    $region74: #{tpu_custom_call.1} parent=1 // pred_check
      _
    $region75: #{tpu_custom_call.1} parent=1 // pred_check_branch
      %162 = sbr.rel (0) target = $region77
    $region76: #{tpu_custom_call.1} parent=1 // pred_region
      %164 = dma.done [#allocation12], 16
    $region77: #{tpu_custom_call.1} parent=1 // pred_fallthru
      _
    // Predicated region
    $region78: #{tpu_custom_call.1} parent=1 // pred_check
      _
    $region79: #{tpu_custom_call.1} parent=1 // pred_check_branch
      %166 = sbr.rel (0) target = $region81
    $region80: #{tpu_custom_call.1} parent=1 // pred_region
      %168 = dma.done [#allocation15], 16
    $region81: #{tpu_custom_call.1} parent=1 // pred_fallthru
      _
    // Predicated region
    $region82: #{tpu_custom_call.1} parent=1 // pred_check
      _
    $region83: #{tpu_custom_call.1} parent=1 // pred_check_branch
      %170 = sbr.rel (0) target = $region85
    $region84: #{tpu_custom_call.1} parent=1 // pred_region
      %172 = dma.done [#allocation15], 16
    $region85: #{tpu_custom_call.1} parent=1 // pred_fallthru
      _
    // Predicated region
    $region86: #{tpu_custom_call.1} parent=1 // pred_check
      _
    $region87: #{tpu_custom_call.1} parent=1 // pred_check_branch
      %174 = sbr.rel (0) target = $region89
    $region88: #{tpu_custom_call.1} parent=1 // pred_region
      %176 = dma.done [#allocation18], 16
    $region89: #{tpu_custom_call.1} parent=1 // pred_fallthru
      _
    // Predicated region
    $region90: #{tpu_custom_call.1} parent=1 // pred_check
      _
    $region91: #{tpu_custom_call.1} parent=1 // pred_check_branch
      %178 = sbr.rel (0) target = $region93
    $region92: #{tpu_custom_call.1} parent=1 // pred_region
      %180 = dma.done [#allocation18], 16
    $region93: #{tpu_custom_call.1} parent=1 // pred_fallthru
      _
    // Predicated region
    $region94: #{tpu_custom_call.1} parent=1 // pred_check
      _
    $region95: #{tpu_custom_call.1} parent=1 // pred_check_branch
      %182 = sbr.rel (0) target = $region97
    $region96: #{tpu_custom_call.1} parent=1 // pred_region
      %184 = dma.done [#allocation21], 16
    $region97: #{tpu_custom_call.1} parent=1 // pred_fallthru
      _
    // Predicated region
    $region98: #{tpu_custom_call.1} parent=1 // pred_check
      _
    $region99: #{tpu_custom_call.1} parent=1 // pred_check_branch
      %186 = sbr.rel (0) target = $region101
    $region100: #{tpu_custom_call.1} parent=1 // pred_region
      %188 = dma.done [#allocation21], 16
    $region101: #{tpu_custom_call.1} parent=1 // pred_fallthru
      _
    %189 = sfence
    %s190 = sld [smem:[#allocation7]]
    %s191 = sld [smem:[#allocation7 + $0x1]]
    %s192 = sld [smem:[#allocation7 + $0x2]]
    %s193 = sld [smem:[#allocation7 + $0x3]]
    %s194 = sld [smem:[#allocation7 + $0x4]]
    %s195 = sld [smem:[#allocation7 + $0x5]]
    %s196 = sld [smem:[#allocation7 + $0x6]]
    %s197 = sld [smem:[#allocation7 + $0x7]]
    %s198 = sld [smem:[#allocation8]]
    %s199 = sld [smem:[#allocation8 + $0x1]]
    %s200 = sld [smem:[#allocation8 + $0x2]]
    %s201 = sld [smem:[#allocation8 + $0x3]]
    %s202 = sld [smem:[#allocation8 + $0x4]]
    %s203 = sld [smem:[#allocation8 + $0x5]]
    %s204 = sld [smem:[#allocation8 + $0x6]]
    %s205 = sld [smem:[#allocation8 + $0x7]]
    %s206 = sld [smem:[#allocation10]]
    %s207 = sld [smem:[#allocation10 + $0x1]]
    %s208 = sld [smem:[#allocation10 + $0x2]]
    %s209 = sld [smem:[#allocation10 + $0x3]]
    %s210 = sld [smem:[#allocation11]]
    %s211 = sld [smem:[#allocation11 + $0x1]]
    %s212 = sld [smem:[#allocation11 + $0x2]]
    %s213 = sld [smem:[#allocation11 + $0x3]]
    %s214 = sld [smem:[#allocation11 + $0x4]]
    %s215 = sld [smem:[#allocation11 + $0x5]]
    %s216 = sld [smem:[#allocation11 + $0x6]]
    %s217 = sld [smem:[#allocation11 + $0x7]]
    %s218 = sld [smem:[#allocation11 + $0x8]]
    %s219 = sld [smem:[#allocation11 + $0x9]]
    %s220 = sld [smem:[#allocation11 + $0xa]]
    %s221 = sld [smem:[#allocation11 + $0xb]]
    %s222 = sld [smem:[#allocation11 + $0xc]]
    %s223 = sld [smem:[#allocation11 + $0xd]]
    %s224 = sld [smem:[#allocation11 + $0xe]]
    %s225 = sld [smem:[#allocation11 + $0xf]]
    %s226 = sld [smem:[#allocation13]]
    %s227 = sld [smem:[#allocation13 + $0x1]]
    %s228 = sld [smem:[#allocation13 + $0x2]]
    %s229 = sld [smem:[#allocation13 + $0x3]]
    %s230 = sld [smem:[#allocation13 + $0x4]]
    %s231 = sld [smem:[#allocation13 + $0x5]]
    %s232 = sld [smem:[#allocation13 + $0x6]]
    %s233 = sld [smem:[#allocation13 + $0x7]]
    %s234 = sld [smem:[#allocation13 + $0x8]]
    %s235 = sld [smem:[#allocation13 + $0x9]]
    %s236 = sld [smem:[#allocation13 + $0xa]]
    %s237 = sld [smem:[#allocation13 + $0xb]]
    %s238 = sld [smem:[#allocation13 + $0xc]]
    %s239 = sld [smem:[#allocation13 + $0xd]]
    %s240 = sld [smem:[#allocation13 + $0xe]]
    %s241 = sld [smem:[#allocation13 + $0xf]]
    %s242 = sld [smem:[#allocation14]]
    %s243 = sld [smem:[#allocation14 + $0x1]]
    %s244 = sld [smem:[#allocation14 + $0x2]]
    %s245 = sld [smem:[#allocation14 + $0x3]]
    %s246 = sld [smem:[#allocation16]]
    %s247 = sld [smem:[#allocation16 + $0x1]]
    %s248 = sld [smem:[#allocation16 + $0x2]]
    %s249 = sld [smem:[#allocation16 + $0x3]]
    %s250 = sld [smem:[#allocation16 + $0x4]]
    %s251 = sld [smem:[#allocation16 + $0x5]]
    %s252 = sld [smem:[#allocation16 + $0x6]]
    %s253 = sld [smem:[#allocation16 + $0x7]]
    %s254 = sld [smem:[#allocation16 + $0x8]]
    %s255 = sld [smem:[#allocation16 + $0x9]]
    %s256 = sld [smem:[#allocation16 + $0xa]]
    %s257 = sld [smem:[#allocation16 + $0xb]]
    %s258 = sld [smem:[#allocation16 + $0xc]]
    %s259 = sld [smem:[#allocation16 + $0xd]]
    %s260 = sld [smem:[#allocation16 + $0xe]]
    %s261 = sld [smem:[#allocation16 + $0xf]]
    %s262 = sld [smem:[#allocation17]]
    %s263 = sld [smem:[#allocation17 + $0x1]]
    %s264 = sld [smem:[#allocation17 + $0x2]]
    %s265 = sld [smem:[#allocation17 + $0x3]]
    %s266 = sld [smem:[#allocation17 + $0x4]]
    %s267 = sld [smem:[#allocation17 + $0x5]]
    %s268 = sld [smem:[#allocation17 + $0x6]]
    %s269 = sld [smem:[#allocation17 + $0x7]]
    %s270 = sld [smem:[#allocation17 + $0x8]]
    %s271 = sld [smem:[#allocation17 + $0x9]]
    %s272 = sld [smem:[#allocation17 + $0xa]]
    %s273 = sld [smem:[#allocation17 + $0xb]]
    %s274 = sld [smem:[#allocation17 + $0xc]]
    %s275 = sld [smem:[#allocation17 + $0xd]]
    %s276 = sld [smem:[#allocation17 + $0xe]]
    %s277 = sld [smem:[#allocation17 + $0xf]]
    %s278 = sld [smem:[#allocation19]]
    %s279 = sld [smem:[#allocation19 + $0x1]]
    %s280 = sld [smem:[#allocation19 + $0x2]]
    %s281 = sld [smem:[#allocation19 + $0x3]]
    %s282 = sld [smem:[#allocation20]]
    %s283 = sld [smem:[#allocation20 + $0x1]]
    %s284 = sld [smem:[#allocation20 + $0x2]]
    %s285 = sld [smem:[#allocation20 + $0x3]]
    %s286 = sld [smem:[#allocation22]]
    %s287 = sld [smem:[#allocation22 + $0x1]]
    %s288 = sld [smem:[#allocation22 + $0x2]]
    %s289 = sld [smem:[#allocation22 + $0x3]]
    %s290 = sld [smem:[#allocation2]]
    %v291 = vld [vmem:[#allocation3] sm:$0xff]
    %s292 = sadd.s32 0, 8
    %s293 = scalar_lea.vmem [#allocation3], %s292
    %v294 = vld [vmem:[%s293] sm:$0xff]
    %v295 = vsub.f32 0.0, %v291
    %v296 = vsub.f32 0.0, %v294
    %vm297 = vcmp.ge.f32.partialorder %v294, %v291
    %vm298 = vcmp.ge.f32.partialorder %v295, %v291
    %vm299 = vcmp.ge.f32.partialorder %v296, %v291
    %v300 = vstv %s198
    %v301 = vsel %vm298, %v300, 0.0
    %v302 = vstv %s191
    %v303 = vsel %vm297, %v302, 0.0
    %v304 = vadd.f32 %v301, %v303
    %v305 = vstv %s199
    %v306 = vsel %vm299, %v305, 0.0
    %v307 = vadd.f32 %v304, %v306
    %s308 = ssub.f32 %s206, %s190
    %v309 = vstv %s308
    %vm310 = vcmp.ge.f32.partialorder %v307, %v309
    %v311 = vsel %vm310, %v291, -inf
    %v312 = vstv %s200
    %v313 = vsel %vm298, %v312, 0.0
    %v314 = vstv %s193
    %v315 = vsel %vm297, %v314, 0.0
    %v316 = vadd.f32 %v313, %v315
    %v317 = vstv %s201
    %v318 = vsel %vm299, %v317, 0.0
    %v319 = vadd.f32 %v316, %v318
    %s320 = ssub.f32 %s207, %s192
    %v321 = vstv %s320
    %vm322 = vcmp.ge.f32.partialorder %v319, %v321
    %v323 = vsel %vm322, %v291, -inf
    %v324 = vstv %s202
    %v325 = vsel %vm298, %v324, 0.0
    %v326 = vstv %s195
    %v327 = vsel %vm297, %v326, 0.0
    %v328 = vadd.f32 %v325, %v327
    %v329 = vstv %s203
    %v330 = vsel %vm299, %v329, 0.0
    %v331 = vadd.f32 %v328, %v330
    %s332 = ssub.f32 %s208, %s194
    %v333 = vstv %s332
    %vm334 = vcmp.ge.f32.partialorder %v331, %v333
    %v335 = vsel %vm334, %v291, -inf
    %v336 = vstv %s204
    %v337 = vsel %vm298, %v336, 0.0
    %v338 = vstv %s197
    %v339 = vsel %vm297, %v338, 0.0
    %v340 = vadd.f32 %v337, %v339
    %v341 = vstv %s205
    %v342 = vsel %vm299, %v341, 0.0
    %v343 = vadd.f32 %v340, %v342
    %s344 = ssub.f32 %s209, %s196
    %v345 = vstv %s344
    %vm346 = vcmp.ge.f32.partialorder %v343, %v345
    %v347 = vsel %vm346, %v291, -inf
    %vm348 = vcmp.ge.f32.partialorder %v291, %v294
    %vm349 = vcmp.ge.f32.partialorder %v295, %v294
    %vm350 = vcmp.ge.f32.partialorder %v296, %v294
    %v351 = vstv %s190
    %v352 = vsel %vm348, %v351, 0.0
    %v353 = vsel %vm349, %v300, 0.0
    %v354 = vadd.f32 %v352, %v353
    %v355 = vsel %vm350, %v305, 0.0
    %v356 = vadd.f32 %v354, %v355
    %s357 = ssub.f32 %s206, %s191
    %v358 = vstv %s357
    %vm359 = vcmp.ge.f32.partialorder %v356, %v358
    %v360 = vsel %vm359, %v294, -inf
    %v361 = vmax.f32 %v311, %v360
    %v362 = vstv %s192
    %v363 = vsel %vm348, %v362, 0.0
    %v364 = vsel %vm349, %v312, 0.0
    %v365 = vadd.f32 %v363, %v364
    %v366 = vsel %vm350, %v317, 0.0
    %v367 = vadd.f32 %v365, %v366
    %s368 = ssub.f32 %s207, %s193
    %v369 = vstv %s368
    %vm370 = vcmp.ge.f32.partialorder %v367, %v369
    %v371 = vsel %vm370, %v294, -inf
    %v372 = vmax.f32 %v323, %v371
    %v373 = vstv %s194
    %v374 = vsel %vm348, %v373, 0.0
    %v375 = vsel %vm349, %v324, 0.0
    %v376 = vadd.f32 %v374, %v375
    %v377 = vsel %vm350, %v329, 0.0
    %v378 = vadd.f32 %v376, %v377
    %s379 = ssub.f32 %s208, %s195
    %v380 = vstv %s379
    %vm381 = vcmp.ge.f32.partialorder %v378, %v380
    %v382 = vsel %vm381, %v294, -inf
    %v383 = vmax.f32 %v335, %v382
    %v384 = vstv %s196
    %v385 = vsel %vm348, %v384, 0.0
    %v386 = vsel %vm349, %v336, 0.0
    %v387 = vadd.f32 %v385, %v386
    %v388 = vsel %vm350, %v341, 0.0
    %v389 = vadd.f32 %v387, %v388
    %s390 = ssub.f32 %s209, %s197
    %v391 = vstv %s390
    %vm392 = vcmp.ge.f32.partialorder %v389, %v391
    %v393 = vsel %vm392, %v294, -inf
    %v394 = vmax.f32 %v347, %v393
    %vm395 = vcmp.ge.f32.partialorder %v291, %v295
    %vm396 = vcmp.ge.f32.partialorder %v294, %v295
    %vm397 = vcmp.ge.f32.partialorder %v296, %v295
    %v398 = vsel %vm395, %v351, 0.0
    %v399 = vsel %vm396, %v302, 0.0
    %v400 = vadd.f32 %v398, %v399
    %v401 = vsel %vm397, %v305, 0.0
    %v402 = vadd.f32 %v400, %v401
    %s403 = ssub.f32 %s206, %s198
    %v404 = vstv %s403
    %vm405 = vcmp.ge.f32.partialorder %v402, %v404
    %v406 = vsel %vm405, %v295, -inf
    %v407 = vmax.f32 %v361, %v406
    %v408 = vsel %vm395, %v362, 0.0
    %v409 = vsel %vm396, %v314, 0.0
    %v410 = vadd.f32 %v408, %v409
    %v411 = vsel %vm397, %v317, 0.0
    %v412 = vadd.f32 %v410, %v411
    %s413 = ssub.f32 %s207, %s200
    %v414 = vstv %s413
    %vm415 = vcmp.ge.f32.partialorder %v412, %v414
    %v416 = vsel %vm415, %v295, -inf
    %v417 = vmax.f32 %v372, %v416
    %v418 = vsel %vm395, %v373, 0.0
    %v419 = vsel %vm396, %v326, 0.0
    %v420 = vadd.f32 %v418, %v419
    %v421 = vsel %vm397, %v329, 0.0
    %v422 = vadd.f32 %v420, %v421
    %s423 = ssub.f32 %s208, %s202
    %v424 = vstv %s423
    %vm425 = vcmp.ge.f32.partialorder %v422, %v424
    %v426 = vsel %vm425, %v295, -inf
    %v427 = vmax.f32 %v383, %v426
    %v428 = vsel %vm395, %v384, 0.0
    %v429 = vsel %vm396, %v338, 0.0
    %v430 = vadd.f32 %v428, %v429
    %v431 = vsel %vm397, %v341, 0.0
    %v432 = vadd.f32 %v430, %v431
    %s433 = ssub.f32 %s209, %s204
    %v434 = vstv %s433
    %vm435 = vcmp.ge.f32.partialorder %v432, %v434
    %v436 = vsel %vm435, %v295, -inf
    %v437 = vmax.f32 %v394, %v436
    %vm438 = vcmp.ge.f32.partialorder %v291, %v296
    %vm439 = vcmp.ge.f32.partialorder %v294, %v296
    %vm440 = vcmp.ge.f32.partialorder %v295, %v296
    %v441 = vsel %vm438, %v351, 0.0
    %v442 = vsel %vm440, %v300, 0.0
    %v443 = vadd.f32 %v441, %v442
    %v444 = vsel %vm439, %v302, 0.0
    %v445 = vadd.f32 %v443, %v444
    %s446 = ssub.f32 %s206, %s199
    %v447 = vstv %s446
    %vm448 = vcmp.ge.f32.partialorder %v445, %v447
    %v449 = vsel %vm448, %v296, -inf
    %v450 = vmax.f32 %v407, %v449
    %v451 = vsel %vm438, %v362, 0.0
    %v452 = vsel %vm440, %v312, 0.0
    %v453 = vadd.f32 %v451, %v452
    %v454 = vsel %vm439, %v314, 0.0
    %v455 = vadd.f32 %v453, %v454
    %s456 = ssub.f32 %s207, %s201
    %v457 = vstv %s456
    %vm458 = vcmp.ge.f32.partialorder %v455, %v457
    %v459 = vsel %vm458, %v296, -inf
    %v460 = vmax.f32 %v417, %v459
    %v461 = vsel %vm438, %v373, 0.0
    %v462 = vsel %vm440, %v324, 0.0
    %v463 = vadd.f32 %v461, %v462
    %v464 = vsel %vm439, %v326, 0.0
    %v465 = vadd.f32 %v463, %v464
    %s466 = ssub.f32 %s208, %s203
    %v467 = vstv %s466
    %vm468 = vcmp.ge.f32.partialorder %v465, %v467
    %v469 = vsel %vm468, %v296, -inf
    %v470 = vmax.f32 %v427, %v469
    %v471 = vsel %vm438, %v384, 0.0
    %v472 = vsel %vm440, %v336, 0.0
    %v473 = vadd.f32 %v471, %v472
    %v474 = vsel %vm439, %v338, 0.0
    %v475 = vadd.f32 %v473, %v474
    %s476 = ssub.f32 %s209, %s205
    %v477 = vstv %s476
    %vm478 = vcmp.ge.f32.partialorder %v475, %v477
    %v479 = vsel %vm478, %v296, -inf
    %v480 = vmax.f32 %v437, %v479
    %v481 = vsub.f32 0.0, %v450
    %v482 = vsub.f32 0.0, %v460
    %v483 = vsub.f32 0.0, %v470
    %v484 = vsub.f32 0.0, %v480
    %vm485 = vcmp.ge.f32.partialorder %v460, %v450
    %vm486 = vcmp.ge.f32.partialorder %v470, %v450
    %vm487 = vcmp.ge.f32.partialorder %v480, %v450
    %vm488 = vcmp.ge.f32.partialorder %v481, %v450
    %vm489 = vcmp.ge.f32.partialorder %v482, %v450
    %vm490 = vcmp.ge.f32.partialorder %v483, %v450
    %vm491 = vcmp.ge.f32.partialorder %v484, %v450
    %v492 = vstv %s226
    %v493 = vsel %vm488, %v492, 0.0
    %v494 = vstv %s211
    %v495 = vsel %vm485, %v494, 0.0
    %v496 = vadd.f32 %v493, %v495
    %v497 = vstv %s227
    %v498 = vsel %vm489, %v497, 0.0
    %v499 = vadd.f32 %v496, %v498
    %v500 = vstv %s212
    %v501 = vsel %vm486, %v500, 0.0
    %v502 = vadd.f32 %v499, %v501
    %v503 = vstv %s228
    %v504 = vsel %vm490, %v503, 0.0
    %v505 = vadd.f32 %v502, %v504
    %v506 = vstv %s213
    %v507 = vsel %vm487, %v506, 0.0
    %v508 = vadd.f32 %v505, %v507
    %v509 = vstv %s229
    %v510 = vsel %vm491, %v509, 0.0
    %v511 = vadd.f32 %v508, %v510
    %s512 = ssub.f32 %s242, %s210
    %v513 = vstv %s512
    %vm514 = vcmp.ge.f32.partialorder %v511, %v513
    %v515 = vsel %vm514, %v450, -inf
    %v516 = vstv %s230
    %v517 = vsel %vm488, %v516, 0.0
    %v518 = vstv %s215
    %v519 = vsel %vm485, %v518, 0.0
    %v520 = vadd.f32 %v517, %v519
    %v521 = vstv %s231
    %v522 = vsel %vm489, %v521, 0.0
    %v523 = vadd.f32 %v520, %v522
    %v524 = vstv %s216
    %v525 = vsel %vm486, %v524, 0.0
    %v526 = vadd.f32 %v523, %v525
    %v527 = vstv %s232
    %v528 = vsel %vm490, %v527, 0.0
    %v529 = vadd.f32 %v526, %v528
    %v530 = vstv %s217
    %v531 = vsel %vm487, %v530, 0.0
    %v532 = vadd.f32 %v529, %v531
    %v533 = vstv %s233
    %v534 = vsel %vm491, %v533, 0.0
    %v535 = vadd.f32 %v532, %v534
    %s536 = ssub.f32 %s243, %s214
    %v537 = vstv %s536
    %vm538 = vcmp.ge.f32.partialorder %v535, %v537
    %v539 = vsel %vm538, %v450, -inf
    %v540 = vstv %s234
    %v541 = vsel %vm488, %v540, 0.0
    %v542 = vstv %s219
    %v543 = vsel %vm485, %v542, 0.0
    %v544 = vadd.f32 %v541, %v543
    %v545 = vstv %s235
    %v546 = vsel %vm489, %v545, 0.0
    %v547 = vadd.f32 %v544, %v546
    %v548 = vstv %s220
    %v549 = vsel %vm486, %v548, 0.0
    %v550 = vadd.f32 %v547, %v549
    %v551 = vstv %s236
    %v552 = vsel %vm490, %v551, 0.0
    %v553 = vadd.f32 %v550, %v552
    %v554 = vstv %s221
    %v555 = vsel %vm487, %v554, 0.0
    %v556 = vadd.f32 %v553, %v555
    %v557 = vstv %s237
    %v558 = vsel %vm491, %v557, 0.0
    %v559 = vadd.f32 %v556, %v558
    %s560 = ssub.f32 %s244, %s218
    %v561 = vstv %s560
    %vm562 = vcmp.ge.f32.partialorder %v559, %v561
    %v563 = vsel %vm562, %v450, -inf
    %v564 = vstv %s238
    %v565 = vsel %vm488, %v564, 0.0
    %v566 = vstv %s223
    %v567 = vsel %vm485, %v566, 0.0
    %v568 = vadd.f32 %v565, %v567
    %v569 = vstv %s239
    %v570 = vsel %vm489, %v569, 0.0
    %v571 = vadd.f32 %v568, %v570
    %v572 = vstv %s224
    %v573 = vsel %vm486, %v572, 0.0
    %v574 = vadd.f32 %v571, %v573
    %v575 = vstv %s240
    %v576 = vsel %vm490, %v575, 0.0
    %v577 = vadd.f32 %v574, %v576
    %v578 = vstv %s225
    %v579 = vsel %vm487, %v578, 0.0
    %v580 = vadd.f32 %v577, %v579
    %v581 = vstv %s241
    %v582 = vsel %vm491, %v581, 0.0
    %v583 = vadd.f32 %v580, %v582
    %s584 = ssub.f32 %s245, %s222
    %v585 = vstv %s584
    %vm586 = vcmp.ge.f32.partialorder %v583, %v585
    %v587 = vsel %vm586, %v450, -inf
    %vm588 = vcmp.ge.f32.partialorder %v450, %v460
    %vm589 = vcmp.ge.f32.partialorder %v470, %v460
    %vm590 = vcmp.ge.f32.partialorder %v480, %v460
    %vm591 = vcmp.ge.f32.partialorder %v481, %v460
    %vm592 = vcmp.ge.f32.partialorder %v482, %v460
    %vm593 = vcmp.ge.f32.partialorder %v483, %v460
    %vm594 = vcmp.ge.f32.partialorder %v484, %v460
    %v595 = vstv %s210
    %v596 = vsel %vm588, %v595, 0.0
    %v597 = vsel %vm591, %v492, 0.0
    %v598 = vadd.f32 %v596, %v597
    %v599 = vsel %vm592, %v497, 0.0
    %v600 = vadd.f32 %v598, %v599
    %v601 = vsel %vm589, %v500, 0.0
    %v602 = vadd.f32 %v600, %v601
    %v603 = vsel %vm593, %v503, 0.0
    %v604 = vadd.f32 %v602, %v603
    %v605 = vsel %vm590, %v506, 0.0
    %v606 = vadd.f32 %v604, %v605
    %v607 = vsel %vm594, %v509, 0.0
    %v608 = vadd.f32 %v606, %v607
    %s609 = ssub.f32 %s242, %s211
    %v610 = vstv %s609
    %vm611 = vcmp.ge.f32.partialorder %v608, %v610
    %v612 = vsel %vm611, %v460, -inf
    %v613 = vmax.f32 %v515, %v612
    %v614 = vstv %s214
    %v615 = vsel %vm588, %v614, 0.0
    %v616 = vsel %vm591, %v516, 0.0
    %v617 = vadd.f32 %v615, %v616
    %v618 = vsel %vm592, %v521, 0.0
    %v619 = vadd.f32 %v617, %v618
    %v620 = vsel %vm589, %v524, 0.0
    %v621 = vadd.f32 %v619, %v620
    %v622 = vsel %vm593, %v527, 0.0
    %v623 = vadd.f32 %v621, %v622
    %v624 = vsel %vm590, %v530, 0.0
    %v625 = vadd.f32 %v623, %v624
    %v626 = vsel %vm594, %v533, 0.0
    %v627 = vadd.f32 %v625, %v626
    %s628 = ssub.f32 %s243, %s215
    %v629 = vstv %s628
    %vm630 = vcmp.ge.f32.partialorder %v627, %v629
    %v631 = vsel %vm630, %v460, -inf
    %v632 = vmax.f32 %v539, %v631
    %v633 = vstv %s218
    %v634 = vsel %vm588, %v633, 0.0
    %v635 = vsel %vm591, %v540, 0.0
    %v636 = vadd.f32 %v634, %v635
    %v637 = vsel %vm592, %v545, 0.0
    %v638 = vadd.f32 %v636, %v637
    %v639 = vsel %vm589, %v548, 0.0
    %v640 = vadd.f32 %v638, %v639
    %v641 = vsel %vm593, %v551, 0.0
    %v642 = vadd.f32 %v640, %v641
    %v643 = vsel %vm590, %v554, 0.0
    %v644 = vadd.f32 %v642, %v643
    %v645 = vsel %vm594, %v557, 0.0
    %v646 = vadd.f32 %v644, %v645
    %s647 = ssub.f32 %s244, %s219
    %v648 = vstv %s647
    %vm649 = vcmp.ge.f32.partialorder %v646, %v648
    %v650 = vsel %vm649, %v460, -inf
    %v651 = vmax.f32 %v563, %v650
    %v652 = vstv %s222
    %v653 = vsel %vm588, %v652, 0.0
    %v654 = vsel %vm591, %v564, 0.0
    %v655 = vadd.f32 %v653, %v654
    %v656 = vsel %vm592, %v569, 0.0
    %v657 = vadd.f32 %v655, %v656
    %v658 = vsel %vm589, %v572, 0.0
    %v659 = vadd.f32 %v657, %v658
    %v660 = vsel %vm593, %v575, 0.0
    %v661 = vadd.f32 %v659, %v660
    %v662 = vsel %vm590, %v578, 0.0
    %v663 = vadd.f32 %v661, %v662
    %v664 = vsel %vm594, %v581, 0.0
    %v665 = vadd.f32 %v663, %v664
    %s666 = ssub.f32 %s245, %s223
    %v667 = vstv %s666
    %vm668 = vcmp.ge.f32.partialorder %v665, %v667
    %v669 = vsel %vm668, %v460, -inf
    %v670 = vmax.f32 %v587, %v669
    %vm671 = vcmp.ge.f32.partialorder %v450, %v470
    %vm672 = vcmp.ge.f32.partialorder %v460, %v470
    %vm673 = vcmp.ge.f32.partialorder %v480, %v470
    %vm674 = vcmp.ge.f32.partialorder %v481, %v470
    %vm675 = vcmp.ge.f32.partialorder %v482, %v470
    %vm676 = vcmp.ge.f32.partialorder %v483, %v470
    %vm677 = vcmp.ge.f32.partialorder %v484, %v470
    %v678 = vsel %vm671, %v595, 0.0
    %v679 = vsel %vm674, %v492, 0.0
    %v680 = vadd.f32 %v678, %v679
    %v681 = vsel %vm672, %v494, 0.0
    %v682 = vadd.f32 %v680, %v681
    %v683 = vsel %vm675, %v497, 0.0
    %v684 = vadd.f32 %v682, %v683
    %v685 = vsel %vm676, %v503, 0.0
    %v686 = vadd.f32 %v684, %v685
    %v687 = vsel %vm673, %v506, 0.0
    %v688 = vadd.f32 %v686, %v687
    %v689 = vsel %vm677, %v509, 0.0
    %v690 = vadd.f32 %v688, %v689
    %s691 = ssub.f32 %s242, %s212
    %v692 = vstv %s691
    %vm693 = vcmp.ge.f32.partialorder %v690, %v692
    %v694 = vsel %vm693, %v470, -inf
    %v695 = vmax.f32 %v613, %v694
    %v696 = vsel %vm671, %v614, 0.0
    %v697 = vsel %vm674, %v516, 0.0
    %v698 = vadd.f32 %v696, %v697
    %v699 = vsel %vm672, %v518, 0.0
    %v700 = vadd.f32 %v698, %v699
    %v701 = vsel %vm675, %v521, 0.0
    %v702 = vadd.f32 %v700, %v701
    %v703 = vsel %vm676, %v527, 0.0
    %v704 = vadd.f32 %v702, %v703
    %v705 = vsel %vm673, %v530, 0.0
    %v706 = vadd.f32 %v704, %v705
    %v707 = vsel %vm677, %v533, 0.0
    %v708 = vadd.f32 %v706, %v707
    %s709 = ssub.f32 %s243, %s216
    %v710 = vstv %s709
    %vm711 = vcmp.ge.f32.partialorder %v708, %v710
    %v712 = vsel %vm711, %v470, -inf
    %v713 = vmax.f32 %v632, %v712
    %v714 = vsel %vm671, %v633, 0.0
    %v715 = vsel %vm674, %v540, 0.0
    %v716 = vadd.f32 %v714, %v715
    %v717 = vsel %vm672, %v542, 0.0
    %v718 = vadd.f32 %v716, %v717
    %v719 = vsel %vm675, %v545, 0.0
    %v720 = vadd.f32 %v718, %v719
    %v721 = vsel %vm676, %v551, 0.0
    %v722 = vadd.f32 %v720, %v721
    %v723 = vsel %vm673, %v554, 0.0
    %v724 = vadd.f32 %v722, %v723
    %v725 = vsel %vm677, %v557, 0.0
    %v726 = vadd.f32 %v724, %v725
    %s727 = ssub.f32 %s244, %s220
    %v728 = vstv %s727
    %vm729 = vcmp.ge.f32.partialorder %v726, %v728
    %v730 = vsel %vm729, %v470, -inf
    %v731 = vmax.f32 %v651, %v730
    %v732 = vsel %vm671, %v652, 0.0
    %v733 = vsel %vm674, %v564, 0.0
    %v734 = vadd.f32 %v732, %v733
    %v735 = vsel %vm672, %v566, 0.0
    %v736 = vadd.f32 %v734, %v735
    %v737 = vsel %vm675, %v569, 0.0
    %v738 = vadd.f32 %v736, %v737
    %v739 = vsel %vm676, %v575, 0.0
    %v740 = vadd.f32 %v738, %v739
    %v741 = vsel %vm673, %v578, 0.0
    %v742 = vadd.f32 %v740, %v741
    %v743 = vsel %vm677, %v581, 0.0
    %v744 = vadd.f32 %v742, %v743
    %s745 = ssub.f32 %s245, %s224
    %v746 = vstv %s745
    %vm747 = vcmp.ge.f32.partialorder %v744, %v746
    %v748 = vsel %vm747, %v470, -inf
    %v749 = vmax.f32 %v670, %v748
    %vm750 = vcmp.ge.f32.partialorder %v450, %v480
    %vm751 = vcmp.ge.f32.partialorder %v460, %v480
    %vm752 = vcmp.ge.f32.partialorder %v470, %v480
    %vm753 = vcmp.ge.f32.partialorder %v481, %v480
    %vm754 = vcmp.ge.f32.partialorder %v482, %v480
    %vm755 = vcmp.ge.f32.partialorder %v483, %v480
    %vm756 = vcmp.ge.f32.partialorder %v484, %v480
    %v757 = vsel %vm750, %v595, 0.0
    %v758 = vsel %vm753, %v492, 0.0
    %v759 = vadd.f32 %v757, %v758
    %v760 = vsel %vm751, %v494, 0.0
    %v761 = vadd.f32 %v759, %v760
    %v762 = vsel %vm754, %v497, 0.0
    %v763 = vadd.f32 %v761, %v762
    %v764 = vsel %vm752, %v500, 0.0
    %v765 = vadd.f32 %v763, %v764
    %v766 = vsel %vm755, %v503, 0.0
    %v767 = vadd.f32 %v765, %v766
    %v768 = vsel %vm756, %v509, 0.0
    %v769 = vadd.f32 %v767, %v768
    %s770 = ssub.f32 %s242, %s213
    %v771 = vstv %s770
    %vm772 = vcmp.ge.f32.partialorder %v769, %v771
    %v773 = vsel %vm772, %v480, -inf
    %v774 = vmax.f32 %v695, %v773
    %v775 = vsel %vm750, %v614, 0.0
    %v776 = vsel %vm753, %v516, 0.0
    %v777 = vadd.f32 %v775, %v776
    %v778 = vsel %vm751, %v518, 0.0
    %v779 = vadd.f32 %v777, %v778
    %v780 = vsel %vm754, %v521, 0.0
    %v781 = vadd.f32 %v779, %v780
    %v782 = vsel %vm752, %v524, 0.0
    %v783 = vadd.f32 %v781, %v782
    %v784 = vsel %vm755, %v527, 0.0
    %v785 = vadd.f32 %v783, %v784
    %v786 = vsel %vm756, %v533, 0.0
    %v787 = vadd.f32 %v785, %v786
    %s788 = ssub.f32 %s243, %s217
    %v789 = vstv %s788
    %vm790 = vcmp.ge.f32.partialorder %v787, %v789
    %v791 = vsel %vm790, %v480, -inf
    %v792 = vmax.f32 %v713, %v791
    %v793 = vsel %vm750, %v633, 0.0
    %v794 = vsel %vm753, %v540, 0.0
    %v795 = vadd.f32 %v793, %v794
    %v796 = vsel %vm751, %v542, 0.0
    %v797 = vadd.f32 %v795, %v796
    %v798 = vsel %vm754, %v545, 0.0
    %v799 = vadd.f32 %v797, %v798
    %v800 = vsel %vm752, %v548, 0.0
    %v801 = vadd.f32 %v799, %v800
    %v802 = vsel %vm755, %v551, 0.0
    %v803 = vadd.f32 %v801, %v802
    %v804 = vsel %vm756, %v557, 0.0
    %v805 = vadd.f32 %v803, %v804
    %s806 = ssub.f32 %s244, %s221
    %v807 = vstv %s806
    %vm808 = vcmp.ge.f32.partialorder %v805, %v807
    %v809 = vsel %vm808, %v480, -inf
    %v810 = vmax.f32 %v731, %v809
    %v811 = vsel %vm750, %v652, 0.0
    %v812 = vsel %vm753, %v564, 0.0
    %v813 = vadd.f32 %v811, %v812
    %v814 = vsel %vm751, %v566, 0.0
    %v815 = vadd.f32 %v813, %v814
    %v816 = vsel %vm754, %v569, 0.0
    %v817 = vadd.f32 %v815, %v816
    %v818 = vsel %vm752, %v572, 0.0
    %v819 = vadd.f32 %v817, %v818
    %v820 = vsel %vm755, %v575, 0.0
    %v821 = vadd.f32 %v819, %v820
    %v822 = vsel %vm756, %v581, 0.0
    %v823 = vadd.f32 %v821, %v822
    %s824 = ssub.f32 %s245, %s225
    %v825 = vstv %s824
    %vm826 = vcmp.ge.f32.partialorder %v823, %v825
    %v827 = vsel %vm826, %v480, -inf
    %v828 = vmax.f32 %v749, %v827
    %vm829 = vcmp.ge.f32.partialorder %v450, %v481
    %vm830 = vcmp.ge.f32.partialorder %v460, %v481
    %vm831 = vcmp.ge.f32.partialorder %v470, %v481
    %vm832 = vcmp.ge.f32.partialorder %v480, %v481
    %vm833 = vcmp.ge.f32.partialorder %v482, %v481
    %vm834 = vcmp.ge.f32.partialorder %v483, %v481
    %vm835 = vcmp.ge.f32.partialorder %v484, %v481
    %v836 = vsel %vm829, %v595, 0.0
    %v837 = vsel %vm830, %v494, 0.0
    %v838 = vadd.f32 %v836, %v837
    %v839 = vsel %vm833, %v497, 0.0
    %v840 = vadd.f32 %v838, %v839
    %v841 = vsel %vm831, %v500, 0.0
    %v842 = vadd.f32 %v840, %v841
    %v843 = vsel %vm834, %v503, 0.0
    %v844 = vadd.f32 %v842, %v843
    %v845 = vsel %vm832, %v506, 0.0
    %v846 = vadd.f32 %v844, %v845
    %v847 = vsel %vm835, %v509, 0.0
    %v848 = vadd.f32 %v846, %v847
    %s849 = ssub.f32 %s242, %s226
    %v850 = vstv %s849
    %vm851 = vcmp.ge.f32.partialorder %v848, %v850
    %v852 = vsel %vm851, %v481, -inf
    %v853 = vmax.f32 %v774, %v852
    %v854 = vsel %vm829, %v614, 0.0
    %v855 = vsel %vm830, %v518, 0.0
    %v856 = vadd.f32 %v854, %v855
    %v857 = vsel %vm833, %v521, 0.0
    %v858 = vadd.f32 %v856, %v857
    %v859 = vsel %vm831, %v524, 0.0
    %v860 = vadd.f32 %v858, %v859
    %v861 = vsel %vm834, %v527, 0.0
    %v862 = vadd.f32 %v860, %v861
    %v863 = vsel %vm832, %v530, 0.0
    %v864 = vadd.f32 %v862, %v863
    %v865 = vsel %vm835, %v533, 0.0
    %v866 = vadd.f32 %v864, %v865
    %s867 = ssub.f32 %s243, %s230
    %v868 = vstv %s867
    %vm869 = vcmp.ge.f32.partialorder %v866, %v868
    %v870 = vsel %vm869, %v481, -inf
    %v871 = vmax.f32 %v792, %v870
    %v872 = vsel %vm829, %v633, 0.0
    %v873 = vsel %vm830, %v542, 0.0
    %v874 = vadd.f32 %v872, %v873
    %v875 = vsel %vm833, %v545, 0.0
    %v876 = vadd.f32 %v874, %v875
    %v877 = vsel %vm831, %v548, 0.0
    %v878 = vadd.f32 %v876, %v877
    %v879 = vsel %vm834, %v551, 0.0
    %v880 = vadd.f32 %v878, %v879
    %v881 = vsel %vm832, %v554, 0.0
    %v882 = vadd.f32 %v880, %v881
    %v883 = vsel %vm835, %v557, 0.0
    %v884 = vadd.f32 %v882, %v883
    %s885 = ssub.f32 %s244, %s234
    %v886 = vstv %s885
    %vm887 = vcmp.ge.f32.partialorder %v884, %v886
    %v888 = vsel %vm887, %v481, -inf
    %v889 = vmax.f32 %v810, %v888
    %v890 = vsel %vm829, %v652, 0.0
    %v891 = vsel %vm830, %v566, 0.0
    %v892 = vadd.f32 %v890, %v891
    %v893 = vsel %vm833, %v569, 0.0
    %v894 = vadd.f32 %v892, %v893
    %v895 = vsel %vm831, %v572, 0.0
    %v896 = vadd.f32 %v894, %v895
    %v897 = vsel %vm834, %v575, 0.0
    %v898 = vadd.f32 %v896, %v897
    %v899 = vsel %vm832, %v578, 0.0
    %v900 = vadd.f32 %v898, %v899
    %v901 = vsel %vm835, %v581, 0.0
    %v902 = vadd.f32 %v900, %v901
    %s903 = ssub.f32 %s245, %s238
    %v904 = vstv %s903
    %vm905 = vcmp.ge.f32.partialorder %v902, %v904
    %v906 = vsel %vm905, %v481, -inf
    %v907 = vmax.f32 %v828, %v906
    %vm908 = vcmp.ge.f32.partialorder %v450, %v482
    %vm909 = vcmp.ge.f32.partialorder %v460, %v482
    %vm910 = vcmp.ge.f32.partialorder %v470, %v482
    %vm911 = vcmp.ge.f32.partialorder %v480, %v482
    %vm912 = vcmp.ge.f32.partialorder %v481, %v482
    %vm913 = vcmp.ge.f32.partialorder %v483, %v482
    %vm914 = vcmp.ge.f32.partialorder %v484, %v482
    %v915 = vsel %vm908, %v595, 0.0
    %v916 = vsel %vm912, %v492, 0.0
    %v917 = vadd.f32 %v915, %v916
    %v918 = vsel %vm909, %v494, 0.0
    %v919 = vadd.f32 %v917, %v918
    %v920 = vsel %vm910, %v500, 0.0
    %v921 = vadd.f32 %v919, %v920
    %v922 = vsel %vm913, %v503, 0.0
    %v923 = vadd.f32 %v921, %v922
    %v924 = vsel %vm911, %v506, 0.0
    %v925 = vadd.f32 %v923, %v924
    %v926 = vsel %vm914, %v509, 0.0
    %v927 = vadd.f32 %v925, %v926
    %s928 = ssub.f32 %s242, %s227
    %v929 = vstv %s928
    %vm930 = vcmp.ge.f32.partialorder %v927, %v929
    %v931 = vsel %vm930, %v482, -inf
    %v932 = vmax.f32 %v853, %v931
    %v933 = vsel %vm908, %v614, 0.0
    %v934 = vsel %vm912, %v516, 0.0
    %v935 = vadd.f32 %v933, %v934
    %v936 = vsel %vm909, %v518, 0.0
    %v937 = vadd.f32 %v935, %v936
    %v938 = vsel %vm910, %v524, 0.0
    %v939 = vadd.f32 %v937, %v938
    %v940 = vsel %vm913, %v527, 0.0
    %v941 = vadd.f32 %v939, %v940
    %v942 = vsel %vm911, %v530, 0.0
    %v943 = vadd.f32 %v941, %v942
    %v944 = vsel %vm914, %v533, 0.0
    %v945 = vadd.f32 %v943, %v944
    %s946 = ssub.f32 %s243, %s231
    %v947 = vstv %s946
    %vm948 = vcmp.ge.f32.partialorder %v945, %v947
    %v949 = vsel %vm948, %v482, -inf
    %v950 = vmax.f32 %v871, %v949
    %v951 = vsel %vm908, %v633, 0.0
    %v952 = vsel %vm912, %v540, 0.0
    %v953 = vadd.f32 %v951, %v952
    %v954 = vsel %vm909, %v542, 0.0
    %v955 = vadd.f32 %v953, %v954
    %v956 = vsel %vm910, %v548, 0.0
    %v957 = vadd.f32 %v955, %v956
    %v958 = vsel %vm913, %v551, 0.0
    %v959 = vadd.f32 %v957, %v958
    %v960 = vsel %vm911, %v554, 0.0
    %v961 = vadd.f32 %v959, %v960
    %v962 = vsel %vm914, %v557, 0.0
    %v963 = vadd.f32 %v961, %v962
    %s964 = ssub.f32 %s244, %s235
    %v965 = vstv %s964
    %vm966 = vcmp.ge.f32.partialorder %v963, %v965
    %v967 = vsel %vm966, %v482, -inf
    %v968 = vmax.f32 %v889, %v967
    %v969 = vsel %vm908, %v652, 0.0
    %v970 = vsel %vm912, %v564, 0.0
    %v971 = vadd.f32 %v969, %v970
    %v972 = vsel %vm909, %v566, 0.0
    %v973 = vadd.f32 %v971, %v972
    %v974 = vsel %vm910, %v572, 0.0
    %v975 = vadd.f32 %v973, %v974
    %v976 = vsel %vm913, %v575, 0.0
    %v977 = vadd.f32 %v975, %v976
    %v978 = vsel %vm911, %v578, 0.0
    %v979 = vadd.f32 %v977, %v978
    %v980 = vsel %vm914, %v581, 0.0
    %v981 = vadd.f32 %v979, %v980
    %s982 = ssub.f32 %s245, %s239
    %v983 = vstv %s982
    %vm984 = vcmp.ge.f32.partialorder %v981, %v983
    %v985 = vsel %vm984, %v482, -inf
    %v986 = vmax.f32 %v907, %v985
    %vm987 = vcmp.ge.f32.partialorder %v450, %v483
    %vm988 = vcmp.ge.f32.partialorder %v460, %v483
    %vm989 = vcmp.ge.f32.partialorder %v470, %v483
    %vm990 = vcmp.ge.f32.partialorder %v480, %v483
    %vm991 = vcmp.ge.f32.partialorder %v481, %v483
    %vm992 = vcmp.ge.f32.partialorder %v482, %v483
    %vm993 = vcmp.ge.f32.partialorder %v484, %v483
    %v994 = vsel %vm987, %v595, 0.0
    %v995 = vsel %vm991, %v492, 0.0
    %v996 = vadd.f32 %v994, %v995
    %v997 = vsel %vm988, %v494, 0.0
    %v998 = vadd.f32 %v996, %v997
    %v999 = vsel %vm992, %v497, 0.0
    %v1000 = vadd.f32 %v998, %v999
    %v1001 = vsel %vm989, %v500, 0.0
    %v1002 = vadd.f32 %v1000, %v1001
    %v1003 = vsel %vm990, %v506, 0.0
    %v1004 = vadd.f32 %v1002, %v1003
    %v1005 = vsel %vm993, %v509, 0.0
    %v1006 = vadd.f32 %v1004, %v1005
    %s1007 = ssub.f32 %s242, %s228
    %v1008 = vstv %s1007
    %vm1009 = vcmp.ge.f32.partialorder %v1006, %v1008
    %v1010 = vsel %vm1009, %v483, -inf
    %v1011 = vmax.f32 %v932, %v1010
    %v1012 = vsel %vm987, %v614, 0.0
    %v1013 = vsel %vm991, %v516, 0.0
    %v1014 = vadd.f32 %v1012, %v1013
    %v1015 = vsel %vm988, %v518, 0.0
    %v1016 = vadd.f32 %v1014, %v1015
    %v1017 = vsel %vm992, %v521, 0.0
    %v1018 = vadd.f32 %v1016, %v1017
    %v1019 = vsel %vm989, %v524, 0.0
    %v1020 = vadd.f32 %v1018, %v1019
    %v1021 = vsel %vm990, %v530, 0.0
    %v1022 = vadd.f32 %v1020, %v1021
    %v1023 = vsel %vm993, %v533, 0.0
    %v1024 = vadd.f32 %v1022, %v1023
    %s1025 = ssub.f32 %s243, %s232
    %v1026 = vstv %s1025
    %vm1027 = vcmp.ge.f32.partialorder %v1024, %v1026
    %v1028 = vsel %vm1027, %v483, -inf
    %v1029 = vmax.f32 %v950, %v1028
    %v1030 = vsel %vm987, %v633, 0.0
    %v1031 = vsel %vm991, %v540, 0.0
    %v1032 = vadd.f32 %v1030, %v1031
    %v1033 = vsel %vm988, %v542, 0.0
    %v1034 = vadd.f32 %v1032, %v1033
    %v1035 = vsel %vm992, %v545, 0.0
    %v1036 = vadd.f32 %v1034, %v1035
    %v1037 = vsel %vm989, %v548, 0.0
    %v1038 = vadd.f32 %v1036, %v1037
    %v1039 = vsel %vm990, %v554, 0.0
    %v1040 = vadd.f32 %v1038, %v1039
    %v1041 = vsel %vm993, %v557, 0.0
    %v1042 = vadd.f32 %v1040, %v1041
    %s1043 = ssub.f32 %s244, %s236
    %v1044 = vstv %s1043
    %vm1045 = vcmp.ge.f32.partialorder %v1042, %v1044
    %v1046 = vsel %vm1045, %v483, -inf
    %v1047 = vmax.f32 %v968, %v1046
    %v1048 = vsel %vm987, %v652, 0.0
    %v1049 = vsel %vm991, %v564, 0.0
    %v1050 = vadd.f32 %v1048, %v1049
    %v1051 = vsel %vm988, %v566, 0.0
    %v1052 = vadd.f32 %v1050, %v1051
    %v1053 = vsel %vm992, %v569, 0.0
    %v1054 = vadd.f32 %v1052, %v1053
    %v1055 = vsel %vm989, %v572, 0.0
    %v1056 = vadd.f32 %v1054, %v1055
    %v1057 = vsel %vm990, %v578, 0.0
    %v1058 = vadd.f32 %v1056, %v1057
    %v1059 = vsel %vm993, %v581, 0.0
    %v1060 = vadd.f32 %v1058, %v1059
    %s1061 = ssub.f32 %s245, %s240
    %v1062 = vstv %s1061
    %vm1063 = vcmp.ge.f32.partialorder %v1060, %v1062
    %v1064 = vsel %vm1063, %v483, -inf
    %v1065 = vmax.f32 %v986, %v1064
    %vm1066 = vcmp.ge.f32.partialorder %v450, %v484
    %vm1067 = vcmp.ge.f32.partialorder %v460, %v484
    %vm1068 = vcmp.ge.f32.partialorder %v470, %v484
    %vm1069 = vcmp.ge.f32.partialorder %v480, %v484
    %vm1070 = vcmp.ge.f32.partialorder %v481, %v484
    %vm1071 = vcmp.ge.f32.partialorder %v482, %v484
    %vm1072 = vcmp.ge.f32.partialorder %v483, %v484
    %v1073 = vsel %vm1066, %v595, 0.0
    %v1074 = vsel %vm1070, %v492, 0.0
    %v1075 = vadd.f32 %v1073, %v1074
    %v1076 = vsel %vm1067, %v494, 0.0
    %v1077 = vadd.f32 %v1075, %v1076
    %v1078 = vsel %vm1071, %v497, 0.0
    %v1079 = vadd.f32 %v1077, %v1078
    %v1080 = vsel %vm1068, %v500, 0.0
    %v1081 = vadd.f32 %v1079, %v1080
    %v1082 = vsel %vm1072, %v503, 0.0
    %v1083 = vadd.f32 %v1081, %v1082
    %v1084 = vsel %vm1069, %v506, 0.0
    %v1085 = vadd.f32 %v1083, %v1084
    %s1086 = ssub.f32 %s242, %s229
    %v1087 = vstv %s1086
    %vm1088 = vcmp.ge.f32.partialorder %v1085, %v1087
    %v1089 = vsel %vm1088, %v484, -inf
    %v1090 = vmax.f32 %v1011, %v1089
    %v1091 = vsel %vm1066, %v614, 0.0
    %v1092 = vsel %vm1070, %v516, 0.0
    %v1093 = vadd.f32 %v1091, %v1092
    %v1094 = vsel %vm1067, %v518, 0.0
    %v1095 = vadd.f32 %v1093, %v1094
    %v1096 = vsel %vm1071, %v521, 0.0
    %v1097 = vadd.f32 %v1095, %v1096
    %v1098 = vsel %vm1068, %v524, 0.0
    %v1099 = vadd.f32 %v1097, %v1098
    %v1100 = vsel %vm1072, %v527, 0.0
    %v1101 = vadd.f32 %v1099, %v1100
    %v1102 = vsel %vm1069, %v530, 0.0
    %v1103 = vadd.f32 %v1101, %v1102
    %s1104 = ssub.f32 %s243, %s233
    %v1105 = vstv %s1104
    %vm1106 = vcmp.ge.f32.partialorder %v1103, %v1105
    %v1107 = vsel %vm1106, %v484, -inf
    %v1108 = vmax.f32 %v1029, %v1107
    %v1109 = vsel %vm1066, %v633, 0.0
    %v1110 = vsel %vm1070, %v540, 0.0
    %v1111 = vadd.f32 %v1109, %v1110
    %v1112 = vsel %vm1067, %v542, 0.0
    %v1113 = vadd.f32 %v1111, %v1112
    %v1114 = vsel %vm1071, %v545, 0.0
    %v1115 = vadd.f32 %v1113, %v1114
    %v1116 = vsel %vm1068, %v548, 0.0
    %v1117 = vadd.f32 %v1115, %v1116
    %v1118 = vsel %vm1072, %v551, 0.0
    %v1119 = vadd.f32 %v1117, %v1118
    %v1120 = vsel %vm1069, %v554, 0.0
    %v1121 = vadd.f32 %v1119, %v1120
    %s1122 = ssub.f32 %s244, %s237
    %v1123 = vstv %s1122
    %vm1124 = vcmp.ge.f32.partialorder %v1121, %v1123
    %v1125 = vsel %vm1124, %v484, -inf
    %v1126 = vmax.f32 %v1047, %v1125
    %v1127 = vsel %vm1066, %v652, 0.0
    %v1128 = vsel %vm1070, %v564, 0.0
    %v1129 = vadd.f32 %v1127, %v1128
    %v1130 = vsel %vm1067, %v566, 0.0
    %v1131 = vadd.f32 %v1129, %v1130
    %v1132 = vsel %vm1071, %v569, 0.0
    %v1133 = vadd.f32 %v1131, %v1132
    %v1134 = vsel %vm1068, %v572, 0.0
    %v1135 = vadd.f32 %v1133, %v1134
    %v1136 = vsel %vm1072, %v575, 0.0
    %v1137 = vadd.f32 %v1135, %v1136
    %v1138 = vsel %vm1069, %v578, 0.0
    %v1139 = vadd.f32 %v1137, %v1138
    %s1140 = ssub.f32 %s245, %s241
    %v1141 = vstv %s1140
    %vm1142 = vcmp.ge.f32.partialorder %v1139, %v1141
    %v1143 = vsel %vm1142, %v484, -inf
    %v1144 = vmax.f32 %v1065, %v1143
    %v1145 = vsub.f32 0.0, %v1090
    %v1146 = vsub.f32 0.0, %v1108
    %v1147 = vsub.f32 0.0, %v1126
    %v1148 = vsub.f32 0.0, %v1144
    %vm1149 = vcmp.ge.f32.partialorder %v1108, %v1090
    %vm1150 = vcmp.ge.f32.partialorder %v1126, %v1090
    %vm1151 = vcmp.ge.f32.partialorder %v1144, %v1090
    %vm1152 = vcmp.ge.f32.partialorder %v1145, %v1090
    %vm1153 = vcmp.ge.f32.partialorder %v1146, %v1090
    %vm1154 = vcmp.ge.f32.partialorder %v1147, %v1090
    %vm1155 = vcmp.ge.f32.partialorder %v1148, %v1090
    %v1156 = vstv %s262
    %v1157 = vsel %vm1152, %v1156, 0.0
    %v1158 = vstv %s247
    %v1159 = vsel %vm1149, %v1158, 0.0
    %v1160 = vadd.f32 %v1157, %v1159
    %v1161 = vstv %s263
    %v1162 = vsel %vm1153, %v1161, 0.0
    %v1163 = vadd.f32 %v1160, %v1162
    %v1164 = vstv %s248
    %v1165 = vsel %vm1150, %v1164, 0.0
    %v1166 = vadd.f32 %v1163, %v1165
    %v1167 = vstv %s264
    %v1168 = vsel %vm1154, %v1167, 0.0
    %v1169 = vadd.f32 %v1166, %v1168
    %v1170 = vstv %s249
    %v1171 = vsel %vm1151, %v1170, 0.0
    %v1172 = vadd.f32 %v1169, %v1171
    %v1173 = vstv %s265
    %v1174 = vsel %vm1155, %v1173, 0.0
    %v1175 = vadd.f32 %v1172, %v1174
    %s1176 = ssub.f32 %s278, %s246
    %v1177 = vstv %s1176
    %vm1178 = vcmp.ge.f32.partialorder %v1175, %v1177
    %v1179 = vsel %vm1178, %v1090, -inf
    %v1180 = vstv %s266
    %v1181 = vsel %vm1152, %v1180, 0.0
    %v1182 = vstv %s251
    %v1183 = vsel %vm1149, %v1182, 0.0
    %v1184 = vadd.f32 %v1181, %v1183
    %v1185 = vstv %s267
    %v1186 = vsel %vm1153, %v1185, 0.0
    %v1187 = vadd.f32 %v1184, %v1186
    %v1188 = vstv %s252
    %v1189 = vsel %vm1150, %v1188, 0.0
    %v1190 = vadd.f32 %v1187, %v1189
    %v1191 = vstv %s268
    %v1192 = vsel %vm1154, %v1191, 0.0
    %v1193 = vadd.f32 %v1190, %v1192
    %v1194 = vstv %s253
    %v1195 = vsel %vm1151, %v1194, 0.0
    %v1196 = vadd.f32 %v1193, %v1195
    %v1197 = vstv %s269
    %v1198 = vsel %vm1155, %v1197, 0.0
    %v1199 = vadd.f32 %v1196, %v1198
    %s1200 = ssub.f32 %s279, %s250
    %v1201 = vstv %s1200
    %vm1202 = vcmp.ge.f32.partialorder %v1199, %v1201
    %v1203 = vsel %vm1202, %v1090, -inf
    %v1204 = vstv %s270
    %v1205 = vsel %vm1152, %v1204, 0.0
    %v1206 = vstv %s255
    %v1207 = vsel %vm1149, %v1206, 0.0
    %v1208 = vadd.f32 %v1205, %v1207
    %v1209 = vstv %s271
    %v1210 = vsel %vm1153, %v1209, 0.0
    %v1211 = vadd.f32 %v1208, %v1210
    %v1212 = vstv %s256
    %v1213 = vsel %vm1150, %v1212, 0.0
    %v1214 = vadd.f32 %v1211, %v1213
    %v1215 = vstv %s272
    %v1216 = vsel %vm1154, %v1215, 0.0
    %v1217 = vadd.f32 %v1214, %v1216
    %v1218 = vstv %s257
    %v1219 = vsel %vm1151, %v1218, 0.0
    %v1220 = vadd.f32 %v1217, %v1219
    %v1221 = vstv %s273
    %v1222 = vsel %vm1155, %v1221, 0.0
    %v1223 = vadd.f32 %v1220, %v1222
    %s1224 = ssub.f32 %s280, %s254
    %v1225 = vstv %s1224
    %vm1226 = vcmp.ge.f32.partialorder %v1223, %v1225
    %v1227 = vsel %vm1226, %v1090, -inf
    %v1228 = vstv %s274
    %v1229 = vsel %vm1152, %v1228, 0.0
    %v1230 = vstv %s259
    %v1231 = vsel %vm1149, %v1230, 0.0
    %v1232 = vadd.f32 %v1229, %v1231
    %v1233 = vstv %s275
    %v1234 = vsel %vm1153, %v1233, 0.0
    %v1235 = vadd.f32 %v1232, %v1234
    %v1236 = vstv %s260
    %v1237 = vsel %vm1150, %v1236, 0.0
    %v1238 = vadd.f32 %v1235, %v1237
    %v1239 = vstv %s276
    %v1240 = vsel %vm1154, %v1239, 0.0
    %v1241 = vadd.f32 %v1238, %v1240
    %v1242 = vstv %s261
    %v1243 = vsel %vm1151, %v1242, 0.0
    %v1244 = vadd.f32 %v1241, %v1243
    %v1245 = vstv %s277
    %v1246 = vsel %vm1155, %v1245, 0.0
    %v1247 = vadd.f32 %v1244, %v1246
    %s1248 = ssub.f32 %s281, %s258
    %v1249 = vstv %s1248
    %vm1250 = vcmp.ge.f32.partialorder %v1247, %v1249
    %v1251 = vsel %vm1250, %v1090, -inf
    %vm1252 = vcmp.ge.f32.partialorder %v1090, %v1108
    %vm1253 = vcmp.ge.f32.partialorder %v1126, %v1108
    %vm1254 = vcmp.ge.f32.partialorder %v1144, %v1108
    %vm1255 = vcmp.ge.f32.partialorder %v1145, %v1108
    %vm1256 = vcmp.ge.f32.partialorder %v1146, %v1108
    %vm1257 = vcmp.ge.f32.partialorder %v1147, %v1108
    %vm1258 = vcmp.ge.f32.partialorder %v1148, %v1108
    %v1259 = vstv %s246
    %v1260 = vsel %vm1252, %v1259, 0.0
    %v1261 = vsel %vm1255, %v1156, 0.0
    %v1262 = vadd.f32 %v1260, %v1261
    %v1263 = vsel %vm1256, %v1161, 0.0
    %v1264 = vadd.f32 %v1262, %v1263
    %v1265 = vsel %vm1253, %v1164, 0.0
    %v1266 = vadd.f32 %v1264, %v1265
    %v1267 = vsel %vm1257, %v1167, 0.0
    %v1268 = vadd.f32 %v1266, %v1267
    %v1269 = vsel %vm1254, %v1170, 0.0
    %v1270 = vadd.f32 %v1268, %v1269
    %v1271 = vsel %vm1258, %v1173, 0.0
    %v1272 = vadd.f32 %v1270, %v1271
    %s1273 = ssub.f32 %s278, %s247
    %v1274 = vstv %s1273
    %vm1275 = vcmp.ge.f32.partialorder %v1272, %v1274
    %v1276 = vsel %vm1275, %v1108, -inf
    %v1277 = vmax.f32 %v1179, %v1276
    %v1278 = vstv %s250
    %v1279 = vsel %vm1252, %v1278, 0.0
    %v1280 = vsel %vm1255, %v1180, 0.0
    %v1281 = vadd.f32 %v1279, %v1280
    %v1282 = vsel %vm1256, %v1185, 0.0
    %v1283 = vadd.f32 %v1281, %v1282
    %v1284 = vsel %vm1253, %v1188, 0.0
    %v1285 = vadd.f32 %v1283, %v1284
    %v1286 = vsel %vm1257, %v1191, 0.0
    %v1287 = vadd.f32 %v1285, %v1286
    %v1288 = vsel %vm1254, %v1194, 0.0
    %v1289 = vadd.f32 %v1287, %v1288
    %v1290 = vsel %vm1258, %v1197, 0.0
    %v1291 = vadd.f32 %v1289, %v1290
    %s1292 = ssub.f32 %s279, %s251
    %v1293 = vstv %s1292
    %vm1294 = vcmp.ge.f32.partialorder %v1291, %v1293
    %v1295 = vsel %vm1294, %v1108, -inf
    %v1296 = vmax.f32 %v1203, %v1295
    %v1297 = vstv %s254
    %v1298 = vsel %vm1252, %v1297, 0.0
    %v1299 = vsel %vm1255, %v1204, 0.0
    %v1300 = vadd.f32 %v1298, %v1299
    %v1301 = vsel %vm1256, %v1209, 0.0
    %v1302 = vadd.f32 %v1300, %v1301
    %v1303 = vsel %vm1253, %v1212, 0.0
    %v1304 = vadd.f32 %v1302, %v1303
    %v1305 = vsel %vm1257, %v1215, 0.0
    %v1306 = vadd.f32 %v1304, %v1305
    %v1307 = vsel %vm1254, %v1218, 0.0
    %v1308 = vadd.f32 %v1306, %v1307
    %v1309 = vsel %vm1258, %v1221, 0.0
    %v1310 = vadd.f32 %v1308, %v1309
    %s1311 = ssub.f32 %s280, %s255
    %v1312 = vstv %s1311
    %vm1313 = vcmp.ge.f32.partialorder %v1310, %v1312
    %v1314 = vsel %vm1313, %v1108, -inf
    %v1315 = vmax.f32 %v1227, %v1314
    %v1316 = vstv %s258
    %v1317 = vsel %vm1252, %v1316, 0.0
    %v1318 = vsel %vm1255, %v1228, 0.0
    %v1319 = vadd.f32 %v1317, %v1318
    %v1320 = vsel %vm1256, %v1233, 0.0
    %v1321 = vadd.f32 %v1319, %v1320
    %v1322 = vsel %vm1253, %v1236, 0.0
    %v1323 = vadd.f32 %v1321, %v1322
    %v1324 = vsel %vm1257, %v1239, 0.0
    %v1325 = vadd.f32 %v1323, %v1324
    %v1326 = vsel %vm1254, %v1242, 0.0
    %v1327 = vadd.f32 %v1325, %v1326
    %v1328 = vsel %vm1258, %v1245, 0.0
    %v1329 = vadd.f32 %v1327, %v1328
    %s1330 = ssub.f32 %s281, %s259
    %v1331 = vstv %s1330
    %vm1332 = vcmp.ge.f32.partialorder %v1329, %v1331
    %v1333 = vsel %vm1332, %v1108, -inf
    %v1334 = vmax.f32 %v1251, %v1333
    %vm1335 = vcmp.ge.f32.partialorder %v1090, %v1126
    %vm1336 = vcmp.ge.f32.partialorder %v1108, %v1126
    %vm1337 = vcmp.ge.f32.partialorder %v1144, %v1126
    %vm1338 = vcmp.ge.f32.partialorder %v1145, %v1126
    %vm1339 = vcmp.ge.f32.partialorder %v1146, %v1126
    %vm1340 = vcmp.ge.f32.partialorder %v1147, %v1126
    %vm1341 = vcmp.ge.f32.partialorder %v1148, %v1126
    %v1342 = vsel %vm1335, %v1259, 0.0
    %v1343 = vsel %vm1338, %v1156, 0.0
    %v1344 = vadd.f32 %v1342, %v1343
    %v1345 = vsel %vm1336, %v1158, 0.0
    %v1346 = vadd.f32 %v1344, %v1345
    %v1347 = vsel %vm1339, %v1161, 0.0
    %v1348 = vadd.f32 %v1346, %v1347
    %v1349 = vsel %vm1340, %v1167, 0.0
    %v1350 = vadd.f32 %v1348, %v1349
    %v1351 = vsel %vm1337, %v1170, 0.0
    %v1352 = vadd.f32 %v1350, %v1351
    %v1353 = vsel %vm1341, %v1173, 0.0
    %v1354 = vadd.f32 %v1352, %v1353
    %s1355 = ssub.f32 %s278, %s248
    %v1356 = vstv %s1355
    %vm1357 = vcmp.ge.f32.partialorder %v1354, %v1356
    %v1358 = vsel %vm1357, %v1126, -inf
    %v1359 = vmax.f32 %v1277, %v1358
    %v1360 = vsel %vm1335, %v1278, 0.0
    %v1361 = vsel %vm1338, %v1180, 0.0
    %v1362 = vadd.f32 %v1360, %v1361
    %v1363 = vsel %vm1336, %v1182, 0.0
    %v1364 = vadd.f32 %v1362, %v1363
    %v1365 = vsel %vm1339, %v1185, 0.0
    %v1366 = vadd.f32 %v1364, %v1365
    %v1367 = vsel %vm1340, %v1191, 0.0
    %v1368 = vadd.f32 %v1366, %v1367
    %v1369 = vsel %vm1337, %v1194, 0.0
    %v1370 = vadd.f32 %v1368, %v1369
    %v1371 = vsel %vm1341, %v1197, 0.0
    %v1372 = vadd.f32 %v1370, %v1371
    %s1373 = ssub.f32 %s279, %s252
    %v1374 = vstv %s1373
    %vm1375 = vcmp.ge.f32.partialorder %v1372, %v1374
    %v1376 = vsel %vm1375, %v1126, -inf
    %v1377 = vmax.f32 %v1296, %v1376
    %v1378 = vsel %vm1335, %v1297, 0.0
    %v1379 = vsel %vm1338, %v1204, 0.0
    %v1380 = vadd.f32 %v1378, %v1379
    %v1381 = vsel %vm1336, %v1206, 0.0
    %v1382 = vadd.f32 %v1380, %v1381
    %v1383 = vsel %vm1339, %v1209, 0.0
    %v1384 = vadd.f32 %v1382, %v1383
    %v1385 = vsel %vm1340, %v1215, 0.0
    %v1386 = vadd.f32 %v1384, %v1385
    %v1387 = vsel %vm1337, %v1218, 0.0
    %v1388 = vadd.f32 %v1386, %v1387
    %v1389 = vsel %vm1341, %v1221, 0.0
    %v1390 = vadd.f32 %v1388, %v1389
    %s1391 = ssub.f32 %s280, %s256
    %v1392 = vstv %s1391
    %vm1393 = vcmp.ge.f32.partialorder %v1390, %v1392
    %v1394 = vsel %vm1393, %v1126, -inf
    %v1395 = vmax.f32 %v1315, %v1394
    %v1396 = vsel %vm1335, %v1316, 0.0
    %v1397 = vsel %vm1338, %v1228, 0.0
    %v1398 = vadd.f32 %v1396, %v1397
    %v1399 = vsel %vm1336, %v1230, 0.0
    %v1400 = vadd.f32 %v1398, %v1399
    %v1401 = vsel %vm1339, %v1233, 0.0
    %v1402 = vadd.f32 %v1400, %v1401
    %v1403 = vsel %vm1340, %v1239, 0.0
    %v1404 = vadd.f32 %v1402, %v1403
    %v1405 = vsel %vm1337, %v1242, 0.0
    %v1406 = vadd.f32 %v1404, %v1405
    %v1407 = vsel %vm1341, %v1245, 0.0
    %v1408 = vadd.f32 %v1406, %v1407
    %s1409 = ssub.f32 %s281, %s260
    %v1410 = vstv %s1409
    %vm1411 = vcmp.ge.f32.partialorder %v1408, %v1410
    %v1412 = vsel %vm1411, %v1126, -inf
    %v1413 = vmax.f32 %v1334, %v1412
    %vm1414 = vcmp.ge.f32.partialorder %v1090, %v1144
    %vm1415 = vcmp.ge.f32.partialorder %v1108, %v1144
    %vm1416 = vcmp.ge.f32.partialorder %v1126, %v1144
    %vm1417 = vcmp.ge.f32.partialorder %v1145, %v1144
    %vm1418 = vcmp.ge.f32.partialorder %v1146, %v1144
    %vm1419 = vcmp.ge.f32.partialorder %v1147, %v1144
    %vm1420 = vcmp.ge.f32.partialorder %v1148, %v1144
    %v1421 = vsel %vm1414, %v1259, 0.0
    %v1422 = vsel %vm1417, %v1156, 0.0
    %v1423 = vadd.f32 %v1421, %v1422
    %v1424 = vsel %vm1415, %v1158, 0.0
    %v1425 = vadd.f32 %v1423, %v1424
    %v1426 = vsel %vm1418, %v1161, 0.0
    %v1427 = vadd.f32 %v1425, %v1426
    %v1428 = vsel %vm1416, %v1164, 0.0
    %v1429 = vadd.f32 %v1427, %v1428
    %v1430 = vsel %vm1419, %v1167, 0.0
    %v1431 = vadd.f32 %v1429, %v1430
    %v1432 = vsel %vm1420, %v1173, 0.0
    %v1433 = vadd.f32 %v1431, %v1432
    %s1434 = ssub.f32 %s278, %s249
    %v1435 = vstv %s1434
    %vm1436 = vcmp.ge.f32.partialorder %v1433, %v1435
    %v1437 = vsel %vm1436, %v1144, -inf
    %v1438 = vmax.f32 %v1359, %v1437
    %v1439 = vsel %vm1414, %v1278, 0.0
    %v1440 = vsel %vm1417, %v1180, 0.0
    %v1441 = vadd.f32 %v1439, %v1440
    %v1442 = vsel %vm1415, %v1182, 0.0
    %v1443 = vadd.f32 %v1441, %v1442
    %v1444 = vsel %vm1418, %v1185, 0.0
    %v1445 = vadd.f32 %v1443, %v1444
    %v1446 = vsel %vm1416, %v1188, 0.0
    %v1447 = vadd.f32 %v1445, %v1446
    %v1448 = vsel %vm1419, %v1191, 0.0
    %v1449 = vadd.f32 %v1447, %v1448
    %v1450 = vsel %vm1420, %v1197, 0.0
    %v1451 = vadd.f32 %v1449, %v1450
    %s1452 = ssub.f32 %s279, %s253
    %v1453 = vstv %s1452
    %vm1454 = vcmp.ge.f32.partialorder %v1451, %v1453
    %v1455 = vsel %vm1454, %v1144, -inf
    %v1456 = vmax.f32 %v1377, %v1455
    %v1457 = vsel %vm1414, %v1297, 0.0
    %v1458 = vsel %vm1417, %v1204, 0.0
    %v1459 = vadd.f32 %v1457, %v1458
    %v1460 = vsel %vm1415, %v1206, 0.0
    %v1461 = vadd.f32 %v1459, %v1460
    %v1462 = vsel %vm1418, %v1209, 0.0
    %v1463 = vadd.f32 %v1461, %v1462
    %v1464 = vsel %vm1416, %v1212, 0.0
    %v1465 = vadd.f32 %v1463, %v1464
    %v1466 = vsel %vm1419, %v1215, 0.0
    %v1467 = vadd.f32 %v1465, %v1466
    %v1468 = vsel %vm1420, %v1221, 0.0
    %v1469 = vadd.f32 %v1467, %v1468
    %s1470 = ssub.f32 %s280, %s257
    %v1471 = vstv %s1470
    %vm1472 = vcmp.ge.f32.partialorder %v1469, %v1471
    %v1473 = vsel %vm1472, %v1144, -inf
    %v1474 = vmax.f32 %v1395, %v1473
    %v1475 = vsel %vm1414, %v1316, 0.0
    %v1476 = vsel %vm1417, %v1228, 0.0
    %v1477 = vadd.f32 %v1475, %v1476
    %v1478 = vsel %vm1415, %v1230, 0.0
    %v1479 = vadd.f32 %v1477, %v1478
    %v1480 = vsel %vm1418, %v1233, 0.0
    %v1481 = vadd.f32 %v1479, %v1480
    %v1482 = vsel %vm1416, %v1236, 0.0
    %v1483 = vadd.f32 %v1481, %v1482
    %v1484 = vsel %vm1419, %v1239, 0.0
    %v1485 = vadd.f32 %v1483, %v1484
    %v1486 = vsel %vm1420, %v1245, 0.0
    %v1487 = vadd.f32 %v1485, %v1486
    %s1488 = ssub.f32 %s281, %s261
    %v1489 = vstv %s1488
    %vm1490 = vcmp.ge.f32.partialorder %v1487, %v1489
    %v1491 = vsel %vm1490, %v1144, -inf
    %v1492 = vmax.f32 %v1413, %v1491
    %vm1493 = vcmp.ge.f32.partialorder %v1090, %v1145
    %vm1494 = vcmp.ge.f32.partialorder %v1108, %v1145
    %vm1495 = vcmp.ge.f32.partialorder %v1126, %v1145
    %vm1496 = vcmp.ge.f32.partialorder %v1144, %v1145
    %vm1497 = vcmp.ge.f32.partialorder %v1146, %v1145
    %vm1498 = vcmp.ge.f32.partialorder %v1147, %v1145
    %vm1499 = vcmp.ge.f32.partialorder %v1148, %v1145
    %v1500 = vsel %vm1493, %v1259, 0.0
    %v1501 = vsel %vm1494, %v1158, 0.0
    %v1502 = vadd.f32 %v1500, %v1501
    %v1503 = vsel %vm1497, %v1161, 0.0
    %v1504 = vadd.f32 %v1502, %v1503
    %v1505 = vsel %vm1495, %v1164, 0.0
    %v1506 = vadd.f32 %v1504, %v1505
    %v1507 = vsel %vm1498, %v1167, 0.0
    %v1508 = vadd.f32 %v1506, %v1507
    %v1509 = vsel %vm1496, %v1170, 0.0
    %v1510 = vadd.f32 %v1508, %v1509
    %v1511 = vsel %vm1499, %v1173, 0.0
    %v1512 = vadd.f32 %v1510, %v1511
    %s1513 = ssub.f32 %s278, %s262
    %v1514 = vstv %s1513
    %vm1515 = vcmp.ge.f32.partialorder %v1512, %v1514
    %v1516 = vsel %vm1515, %v1145, -inf
    %v1517 = vmax.f32 %v1438, %v1516
    %v1518 = vsel %vm1493, %v1278, 0.0
    %v1519 = vsel %vm1494, %v1182, 0.0
    %v1520 = vadd.f32 %v1518, %v1519
    %v1521 = vsel %vm1497, %v1185, 0.0
    %v1522 = vadd.f32 %v1520, %v1521
    %v1523 = vsel %vm1495, %v1188, 0.0
    %v1524 = vadd.f32 %v1522, %v1523
    %v1525 = vsel %vm1498, %v1191, 0.0
    %v1526 = vadd.f32 %v1524, %v1525
    %v1527 = vsel %vm1496, %v1194, 0.0
    %v1528 = vadd.f32 %v1526, %v1527
    %v1529 = vsel %vm1499, %v1197, 0.0
    %v1530 = vadd.f32 %v1528, %v1529
    %s1531 = ssub.f32 %s279, %s266
    %v1532 = vstv %s1531
    %vm1533 = vcmp.ge.f32.partialorder %v1530, %v1532
    %v1534 = vsel %vm1533, %v1145, -inf
    %v1535 = vmax.f32 %v1456, %v1534
    %v1536 = vsel %vm1493, %v1297, 0.0
    %v1537 = vsel %vm1494, %v1206, 0.0
    %v1538 = vadd.f32 %v1536, %v1537
    %v1539 = vsel %vm1497, %v1209, 0.0
    %v1540 = vadd.f32 %v1538, %v1539
    %v1541 = vsel %vm1495, %v1212, 0.0
    %v1542 = vadd.f32 %v1540, %v1541
    %v1543 = vsel %vm1498, %v1215, 0.0
    %v1544 = vadd.f32 %v1542, %v1543
    %v1545 = vsel %vm1496, %v1218, 0.0
    %v1546 = vadd.f32 %v1544, %v1545
    %v1547 = vsel %vm1499, %v1221, 0.0
    %v1548 = vadd.f32 %v1546, %v1547
    %s1549 = ssub.f32 %s280, %s270
    %v1550 = vstv %s1549
    %vm1551 = vcmp.ge.f32.partialorder %v1548, %v1550
    %v1552 = vsel %vm1551, %v1145, -inf
    %v1553 = vmax.f32 %v1474, %v1552
    %v1554 = vsel %vm1493, %v1316, 0.0
    %v1555 = vsel %vm1494, %v1230, 0.0
    %v1556 = vadd.f32 %v1554, %v1555
    %v1557 = vsel %vm1497, %v1233, 0.0
    %v1558 = vadd.f32 %v1556, %v1557
    %v1559 = vsel %vm1495, %v1236, 0.0
    %v1560 = vadd.f32 %v1558, %v1559
    %v1561 = vsel %vm1498, %v1239, 0.0
    %v1562 = vadd.f32 %v1560, %v1561
    %v1563 = vsel %vm1496, %v1242, 0.0
    %v1564 = vadd.f32 %v1562, %v1563
    %v1565 = vsel %vm1499, %v1245, 0.0
    %v1566 = vadd.f32 %v1564, %v1565
    %s1567 = ssub.f32 %s281, %s274
    %v1568 = vstv %s1567
    %vm1569 = vcmp.ge.f32.partialorder %v1566, %v1568
    %v1570 = vsel %vm1569, %v1145, -inf
    %v1571 = vmax.f32 %v1492, %v1570
    %vm1572 = vcmp.ge.f32.partialorder %v1090, %v1146
    %vm1573 = vcmp.ge.f32.partialorder %v1108, %v1146
    %vm1574 = vcmp.ge.f32.partialorder %v1126, %v1146
    %vm1575 = vcmp.ge.f32.partialorder %v1144, %v1146
    %vm1576 = vcmp.ge.f32.partialorder %v1145, %v1146
    %vm1577 = vcmp.ge.f32.partialorder %v1147, %v1146
    %vm1578 = vcmp.ge.f32.partialorder %v1148, %v1146
    %v1579 = vsel %vm1572, %v1259, 0.0
    %v1580 = vsel %vm1576, %v1156, 0.0
    %v1581 = vadd.f32 %v1579, %v1580
    %v1582 = vsel %vm1573, %v1158, 0.0
    %v1583 = vadd.f32 %v1581, %v1582
    %v1584 = vsel %vm1574, %v1164, 0.0
    %v1585 = vadd.f32 %v1583, %v1584
    %v1586 = vsel %vm1577, %v1167, 0.0
    %v1587 = vadd.f32 %v1585, %v1586
    %v1588 = vsel %vm1575, %v1170, 0.0
    %v1589 = vadd.f32 %v1587, %v1588
    %v1590 = vsel %vm1578, %v1173, 0.0
    %v1591 = vadd.f32 %v1589, %v1590
    %s1592 = ssub.f32 %s278, %s263
    %v1593 = vstv %s1592
    %vm1594 = vcmp.ge.f32.partialorder %v1591, %v1593
    %v1595 = vsel %vm1594, %v1146, -inf
    %v1596 = vmax.f32 %v1517, %v1595
    %v1597 = vsel %vm1572, %v1278, 0.0
    %v1598 = vsel %vm1576, %v1180, 0.0
    %v1599 = vadd.f32 %v1597, %v1598
    %v1600 = vsel %vm1573, %v1182, 0.0
    %v1601 = vadd.f32 %v1599, %v1600
    %v1602 = vsel %vm1574, %v1188, 0.0
    %v1603 = vadd.f32 %v1601, %v1602
    %v1604 = vsel %vm1577, %v1191, 0.0
    %v1605 = vadd.f32 %v1603, %v1604
    %v1606 = vsel %vm1575, %v1194, 0.0
    %v1607 = vadd.f32 %v1605, %v1606
    %v1608 = vsel %vm1578, %v1197, 0.0
    %v1609 = vadd.f32 %v1607, %v1608
    %s1610 = ssub.f32 %s279, %s267
    %v1611 = vstv %s1610
    %vm1612 = vcmp.ge.f32.partialorder %v1609, %v1611
    %v1613 = vsel %vm1612, %v1146, -inf
    %v1614 = vmax.f32 %v1535, %v1613
    %v1615 = vsel %vm1572, %v1297, 0.0
    %v1616 = vsel %vm1576, %v1204, 0.0
    %v1617 = vadd.f32 %v1615, %v1616
    %v1618 = vsel %vm1573, %v1206, 0.0
    %v1619 = vadd.f32 %v1617, %v1618
    %v1620 = vsel %vm1574, %v1212, 0.0
    %v1621 = vadd.f32 %v1619, %v1620
    %v1622 = vsel %vm1577, %v1215, 0.0
    %v1623 = vadd.f32 %v1621, %v1622
    %v1624 = vsel %vm1575, %v1218, 0.0
    %v1625 = vadd.f32 %v1623, %v1624
    %v1626 = vsel %vm1578, %v1221, 0.0
    %v1627 = vadd.f32 %v1625, %v1626
    %s1628 = ssub.f32 %s280, %s271
    %v1629 = vstv %s1628
    %vm1630 = vcmp.ge.f32.partialorder %v1627, %v1629
    %v1631 = vsel %vm1630, %v1146, -inf
    %v1632 = vmax.f32 %v1553, %v1631
    %v1633 = vsel %vm1572, %v1316, 0.0
    %v1634 = vsel %vm1576, %v1228, 0.0
    %v1635 = vadd.f32 %v1633, %v1634
    %v1636 = vsel %vm1573, %v1230, 0.0
    %v1637 = vadd.f32 %v1635, %v1636
    %v1638 = vsel %vm1574, %v1236, 0.0
    %v1639 = vadd.f32 %v1637, %v1638
    %v1640 = vsel %vm1577, %v1239, 0.0
    %v1641 = vadd.f32 %v1639, %v1640
    %v1642 = vsel %vm1575, %v1242, 0.0
    %v1643 = vadd.f32 %v1641, %v1642
    %v1644 = vsel %vm1578, %v1245, 0.0
    %v1645 = vadd.f32 %v1643, %v1644
    %s1646 = ssub.f32 %s281, %s275
    %v1647 = vstv %s1646
    %vm1648 = vcmp.ge.f32.partialorder %v1645, %v1647
    %v1649 = vsel %vm1648, %v1146, -inf
    %v1650 = vmax.f32 %v1571, %v1649
    %vm1651 = vcmp.ge.f32.partialorder %v1090, %v1147
    %vm1652 = vcmp.ge.f32.partialorder %v1108, %v1147
    %vm1653 = vcmp.ge.f32.partialorder %v1126, %v1147
    %vm1654 = vcmp.ge.f32.partialorder %v1144, %v1147
    %vm1655 = vcmp.ge.f32.partialorder %v1145, %v1147
    %vm1656 = vcmp.ge.f32.partialorder %v1146, %v1147
    %vm1657 = vcmp.ge.f32.partialorder %v1148, %v1147
    %v1658 = vsel %vm1651, %v1259, 0.0
    %v1659 = vsel %vm1655, %v1156, 0.0
    %v1660 = vadd.f32 %v1658, %v1659
    %v1661 = vsel %vm1652, %v1158, 0.0
    %v1662 = vadd.f32 %v1660, %v1661
    %v1663 = vsel %vm1656, %v1161, 0.0
    %v1664 = vadd.f32 %v1662, %v1663
    %v1665 = vsel %vm1653, %v1164, 0.0
    %v1666 = vadd.f32 %v1664, %v1665
    %v1667 = vsel %vm1654, %v1170, 0.0
    %v1668 = vadd.f32 %v1666, %v1667
    %v1669 = vsel %vm1657, %v1173, 0.0
    %v1670 = vadd.f32 %v1668, %v1669
    %s1671 = ssub.f32 %s278, %s264
    %v1672 = vstv %s1671
    %vm1673 = vcmp.ge.f32.partialorder %v1670, %v1672
    %v1674 = vsel %vm1673, %v1147, -inf
    %v1675 = vmax.f32 %v1596, %v1674
    %v1676 = vsel %vm1651, %v1278, 0.0
    %v1677 = vsel %vm1655, %v1180, 0.0
    %v1678 = vadd.f32 %v1676, %v1677
    %v1679 = vsel %vm1652, %v1182, 0.0
    %v1680 = vadd.f32 %v1678, %v1679
    %v1681 = vsel %vm1656, %v1185, 0.0
    %v1682 = vadd.f32 %v1680, %v1681
    %v1683 = vsel %vm1653, %v1188, 0.0
    %v1684 = vadd.f32 %v1682, %v1683
    %v1685 = vsel %vm1654, %v1194, 0.0
    %v1686 = vadd.f32 %v1684, %v1685
    %v1687 = vsel %vm1657, %v1197, 0.0
    %v1688 = vadd.f32 %v1686, %v1687
    %s1689 = ssub.f32 %s279, %s268
    %v1690 = vstv %s1689
    %vm1691 = vcmp.ge.f32.partialorder %v1688, %v1690
    %v1692 = vsel %vm1691, %v1147, -inf
    %v1693 = vmax.f32 %v1614, %v1692
    %v1694 = vsel %vm1651, %v1297, 0.0
    %v1695 = vsel %vm1655, %v1204, 0.0
    %v1696 = vadd.f32 %v1694, %v1695
    %v1697 = vsel %vm1652, %v1206, 0.0
    %v1698 = vadd.f32 %v1696, %v1697
    %v1699 = vsel %vm1656, %v1209, 0.0
    %v1700 = vadd.f32 %v1698, %v1699
    %v1701 = vsel %vm1653, %v1212, 0.0
    %v1702 = vadd.f32 %v1700, %v1701
    %v1703 = vsel %vm1654, %v1218, 0.0
    %v1704 = vadd.f32 %v1702, %v1703
    %v1705 = vsel %vm1657, %v1221, 0.0
    %v1706 = vadd.f32 %v1704, %v1705
    %s1707 = ssub.f32 %s280, %s272
    %v1708 = vstv %s1707
    %vm1709 = vcmp.ge.f32.partialorder %v1706, %v1708
    %v1710 = vsel %vm1709, %v1147, -inf
    %v1711 = vmax.f32 %v1632, %v1710
    %v1712 = vsel %vm1651, %v1316, 0.0
    %v1713 = vsel %vm1655, %v1228, 0.0
    %v1714 = vadd.f32 %v1712, %v1713
    %v1715 = vsel %vm1652, %v1230, 0.0
    %v1716 = vadd.f32 %v1714, %v1715
    %v1717 = vsel %vm1656, %v1233, 0.0
    %v1718 = vadd.f32 %v1716, %v1717
    %v1719 = vsel %vm1653, %v1236, 0.0
    %v1720 = vadd.f32 %v1718, %v1719
    %v1721 = vsel %vm1654, %v1242, 0.0
    %v1722 = vadd.f32 %v1720, %v1721
    %v1723 = vsel %vm1657, %v1245, 0.0
    %v1724 = vadd.f32 %v1722, %v1723
    %s1725 = ssub.f32 %s281, %s276
    %v1726 = vstv %s1725
    %vm1727 = vcmp.ge.f32.partialorder %v1724, %v1726
    %v1728 = vsel %vm1727, %v1147, -inf
    %v1729 = vmax.f32 %v1650, %v1728
    %vm1730 = vcmp.ge.f32.partialorder %v1090, %v1148
    %vm1731 = vcmp.ge.f32.partialorder %v1108, %v1148
    %vm1732 = vcmp.ge.f32.partialorder %v1126, %v1148
    %vm1733 = vcmp.ge.f32.partialorder %v1144, %v1148
    %vm1734 = vcmp.ge.f32.partialorder %v1145, %v1148
    %vm1735 = vcmp.ge.f32.partialorder %v1146, %v1148
    %vm1736 = vcmp.ge.f32.partialorder %v1147, %v1148
    %v1737 = vsel %vm1730, %v1259, 0.0
    %v1738 = vsel %vm1734, %v1156, 0.0
    %v1739 = vadd.f32 %v1737, %v1738
    %v1740 = vsel %vm1731, %v1158, 0.0
    %v1741 = vadd.f32 %v1739, %v1740
    %v1742 = vsel %vm1735, %v1161, 0.0
    %v1743 = vadd.f32 %v1741, %v1742
    %v1744 = vsel %vm1732, %v1164, 0.0
    %v1745 = vadd.f32 %v1743, %v1744
    %v1746 = vsel %vm1736, %v1167, 0.0
    %v1747 = vadd.f32 %v1745, %v1746
    %v1748 = vsel %vm1733, %v1170, 0.0
    %v1749 = vadd.f32 %v1747, %v1748
    %s1750 = ssub.f32 %s278, %s265
    %v1751 = vstv %s1750
    %vm1752 = vcmp.ge.f32.partialorder %v1749, %v1751
    %v1753 = vsel %vm1752, %v1148, -inf
    %v1754 = vmax.f32 %v1675, %v1753
    %v1755 = vsel %vm1730, %v1278, 0.0
    %v1756 = vsel %vm1734, %v1180, 0.0
    %v1757 = vadd.f32 %v1755, %v1756
    %v1758 = vsel %vm1731, %v1182, 0.0
    %v1759 = vadd.f32 %v1757, %v1758
    %v1760 = vsel %vm1735, %v1185, 0.0
    %v1761 = vadd.f32 %v1759, %v1760
    %v1762 = vsel %vm1732, %v1188, 0.0
    %v1763 = vadd.f32 %v1761, %v1762
    %v1764 = vsel %vm1736, %v1191, 0.0
    %v1765 = vadd.f32 %v1763, %v1764
    %v1766 = vsel %vm1733, %v1194, 0.0
    %v1767 = vadd.f32 %v1765, %v1766
    %s1768 = ssub.f32 %s279, %s269
    %v1769 = vstv %s1768
    %vm1770 = vcmp.ge.f32.partialorder %v1767, %v1769
    %v1771 = vsel %vm1770, %v1148, -inf
    %v1772 = vmax.f32 %v1693, %v1771
    %v1773 = vsel %vm1730, %v1297, 0.0
    %v1774 = vsel %vm1734, %v1204, 0.0
    %v1775 = vadd.f32 %v1773, %v1774
    %v1776 = vsel %vm1731, %v1206, 0.0
    %v1777 = vadd.f32 %v1775, %v1776
    %v1778 = vsel %vm1735, %v1209, 0.0
    %v1779 = vadd.f32 %v1777, %v1778
    %v1780 = vsel %vm1732, %v1212, 0.0
    %v1781 = vadd.f32 %v1779, %v1780
    %v1782 = vsel %vm1736, %v1215, 0.0
    %v1783 = vadd.f32 %v1781, %v1782
    %v1784 = vsel %vm1733, %v1218, 0.0
    %v1785 = vadd.f32 %v1783, %v1784
    %s1786 = ssub.f32 %s280, %s273
    %v1787 = vstv %s1786
    %vm1788 = vcmp.ge.f32.partialorder %v1785, %v1787
    %v1789 = vsel %vm1788, %v1148, -inf
    %v1790 = vmax.f32 %v1711, %v1789
    %v1791 = vsel %vm1730, %v1316, 0.0
    %v1792 = vsel %vm1734, %v1228, 0.0
    %v1793 = vadd.f32 %v1791, %v1792
    %v1794 = vsel %vm1731, %v1230, 0.0
    %v1795 = vadd.f32 %v1793, %v1794
    %v1796 = vsel %vm1735, %v1233, 0.0
    %v1797 = vadd.f32 %v1795, %v1796
    %v1798 = vsel %vm1732, %v1236, 0.0
    %v1799 = vadd.f32 %v1797, %v1798
    %v1800 = vsel %vm1736, %v1239, 0.0
    %v1801 = vadd.f32 %v1799, %v1800
    %v1802 = vsel %vm1733, %v1242, 0.0
    %v1803 = vadd.f32 %v1801, %v1802
    %s1804 = ssub.f32 %s281, %s277
    %v1805 = vstv %s1804
    %vm1806 = vcmp.ge.f32.partialorder %v1803, %v1805
    %v1807 = vsel %vm1806, %v1148, -inf
    %v1808 = vmax.f32 %v1729, %v1807
    %v1809 = vsub.f32 0.0, %v1754
    %v1810 = vsub.f32 0.0, %v1772
    %v1811 = vsub.f32 0.0, %v1790
    %v1812 = vsub.f32 0.0, %v1808
    %vm1813 = vcmp.ge.f32.partialorder %v1772, %v1754
    %vm1814 = vcmp.ge.f32.partialorder %v1790, %v1754
    %vm1815 = vcmp.ge.f32.partialorder %v1808, %v1754
    %vm1816 = vcmp.ge.f32.partialorder %v1809, %v1754
    %vm1817 = vcmp.ge.f32.partialorder %v1810, %v1754
    %vm1818 = vcmp.ge.f32.partialorder %v1811, %v1754
    %vm1819 = vcmp.ge.f32.partialorder %v1812, %v1754
    %v1820 = vstv %s286
    %v1821 = vsel %vm1816, %v1820, 0.0
    %v1822 = vstv %s283
    %v1823 = vsel %vm1813, %v1822, 0.0
    %v1824 = vadd.f32 %v1821, %v1823
    %v1825 = vstv %s287
    %v1826 = vsel %vm1817, %v1825, 0.0
    %v1827 = vadd.f32 %v1824, %v1826
    %v1828 = vstv %s284
    %v1829 = vsel %vm1814, %v1828, 0.0
    %v1830 = vadd.f32 %v1827, %v1829
    %v1831 = vstv %s288
    %v1832 = vsel %vm1818, %v1831, 0.0
    %v1833 = vadd.f32 %v1830, %v1832
    %v1834 = vstv %s285
    %v1835 = vsel %vm1815, %v1834, 0.0
    %v1836 = vadd.f32 %v1833, %v1835
    %v1837 = vstv %s289
    %v1838 = vsel %vm1819, %v1837, 0.0
    %v1839 = vadd.f32 %v1836, %v1838
    %s1840 = ssub.f32 %s290, %s282
    %v1841 = vstv %s1840
    %vm1842 = vcmp.ge.f32.partialorder %v1839, %v1841
    %v1843 = vsel %vm1842, %v1754, -inf
    %vm1844 = vcmp.ge.f32.partialorder %v1754, %v1772
    %vm1845 = vcmp.ge.f32.partialorder %v1790, %v1772
    %vm1846 = vcmp.ge.f32.partialorder %v1808, %v1772
    %vm1847 = vcmp.ge.f32.partialorder %v1809, %v1772
    %vm1848 = vcmp.ge.f32.partialorder %v1810, %v1772
    %vm1849 = vcmp.ge.f32.partialorder %v1811, %v1772
    %vm1850 = vcmp.ge.f32.partialorder %v1812, %v1772
    %v1851 = vstv %s282
    %v1852 = vsel %vm1844, %v1851, 0.0
    %v1853 = vsel %vm1847, %v1820, 0.0
    %v1854 = vadd.f32 %v1852, %v1853
    %v1855 = vsel %vm1848, %v1825, 0.0
    %v1856 = vadd.f32 %v1854, %v1855
    %v1857 = vsel %vm1845, %v1828, 0.0
    %v1858 = vadd.f32 %v1856, %v1857
    %v1859 = vsel %vm1849, %v1831, 0.0
    %v1860 = vadd.f32 %v1858, %v1859
    %v1861 = vsel %vm1846, %v1834, 0.0
    %v1862 = vadd.f32 %v1860, %v1861
    %v1863 = vsel %vm1850, %v1837, 0.0
    %v1864 = vadd.f32 %v1862, %v1863
    %s1865 = ssub.f32 %s290, %s283
    %v1866 = vstv %s1865
    %vm1867 = vcmp.ge.f32.partialorder %v1864, %v1866
    %v1868 = vsel %vm1867, %v1772, -inf
    %v1869 = vmax.f32 %v1843, %v1868
    %vm1870 = vcmp.ge.f32.partialorder %v1754, %v1790
    %vm1871 = vcmp.ge.f32.partialorder %v1772, %v1790
    %vm1872 = vcmp.ge.f32.partialorder %v1808, %v1790
    %vm1873 = vcmp.ge.f32.partialorder %v1809, %v1790
    %vm1874 = vcmp.ge.f32.partialorder %v1810, %v1790
    %vm1875 = vcmp.ge.f32.partialorder %v1811, %v1790
    %vm1876 = vcmp.ge.f32.partialorder %v1812, %v1790
    %v1877 = vsel %vm1870, %v1851, 0.0
    %v1878 = vsel %vm1873, %v1820, 0.0
    %v1879 = vadd.f32 %v1877, %v1878
    %v1880 = vsel %vm1871, %v1822, 0.0
    %v1881 = vadd.f32 %v1879, %v1880
    %v1882 = vsel %vm1874, %v1825, 0.0
    %v1883 = vadd.f32 %v1881, %v1882
    %v1884 = vsel %vm1875, %v1831, 0.0
    %v1885 = vadd.f32 %v1883, %v1884
    %v1886 = vsel %vm1872, %v1834, 0.0
    %v1887 = vadd.f32 %v1885, %v1886
    %v1888 = vsel %vm1876, %v1837, 0.0
    %v1889 = vadd.f32 %v1887, %v1888
    %s1890 = ssub.f32 %s290, %s284
    %v1891 = vstv %s1890
    %vm1892 = vcmp.ge.f32.partialorder %v1889, %v1891
    %v1893 = vsel %vm1892, %v1790, -inf
    %v1894 = vmax.f32 %v1869, %v1893
    %vm1895 = vcmp.ge.f32.partialorder %v1754, %v1808
    %vm1896 = vcmp.ge.f32.partialorder %v1772, %v1808
    %vm1897 = vcmp.ge.f32.partialorder %v1790, %v1808
    %vm1898 = vcmp.ge.f32.partialorder %v1809, %v1808
    %vm1899 = vcmp.ge.f32.partialorder %v1810, %v1808
    %vm1900 = vcmp.ge.f32.partialorder %v1811, %v1808
    %vm1901 = vcmp.ge.f32.partialorder %v1812, %v1808
    %v1902 = vsel %vm1895, %v1851, 0.0
    %v1903 = vsel %vm1898, %v1820, 0.0
    %v1904 = vadd.f32 %v1902, %v1903
    %v1905 = vsel %vm1896, %v1822, 0.0
    %v1906 = vadd.f32 %v1904, %v1905
    %v1907 = vsel %vm1899, %v1825, 0.0
    %v1908 = vadd.f32 %v1906, %v1907
    %v1909 = vsel %vm1897, %v1828, 0.0
    %v1910 = vadd.f32 %v1908, %v1909
    %v1911 = vsel %vm1900, %v1831, 0.0
    %v1912 = vadd.f32 %v1910, %v1911
    %v1913 = vsel %vm1901, %v1837, 0.0
    %v1914 = vadd.f32 %v1912, %v1913
    %s1915 = ssub.f32 %s290, %s285
    %v1916 = vstv %s1915
    %vm1917 = vcmp.ge.f32.partialorder %v1914, %v1916
    %v1918 = vsel %vm1917, %v1808, -inf
    %v1919 = vmax.f32 %v1894, %v1918
    %vm1920 = vcmp.ge.f32.partialorder %v1754, %v1809
    %vm1921 = vcmp.ge.f32.partialorder %v1772, %v1809
    %vm1922 = vcmp.ge.f32.partialorder %v1790, %v1809
    %vm1923 = vcmp.ge.f32.partialorder %v1808, %v1809
    %vm1924 = vcmp.ge.f32.partialorder %v1810, %v1809
    %vm1925 = vcmp.ge.f32.partialorder %v1811, %v1809
    %vm1926 = vcmp.ge.f32.partialorder %v1812, %v1809
    %v1927 = vsel %vm1920, %v1851, 0.0
    %v1928 = vsel %vm1921, %v1822, 0.0
    %v1929 = vadd.f32 %v1927, %v1928
    %v1930 = vsel %vm1924, %v1825, 0.0
    %v1931 = vadd.f32 %v1929, %v1930
    %v1932 = vsel %vm1922, %v1828, 0.0
    %v1933 = vadd.f32 %v1931, %v1932
    %v1934 = vsel %vm1925, %v1831, 0.0
    %v1935 = vadd.f32 %v1933, %v1934
    %v1936 = vsel %vm1923, %v1834, 0.0
    %v1937 = vadd.f32 %v1935, %v1936
    %v1938 = vsel %vm1926, %v1837, 0.0
    %v1939 = vadd.f32 %v1937, %v1938
    %s1940 = ssub.f32 %s290, %s286
    %v1941 = vstv %s1940
    %vm1942 = vcmp.ge.f32.partialorder %v1939, %v1941
    %v1943 = vsel %vm1942, %v1809, -inf
    %v1944 = vmax.f32 %v1919, %v1943
    %vm1945 = vcmp.ge.f32.partialorder %v1754, %v1810
    %vm1946 = vcmp.ge.f32.partialorder %v1772, %v1810
    %vm1947 = vcmp.ge.f32.partialorder %v1790, %v1810
    %vm1948 = vcmp.ge.f32.partialorder %v1808, %v1810
    %vm1949 = vcmp.ge.f32.partialorder %v1809, %v1810
    %vm1950 = vcmp.ge.f32.partialorder %v1811, %v1810
    %vm1951 = vcmp.ge.f32.partialorder %v1812, %v1810
    %v1952 = vsel %vm1945, %v1851, 0.0
    %v1953 = vsel %vm1949, %v1820, 0.0
    %v1954 = vadd.f32 %v1952, %v1953
    %v1955 = vsel %vm1946, %v1822, 0.0
    %v1956 = vadd.f32 %v1954, %v1955
    %v1957 = vsel %vm1947, %v1828, 0.0
    %v1958 = vadd.f32 %v1956, %v1957
    %v1959 = vsel %vm1950, %v1831, 0.0
    %v1960 = vadd.f32 %v1958, %v1959
    %v1961 = vsel %vm1948, %v1834, 0.0
    %v1962 = vadd.f32 %v1960, %v1961
    %v1963 = vsel %vm1951, %v1837, 0.0
    %v1964 = vadd.f32 %v1962, %v1963
    %s1965 = ssub.f32 %s290, %s287
    %v1966 = vstv %s1965
    %vm1967 = vcmp.ge.f32.partialorder %v1964, %v1966
    %v1968 = vsel %vm1967, %v1810, -inf
    %v1969 = vmax.f32 %v1944, %v1968
    %vm1970 = vcmp.ge.f32.partialorder %v1754, %v1811
    %vm1971 = vcmp.ge.f32.partialorder %v1772, %v1811
    %vm1972 = vcmp.ge.f32.partialorder %v1790, %v1811
    %vm1973 = vcmp.ge.f32.partialorder %v1808, %v1811
    %vm1974 = vcmp.ge.f32.partialorder %v1809, %v1811
    %vm1975 = vcmp.ge.f32.partialorder %v1810, %v1811
    %vm1976 = vcmp.ge.f32.partialorder %v1812, %v1811
    %v1977 = vsel %vm1970, %v1851, 0.0
    %v1978 = vsel %vm1974, %v1820, 0.0
    %v1979 = vadd.f32 %v1977, %v1978
    %v1980 = vsel %vm1971, %v1822, 0.0
    %v1981 = vadd.f32 %v1979, %v1980
    %v1982 = vsel %vm1975, %v1825, 0.0
    %v1983 = vadd.f32 %v1981, %v1982
    %v1984 = vsel %vm1972, %v1828, 0.0
    %v1985 = vadd.f32 %v1983, %v1984
    %v1986 = vsel %vm1973, %v1834, 0.0
    %v1987 = vadd.f32 %v1985, %v1986
    %v1988 = vsel %vm1976, %v1837, 0.0
    %v1989 = vadd.f32 %v1987, %v1988
    %s1990 = ssub.f32 %s290, %s288
    %v1991 = vstv %s1990
    %vm1992 = vcmp.ge.f32.partialorder %v1989, %v1991
    %v1993 = vsel %vm1992, %v1811, -inf
    %v1994 = vmax.f32 %v1969, %v1993
    %vm1995 = vcmp.ge.f32.partialorder %v1754, %v1812
    %vm1996 = vcmp.ge.f32.partialorder %v1772, %v1812
    %vm1997 = vcmp.ge.f32.partialorder %v1790, %v1812
    %vm1998 = vcmp.ge.f32.partialorder %v1808, %v1812
    %vm1999 = vcmp.ge.f32.partialorder %v1809, %v1812
    %vm2000 = vcmp.ge.f32.partialorder %v1810, %v1812
    %vm2001 = vcmp.ge.f32.partialorder %v1811, %v1812
    %v2002 = vsel %vm1995, %v1851, 0.0
    %v2003 = vsel %vm1999, %v1820, 0.0
    %v2004 = vadd.f32 %v2002, %v2003
    %v2005 = vsel %vm1996, %v1822, 0.0
    %v2006 = vadd.f32 %v2004, %v2005
    %v2007 = vsel %vm2000, %v1825, 0.0
    %v2008 = vadd.f32 %v2006, %v2007
    %v2009 = vsel %vm1997, %v1828, 0.0
    %v2010 = vadd.f32 %v2008, %v2009
    %v2011 = vsel %vm2001, %v1831, 0.0
    %v2012 = vadd.f32 %v2010, %v2011
    %v2013 = vsel %vm1998, %v1834, 0.0
    %v2014 = vadd.f32 %v2012, %v2013
    %s2015 = ssub.f32 %s290, %s289
    %v2016 = vstv %s2015
    %vm2017 = vcmp.ge.f32.partialorder %v2014, %v2016
    %v2018 = vsel %vm2017, %v1812, -inf
    %v2019 = vmax.f32 %v1994, %v2018
    %2020 = vst [vmem:[#allocation23] sm:$0xff] %v2019
    // Predicated region
    $region102: #{tpu_custom_call.1} parent=1 // pred_check
      _
    $region103: #{tpu_custom_call.1} parent=1 // pred_check_branch
      %2022 = sbr.rel (0) target = $region105
    $region104: #{tpu_custom_call.1} parent=1 // pred_region
      %2024 = vsyncadd [#allocation5], 0
      %s2026 = sshll.u32 [#allocation23], 4
      %s2027 = int_to_ptr.vmem [resolvable:$true] %s2026
      %s2028 = sshll.u32 %s13, 4
      %s2029 = int_to_ptr.hbm [resolvable:$true] %s2028
      %2031 = dma.vmem_to_hbm [thread:$0]  %s2027, 128, %s2029, [#allocation5]
    $region105: #{tpu_custom_call.1} parent=1 // pred_fallthru
      _
    // Predicated region
    $region106: #{tpu_custom_call.1} parent=1 // pred_check
      _
    $region107: #{tpu_custom_call.1} parent=1 // pred_check_branch
      %2033 = sbr.rel (0) target = $region109
    $region108: #{tpu_custom_call.1} parent=1 // pred_region
      %2035 = dma.done [#allocation5], 128
    $region109: #{tpu_custom_call.1} parent=1 // pred_fallthru
      _
    %2036 = vsyncpa [#allocation4], 1
    %2037 = vsyncpa [#allocation5], 1
    %2038 = vsyncpa [#allocation6], 1
    %2039 = vsyncpa [#allocation9], 1
    %2040 = vsyncpa [#allocation12], 1
    %2041 = vsyncpa [#allocation15], 1
    %2042 = vsyncpa [#allocation18], 1
    %2043 = vsyncpa [#allocation21], 1

</llo_original>
